<compile_context>
chip_gen: v5e
topology: v5e:2x2
jax: 0.10.0
libtpu: 0.0.40
codegen_flags: <defaults>
</compile_context>

<pallas_src>
import jax
import jax.numpy as jnp
from jax.experimental import pallas as pl
from jax.experimental.pallas import tpu as pltpu

# -------- model dimensions (padded to lane-friendly multiples of 128) --------
C1 = 32          # conv1 output channels
C2 = 469         # conv2 output channels == BiLSTM input size
C2P = 512        # 469 padded
HL = 200         # BiLSTM hidden size per direction
HP = 256         # 200 padded
MID = 40         # classifier mid features
MIDP = 128       # 40 padded
OUT = 5          # outputs per head
OUTP = 128       # single lane-dense output row
HEAD2_COL = 64   # head2 lives at columns [64:69] of the packed output

TAPC = 10        # columns per conv2 tap in the composed im2col (9 data + 1 ind)
K1P = 128        # 9*TAPC = 90 padded to 128 (K of the conv1 block-diag matmul)
BIG = 1e9        # "outside the image" indicator magnitude (ReLU clamps to 0)


# =============================================================================
# Fused forward kernel
# =============================================================================
def _fused_kernel(xc_ref, pool_ref, w1_ref, b1_ref, w2_ref, b2_ref,
                  bl_ref, bf1_ref, bh_ref,
                  wl_hbm, wf1_hbm, wh_hbm,
                  o_ref,
                  wl_vmem, wf1_vmem, wh_vmem, dma_sems):
    f32 = jnp.float32
    bf16 = jnp.bfloat16

    # ---- kick off HBM->VMEM copies of the tail weights (overlap with conv) --
    cp_lstm = pltpu.make_async_copy(wl_hbm, wl_vmem, dma_sems.at[0])
    cp_fc1 = pltpu.make_async_copy(wf1_hbm, wf1_vmem, dma_sems.at[1])
    cp_head = pltpu.make_async_copy(wh_hbm, wh_vmem, dma_sems.at[2])
    cp_lstm.start()          # largest / needed first
    cp_fc1.start()
    cp_head.start()

    # ---- conv1 (+ conv2 zero padding) folded into ONE block-diag matmul -----
    # im2col[m, k*C1 + c] = ReLU(conv1(x) at the conv2-tap-k-shifted position
    # of pixel m), or 0 when that position is outside the image (the -BIG
    # indicator column dominates the pre-activation and ReLU clamps it).
    im2col = jnp.dot(xc_ref[...], w1_ref[...], preferred_element_type=f32)
    im2col = jnp.maximum(im2col + b1_ref[...], 0.0)            # (M, 9*C1) f32

    # ---- conv2: ONE K=288 matmul (bf16 x bf16 -> f32), no VMEM accumulator --
    z2 = jnp.dot(im2col.astype(bf16), w2_ref[...], preferred_element_type=f32)
    a2 = jnp.maximum(z2 + b2_ref[...], 0.0)                    # (M, C2P) f32

    # ---- global average pool, fused as a tiny pooling matmul ----------------
    feat = jnp.dot(pool_ref[...], a2, preferred_element_type=f32)  # (B, C2P)

    # ---- BiLSTM, single timestep, h0 = c0 = 0 --------------------------------
    # One wide matmul for both directions and all live gates.  Gate-column
    # layout (packed at init): [i_f | i_b | g_f | g_b | o_f | o_b], each HP
    # wide, so the elementwise math below directly yields [h_fwd | h_bwd].
    # NOTE: the forget gate is dropped.  Valid ONLY because seq_len == 1 and
    #       c0 == 0 (f * c0 == 0); a multi-step extension must re-add it.
    cp_lstm.wait()
    gates = jnp.dot(feat.astype(bf16), wl_vmem[...],
                    preferred_element_type=f32) + bl_ref[...]  # (B, 6*HP)
    i_all = jax.nn.sigmoid(gates[:, 0:2 * HP])
    g_all = jnp.tanh(gates[:, 2 * HP:4 * HP])
    o_all = jax.nn.sigmoid(gates[:, 4 * HP:6 * HP])
    h_all = o_all * jnp.tanh(i_all * g_all)                    # (B, 2*HP) f32

    # ---- classifier: fc1 + ReLU, both heads in one matmul --------------------
    cp_fc1.wait()
    mid = jnp.maximum(
        jnp.dot(h_all.astype(bf16), wf1_vmem[...],
                preferred_element_type=f32) + bf1_ref[...], 0.0)   # (B, MIDP)
    cp_head.wait()
    o_ref[...] = jnp.dot(mid.astype(bf16), wh_vmem[...],
                         preferred_element_type=f32) + bh_ref[...]  # (B, OUTP)


# =============================================================================
# Wrapper
# =============================================================================
def sound_stage_net_v2(packed, x):
    """x: (B, 1, H, W) float32, NCHW at the API boundary (PyTorch layout)."""
    B, Cin, H, W = x.shape
    assert Cin == 1, "SoundStageNetV2 expects a 1-channel spectrogram"
    M = B * H * W
    HW = H * W

    # Composed conv1/conv2 im2col of the INPUT (5x5 receptive field).  For
    # conv2 tap k=(di,dj) and conv1 tap (r,s), column k*TAPC + r*3+s holds the
    # input (zero-padded by 2) at offset (di+r-2, dj+s-2); column k*TAPC+9 is
    # a 0 / -BIG indicator that (after ReLU) zeroes conv1's output wherever
    # conv2's tap falls outside the image, i.e. conv2's zero padding.
    xpad2 = jnp.pad(x[:, 0].astype(jnp.float32), ((0, 0), (2, 2), (2, 2)))
    ys = jnp.arange(H)
    xs = jnp.arange(W)
    cols = []
    for di in range(3):
        vh = (ys + di - 1 >= 0) & (ys + di - 1 < H)
        for dj in range(3):
            vw = (xs + dj - 1 >= 0) & (xs + dj - 1 < W)
            for r in range(3):
                for s in range(3):
                    cols.append(xpad2[:, di + r:di + r + H, dj + s:dj + s + W])
            ind = jnp.where(vh[:, None] & vw[None, :], 0.0, -BIG)
            cols.append(jnp.broadcast_to(ind, (B, H, W)))
    xcols = jnp.stack(cols, axis=-1).reshape(M, 9 * TAPC)
    xcols = jnp.pad(xcols, ((0, 0), (0, K1P - 9 * TAPC))).astype(jnp.bfloat16)

    # Per-batch mean-pooling matrix (GAP as a matmul): row b has 1/HW over the
    # HW rows of image b.
    pool = jnp.repeat(jnp.eye(B, dtype=jnp.float32), HW, axis=1) / HW  # (B, M)

    y = pl.pallas_call(
        _fused_kernel,
        out_shape=jax.ShapeDtypeStruct((B, OUTP), jnp.float32),
        in_specs=(
            [pl.BlockSpec(memory_space=pltpu.MemorySpace.VMEM)] * 9      # small
            + [pl.BlockSpec(memory_space=pl.ANY)] * 3                    # big weights
        ),
        out_specs=pl.BlockSpec(memory_space=pltpu.MemorySpace.VMEM),
        scratch_shapes=[
            pltpu.VMEM((C2P, 6 * HP), jnp.bfloat16),    # w_lstm landing buffer
            pltpu.VMEM((2 * HP, MIDP), jnp.bfloat16),   # w_fc1 landing buffer
            pltpu.VMEM((MIDP, OUTP), jnp.bfloat16),     # w_heads landing buffer
            pltpu.SemaphoreType.DMA((3,)),
        ],
        # footprint ~4-5 MiB: comfortably inside the scoped default on all gens
        compiler_params=pltpu.CompilerParams(vmem_limit_bytes=32 * 1024 * 1024),
    )(xcols, pool,
      packed["w1"], packed["b1"], packed["w2"], packed["b2"],
      packed["b_lstm"], packed["b_fc1"], packed["b_heads"],
      packed["w_lstm"], packed["w_fc1"], packed["w_heads"])

    return y[:, 0:OUT], y[:, HEAD2_COL:HEAD2_COL + OUT]


# =============================================================================
# Parameter creation (PyTorch layout) and packing into the kernel layout
# =============================================================================
def init_torch_params(key):
    ks = jax.random.split(key, 20)

    def rn(k, shape, scale=0.05):
        return (scale * jax.random.normal(k, shape)).astype(jnp.float32)

    return {
        "conv1_w": rn(ks[0], (C1, 1, 3, 3)), "conv1_b": rn(ks[1], (C1,)),
        "conv2_w": rn(ks[2], (C2, C1, 3, 3)), "conv2_b": rn(ks[3], (C2,)),
        # bidirectional LSTM; weight_hh / h0 / c0 unused (seq_len==1, zero state)
        "w_ih_f": rn(ks[4], (4 * HL, C2)),
        "b_ih_f": rn(ks[5], (4 * HL,)), "b_hh_f": rn(ks[6], (4 * HL,)),
        "w_ih_b": rn(ks[7], (4 * HL, C2)),
        "b_ih_b": rn(ks[8], (4 * HL,)), "b_hh_b": rn(ks[9], (4 * HL,)),
        "fc1_w": rn(ks[10], (MID, 2 * HL)), "fc1_b": rn(ks[11], (MID,)),
        "head1_w": rn(ks[12], (OUT, MID)), "head1_b": rn(ks[13], (OUT,)),
        "head2_w": rn(ks[14], (OUT, MID)), "head2_b": rn(ks[15], (OUT,)),
    }


def pack_params(tp):
    """Pack PyTorch-layout parameters into the kernel's padded, lane-dense layout."""
    f32, bf16 = jnp.float32, jnp.bfloat16

    # conv1 as a block-diagonal matmul that directly emits conv2's im2col:
    # block k (one per conv2 tap) maps the 9 conv1 input taps plus one
    # "outside the image" indicator column onto conv1's C1 output channels.
    w1 = tp["conv1_w"].reshape(C1, 9).T                       # (9, C1), row = r*3+s
    w1_block = jnp.zeros((K1P, 9 * C1), f32)
    for k in range(9):
        w1_block = w1_block.at[k * TAPC:k * TAPC + 9, k * C1:(k + 1) * C1].set(w1)
        w1_block = w1_block.at[k * TAPC + 9, k * C1:(k + 1) * C1].set(1.0)
    b1 = jnp.tile(tp["conv1_b"], 9).reshape(1, 9 * C1).astype(f32)

    # conv2 as one (9*C1, C2P) matmul; rows are k-major / c-minor, matching the
    # im2col column layout above.  Out-channels zero-padded 469 -> 512.
    w2 = jnp.transpose(tp["conv2_w"], (2, 3, 1, 0)).reshape(9 * C1, C2)
    w2 = jnp.pad(w2, ((0, 0), (0, C2P - C2))).astype(bf16)
    b2 = jnp.pad(tp["conv2_b"], (0, C2P - C2)).reshape(1, C2P).astype(f32)

    # BiLSTM: weight_ih is (4*HL, C2), PyTorch gate order [i, f, g, o].
    # Forget gate dropped (seq_len == 1, c0 == 0).
    # Column layout: [i_f | i_b | g_f | g_b | o_f | o_b], each HP wide.
    # Padded gate columns (HL..HP) carry zero weights AND zero bias so the
    # padded hidden lanes come out exactly 0 (see correctness note in review).
    def gate(w_ih, b_ih, b_hh, g):
        wg = w_ih[g * HL:(g + 1) * HL, :].T                   # (C2, HL)
        bg = (b_ih + b_hh)[g * HL:(g + 1) * HL]               # (HL,)
        wg = jnp.pad(wg, ((0, C2P - C2), (0, HP - HL)))
        bg = jnp.pad(bg, (0, HP - HL)).reshape(1, HP)
        return wg, bg

    fwd = lambda g: gate(tp["w_ih_f"], tp["b_ih_f"], tp["b_hh_f"], g)
    bwd = lambda g: gate(tp["w_ih_b"], tp["b_ih_b"], tp["b_hh_b"], g)
    blocks = [fwd(0), bwd(0), fwd(2), bwd(2), fwd(3), bwd(3)]  # i, g, o per dir
    w_lstm = jnp.concatenate([w for w, _ in blocks], axis=1).astype(bf16)
    b_lstm = jnp.concatenate([b for _, b in blocks], axis=1).astype(f32)

    # fc1: (MID, 2*HL); its input [h_f | h_b] sits at rows [0:HL] and [HP:HP+HL]
    w_fc1 = jnp.zeros((2 * HP, MIDP), f32)
    w_fc1 = w_fc1.at[0:HL, 0:MID].set(tp["fc1_w"][:, 0:HL].T)
    w_fc1 = w_fc1.at[HP:HP + HL, 0:MID].set(tp["fc1_w"][:, HL:2 * HL].T)
    b_fc1 = jnp.zeros((1, MIDP), f32).at[0, 0:MID].set(tp["fc1_b"])

    # heads: one (MIDP, OUTP) matmul; head1 -> cols [0:OUT], head2 -> [64:64+OUT]
    w_h = jnp.zeros((MIDP, OUTP), f32)
    w_h = w_h.at[0:MID, 0:OUT].set(tp["head1_w"].T)
    w_h = w_h.at[0:MID, HEAD2_COL:HEAD2_COL + OUT].set(tp["head2_w"].T)
    b_h = jnp.zeros((1, OUTP), f32)
    b_h = b_h.at[0, 0:OUT].set(tp["head1_b"])
    b_h = b_h.at[0, HEAD2_COL:HEAD2_COL + OUT].set(tp["head2_b"])

    return {
        "w1": w1_block.astype(bf16), "b1": b1, "w2": w2, "b2": b2,
        "w_lstm": w_lstm, "b_lstm": b_lstm,
        "w_fc1": w_fc1.astype(bf16), "b_fc1": b_fc1,
        "w_heads": w_h.astype(bf16), "b_heads": b_h,
    }


if __name__ == "__main__":
    key = jax.random.PRNGKey(0)
    pkey, xkey = jax.random.split(key)

    packed = pack_params(init_torch_params(pkey))
    x = jax.random.normal(xkey, (2, 1, 16, 16), dtype=jnp.float32)  # NCHW input

    out1, out2 = jax.jit(sound_stage_net_v2)(packed, x)
    jax.block_until_ready((out1, out2))

    assert out1.shape == (2, OUT) and out2.shape == (2, OUT)
    assert out1.dtype == jnp.float32 and out2.dtype == jnp.float32
    assert bool(jnp.all(jnp.isfinite(out1))) and bool(jnp.all(jnp.isfinite(out2)))
    print("KERNEL_OK")
</pallas_src>

<mosaic_0001>
module attributes {stable_mosaic.version = 11 : i64} {
  func.func @_fused_kernel(%arg0: memref<512x128xbf16, #tpu.memory_space<vmem>>, %arg1: memref<2x512xf32, #tpu.memory_space<vmem>>, %arg2: memref<128x288xbf16, #tpu.memory_space<vmem>>, %arg3: memref<1x288xf32, #tpu.memory_space<vmem>>, %arg4: memref<288x512xbf16, #tpu.memory_space<vmem>>, %arg5: memref<1x512xf32, #tpu.memory_space<vmem>>, %arg6: memref<1x1536xf32, #tpu.memory_space<vmem>>, %arg7: memref<1x128xf32, #tpu.memory_space<vmem>>, %arg8: memref<1x128xf32, #tpu.memory_space<vmem>>, %arg9: memref<512x1536xbf16, #tpu.memory_space<any>>, %arg10: memref<512x128xbf16, #tpu.memory_space<any>>, %arg11: memref<128x128xbf16, #tpu.memory_space<any>>, %arg12: memref<2x128xf32, #tpu.memory_space<vmem>>, %arg13: memref<512x1536xbf16, #tpu.memory_space<vmem>>, %arg14: memref<512x128xbf16, #tpu.memory_space<vmem>>, %arg15: memref<128x128xbf16, #tpu.memory_space<vmem>>, %arg16: memref<3x!tpu.dma_semaphore, #tpu.memory_space<semaphore_mem>>) attributes {dimension_semantics = [], scalar_prefetch = 0 : i64, scratch_operands = 4 : i64, tpu.core_type = #tpu.core_type<tc>} {
    %c0_i32 = arith.constant 0 : i32
    %0 = tpu.memref_slice %arg16[%c0_i32] : memref<3x!tpu.dma_semaphore, #tpu.memory_space<semaphore_mem>> -> memref<1x!tpu.dma_semaphore, #tpu.memory_space<semaphore_mem>>
    %1 = tpu.memref_squeeze %0 : memref<1x!tpu.dma_semaphore, #tpu.memory_space<semaphore_mem>> -> memref<!tpu.dma_semaphore, #tpu.memory_space<semaphore_mem>>
    tpu.enqueue_dma source(%arg9 : memref<512x1536xbf16, #tpu.memory_space<any>>) target(%arg13 : memref<512x1536xbf16, #tpu.memory_space<vmem>>) target_semaphore(%1 : memref<!tpu.dma_semaphore, #tpu.memory_space<semaphore_mem>>)
    %c1_i32 = arith.constant 1 : i32
    %2 = tpu.memref_slice %arg16[%c1_i32] : memref<3x!tpu.dma_semaphore, #tpu.memory_space<semaphore_mem>> -> memref<1x!tpu.dma_semaphore, #tpu.memory_space<semaphore_mem>>
    %3 = tpu.memref_squeeze %2 : memref<1x!tpu.dma_semaphore, #tpu.memory_space<semaphore_mem>> -> memref<!tpu.dma_semaphore, #tpu.memory_space<semaphore_mem>>
    tpu.enqueue_dma source(%arg10 : memref<512x128xbf16, #tpu.memory_space<any>>) target(%arg14 : memref<512x128xbf16, #tpu.memory_space<vmem>>) target_semaphore(%3 : memref<!tpu.dma_semaphore, #tpu.memory_space<semaphore_mem>>)
    %c2_i32 = arith.constant 2 : i32
    %4 = tpu.memref_slice %arg16[%c2_i32] : memref<3x!tpu.dma_semaphore, #tpu.memory_space<semaphore_mem>> -> memref<1x!tpu.dma_semaphore, #tpu.memory_space<semaphore_mem>>
    %5 = tpu.memref_squeeze %4 : memref<1x!tpu.dma_semaphore, #tpu.memory_space<semaphore_mem>> -> memref<!tpu.dma_semaphore, #tpu.memory_space<semaphore_mem>>
    tpu.enqueue_dma source(%arg11 : memref<128x128xbf16, #tpu.memory_space<any>>) target(%arg15 : memref<128x128xbf16, #tpu.memory_space<vmem>>) target_semaphore(%5 : memref<!tpu.dma_semaphore, #tpu.memory_space<semaphore_mem>>)
    %c0 = arith.constant 0 : index
    %c0_0 = arith.constant 0 : index
    %6 = vector.load %arg0[%c0, %c0_0] : memref<512x128xbf16, #tpu.memory_space<vmem>>, vector<512x128xbf16>
    %c0_1 = arith.constant 0 : index
    %c0_2 = arith.constant 0 : index
    %7 = vector.load %arg2[%c0_1, %c0_2] : memref<128x288xbf16, #tpu.memory_space<vmem>>, vector<128x288xbf16>
    %cst = arith.constant dense<0.000000e+00> : vector<512x288xf32>
    %8 = tpu.matmul %6, %7, %cst {dimension_numbers = #tpu.dot_dimension_numbers<[1], [0], [0], [1], [0, 0, 1, 1], [], []>} : vector<512x128xbf16>, vector<128x288xbf16>, vector<512x288xf32> -> vector<512x288xf32>
    %c0_3 = arith.constant 0 : index
    %c0_4 = arith.constant 0 : index
    %9 = vector.load %arg3[%c0_3, %c0_4] : memref<1x288xf32, #tpu.memory_space<vmem>>, vector<1x288xf32>
    %10 = vector.broadcast %9 : vector<1x288xf32> to vector<512x288xf32>
    %11 = arith.addf %8, %10 : vector<512x288xf32>
    %cst_5 = arith.constant 0.000000e+00 : f32
    %12 = vector.broadcast %cst_5 : f32 to vector<512x288xf32>
    %13 = arith.maximumf %11, %12 : vector<512x288xf32>
    %14 = arith.truncf %13 : vector<512x288xf32> to vector<512x288xbf16>
    %c0_6 = arith.constant 0 : index
    %c0_7 = arith.constant 0 : index
    %15 = vector.load %arg4[%c0_6, %c0_7] : memref<288x512xbf16, #tpu.memory_space<vmem>>, vector<288x512xbf16>
    %cst_8 = arith.constant dense<0.000000e+00> : vector<512x512xf32>
    %16 = tpu.matmul %14, %15, %cst_8 {dimension_numbers = #tpu.dot_dimension_numbers<[1], [0], [0], [1], [0, 0, 1, 1], [], []>} : vector<512x288xbf16>, vector<288x512xbf16>, vector<512x512xf32> -> vector<512x512xf32>
    %c0_9 = arith.constant 0 : index
    %c0_10 = arith.constant 0 : index
    %17 = vector.load %arg5[%c0_9, %c0_10] : memref<1x512xf32, #tpu.memory_space<vmem>>, vector<1x512xf32>
    %18 = vector.broadcast %17 : vector<1x512xf32> to vector<512x512xf32>
    %19 = arith.addf %16, %18 : vector<512x512xf32>
    %cst_11 = arith.constant 0.000000e+00 : f32
    %20 = vector.broadcast %cst_11 : f32 to vector<512x512xf32>
    %21 = arith.maximumf %19, %20 : vector<512x512xf32>
    %c0_12 = arith.constant 0 : index
    %c0_13 = arith.constant 0 : index
    %22 = vector.load %arg1[%c0_12, %c0_13] : memref<2x512xf32, #tpu.memory_space<vmem>>, vector<2x512xf32>
    %cst_14 = arith.constant dense<0.000000e+00> : vector<2x512xf32>
    %23 = tpu.matmul %22, %21, %cst_14 {dimension_numbers = #tpu.dot_dimension_numbers<[1], [0], [0], [1], [0, 0, 1, 1], [], []>} : vector<2x512xf32>, vector<512x512xf32>, vector<2x512xf32> -> vector<2x512xf32>
    %c0_i32_15 = arith.constant 0 : i32
    %24 = tpu.memref_slice %arg16[%c0_i32_15] : memref<3x!tpu.dma_semaphore, #tpu.memory_space<semaphore_mem>> -> memref<1x!tpu.dma_semaphore, #tpu.memory_space<semaphore_mem>>
    %25 = tpu.memref_squeeze %24 : memref<1x!tpu.dma_semaphore, #tpu.memory_space<semaphore_mem>> -> memref<!tpu.dma_semaphore, #tpu.memory_space<semaphore_mem>>
    tpu.wait_dma2 semaphore(%25 : memref<!tpu.dma_semaphore, #tpu.memory_space<semaphore_mem>>) src(%arg9 : memref<512x1536xbf16, #tpu.memory_space<any>>) dst(%arg13 : memref<512x1536xbf16, #tpu.memory_space<vmem>>)
    %26 = arith.truncf %23 : vector<2x512xf32> to vector<2x512xbf16>
    %c0_16 = arith.constant 0 : index
    %c0_17 = arith.constant 0 : index
    %27 = vector.load %arg13[%c0_16, %c0_17] : memref<512x1536xbf16, #tpu.memory_space<vmem>>, vector<512x1536xbf16>
    %cst_18 = arith.constant dense<0.000000e+00> : vector<2x1536xf32>
    %28 = tpu.matmul %26, %27, %cst_18 {dimension_numbers = #tpu.dot_dimension_numbers<[1], [0], [0], [1], [0, 0, 1, 1], [], []>} : vector<2x512xbf16>, vector<512x1536xbf16>, vector<2x1536xf32> -> vector<2x1536xf32>
    %c0_19 = arith.constant 0 : index
    %c0_20 = arith.constant 0 : index
    %29 = vector.load %arg6[%c0_19, %c0_20] : memref<1x1536xf32, #tpu.memory_space<vmem>>, vector<1x1536xf32>
    %30 = vector.broadcast %29 : vector<1x1536xf32> to vector<2x1536xf32>
    %31 = arith.addf %28, %30 : vector<2x1536xf32>
    %32 = vector.extract_strided_slice %31 {offsets = [0, 0], sizes = [2, 512], strides = [1, 1]} : vector<2x1536xf32> to vector<2x512xf32>
    %33 = arith.negf %32 : vector<2x512xf32>
    %34 = math.exp %33 : vector<2x512xf32>
    %cst_21 = arith.constant 1.000000e+00 : f32
    %35 = vector.broadcast %cst_21 : f32 to vector<2x512xf32>
    %36 = arith.addf %35, %34 : vector<2x512xf32>
    %37 = arith.divf %35, %36 : vector<2x512xf32>
    %38 = vector.extract_strided_slice %31 {offsets = [0, 512], sizes = [2, 512], strides = [1, 1]} : vector<2x1536xf32> to vector<2x512xf32>
    %39 = math.tanh %38 : vector<2x512xf32>
    %40 = vector.extract_strided_slice %31 {offsets = [0, 1024], sizes = [2, 512], strides = [1, 1]} : vector<2x1536xf32> to vector<2x512xf32>
    %41 = arith.negf %40 : vector<2x512xf32>
    %42 = math.exp %41 : vector<2x512xf32>
    %cst_22 = arith.constant 1.000000e+00 : f32
    %43 = vector.broadcast %cst_22 : f32 to vector<2x512xf32>
    %44 = arith.addf %43, %42 : vector<2x512xf32>
    %45 = arith.divf %43, %44 : vector<2x512xf32>
    %46 = arith.mulf %37, %39 : vector<2x512xf32>
    %47 = math.tanh %46 : vector<2x512xf32>
    %48 = arith.mulf %45, %47 : vector<2x512xf32>
    %c1_i32_23 = arith.constant 1 : i32
    %49 = tpu.memref_slice %arg16[%c1_i32_23] : memref<3x!tpu.dma_semaphore, #tpu.memory_space<semaphore_mem>> -> memref<1x!tpu.dma_semaphore, #tpu.memory_space<semaphore_mem>>
    %50 = tpu.memref_squeeze %49 : memref<1x!tpu.dma_semaphore, #tpu.memory_space<semaphore_mem>> -> memref<!tpu.dma_semaphore, #tpu.memory_space<semaphore_mem>>
    tpu.wait_dma2 semaphore(%50 : memref<!tpu.dma_semaphore, #tpu.memory_space<semaphore_mem>>) src(%arg10 : memref<512x128xbf16, #tpu.memory_space<any>>) dst(%arg14 : memref<512x128xbf16, #tpu.memory_space<vmem>>)
    %51 = arith.truncf %48 : vector<2x512xf32> to vector<2x512xbf16>
    %c0_24 = arith.constant 0 : index
    %c0_25 = arith.constant 0 : index
    %52 = vector.load %arg14[%c0_24, %c0_25] : memref<512x128xbf16, #tpu.memory_space<vmem>>, vector<512x128xbf16>
    %cst_26 = arith.constant dense<0.000000e+00> : vector<2x128xf32>
    %53 = tpu.matmul %51, %52, %cst_26 {dimension_numbers = #tpu.dot_dimension_numbers<[1], [0], [0], [1], [0, 0, 1, 1], [], []>} : vector<2x512xbf16>, vector<512x128xbf16>, vector<2x128xf32> -> vector<2x128xf32>
    %c0_27 = arith.constant 0 : index
    %c0_28 = arith.constant 0 : index
    %54 = vector.load %arg7[%c0_27, %c0_28] : memref<1x128xf32, #tpu.memory_space<vmem>>, vector<1x128xf32>
    %55 = vector.broadcast %54 : vector<1x128xf32> to vector<2x128xf32>
    %56 = arith.addf %53, %55 : vector<2x128xf32>
    %cst_29 = arith.constant 0.000000e+00 : f32
    %57 = vector.broadcast %cst_29 : f32 to vector<2x128xf32>
    %58 = arith.maximumf %56, %57 : vector<2x128xf32>
    %c2_i32_30 = arith.constant 2 : i32
    %59 = tpu.memref_slice %arg16[%c2_i32_30] : memref<3x!tpu.dma_semaphore, #tpu.memory_space<semaphore_mem>> -> memref<1x!tpu.dma_semaphore, #tpu.memory_space<semaphore_mem>>
    %60 = tpu.memref_squeeze %59 : memref<1x!tpu.dma_semaphore, #tpu.memory_space<semaphore_mem>> -> memref<!tpu.dma_semaphore, #tpu.memory_space<semaphore_mem>>
    tpu.wait_dma2 semaphore(%60 : memref<!tpu.dma_semaphore, #tpu.memory_space<semaphore_mem>>) src(%arg11 : memref<128x128xbf16, #tpu.memory_space<any>>) dst(%arg15 : memref<128x128xbf16, #tpu.memory_space<vmem>>)
    %61 = arith.truncf %58 : vector<2x128xf32> to vector<2x128xbf16>
    %c0_31 = arith.constant 0 : index
    %c0_32 = arith.constant 0 : index
    %62 = vector.load %arg15[%c0_31, %c0_32] : memref<128x128xbf16, #tpu.memory_space<vmem>>, vector<128x128xbf16>
    %cst_33 = arith.constant dense<0.000000e+00> : vector<2x128xf32>
    %63 = tpu.matmul %61, %62, %cst_33 {dimension_numbers = #tpu.dot_dimension_numbers<[1], [0], [0], [1], [0, 0, 1, 1], [], []>} : vector<2x128xbf16>, vector<128x128xbf16>, vector<2x128xf32> -> vector<2x128xf32>
    %c0_34 = arith.constant 0 : index
    %c0_35 = arith.constant 0 : index
    %64 = vector.load %arg8[%c0_34, %c0_35] : memref<1x128xf32, #tpu.memory_space<vmem>>, vector<1x128xf32>
    %65 = vector.broadcast %64 : vector<1x128xf32> to vector<2x128xf32>
    %66 = arith.addf %63, %65 : vector<2x128xf32>
    %c0_36 = arith.constant 0 : index
    %c0_37 = arith.constant 0 : index
    %67 = vector.load %arg12[%c0_36, %c0_37] : memref<2x128xf32, #tpu.memory_space<vmem>>, vector<2x128xf32>
    tpu.vector_store %arg12[%c0_36, %c0_37], %66 {strides = array<i32>} : memref<2x128xf32, #tpu.memory_space<vmem>>, vector<2x128xf32>,
    return
  }
}

</mosaic_0001>

<llo_original>
// kernel: sound_stage_net_v2.1
$region0: #{sound_stage_net_v2.1}
  #allocation0 [shape = 'u32[]', space=smem, size = 0x4, offset = 0x4, fixed_abs, tag = 'smem constant byte address 0x4 - core index']
  #allocation1 [shape = 'u32[72,128]{1,0:T(1,128)}', space=vmem, size = 0x9000, scoped, tag = 'internal scratch']
  #allocation2 [shape = 'bf16[512,1536]{1,0:T(8,128)(2,1)}', space=vmem, size = 0x180000, scoped, tag = 'scratch operand']
  #allocation3 [shape = 'bf16[512,128]{1,0:T(8,128)(2,1)}', space=vmem, size = 0x20000, scoped, tag = 'scratch operand']
  #allocation4 [shape = 'bf16[128,128]{1,0:T(8,128)(2,1)}', space=vmem, size = 0x8000, scoped, tag = 'scratch operand']
  #allocation5 [shape = 's32[3]{0}', space=sflag, size = 0xc, scoped, tag = 'scratch operand']
  #allocation6 [shape = 's32[]', space=sflag, size = 0x4, offset = 0, fixed_abs, tag = 'sflag constant byte address 0x0 - dummy sync flag']
  #allocation7 [shape = 's32[]', space=sflag, size = 0x4, offset = 0, fixed_abs, tag = 'sflag constant byte address 0x0 - dummy sync flag']
  #allocation8 [shape = 's32[]', space=sflag, size = 0x4, offset = 0, fixed_abs, tag = 'sflag constant byte address 0x0 - dummy sync flag']
  %s0 = inlined_call_operand.vmem [shape: bf16[512,128], index: 0, kind: input, shape index: {}]
  %s1 = inlined_call_operand.vmem [shape: f32[2,512], index: 1, kind: input, shape index: {}]
  %s2 = inlined_call_operand.vmem [shape: bf16[128,288], index: 2, kind: input, shape index: {}]
  %s3 = inlined_call_operand.vmem [shape: f32[1,288], index: 3, kind: input, shape index: {}]
  %s4 = inlined_call_operand.vmem [shape: bf16[288,512], index: 4, kind: input, shape index: {}]
  %s5 = inlined_call_operand.vmem [shape: f32[1,512], index: 5, kind: input, shape index: {}]
  %s6 = inlined_call_operand.vmem [shape: f32[1,1536], index: 6, kind: input, shape index: {}]
  %s7 = inlined_call_operand.vmem [shape: f32[1,128], index: 7, kind: input, shape index: {}]
  %s8 = inlined_call_operand.vmem [shape: f32[1,128], index: 8, kind: input, shape index: {}]
  %s9 = inlined_call_operand.vmem [shape: bf16[512,1536], index: 9, kind: input, shape index: {}]
  %s10 = inlined_call_operand.vmem [shape: bf16[512,128], index: 10, kind: input, shape index: {}]
  %s11 = inlined_call_operand.vmem [shape: bf16[128,128], index: 11, kind: input, shape index: {}]
  %s12 = inlined_call_operand.vmem [shape: f32[2,128], index: 12, kind: output, shape index: {}]
  %s13 = sld [smem:[#allocation0]]
  $region103: #{sound_stage_net_v2.1} parent=0
    _
  %s15 = ssub.s32 1, %s13
  %s16 = scalar_select 0, %s15, %s13
  // Predicated region
  $region2: #{sound_stage_net_v2.1} parent=0 // pred_check
    _
  $region3: #{sound_stage_net_v2.1} parent=0 // pred_check_branch
    %18 = sbr.rel (0) target = $region5
  $region4: #{sound_stage_net_v2.1} parent=0 // pred_region
    _
  $region5: #{sound_stage_net_v2.1} parent=0 // pred_fallthru
    _
  // Predicated region
  $region6: #{sound_stage_net_v2.1} parent=0 // pred_check
    _
  $region7: #{sound_stage_net_v2.1} parent=0 // pred_check_branch
    %20 = sbr.rel (0) target = $region9
  $region8: #{sound_stage_net_v2.1} parent=0 // pred_region
    _
  $region9: #{sound_stage_net_v2.1} parent=0 // pred_fallthru
    _
  // Predicated region
  $region10: #{sound_stage_net_v2.1} parent=0 // pred_check
    _
  $region11: #{sound_stage_net_v2.1} parent=0 // pred_check_branch
    %22 = sbr.rel (0) target = $region13
  $region12: #{sound_stage_net_v2.1} parent=0 // pred_region
    _
  $region13: #{sound_stage_net_v2.1} parent=0 // pred_fallthru
    _
  // Predicated region
  $region14: #{sound_stage_net_v2.1} parent=0 // pred_check
    _
  $region15: #{sound_stage_net_v2.1} parent=0 // pred_check_branch
    %24 = sbr.rel (0) target = $region17
  $region16: #{sound_stage_net_v2.1} parent=0 // pred_region
    _
  $region17: #{sound_stage_net_v2.1} parent=0 // pred_fallthru
    _
  // Predicated region
  $region18: #{sound_stage_net_v2.1} parent=0 // pred_check
    _
  $region19: #{sound_stage_net_v2.1} parent=0 // pred_check_branch
    %26 = sbr.rel (0) target = $region21
  $region20: #{sound_stage_net_v2.1} parent=0 // pred_region
    _
  $region21: #{sound_stage_net_v2.1} parent=0 // pred_fallthru
    _
  // Predicated region
  $region22: #{sound_stage_net_v2.1} parent=0 // pred_check
    _
  $region23: #{sound_stage_net_v2.1} parent=0 // pred_check_branch
    %28 = sbr.rel (0) target = $region25
  $region24: #{sound_stage_net_v2.1} parent=0 // pred_region
    _
  $region25: #{sound_stage_net_v2.1} parent=0 // pred_fallthru
    _
  // Predicated region
  $region26: #{sound_stage_net_v2.1} parent=0 // pred_check
    _
  $region27: #{sound_stage_net_v2.1} parent=0 // pred_check_branch
    %30 = sbr.rel (0) target = $region29
  $region28: #{sound_stage_net_v2.1} parent=0 // pred_region
    _
  $region29: #{sound_stage_net_v2.1} parent=0 // pred_fallthru
    _
  // Predicated region
  $region30: #{sound_stage_net_v2.1} parent=0 // pred_check
    _
  $region31: #{sound_stage_net_v2.1} parent=0 // pred_check_branch
    %32 = sbr.rel (0) target = $region33
  $region32: #{sound_stage_net_v2.1} parent=0 // pred_region
    _
  $region33: #{sound_stage_net_v2.1} parent=0 // pred_fallthru
    _
  // Predicated region
  $region34: #{sound_stage_net_v2.1} parent=0 // pred_check
    _
  $region35: #{sound_stage_net_v2.1} parent=0 // pred_check_branch
    %34 = sbr.rel (0) target = $region37
  $region36: #{sound_stage_net_v2.1} parent=0 // pred_region
    _
  $region37: #{sound_stage_net_v2.1} parent=0 // pred_fallthru
    _
  // Predicated region
  $region38: #{sound_stage_net_v2.1} parent=0 // pred_check
    _
  $region39: #{sound_stage_net_v2.1} parent=0 // pred_check_branch
    %37 = sbr.rel (0) target = $region41
  $region40: #{sound_stage_net_v2.1} parent=0 // pred_region
    loop: start=0, step=1, limit=1
    $region42: #{sound_stage_net_v2.1} parent=40 // loop_pre_header
      _
    $region43: #{sound_stage_net_v2.1} parent=40 // loop_header
      %s39 = sphi 0, %s43
      %p40 = scmp.ge.s32.totalorder %s39, 1
      %s44 = sphi %s9, %s9
      %s45 = sphi [#allocation2], [#allocation2]
    $region44: #{sound_stage_net_v2.1} parent=40 // loop_header_branch
      %42 = sbr.rel (%p40) target = $region48
    $region45: #{sound_stage_net_v2.1} parent=40 // loop_body
      %v46 = vld [vmem:[%s44] sm:$0xff]
      %47 = vst [vmem:[%s45] sm:$0xff] %v46
      %v48 = vld [vmem:[%s44 + $0x8] sm:$0xff]
      %49 = vst [vmem:[%s45 + $0x8] sm:$0xff] %v48
      %v50 = vld [vmem:[%s44 + $0x10] sm:$0xff]
      %51 = vst [vmem:[%s45 + $0x10] sm:$0xff] %v50
      %v52 = vld [vmem:[%s44 + $0x18] sm:$0xff]
      %53 = vst [vmem:[%s45 + $0x18] sm:$0xff] %v52
      %v54 = vld [vmem:[%s44 + $0x20] sm:$0xff]
      %55 = vst [vmem:[%s45 + $0x20] sm:$0xff] %v54
      %v56 = vld [vmem:[%s44 + $0x28] sm:$0xff]
      %57 = vst [vmem:[%s45 + $0x28] sm:$0xff] %v56
      %v58 = vld [vmem:[%s44 + $0x30] sm:$0xff]
      %59 = vst [vmem:[%s45 + $0x30] sm:$0xff] %v58
      %v60 = vld [vmem:[%s44 + $0x38] sm:$0xff]
      %61 = vst [vmem:[%s45 + $0x38] sm:$0xff] %v60
      %v62 = vld [vmem:[%s44 + $0x40] sm:$0xff]
      %63 = vst [vmem:[%s45 + $0x40] sm:$0xff] %v62
      %v64 = vld [vmem:[%s44 + $0x48] sm:$0xff]
      %65 = vst [vmem:[%s45 + $0x48] sm:$0xff] %v64
      %v66 = vld [vmem:[%s44 + $0x50] sm:$0xff]
      %67 = vst [vmem:[%s45 + $0x50] sm:$0xff] %v66
      %v68 = vld [vmem:[%s44 + $0x58] sm:$0xff]
      %69 = vst [vmem:[%s45 + $0x58] sm:$0xff] %v68
      %v70 = vld [vmem:[%s44 + $0x60] sm:$0xff]
      %71 = vst [vmem:[%s45 + $0x60] sm:$0xff] %v70
      %v72 = vld [vmem:[%s44 + $0x68] sm:$0xff]
      %73 = vst [vmem:[%s45 + $0x68] sm:$0xff] %v72
      %v74 = vld [vmem:[%s44 + $0x70] sm:$0xff]
      %75 = vst [vmem:[%s45 + $0x70] sm:$0xff] %v74
      %v76 = vld [vmem:[%s44 + $0x78] sm:$0xff]
      %77 = vst [vmem:[%s45 + $0x78] sm:$0xff] %v76
      %v78 = vld [vmem:[%s44 + $0x80] sm:$0xff]
      %79 = vst [vmem:[%s45 + $0x80] sm:$0xff] %v78
      %v80 = vld [vmem:[%s44 + $0x88] sm:$0xff]
      %81 = vst [vmem:[%s45 + $0x88] sm:$0xff] %v80
      %v82 = vld [vmem:[%s44 + $0x90] sm:$0xff]
      %83 = vst [vmem:[%s45 + $0x90] sm:$0xff] %v82
      %v84 = vld [vmem:[%s44 + $0x98] sm:$0xff]
      %85 = vst [vmem:[%s45 + $0x98] sm:$0xff] %v84
      %v86 = vld [vmem:[%s44 + $0xa0] sm:$0xff]
      %87 = vst [vmem:[%s45 + $0xa0] sm:$0xff] %v86
      %v88 = vld [vmem:[%s44 + $0xa8] sm:$0xff]
      %89 = vst [vmem:[%s45 + $0xa8] sm:$0xff] %v88
      %v90 = vld [vmem:[%s44 + $0xb0] sm:$0xff]
      %91 = vst [vmem:[%s45 + $0xb0] sm:$0xff] %v90
      %v92 = vld [vmem:[%s44 + $0xb8] sm:$0xff]
      %93 = vst [vmem:[%s45 + $0xb8] sm:$0xff] %v92
      %v94 = vld [vmem:[%s44 + $0xc0] sm:$0xff]
      %95 = vst [vmem:[%s45 + $0xc0] sm:$0xff] %v94
      %v96 = vld [vmem:[%s44 + $0xc8] sm:$0xff]
      %97 = vst [vmem:[%s45 + $0xc8] sm:$0xff] %v96
      %v98 = vld [vmem:[%s44 + $0xd0] sm:$0xff]
      %99 = vst [vmem:[%s45 + $0xd0] sm:$0xff] %v98
      %v100 = vld [vmem:[%s44 + $0xd8] sm:$0xff]
      %101 = vst [vmem:[%s45 + $0xd8] sm:$0xff] %v100
      %v102 = vld [vmem:[%s44 + $0xe0] sm:$0xff]
      %103 = vst [vmem:[%s45 + $0xe0] sm:$0xff] %v102
      %v104 = vld [vmem:[%s44 + $0xe8] sm:$0xff]
      %105 = vst [vmem:[%s45 + $0xe8] sm:$0xff] %v104
      %v106 = vld [vmem:[%s44 + $0xf0] sm:$0xff]
      %107 = vst [vmem:[%s45 + $0xf0] sm:$0xff] %v106
      %v108 = vld [vmem:[%s44 + $0xf8] sm:$0xff]
      %109 = vst [vmem:[%s45 + $0xf8] sm:$0xff] %v108
      %v110 = vld [vmem:[%s44 + $0x100] sm:$0xff]
      %111 = vst [vmem:[%s45 + $0x100] sm:$0xff] %v110
      %v112 = vld [vmem:[%s44 + $0x108] sm:$0xff]
      %113 = vst [vmem:[%s45 + $0x108] sm:$0xff] %v112
      %v114 = vld [vmem:[%s44 + $0x110] sm:$0xff]
      %115 = vst [vmem:[%s45 + $0x110] sm:$0xff] %v114
      %v116 = vld [vmem:[%s44 + $0x118] sm:$0xff]
      %117 = vst [vmem:[%s45 + $0x118] sm:$0xff] %v116
      %v118 = vld [vmem:[%s44 + $0x120] sm:$0xff]
      %119 = vst [vmem:[%s45 + $0x120] sm:$0xff] %v118
      %v120 = vld [vmem:[%s44 + $0x128] sm:$0xff]
      %121 = vst [vmem:[%s45 + $0x128] sm:$0xff] %v120
      %v122 = vld [vmem:[%s44 + $0x130] sm:$0xff]
      %123 = vst [vmem:[%s45 + $0x130] sm:$0xff] %v122
      %v124 = vld [vmem:[%s44 + $0x138] sm:$0xff]
      %125 = vst [vmem:[%s45 + $0x138] sm:$0xff] %v124
      %v126 = vld [vmem:[%s44 + $0x140] sm:$0xff]
      %127 = vst [vmem:[%s45 + $0x140] sm:$0xff] %v126
      %v128 = vld [vmem:[%s44 + $0x148] sm:$0xff]
      %129 = vst [vmem:[%s45 + $0x148] sm:$0xff] %v128
      %v130 = vld [vmem:[%s44 + $0x150] sm:$0xff]
      %131 = vst [vmem:[%s45 + $0x150] sm:$0xff] %v130
      %v132 = vld [vmem:[%s44 + $0x158] sm:$0xff]
      %133 = vst [vmem:[%s45 + $0x158] sm:$0xff] %v132
      %v134 = vld [vmem:[%s44 + $0x160] sm:$0xff]
      %135 = vst [vmem:[%s45 + $0x160] sm:$0xff] %v134
      %v136 = vld [vmem:[%s44 + $0x168] sm:$0xff]
      %137 = vst [vmem:[%s45 + $0x168] sm:$0xff] %v136
      %v138 = vld [vmem:[%s44 + $0x170] sm:$0xff]
      %139 = vst [vmem:[%s45 + $0x170] sm:$0xff] %v138
      %v140 = vld [vmem:[%s44 + $0x178] sm:$0xff]
      %141 = vst [vmem:[%s45 + $0x178] sm:$0xff] %v140
      %v142 = vld [vmem:[%s44 + $0x180] sm:$0xff]
      %143 = vst [vmem:[%s45 + $0x180] sm:$0xff] %v142
      %v144 = vld [vmem:[%s44 + $0x188] sm:$0xff]
      %145 = vst [vmem:[%s45 + $0x188] sm:$0xff] %v144
      %v146 = vld [vmem:[%s44 + $0x190] sm:$0xff]
      %147 = vst [vmem:[%s45 + $0x190] sm:$0xff] %v146
      %v148 = vld [vmem:[%s44 + $0x198] sm:$0xff]
      %149 = vst [vmem:[%s45 + $0x198] sm:$0xff] %v148
      %v150 = vld [vmem:[%s44 + $0x1a0] sm:$0xff]
      %151 = vst [vmem:[%s45 + $0x1a0] sm:$0xff] %v150
      %v152 = vld [vmem:[%s44 + $0x1a8] sm:$0xff]
      %153 = vst [vmem:[%s45 + $0x1a8] sm:$0xff] %v152
      %v154 = vld [vmem:[%s44 + $0x1b0] sm:$0xff]
      %155 = vst [vmem:[%s45 + $0x1b0] sm:$0xff] %v154
      %v156 = vld [vmem:[%s44 + $0x1b8] sm:$0xff]
      %157 = vst [vmem:[%s45 + $0x1b8] sm:$0xff] %v156
      %v158 = vld [vmem:[%s44 + $0x1c0] sm:$0xff]
      %159 = vst [vmem:[%s45 + $0x1c0] sm:$0xff] %v158
      %v160 = vld [vmem:[%s44 + $0x1c8] sm:$0xff]
      %161 = vst [vmem:[%s45 + $0x1c8] sm:$0xff] %v160
      %v162 = vld [vmem:[%s44 + $0x1d0] sm:$0xff]
      %163 = vst [vmem:[%s45 + $0x1d0] sm:$0xff] %v162
      %v164 = vld [vmem:[%s44 + $0x1d8] sm:$0xff]
      %165 = vst [vmem:[%s45 + $0x1d8] sm:$0xff] %v164
      %v166 = vld [vmem:[%s44 + $0x1e0] sm:$0xff]
      %167 = vst [vmem:[%s45 + $0x1e0] sm:$0xff] %v166
      %v168 = vld [vmem:[%s44 + $0x1e8] sm:$0xff]
      %169 = vst [vmem:[%s45 + $0x1e8] sm:$0xff] %v168
      %v170 = vld [vmem:[%s44 + $0x1f0] sm:$0xff]
      %171 = vst [vmem:[%s45 + $0x1f0] sm:$0xff] %v170
      %v172 = vld [vmem:[%s44 + $0x1f8] sm:$0xff]
      %173 = vst [vmem:[%s45 + $0x1f8] sm:$0xff] %v172
      %v174 = vld [vmem:[%s44 + $0x200] sm:$0xff]
      %175 = vst [vmem:[%s45 + $0x200] sm:$0xff] %v174
      %v176 = vld [vmem:[%s44 + $0x208] sm:$0xff]
      %177 = vst [vmem:[%s45 + $0x208] sm:$0xff] %v176
      %v178 = vld [vmem:[%s44 + $0x210] sm:$0xff]
      %179 = vst [vmem:[%s45 + $0x210] sm:$0xff] %v178
      %v180 = vld [vmem:[%s44 + $0x218] sm:$0xff]
      %181 = vst [vmem:[%s45 + $0x218] sm:$0xff] %v180
      %v182 = vld [vmem:[%s44 + $0x220] sm:$0xff]
      %183 = vst [vmem:[%s45 + $0x220] sm:$0xff] %v182
      %v184 = vld [vmem:[%s44 + $0x228] sm:$0xff]
      %185 = vst [vmem:[%s45 + $0x228] sm:$0xff] %v184
      %v186 = vld [vmem:[%s44 + $0x230] sm:$0xff]
      %187 = vst [vmem:[%s45 + $0x230] sm:$0xff] %v186
      %v188 = vld [vmem:[%s44 + $0x238] sm:$0xff]
      %189 = vst [vmem:[%s45 + $0x238] sm:$0xff] %v188
      %v190 = vld [vmem:[%s44 + $0x240] sm:$0xff]
      %191 = vst [vmem:[%s45 + $0x240] sm:$0xff] %v190
      %v192 = vld [vmem:[%s44 + $0x248] sm:$0xff]
      %193 = vst [vmem:[%s45 + $0x248] sm:$0xff] %v192
      %v194 = vld [vmem:[%s44 + $0x250] sm:$0xff]
      %195 = vst [vmem:[%s45 + $0x250] sm:$0xff] %v194
      %v196 = vld [vmem:[%s44 + $0x258] sm:$0xff]
      %197 = vst [vmem:[%s45 + $0x258] sm:$0xff] %v196
      %v198 = vld [vmem:[%s44 + $0x260] sm:$0xff]
      %199 = vst [vmem:[%s45 + $0x260] sm:$0xff] %v198
      %v200 = vld [vmem:[%s44 + $0x268] sm:$0xff]
      %201 = vst [vmem:[%s45 + $0x268] sm:$0xff] %v200
      %v202 = vld [vmem:[%s44 + $0x270] sm:$0xff]
      %203 = vst [vmem:[%s45 + $0x270] sm:$0xff] %v202
      %v204 = vld [vmem:[%s44 + $0x278] sm:$0xff]
      %205 = vst [vmem:[%s45 + $0x278] sm:$0xff] %v204
      %v206 = vld [vmem:[%s44 + $0x280] sm:$0xff]
      %207 = vst [vmem:[%s45 + $0x280] sm:$0xff] %v206
      %v208 = vld [vmem:[%s44 + $0x288] sm:$0xff]
      %209 = vst [vmem:[%s45 + $0x288] sm:$0xff] %v208
      %v210 = vld [vmem:[%s44 + $0x290] sm:$0xff]
      %211 = vst [vmem:[%s45 + $0x290] sm:$0xff] %v210
      %v212 = vld [vmem:[%s44 + $0x298] sm:$0xff]
      %213 = vst [vmem:[%s45 + $0x298] sm:$0xff] %v212
      %v214 = vld [vmem:[%s44 + $0x2a0] sm:$0xff]
      %215 = vst [vmem:[%s45 + $0x2a0] sm:$0xff] %v214
      %v216 = vld [vmem:[%s44 + $0x2a8] sm:$0xff]
      %217 = vst [vmem:[%s45 + $0x2a8] sm:$0xff] %v216
      %v218 = vld [vmem:[%s44 + $0x2b0] sm:$0xff]
      %219 = vst [vmem:[%s45 + $0x2b0] sm:$0xff] %v218
      %v220 = vld [vmem:[%s44 + $0x2b8] sm:$0xff]
      %221 = vst [vmem:[%s45 + $0x2b8] sm:$0xff] %v220
      %v222 = vld [vmem:[%s44 + $0x2c0] sm:$0xff]
      %223 = vst [vmem:[%s45 + $0x2c0] sm:$0xff] %v222
      %v224 = vld [vmem:[%s44 + $0x2c8] sm:$0xff]
      %225 = vst [vmem:[%s45 + $0x2c8] sm:$0xff] %v224
      %v226 = vld [vmem:[%s44 + $0x2d0] sm:$0xff]
      %227 = vst [vmem:[%s45 + $0x2d0] sm:$0xff] %v226
      %v228 = vld [vmem:[%s44 + $0x2d8] sm:$0xff]
      %229 = vst [vmem:[%s45 + $0x2d8] sm:$0xff] %v228
      %v230 = vld [vmem:[%s44 + $0x2e0] sm:$0xff]
      %231 = vst [vmem:[%s45 + $0x2e0] sm:$0xff] %v230
      %v232 = vld [vmem:[%s44 + $0x2e8] sm:$0xff]
      %233 = vst [vmem:[%s45 + $0x2e8] sm:$0xff] %v232
      %v234 = vld [vmem:[%s44 + $0x2f0] sm:$0xff]
      %235 = vst [vmem:[%s45 + $0x2f0] sm:$0xff] %v234
      %v236 = vld [vmem:[%s44 + $0x2f8] sm:$0xff]
      %237 = vst [vmem:[%s45 + $0x2f8] sm:$0xff] %v236
      %v238 = vld [vmem:[%s44 + $0x300] sm:$0xff]
      %239 = vst [vmem:[%s45 + $0x300] sm:$0xff] %v238
      %v240 = vld [vmem:[%s44 + $0x308] sm:$0xff]
      %241 = vst [vmem:[%s45 + $0x308] sm:$0xff] %v240
      %v242 = vld [vmem:[%s44 + $0x310] sm:$0xff]
      %243 = vst [vmem:[%s45 + $0x310] sm:$0xff] %v242
      %v244 = vld [vmem:[%s44 + $0x318] sm:$0xff]
      %245 = vst [vmem:[%s45 + $0x318] sm:$0xff] %v244
      %v246 = vld [vmem:[%s44 + $0x320] sm:$0xff]
      %247 = vst [vmem:[%s45 + $0x320] sm:$0xff] %v246
      %v248 = vld [vmem:[%s44 + $0x328] sm:$0xff]
      %249 = vst [vmem:[%s45 + $0x328] sm:$0xff] %v248
      %v250 = vld [vmem:[%s44 + $0x330] sm:$0xff]
      %251 = vst [vmem:[%s45 + $0x330] sm:$0xff] %v250
      %v252 = vld [vmem:[%s44 + $0x338] sm:$0xff]
      %253 = vst [vmem:[%s45 + $0x338] sm:$0xff] %v252
      %v254 = vld [vmem:[%s44 + $0x340] sm:$0xff]
      %255 = vst [vmem:[%s45 + $0x340] sm:$0xff] %v254
      %v256 = vld [vmem:[%s44 + $0x348] sm:$0xff]
      %257 = vst [vmem:[%s45 + $0x348] sm:$0xff] %v256
      %v258 = vld [vmem:[%s44 + $0x350] sm:$0xff]
      %259 = vst [vmem:[%s45 + $0x350] sm:$0xff] %v258
      %v260 = vld [vmem:[%s44 + $0x358] sm:$0xff]
      %261 = vst [vmem:[%s45 + $0x358] sm:$0xff] %v260
      %v262 = vld [vmem:[%s44 + $0x360] sm:$0xff]
      %263 = vst [vmem:[%s45 + $0x360] sm:$0xff] %v262
      %v264 = vld [vmem:[%s44 + $0x368] sm:$0xff]
      %265 = vst [vmem:[%s45 + $0x368] sm:$0xff] %v264
      %v266 = vld [vmem:[%s44 + $0x370] sm:$0xff]
      %267 = vst [vmem:[%s45 + $0x370] sm:$0xff] %v266
      %v268 = vld [vmem:[%s44 + $0x378] sm:$0xff]
      %269 = vst [vmem:[%s45 + $0x378] sm:$0xff] %v268
      %v270 = vld [vmem:[%s44 + $0x380] sm:$0xff]
      %271 = vst [vmem:[%s45 + $0x380] sm:$0xff] %v270
      %v272 = vld [vmem:[%s44 + $0x388] sm:$0xff]
      %273 = vst [vmem:[%s45 + $0x388] sm:$0xff] %v272
      %v274 = vld [vmem:[%s44 + $0x390] sm:$0xff]
      %275 = vst [vmem:[%s45 + $0x390] sm:$0xff] %v274
      %v276 = vld [vmem:[%s44 + $0x398] sm:$0xff]
      %277 = vst [vmem:[%s45 + $0x398] sm:$0xff] %v276
      %v278 = vld [vmem:[%s44 + $0x3a0] sm:$0xff]
      %279 = vst [vmem:[%s45 + $0x3a0] sm:$0xff] %v278
      %v280 = vld [vmem:[%s44 + $0x3a8] sm:$0xff]
      %281 = vst [vmem:[%s45 + $0x3a8] sm:$0xff] %v280
      %v282 = vld [vmem:[%s44 + $0x3b0] sm:$0xff]
      %283 = vst [vmem:[%s45 + $0x3b0] sm:$0xff] %v282
      %v284 = vld [vmem:[%s44 + $0x3b8] sm:$0xff]
      %285 = vst [vmem:[%s45 + $0x3b8] sm:$0xff] %v284
      %v286 = vld [vmem:[%s44 + $0x3c0] sm:$0xff]
      %287 = vst [vmem:[%s45 + $0x3c0] sm:$0xff] %v286
      %v288 = vld [vmem:[%s44 + $0x3c8] sm:$0xff]
      %289 = vst [vmem:[%s45 + $0x3c8] sm:$0xff] %v288
      %v290 = vld [vmem:[%s44 + $0x3d0] sm:$0xff]
      %291 = vst [vmem:[%s45 + $0x3d0] sm:$0xff] %v290
      %v292 = vld [vmem:[%s44 + $0x3d8] sm:$0xff]
      %293 = vst [vmem:[%s45 + $0x3d8] sm:$0xff] %v292
      %v294 = vld [vmem:[%s44 + $0x3e0] sm:$0xff]
      %295 = vst [vmem:[%s45 + $0x3e0] sm:$0xff] %v294
      %v296 = vld [vmem:[%s44 + $0x3e8] sm:$0xff]
      %297 = vst [vmem:[%s45 + $0x3e8] sm:$0xff] %v296
      %v298 = vld [vmem:[%s44 + $0x3f0] sm:$0xff]
      %299 = vst [vmem:[%s45 + $0x3f0] sm:$0xff] %v298
      %v300 = vld [vmem:[%s44 + $0x3f8] sm:$0xff]
      %301 = vst [vmem:[%s45 + $0x3f8] sm:$0xff] %v300
      %v302 = vld [vmem:[%s44 + $0x400] sm:$0xff]
      %303 = vst [vmem:[%s45 + $0x400] sm:$0xff] %v302
      %v304 = vld [vmem:[%s44 + $0x408] sm:$0xff]
      %305 = vst [vmem:[%s45 + $0x408] sm:$0xff] %v304
      %v306 = vld [vmem:[%s44 + $0x410] sm:$0xff]
      %307 = vst [vmem:[%s45 + $0x410] sm:$0xff] %v306
      %v308 = vld [vmem:[%s44 + $0x418] sm:$0xff]
      %309 = vst [vmem:[%s45 + $0x418] sm:$0xff] %v308
      %v310 = vld [vmem:[%s44 + $0x420] sm:$0xff]
      %311 = vst [vmem:[%s45 + $0x420] sm:$0xff] %v310
      %v312 = vld [vmem:[%s44 + $0x428] sm:$0xff]
      %313 = vst [vmem:[%s45 + $0x428] sm:$0xff] %v312
      %v314 = vld [vmem:[%s44 + $0x430] sm:$0xff]
      %315 = vst [vmem:[%s45 + $0x430] sm:$0xff] %v314
      %v316 = vld [vmem:[%s44 + $0x438] sm:$0xff]
      %317 = vst [vmem:[%s45 + $0x438] sm:$0xff] %v316
      %v318 = vld [vmem:[%s44 + $0x440] sm:$0xff]
      %319 = vst [vmem:[%s45 + $0x440] sm:$0xff] %v318
      %v320 = vld [vmem:[%s44 + $0x448] sm:$0xff]
      %321 = vst [vmem:[%s45 + $0x448] sm:$0xff] %v320
      %v322 = vld [vmem:[%s44 + $0x450] sm:$0xff]
      %323 = vst [vmem:[%s45 + $0x450] sm:$0xff] %v322
      %v324 = vld [vmem:[%s44 + $0x458] sm:$0xff]
      %325 = vst [vmem:[%s45 + $0x458] sm:$0xff] %v324
      %v326 = vld [vmem:[%s44 + $0x460] sm:$0xff]
      %327 = vst [vmem:[%s45 + $0x460] sm:$0xff] %v326
      %v328 = vld [vmem:[%s44 + $0x468] sm:$0xff]
      %329 = vst [vmem:[%s45 + $0x468] sm:$0xff] %v328
      %v330 = vld [vmem:[%s44 + $0x470] sm:$0xff]
      %331 = vst [vmem:[%s45 + $0x470] sm:$0xff] %v330
      %v332 = vld [vmem:[%s44 + $0x478] sm:$0xff]
      %333 = vst [vmem:[%s45 + $0x478] sm:$0xff] %v332
      %v334 = vld [vmem:[%s44 + $0x480] sm:$0xff]
      %335 = vst [vmem:[%s45 + $0x480] sm:$0xff] %v334
      %v336 = vld [vmem:[%s44 + $0x488] sm:$0xff]
      %337 = vst [vmem:[%s45 + $0x488] sm:$0xff] %v336
      %v338 = vld [vmem:[%s44 + $0x490] sm:$0xff]
      %339 = vst [vmem:[%s45 + $0x490] sm:$0xff] %v338
      %v340 = vld [vmem:[%s44 + $0x498] sm:$0xff]
      %341 = vst [vmem:[%s45 + $0x498] sm:$0xff] %v340
      %v342 = vld [vmem:[%s44 + $0x4a0] sm:$0xff]
      %343 = vst [vmem:[%s45 + $0x4a0] sm:$0xff] %v342
      %v344 = vld [vmem:[%s44 + $0x4a8] sm:$0xff]
      %345 = vst [vmem:[%s45 + $0x4a8] sm:$0xff] %v344
      %v346 = vld [vmem:[%s44 + $0x4b0] sm:$0xff]
      %347 = vst [vmem:[%s45 + $0x4b0] sm:$0xff] %v346
      %v348 = vld [vmem:[%s44 + $0x4b8] sm:$0xff]
      %349 = vst [vmem:[%s45 + $0x4b8] sm:$0xff] %v348
      %v350 = vld [vmem:[%s44 + $0x4c0] sm:$0xff]
      %351 = vst [vmem:[%s45 + $0x4c0] sm:$0xff] %v350
      %v352 = vld [vmem:[%s44 + $0x4c8] sm:$0xff]
      %353 = vst [vmem:[%s45 + $0x4c8] sm:$0xff] %v352
      %v354 = vld [vmem:[%s44 + $0x4d0] sm:$0xff]
      %355 = vst [vmem:[%s45 + $0x4d0] sm:$0xff] %v354
      %v356 = vld [vmem:[%s44 + $0x4d8] sm:$0xff]
      %357 = vst [vmem:[%s45 + $0x4d8] sm:$0xff] %v356
      %v358 = vld [vmem:[%s44 + $0x4e0] sm:$0xff]
      %359 = vst [vmem:[%s45 + $0x4e0] sm:$0xff] %v358
      %v360 = vld [vmem:[%s44 + $0x4e8] sm:$0xff]
      %361 = vst [vmem:[%s45 + $0x4e8] sm:$0xff] %v360
      %v362 = vld [vmem:[%s44 + $0x4f0] sm:$0xff]
      %363 = vst [vmem:[%s45 + $0x4f0] sm:$0xff] %v362
      %v364 = vld [vmem:[%s44 + $0x4f8] sm:$0xff]
      %365 = vst [vmem:[%s45 + $0x4f8] sm:$0xff] %v364
      %v366 = vld [vmem:[%s44 + $0x500] sm:$0xff]
      %367 = vst [vmem:[%s45 + $0x500] sm:$0xff] %v366
      %v368 = vld [vmem:[%s44 + $0x508] sm:$0xff]
      %369 = vst [vmem:[%s45 + $0x508] sm:$0xff] %v368
      %v370 = vld [vmem:[%s44 + $0x510] sm:$0xff]
      %371 = vst [vmem:[%s45 + $0x510] sm:$0xff] %v370
      %v372 = vld [vmem:[%s44 + $0x518] sm:$0xff]
      %373 = vst [vmem:[%s45 + $0x518] sm:$0xff] %v372
      %v374 = vld [vmem:[%s44 + $0x520] sm:$0xff]
      %375 = vst [vmem:[%s45 + $0x520] sm:$0xff] %v374
      %v376 = vld [vmem:[%s44 + $0x528] sm:$0xff]
      %377 = vst [vmem:[%s45 + $0x528] sm:$0xff] %v376
      %v378 = vld [vmem:[%s44 + $0x530] sm:$0xff]
      %379 = vst [vmem:[%s45 + $0x530] sm:$0xff] %v378
      %v380 = vld [vmem:[%s44 + $0x538] sm:$0xff]
      %381 = vst [vmem:[%s45 + $0x538] sm:$0xff] %v380
      %v382 = vld [vmem:[%s44 + $0x540] sm:$0xff]
      %383 = vst [vmem:[%s45 + $0x540] sm:$0xff] %v382
      %v384 = vld [vmem:[%s44 + $0x548] sm:$0xff]
      %385 = vst [vmem:[%s45 + $0x548] sm:$0xff] %v384
      %v386 = vld [vmem:[%s44 + $0x550] sm:$0xff]
      %387 = vst [vmem:[%s45 + $0x550] sm:$0xff] %v386
      %v388 = vld [vmem:[%s44 + $0x558] sm:$0xff]
      %389 = vst [vmem:[%s45 + $0x558] sm:$0xff] %v388
      %v390 = vld [vmem:[%s44 + $0x560] sm:$0xff]
      %391 = vst [vmem:[%s45 + $0x560] sm:$0xff] %v390
      %v392 = vld [vmem:[%s44 + $0x568] sm:$0xff]
      %393 = vst [vmem:[%s45 + $0x568] sm:$0xff] %v392
      %v394 = vld [vmem:[%s44 + $0x570] sm:$0xff]
      %395 = vst [vmem:[%s45 + $0x570] sm:$0xff] %v394
      %v396 = vld [vmem:[%s44 + $0x578] sm:$0xff]
      %397 = vst [vmem:[%s45 + $0x578] sm:$0xff] %v396
      %v398 = vld [vmem:[%s44 + $0x580] sm:$0xff]
      %399 = vst [vmem:[%s45 + $0x580] sm:$0xff] %v398
      %v400 = vld [vmem:[%s44 + $0x588] sm:$0xff]
      %401 = vst [vmem:[%s45 + $0x588] sm:$0xff] %v400
      %v402 = vld [vmem:[%s44 + $0x590] sm:$0xff]
      %403 = vst [vmem:[%s45 + $0x590] sm:$0xff] %v402
      %v404 = vld [vmem:[%s44 + $0x598] sm:$0xff]
      %405 = vst [vmem:[%s45 + $0x598] sm:$0xff] %v404
      %v406 = vld [vmem:[%s44 + $0x5a0] sm:$0xff]
      %407 = vst [vmem:[%s45 + $0x5a0] sm:$0xff] %v406
      %v408 = vld [vmem:[%s44 + $0x5a8] sm:$0xff]
      %409 = vst [vmem:[%s45 + $0x5a8] sm:$0xff] %v408
      %v410 = vld [vmem:[%s44 + $0x5b0] sm:$0xff]
      %411 = vst [vmem:[%s45 + $0x5b0] sm:$0xff] %v410
      %v412 = vld [vmem:[%s44 + $0x5b8] sm:$0xff]
      %413 = vst [vmem:[%s45 + $0x5b8] sm:$0xff] %v412
      %v414 = vld [vmem:[%s44 + $0x5c0] sm:$0xff]
      %415 = vst [vmem:[%s45 + $0x5c0] sm:$0xff] %v414
      %v416 = vld [vmem:[%s44 + $0x5c8] sm:$0xff]
      %417 = vst [vmem:[%s45 + $0x5c8] sm:$0xff] %v416
      %v418 = vld [vmem:[%s44 + $0x5d0] sm:$0xff]
      %419 = vst [vmem:[%s45 + $0x5d0] sm:$0xff] %v418
      %v420 = vld [vmem:[%s44 + $0x5d8] sm:$0xff]
      %421 = vst [vmem:[%s45 + $0x5d8] sm:$0xff] %v420
      %v422 = vld [vmem:[%s44 + $0x5e0] sm:$0xff]
      %423 = vst [vmem:[%s45 + $0x5e0] sm:$0xff] %v422
      %v424 = vld [vmem:[%s44 + $0x5e8] sm:$0xff]
      %425 = vst [vmem:[%s45 + $0x5e8] sm:$0xff] %v424
      %v426 = vld [vmem:[%s44 + $0x5f0] sm:$0xff]
      %427 = vst [vmem:[%s45 + $0x5f0] sm:$0xff] %v426
      %v428 = vld [vmem:[%s44 + $0x5f8] sm:$0xff]
      %429 = vst [vmem:[%s45 + $0x5f8] sm:$0xff] %v428
      %v430 = vld [vmem:[%s44 + $0x600] sm:$0xff]
      %431 = vst [vmem:[%s45 + $0x600] sm:$0xff] %v430
      %v432 = vld [vmem:[%s44 + $0x608] sm:$0xff]
      %433 = vst [vmem:[%s45 + $0x608] sm:$0xff] %v432
      %v434 = vld [vmem:[%s44 + $0x610] sm:$0xff]
      %435 = vst [vmem:[%s45 + $0x610] sm:$0xff] %v434
      %v436 = vld [vmem:[%s44 + $0x618] sm:$0xff]
      %437 = vst [vmem:[%s45 + $0x618] sm:$0xff] %v436
      %v438 = vld [vmem:[%s44 + $0x620] sm:$0xff]
      %439 = vst [vmem:[%s45 + $0x620] sm:$0xff] %v438
      %v440 = vld [vmem:[%s44 + $0x628] sm:$0xff]
      %441 = vst [vmem:[%s45 + $0x628] sm:$0xff] %v440
      %v442 = vld [vmem:[%s44 + $0x630] sm:$0xff]
      %443 = vst [vmem:[%s45 + $0x630] sm:$0xff] %v442
      %v444 = vld [vmem:[%s44 + $0x638] sm:$0xff]
      %445 = vst [vmem:[%s45 + $0x638] sm:$0xff] %v444
      %v446 = vld [vmem:[%s44 + $0x640] sm:$0xff]
      %447 = vst [vmem:[%s45 + $0x640] sm:$0xff] %v446
      %v448 = vld [vmem:[%s44 + $0x648] sm:$0xff]
      %449 = vst [vmem:[%s45 + $0x648] sm:$0xff] %v448
      %v450 = vld [vmem:[%s44 + $0x650] sm:$0xff]
      %451 = vst [vmem:[%s45 + $0x650] sm:$0xff] %v450
      %v452 = vld [vmem:[%s44 + $0x658] sm:$0xff]
      %453 = vst [vmem:[%s45 + $0x658] sm:$0xff] %v452
      %v454 = vld [vmem:[%s44 + $0x660] sm:$0xff]
      %455 = vst [vmem:[%s45 + $0x660] sm:$0xff] %v454
      %v456 = vld [vmem:[%s44 + $0x668] sm:$0xff]
      %457 = vst [vmem:[%s45 + $0x668] sm:$0xff] %v456
      %v458 = vld [vmem:[%s44 + $0x670] sm:$0xff]
      %459 = vst [vmem:[%s45 + $0x670] sm:$0xff] %v458
      %v460 = vld [vmem:[%s44 + $0x678] sm:$0xff]
      %461 = vst [vmem:[%s45 + $0x678] sm:$0xff] %v460
      %v462 = vld [vmem:[%s44 + $0x680] sm:$0xff]
      %463 = vst [vmem:[%s45 + $0x680] sm:$0xff] %v462
      %v464 = vld [vmem:[%s44 + $0x688] sm:$0xff]
      %465 = vst [vmem:[%s45 + $0x688] sm:$0xff] %v464
      %v466 = vld [vmem:[%s44 + $0x690] sm:$0xff]
      %467 = vst [vmem:[%s45 + $0x690] sm:$0xff] %v466
      %v468 = vld [vmem:[%s44 + $0x698] sm:$0xff]
      %469 = vst [vmem:[%s45 + $0x698] sm:$0xff] %v468
      %v470 = vld [vmem:[%s44 + $0x6a0] sm:$0xff]
      %471 = vst [vmem:[%s45 + $0x6a0] sm:$0xff] %v470
      %v472 = vld [vmem:[%s44 + $0x6a8] sm:$0xff]
      %473 = vst [vmem:[%s45 + $0x6a8] sm:$0xff] %v472
      %v474 = vld [vmem:[%s44 + $0x6b0] sm:$0xff]
      %475 = vst [vmem:[%s45 + $0x6b0] sm:$0xff] %v474
      %v476 = vld [vmem:[%s44 + $0x6b8] sm:$0xff]
      %477 = vst [vmem:[%s45 + $0x6b8] sm:$0xff] %v476
      %v478 = vld [vmem:[%s44 + $0x6c0] sm:$0xff]
      %479 = vst [vmem:[%s45 + $0x6c0] sm:$0xff] %v478
      %v480 = vld [vmem:[%s44 + $0x6c8] sm:$0xff]
      %481 = vst [vmem:[%s45 + $0x6c8] sm:$0xff] %v480
      %v482 = vld [vmem:[%s44 + $0x6d0] sm:$0xff]
      %483 = vst [vmem:[%s45 + $0x6d0] sm:$0xff] %v482
      %v484 = vld [vmem:[%s44 + $0x6d8] sm:$0xff]
      %485 = vst [vmem:[%s45 + $0x6d8] sm:$0xff] %v484
      %v486 = vld [vmem:[%s44 + $0x6e0] sm:$0xff]
      %487 = vst [vmem:[%s45 + $0x6e0] sm:$0xff] %v486
      %v488 = vld [vmem:[%s44 + $0x6e8] sm:$0xff]
      %489 = vst [vmem:[%s45 + $0x6e8] sm:$0xff] %v488
      %v490 = vld [vmem:[%s44 + $0x6f0] sm:$0xff]
      %491 = vst [vmem:[%s45 + $0x6f0] sm:$0xff] %v490
      %v492 = vld [vmem:[%s44 + $0x6f8] sm:$0xff]
      %493 = vst [vmem:[%s45 + $0x6f8] sm:$0xff] %v492
      %v494 = vld [vmem:[%s44 + $0x700] sm:$0xff]
      %495 = vst [vmem:[%s45 + $0x700] sm:$0xff] %v494
      %v496 = vld [vmem:[%s44 + $0x708] sm:$0xff]
      %497 = vst [vmem:[%s45 + $0x708] sm:$0xff] %v496
      %v498 = vld [vmem:[%s44 + $0x710] sm:$0xff]
      %499 = vst [vmem:[%s45 + $0x710] sm:$0xff] %v498
      %v500 = vld [vmem:[%s44 + $0x718] sm:$0xff]
      %501 = vst [vmem:[%s45 + $0x718] sm:$0xff] %v500
      %v502 = vld [vmem:[%s44 + $0x720] sm:$0xff]
      %503 = vst [vmem:[%s45 + $0x720] sm:$0xff] %v502
      %v504 = vld [vmem:[%s44 + $0x728] sm:$0xff]
      %505 = vst [vmem:[%s45 + $0x728] sm:$0xff] %v504
      %v506 = vld [vmem:[%s44 + $0x730] sm:$0xff]
      %507 = vst [vmem:[%s45 + $0x730] sm:$0xff] %v506
      %v508 = vld [vmem:[%s44 + $0x738] sm:$0xff]
      %509 = vst [vmem:[%s45 + $0x738] sm:$0xff] %v508
      %v510 = vld [vmem:[%s44 + $0x740] sm:$0xff]
      %511 = vst [vmem:[%s45 + $0x740] sm:$0xff] %v510
      %v512 = vld [vmem:[%s44 + $0x748] sm:$0xff]
      %513 = vst [vmem:[%s45 + $0x748] sm:$0xff] %v512
      %v514 = vld [vmem:[%s44 + $0x750] sm:$0xff]
      %515 = vst [vmem:[%s45 + $0x750] sm:$0xff] %v514
      %v516 = vld [vmem:[%s44 + $0x758] sm:$0xff]
      %517 = vst [vmem:[%s45 + $0x758] sm:$0xff] %v516
      %v518 = vld [vmem:[%s44 + $0x760] sm:$0xff]
      %519 = vst [vmem:[%s45 + $0x760] sm:$0xff] %v518
      %v520 = vld [vmem:[%s44 + $0x768] sm:$0xff]
      %521 = vst [vmem:[%s45 + $0x768] sm:$0xff] %v520
      %v522 = vld [vmem:[%s44 + $0x770] sm:$0xff]
      %523 = vst [vmem:[%s45 + $0x770] sm:$0xff] %v522
      %v524 = vld [vmem:[%s44 + $0x778] sm:$0xff]
      %525 = vst [vmem:[%s45 + $0x778] sm:$0xff] %v524
      %v526 = vld [vmem:[%s44 + $0x780] sm:$0xff]
      %527 = vst [vmem:[%s45 + $0x780] sm:$0xff] %v526
      %v528 = vld [vmem:[%s44 + $0x788] sm:$0xff]
      %529 = vst [vmem:[%s45 + $0x788] sm:$0xff] %v528
      %v530 = vld [vmem:[%s44 + $0x790] sm:$0xff]
      %531 = vst [vmem:[%s45 + $0x790] sm:$0xff] %v530
      %v532 = vld [vmem:[%s44 + $0x798] sm:$0xff]
      %533 = vst [vmem:[%s45 + $0x798] sm:$0xff] %v532
      %v534 = vld [vmem:[%s44 + $0x7a0] sm:$0xff]
      %535 = vst [vmem:[%s45 + $0x7a0] sm:$0xff] %v534
      %v536 = vld [vmem:[%s44 + $0x7a8] sm:$0xff]
      %537 = vst [vmem:[%s45 + $0x7a8] sm:$0xff] %v536
      %v538 = vld [vmem:[%s44 + $0x7b0] sm:$0xff]
      %539 = vst [vmem:[%s45 + $0x7b0] sm:$0xff] %v538
      %v540 = vld [vmem:[%s44 + $0x7b8] sm:$0xff]
      %541 = vst [vmem:[%s45 + $0x7b8] sm:$0xff] %v540
      %v542 = vld [vmem:[%s44 + $0x7c0] sm:$0xff]
      %543 = vst [vmem:[%s45 + $0x7c0] sm:$0xff] %v542
      %v544 = vld [vmem:[%s44 + $0x7c8] sm:$0xff]
      %545 = vst [vmem:[%s45 + $0x7c8] sm:$0xff] %v544
      %v546 = vld [vmem:[%s44 + $0x7d0] sm:$0xff]
      %547 = vst [vmem:[%s45 + $0x7d0] sm:$0xff] %v546
      %v548 = vld [vmem:[%s44 + $0x7d8] sm:$0xff]
      %549 = vst [vmem:[%s45 + $0x7d8] sm:$0xff] %v548
      %v550 = vld [vmem:[%s44 + $0x7e0] sm:$0xff]
      %551 = vst [vmem:[%s45 + $0x7e0] sm:$0xff] %v550
      %v552 = vld [vmem:[%s44 + $0x7e8] sm:$0xff]
      %553 = vst [vmem:[%s45 + $0x7e8] sm:$0xff] %v552
      %v554 = vld [vmem:[%s44 + $0x7f0] sm:$0xff]
      %555 = vst [vmem:[%s45 + $0x7f0] sm:$0xff] %v554
      %v556 = vld [vmem:[%s44 + $0x7f8] sm:$0xff]
      %557 = vst [vmem:[%s45 + $0x7f8] sm:$0xff] %v556
      %v558 = vld [vmem:[%s44 + $0x800] sm:$0xff]
      %559 = vst [vmem:[%s45 + $0x800] sm:$0xff] %v558
      %v560 = vld [vmem:[%s44 + $0x808] sm:$0xff]
      %561 = vst [vmem:[%s45 + $0x808] sm:$0xff] %v560
      %v562 = vld [vmem:[%s44 + $0x810] sm:$0xff]
      %563 = vst [vmem:[%s45 + $0x810] sm:$0xff] %v562
      %v564 = vld [vmem:[%s44 + $0x818] sm:$0xff]
      %565 = vst [vmem:[%s45 + $0x818] sm:$0xff] %v564
      %v566 = vld [vmem:[%s44 + $0x820] sm:$0xff]
      %567 = vst [vmem:[%s45 + $0x820] sm:$0xff] %v566
      %v568 = vld [vmem:[%s44 + $0x828] sm:$0xff]
      %569 = vst [vmem:[%s45 + $0x828] sm:$0xff] %v568
      %v570 = vld [vmem:[%s44 + $0x830] sm:$0xff]
      %571 = vst [vmem:[%s45 + $0x830] sm:$0xff] %v570
      %v572 = vld [vmem:[%s44 + $0x838] sm:$0xff]
      %573 = vst [vmem:[%s45 + $0x838] sm:$0xff] %v572
      %v574 = vld [vmem:[%s44 + $0x840] sm:$0xff]
      %575 = vst [vmem:[%s45 + $0x840] sm:$0xff] %v574
      %v576 = vld [vmem:[%s44 + $0x848] sm:$0xff]
      %577 = vst [vmem:[%s45 + $0x848] sm:$0xff] %v576
      %v578 = vld [vmem:[%s44 + $0x850] sm:$0xff]
      %579 = vst [vmem:[%s45 + $0x850] sm:$0xff] %v578
      %v580 = vld [vmem:[%s44 + $0x858] sm:$0xff]
      %581 = vst [vmem:[%s45 + $0x858] sm:$0xff] %v580
      %v582 = vld [vmem:[%s44 + $0x860] sm:$0xff]
      %583 = vst [vmem:[%s45 + $0x860] sm:$0xff] %v582
      %v584 = vld [vmem:[%s44 + $0x868] sm:$0xff]
      %585 = vst [vmem:[%s45 + $0x868] sm:$0xff] %v584
      %v586 = vld [vmem:[%s44 + $0x870] sm:$0xff]
      %587 = vst [vmem:[%s45 + $0x870] sm:$0xff] %v586
      %v588 = vld [vmem:[%s44 + $0x878] sm:$0xff]
      %589 = vst [vmem:[%s45 + $0x878] sm:$0xff] %v588
      %v590 = vld [vmem:[%s44 + $0x880] sm:$0xff]
      %591 = vst [vmem:[%s45 + $0x880] sm:$0xff] %v590
      %v592 = vld [vmem:[%s44 + $0x888] sm:$0xff]
      %593 = vst [vmem:[%s45 + $0x888] sm:$0xff] %v592
      %v594 = vld [vmem:[%s44 + $0x890] sm:$0xff]
      %595 = vst [vmem:[%s45 + $0x890] sm:$0xff] %v594
      %v596 = vld [vmem:[%s44 + $0x898] sm:$0xff]
      %597 = vst [vmem:[%s45 + $0x898] sm:$0xff] %v596
      %v598 = vld [vmem:[%s44 + $0x8a0] sm:$0xff]
      %599 = vst [vmem:[%s45 + $0x8a0] sm:$0xff] %v598
      %v600 = vld [vmem:[%s44 + $0x8a8] sm:$0xff]
      %601 = vst [vmem:[%s45 + $0x8a8] sm:$0xff] %v600
      %v602 = vld [vmem:[%s44 + $0x8b0] sm:$0xff]
      %603 = vst [vmem:[%s45 + $0x8b0] sm:$0xff] %v602
      %v604 = vld [vmem:[%s44 + $0x8b8] sm:$0xff]
      %605 = vst [vmem:[%s45 + $0x8b8] sm:$0xff] %v604
      %v606 = vld [vmem:[%s44 + $0x8c0] sm:$0xff]
      %607 = vst [vmem:[%s45 + $0x8c0] sm:$0xff] %v606
      %v608 = vld [vmem:[%s44 + $0x8c8] sm:$0xff]
      %609 = vst [vmem:[%s45 + $0x8c8] sm:$0xff] %v608
      %v610 = vld [vmem:[%s44 + $0x8d0] sm:$0xff]
      %611 = vst [vmem:[%s45 + $0x8d0] sm:$0xff] %v610
      %v612 = vld [vmem:[%s44 + $0x8d8] sm:$0xff]
      %613 = vst [vmem:[%s45 + $0x8d8] sm:$0xff] %v612
      %v614 = vld [vmem:[%s44 + $0x8e0] sm:$0xff]
      %615 = vst [vmem:[%s45 + $0x8e0] sm:$0xff] %v614
      %v616 = vld [vmem:[%s44 + $0x8e8] sm:$0xff]
      %617 = vst [vmem:[%s45 + $0x8e8] sm:$0xff] %v616
      %v618 = vld [vmem:[%s44 + $0x8f0] sm:$0xff]
      %619 = vst [vmem:[%s45 + $0x8f0] sm:$0xff] %v618
      %v620 = vld [vmem:[%s44 + $0x8f8] sm:$0xff]
      %621 = vst [vmem:[%s45 + $0x8f8] sm:$0xff] %v620
      %v622 = vld [vmem:[%s44 + $0x900] sm:$0xff]
      %623 = vst [vmem:[%s45 + $0x900] sm:$0xff] %v622
      %v624 = vld [vmem:[%s44 + $0x908] sm:$0xff]
      %625 = vst [vmem:[%s45 + $0x908] sm:$0xff] %v624
      %v626 = vld [vmem:[%s44 + $0x910] sm:$0xff]
      %627 = vst [vmem:[%s45 + $0x910] sm:$0xff] %v626
      %v628 = vld [vmem:[%s44 + $0x918] sm:$0xff]
      %629 = vst [vmem:[%s45 + $0x918] sm:$0xff] %v628
      %v630 = vld [vmem:[%s44 + $0x920] sm:$0xff]
      %631 = vst [vmem:[%s45 + $0x920] sm:$0xff] %v630
      %v632 = vld [vmem:[%s44 + $0x928] sm:$0xff]
      %633 = vst [vmem:[%s45 + $0x928] sm:$0xff] %v632
      %v634 = vld [vmem:[%s44 + $0x930] sm:$0xff]
      %635 = vst [vmem:[%s45 + $0x930] sm:$0xff] %v634
      %v636 = vld [vmem:[%s44 + $0x938] sm:$0xff]
      %637 = vst [vmem:[%s45 + $0x938] sm:$0xff] %v636
      %v638 = vld [vmem:[%s44 + $0x940] sm:$0xff]
      %639 = vst [vmem:[%s45 + $0x940] sm:$0xff] %v638
      %v640 = vld [vmem:[%s44 + $0x948] sm:$0xff]
      %641 = vst [vmem:[%s45 + $0x948] sm:$0xff] %v640
      %v642 = vld [vmem:[%s44 + $0x950] sm:$0xff]
      %643 = vst [vmem:[%s45 + $0x950] sm:$0xff] %v642
      %v644 = vld [vmem:[%s44 + $0x958] sm:$0xff]
      %645 = vst [vmem:[%s45 + $0x958] sm:$0xff] %v644
      %v646 = vld [vmem:[%s44 + $0x960] sm:$0xff]
      %647 = vst [vmem:[%s45 + $0x960] sm:$0xff] %v646
      %v648 = vld [vmem:[%s44 + $0x968] sm:$0xff]
      %649 = vst [vmem:[%s45 + $0x968] sm:$0xff] %v648
      %v650 = vld [vmem:[%s44 + $0x970] sm:$0xff]
      %651 = vst [vmem:[%s45 + $0x970] sm:$0xff] %v650
      %v652 = vld [vmem:[%s44 + $0x978] sm:$0xff]
      %653 = vst [vmem:[%s45 + $0x978] sm:$0xff] %v652
      %v654 = vld [vmem:[%s44 + $0x980] sm:$0xff]
      %655 = vst [vmem:[%s45 + $0x980] sm:$0xff] %v654
      %v656 = vld [vmem:[%s44 + $0x988] sm:$0xff]
      %657 = vst [vmem:[%s45 + $0x988] sm:$0xff] %v656
      %v658 = vld [vmem:[%s44 + $0x990] sm:$0xff]
      %659 = vst [vmem:[%s45 + $0x990] sm:$0xff] %v658
      %v660 = vld [vmem:[%s44 + $0x998] sm:$0xff]
      %661 = vst [vmem:[%s45 + $0x998] sm:$0xff] %v660
      %v662 = vld [vmem:[%s44 + $0x9a0] sm:$0xff]
      %663 = vst [vmem:[%s45 + $0x9a0] sm:$0xff] %v662
      %v664 = vld [vmem:[%s44 + $0x9a8] sm:$0xff]
      %665 = vst [vmem:[%s45 + $0x9a8] sm:$0xff] %v664
      %v666 = vld [vmem:[%s44 + $0x9b0] sm:$0xff]
      %667 = vst [vmem:[%s45 + $0x9b0] sm:$0xff] %v666
      %v668 = vld [vmem:[%s44 + $0x9b8] sm:$0xff]
      %669 = vst [vmem:[%s45 + $0x9b8] sm:$0xff] %v668
      %v670 = vld [vmem:[%s44 + $0x9c0] sm:$0xff]
      %671 = vst [vmem:[%s45 + $0x9c0] sm:$0xff] %v670
      %v672 = vld [vmem:[%s44 + $0x9c8] sm:$0xff]
      %673 = vst [vmem:[%s45 + $0x9c8] sm:$0xff] %v672
      %v674 = vld [vmem:[%s44 + $0x9d0] sm:$0xff]
      %675 = vst [vmem:[%s45 + $0x9d0] sm:$0xff] %v674
      %v676 = vld [vmem:[%s44 + $0x9d8] sm:$0xff]
      %677 = vst [vmem:[%s45 + $0x9d8] sm:$0xff] %v676
      %v678 = vld [vmem:[%s44 + $0x9e0] sm:$0xff]
      %679 = vst [vmem:[%s45 + $0x9e0] sm:$0xff] %v678
      %v680 = vld [vmem:[%s44 + $0x9e8] sm:$0xff]
      %681 = vst [vmem:[%s45 + $0x9e8] sm:$0xff] %v680
      %v682 = vld [vmem:[%s44 + $0x9f0] sm:$0xff]
      %683 = vst [vmem:[%s45 + $0x9f0] sm:$0xff] %v682
      %v684 = vld [vmem:[%s44 + $0x9f8] sm:$0xff]
      %685 = vst [vmem:[%s45 + $0x9f8] sm:$0xff] %v684
      %v686 = vld [vmem:[%s44 + $0xa00] sm:$0xff]
      %687 = vst [vmem:[%s45 + $0xa00] sm:$0xff] %v686
      %v688 = vld [vmem:[%s44 + $0xa08] sm:$0xff]
      %689 = vst [vmem:[%s45 + $0xa08] sm:$0xff] %v688
      %v690 = vld [vmem:[%s44 + $0xa10] sm:$0xff]
      %691 = vst [vmem:[%s45 + $0xa10] sm:$0xff] %v690
      %v692 = vld [vmem:[%s44 + $0xa18] sm:$0xff]
      %693 = vst [vmem:[%s45 + $0xa18] sm:$0xff] %v692
      %v694 = vld [vmem:[%s44 + $0xa20] sm:$0xff]
      %695 = vst [vmem:[%s45 + $0xa20] sm:$0xff] %v694
      %v696 = vld [vmem:[%s44 + $0xa28] sm:$0xff]
      %697 = vst [vmem:[%s45 + $0xa28] sm:$0xff] %v696
      %v698 = vld [vmem:[%s44 + $0xa30] sm:$0xff]
      %699 = vst [vmem:[%s45 + $0xa30] sm:$0xff] %v698
      %v700 = vld [vmem:[%s44 + $0xa38] sm:$0xff]
      %701 = vst [vmem:[%s45 + $0xa38] sm:$0xff] %v700
      %v702 = vld [vmem:[%s44 + $0xa40] sm:$0xff]
      %703 = vst [vmem:[%s45 + $0xa40] sm:$0xff] %v702
      %v704 = vld [vmem:[%s44 + $0xa48] sm:$0xff]
      %705 = vst [vmem:[%s45 + $0xa48] sm:$0xff] %v704
      %v706 = vld [vmem:[%s44 + $0xa50] sm:$0xff]
      %707 = vst [vmem:[%s45 + $0xa50] sm:$0xff] %v706
      %v708 = vld [vmem:[%s44 + $0xa58] sm:$0xff]
      %709 = vst [vmem:[%s45 + $0xa58] sm:$0xff] %v708
      %v710 = vld [vmem:[%s44 + $0xa60] sm:$0xff]
      %711 = vst [vmem:[%s45 + $0xa60] sm:$0xff] %v710
      %v712 = vld [vmem:[%s44 + $0xa68] sm:$0xff]
      %713 = vst [vmem:[%s45 + $0xa68] sm:$0xff] %v712
      %v714 = vld [vmem:[%s44 + $0xa70] sm:$0xff]
      %715 = vst [vmem:[%s45 + $0xa70] sm:$0xff] %v714
      %v716 = vld [vmem:[%s44 + $0xa78] sm:$0xff]
      %717 = vst [vmem:[%s45 + $0xa78] sm:$0xff] %v716
      %v718 = vld [vmem:[%s44 + $0xa80] sm:$0xff]
      %719 = vst [vmem:[%s45 + $0xa80] sm:$0xff] %v718
      %v720 = vld [vmem:[%s44 + $0xa88] sm:$0xff]
      %721 = vst [vmem:[%s45 + $0xa88] sm:$0xff] %v720
      %v722 = vld [vmem:[%s44 + $0xa90] sm:$0xff]
      %723 = vst [vmem:[%s45 + $0xa90] sm:$0xff] %v722
      %v724 = vld [vmem:[%s44 + $0xa98] sm:$0xff]
      %725 = vst [vmem:[%s45 + $0xa98] sm:$0xff] %v724
      %v726 = vld [vmem:[%s44 + $0xaa0] sm:$0xff]
      %727 = vst [vmem:[%s45 + $0xaa0] sm:$0xff] %v726
      %v728 = vld [vmem:[%s44 + $0xaa8] sm:$0xff]
      %729 = vst [vmem:[%s45 + $0xaa8] sm:$0xff] %v728
      %v730 = vld [vmem:[%s44 + $0xab0] sm:$0xff]
      %731 = vst [vmem:[%s45 + $0xab0] sm:$0xff] %v730
      %v732 = vld [vmem:[%s44 + $0xab8] sm:$0xff]
      %733 = vst [vmem:[%s45 + $0xab8] sm:$0xff] %v732
      %v734 = vld [vmem:[%s44 + $0xac0] sm:$0xff]
      %735 = vst [vmem:[%s45 + $0xac0] sm:$0xff] %v734
      %v736 = vld [vmem:[%s44 + $0xac8] sm:$0xff]
      %737 = vst [vmem:[%s45 + $0xac8] sm:$0xff] %v736
      %v738 = vld [vmem:[%s44 + $0xad0] sm:$0xff]
      %739 = vst [vmem:[%s45 + $0xad0] sm:$0xff] %v738
      %v740 = vld [vmem:[%s44 + $0xad8] sm:$0xff]
      %741 = vst [vmem:[%s45 + $0xad8] sm:$0xff] %v740
      %v742 = vld [vmem:[%s44 + $0xae0] sm:$0xff]
      %743 = vst [vmem:[%s45 + $0xae0] sm:$0xff] %v742
      %v744 = vld [vmem:[%s44 + $0xae8] sm:$0xff]
      %745 = vst [vmem:[%s45 + $0xae8] sm:$0xff] %v744
      %v746 = vld [vmem:[%s44 + $0xaf0] sm:$0xff]
      %747 = vst [vmem:[%s45 + $0xaf0] sm:$0xff] %v746
      %v748 = vld [vmem:[%s44 + $0xaf8] sm:$0xff]
      %749 = vst [vmem:[%s45 + $0xaf8] sm:$0xff] %v748
      %v750 = vld [vmem:[%s44 + $0xb00] sm:$0xff]
      %751 = vst [vmem:[%s45 + $0xb00] sm:$0xff] %v750
      %v752 = vld [vmem:[%s44 + $0xb08] sm:$0xff]
      %753 = vst [vmem:[%s45 + $0xb08] sm:$0xff] %v752
      %v754 = vld [vmem:[%s44 + $0xb10] sm:$0xff]
      %755 = vst [vmem:[%s45 + $0xb10] sm:$0xff] %v754
      %v756 = vld [vmem:[%s44 + $0xb18] sm:$0xff]
      %757 = vst [vmem:[%s45 + $0xb18] sm:$0xff] %v756
      %v758 = vld [vmem:[%s44 + $0xb20] sm:$0xff]
      %759 = vst [vmem:[%s45 + $0xb20] sm:$0xff] %v758
      %v760 = vld [vmem:[%s44 + $0xb28] sm:$0xff]
      %761 = vst [vmem:[%s45 + $0xb28] sm:$0xff] %v760
      %v762 = vld [vmem:[%s44 + $0xb30] sm:$0xff]
      %763 = vst [vmem:[%s45 + $0xb30] sm:$0xff] %v762
      %v764 = vld [vmem:[%s44 + $0xb38] sm:$0xff]
      %765 = vst [vmem:[%s45 + $0xb38] sm:$0xff] %v764
      %v766 = vld [vmem:[%s44 + $0xb40] sm:$0xff]
      %767 = vst [vmem:[%s45 + $0xb40] sm:$0xff] %v766
      %v768 = vld [vmem:[%s44 + $0xb48] sm:$0xff]
      %769 = vst [vmem:[%s45 + $0xb48] sm:$0xff] %v768
      %v770 = vld [vmem:[%s44 + $0xb50] sm:$0xff]
      %771 = vst [vmem:[%s45 + $0xb50] sm:$0xff] %v770
      %v772 = vld [vmem:[%s44 + $0xb58] sm:$0xff]
      %773 = vst [vmem:[%s45 + $0xb58] sm:$0xff] %v772
      %v774 = vld [vmem:[%s44 + $0xb60] sm:$0xff]
      %775 = vst [vmem:[%s45 + $0xb60] sm:$0xff] %v774
      %v776 = vld [vmem:[%s44 + $0xb68] sm:$0xff]
      %777 = vst [vmem:[%s45 + $0xb68] sm:$0xff] %v776
      %v778 = vld [vmem:[%s44 + $0xb70] sm:$0xff]
      %779 = vst [vmem:[%s45 + $0xb70] sm:$0xff] %v778
      %v780 = vld [vmem:[%s44 + $0xb78] sm:$0xff]
      %781 = vst [vmem:[%s45 + $0xb78] sm:$0xff] %v780
      %v782 = vld [vmem:[%s44 + $0xb80] sm:$0xff]
      %783 = vst [vmem:[%s45 + $0xb80] sm:$0xff] %v782
      %v784 = vld [vmem:[%s44 + $0xb88] sm:$0xff]
      %785 = vst [vmem:[%s45 + $0xb88] sm:$0xff] %v784
      %v786 = vld [vmem:[%s44 + $0xb90] sm:$0xff]
      %787 = vst [vmem:[%s45 + $0xb90] sm:$0xff] %v786
      %v788 = vld [vmem:[%s44 + $0xb98] sm:$0xff]
      %789 = vst [vmem:[%s45 + $0xb98] sm:$0xff] %v788
      %v790 = vld [vmem:[%s44 + $0xba0] sm:$0xff]
      %791 = vst [vmem:[%s45 + $0xba0] sm:$0xff] %v790
      %v792 = vld [vmem:[%s44 + $0xba8] sm:$0xff]
      %793 = vst [vmem:[%s45 + $0xba8] sm:$0xff] %v792
      %v794 = vld [vmem:[%s44 + $0xbb0] sm:$0xff]
      %795 = vst [vmem:[%s45 + $0xbb0] sm:$0xff] %v794
      %v796 = vld [vmem:[%s44 + $0xbb8] sm:$0xff]
      %797 = vst [vmem:[%s45 + $0xbb8] sm:$0xff] %v796
      %v798 = vld [vmem:[%s44 + $0xbc0] sm:$0xff]
      %799 = vst [vmem:[%s45 + $0xbc0] sm:$0xff] %v798
      %v800 = vld [vmem:[%s44 + $0xbc8] sm:$0xff]
      %801 = vst [vmem:[%s45 + $0xbc8] sm:$0xff] %v800
      %v802 = vld [vmem:[%s44 + $0xbd0] sm:$0xff]
      %803 = vst [vmem:[%s45 + $0xbd0] sm:$0xff] %v802
      %v804 = vld [vmem:[%s44 + $0xbd8] sm:$0xff]
      %805 = vst [vmem:[%s45 + $0xbd8] sm:$0xff] %v804
      %v806 = vld [vmem:[%s44 + $0xbe0] sm:$0xff]
      %807 = vst [vmem:[%s45 + $0xbe0] sm:$0xff] %v806
      %v808 = vld [vmem:[%s44 + $0xbe8] sm:$0xff]
      %809 = vst [vmem:[%s45 + $0xbe8] sm:$0xff] %v808
      %v810 = vld [vmem:[%s44 + $0xbf0] sm:$0xff]
      %811 = vst [vmem:[%s45 + $0xbf0] sm:$0xff] %v810
      %v812 = vld [vmem:[%s44 + $0xbf8] sm:$0xff]
      %813 = vst [vmem:[%s45 + $0xbf8] sm:$0xff] %v812
    $region46: #{sound_stage_net_v2.1} parent=40 // loop_footer
      %s43 = sadd.s32 1, %s39
    $region47: #{sound_stage_net_v2.1} parent=40 // loop_footer_branch
      %38 = sbr.rel target = $region43
    $region48: #{sound_stage_net_v2.1} parent=40 // loop_exit
      _
  $region41: #{sound_stage_net_v2.1} parent=0 // pred_fallthru
    _
  // Predicated region
  $region49: #{sound_stage_net_v2.1} parent=0 // pred_check
    _
  $region50: #{sound_stage_net_v2.1} parent=0 // pred_check_branch
    %815 = sbr.rel target = $region52
  $region51: #{sound_stage_net_v2.1} parent=0 // pred_region
    _
  $region52: #{sound_stage_net_v2.1} parent=0 // pred_fallthru
    _
  // Predicated region
  $region53: #{sound_stage_net_v2.1} parent=0 // pred_check
    _
  $region54: #{sound_stage_net_v2.1} parent=0 // pred_check_branch
    %818 = sbr.rel (0) target = $region56
  $region55: #{sound_stage_net_v2.1} parent=0 // pred_region
    %819 = vsyncadd [#allocation5], 49152
  $region56: #{sound_stage_net_v2.1} parent=0 // pred_fallthru
    _
  %s820 = scalar_lea.sflag [#allocation5], 1
  // Predicated region
  $region57: #{sound_stage_net_v2.1} parent=0 // pred_check
    _
  $region58: #{sound_stage_net_v2.1} parent=0 // pred_check_branch
    %822 = sbr.rel (0) target = $region60
  $region59: #{sound_stage_net_v2.1} parent=0 // pred_region
    loop: start=0, step=1, limit=1
    $region61: #{sound_stage_net_v2.1} parent=59 // loop_pre_header
      _
    $region62: #{sound_stage_net_v2.1} parent=59 // loop_header
      %s824 = sphi 0, %s828
      %p825 = scmp.ge.s32.totalorder %s824, 1
      %s829 = sphi %s10, %s10
      %s830 = sphi [#allocation3], [#allocation3]
    $region63: #{sound_stage_net_v2.1} parent=59 // loop_header_branch
      %827 = sbr.rel (%p825) target = $region67
    $region64: #{sound_stage_net_v2.1} parent=59 // loop_body
      %v831 = vld [vmem:[%s829] sm:$0xff]
      %832 = vst [vmem:[%s830] sm:$0xff] %v831
      %v833 = vld [vmem:[%s829 + $0x8] sm:$0xff]
      %834 = vst [vmem:[%s830 + $0x8] sm:$0xff] %v833
      %v835 = vld [vmem:[%s829 + $0x10] sm:$0xff]
      %836 = vst [vmem:[%s830 + $0x10] sm:$0xff] %v835
      %v837 = vld [vmem:[%s829 + $0x18] sm:$0xff]
      %838 = vst [vmem:[%s830 + $0x18] sm:$0xff] %v837
      %v839 = vld [vmem:[%s829 + $0x20] sm:$0xff]
      %840 = vst [vmem:[%s830 + $0x20] sm:$0xff] %v839
      %v841 = vld [vmem:[%s829 + $0x28] sm:$0xff]
      %842 = vst [vmem:[%s830 + $0x28] sm:$0xff] %v841
      %v843 = vld [vmem:[%s829 + $0x30] sm:$0xff]
      %844 = vst [vmem:[%s830 + $0x30] sm:$0xff] %v843
      %v845 = vld [vmem:[%s829 + $0x38] sm:$0xff]
      %846 = vst [vmem:[%s830 + $0x38] sm:$0xff] %v845
      %v847 = vld [vmem:[%s829 + $0x40] sm:$0xff]
      %848 = vst [vmem:[%s830 + $0x40] sm:$0xff] %v847
      %v849 = vld [vmem:[%s829 + $0x48] sm:$0xff]
      %850 = vst [vmem:[%s830 + $0x48] sm:$0xff] %v849
      %v851 = vld [vmem:[%s829 + $0x50] sm:$0xff]
      %852 = vst [vmem:[%s830 + $0x50] sm:$0xff] %v851
      %v853 = vld [vmem:[%s829 + $0x58] sm:$0xff]
      %854 = vst [vmem:[%s830 + $0x58] sm:$0xff] %v853
      %v855 = vld [vmem:[%s829 + $0x60] sm:$0xff]
      %856 = vst [vmem:[%s830 + $0x60] sm:$0xff] %v855
      %v857 = vld [vmem:[%s829 + $0x68] sm:$0xff]
      %858 = vst [vmem:[%s830 + $0x68] sm:$0xff] %v857
      %v859 = vld [vmem:[%s829 + $0x70] sm:$0xff]
      %860 = vst [vmem:[%s830 + $0x70] sm:$0xff] %v859
      %v861 = vld [vmem:[%s829 + $0x78] sm:$0xff]
      %862 = vst [vmem:[%s830 + $0x78] sm:$0xff] %v861
      %v863 = vld [vmem:[%s829 + $0x80] sm:$0xff]
      %864 = vst [vmem:[%s830 + $0x80] sm:$0xff] %v863
      %v865 = vld [vmem:[%s829 + $0x88] sm:$0xff]
      %866 = vst [vmem:[%s830 + $0x88] sm:$0xff] %v865
      %v867 = vld [vmem:[%s829 + $0x90] sm:$0xff]
      %868 = vst [vmem:[%s830 + $0x90] sm:$0xff] %v867
      %v869 = vld [vmem:[%s829 + $0x98] sm:$0xff]
      %870 = vst [vmem:[%s830 + $0x98] sm:$0xff] %v869
      %v871 = vld [vmem:[%s829 + $0xa0] sm:$0xff]
      %872 = vst [vmem:[%s830 + $0xa0] sm:$0xff] %v871
      %v873 = vld [vmem:[%s829 + $0xa8] sm:$0xff]
      %874 = vst [vmem:[%s830 + $0xa8] sm:$0xff] %v873
      %v875 = vld [vmem:[%s829 + $0xb0] sm:$0xff]
      %876 = vst [vmem:[%s830 + $0xb0] sm:$0xff] %v875
      %v877 = vld [vmem:[%s829 + $0xb8] sm:$0xff]
      %878 = vst [vmem:[%s830 + $0xb8] sm:$0xff] %v877
      %v879 = vld [vmem:[%s829 + $0xc0] sm:$0xff]
      %880 = vst [vmem:[%s830 + $0xc0] sm:$0xff] %v879
      %v881 = vld [vmem:[%s829 + $0xc8] sm:$0xff]
      %882 = vst [vmem:[%s830 + $0xc8] sm:$0xff] %v881
      %v883 = vld [vmem:[%s829 + $0xd0] sm:$0xff]
      %884 = vst [vmem:[%s830 + $0xd0] sm:$0xff] %v883
      %v885 = vld [vmem:[%s829 + $0xd8] sm:$0xff]
      %886 = vst [vmem:[%s830 + $0xd8] sm:$0xff] %v885
      %v887 = vld [vmem:[%s829 + $0xe0] sm:$0xff]
      %888 = vst [vmem:[%s830 + $0xe0] sm:$0xff] %v887
      %v889 = vld [vmem:[%s829 + $0xe8] sm:$0xff]
      %890 = vst [vmem:[%s830 + $0xe8] sm:$0xff] %v889
      %v891 = vld [vmem:[%s829 + $0xf0] sm:$0xff]
      %892 = vst [vmem:[%s830 + $0xf0] sm:$0xff] %v891
      %v893 = vld [vmem:[%s829 + $0xf8] sm:$0xff]
      %894 = vst [vmem:[%s830 + $0xf8] sm:$0xff] %v893
    $region65: #{sound_stage_net_v2.1} parent=59 // loop_footer
      %s828 = sadd.s32 1, %s824
    $region66: #{sound_stage_net_v2.1} parent=59 // loop_footer_branch
      %823 = sbr.rel target = $region62
    $region67: #{sound_stage_net_v2.1} parent=59 // loop_exit
      _
  $region60: #{sound_stage_net_v2.1} parent=0 // pred_fallthru
    _
  // Predicated region
  $region68: #{sound_stage_net_v2.1} parent=0 // pred_check
    _
  $region69: #{sound_stage_net_v2.1} parent=0 // pred_check_branch
    %896 = sbr.rel target = $region71
  $region70: #{sound_stage_net_v2.1} parent=0 // pred_region
    _
  $region71: #{sound_stage_net_v2.1} parent=0 // pred_fallthru
    _
  // Predicated region
  $region72: #{sound_stage_net_v2.1} parent=0 // pred_check
    _
  $region73: #{sound_stage_net_v2.1} parent=0 // pred_check_branch
    %899 = sbr.rel (0) target = $region75
  $region74: #{sound_stage_net_v2.1} parent=0 // pred_region
    %900 = vsyncadd %s820, 4096
  $region75: #{sound_stage_net_v2.1} parent=0 // pred_fallthru
    _
  %s901 = scalar_lea.sflag [#allocation5], 2
  // Predicated region
  $region76: #{sound_stage_net_v2.1} parent=0 // pred_check
    _
  $region77: #{sound_stage_net_v2.1} parent=0 // pred_check_branch
    %903 = sbr.rel (0) target = $region79
  $region78: #{sound_stage_net_v2.1} parent=0 // pred_region
    loop: start=0, step=1, limit=1
    $region80: #{sound_stage_net_v2.1} parent=78 // loop_pre_header
      _
    $region81: #{sound_stage_net_v2.1} parent=78 // loop_header
      %s905 = sphi 0, %s909
      %p906 = scmp.ge.s32.totalorder %s905, 1
      %s910 = sphi %s11, %s11
      %s911 = sphi [#allocation4], [#allocation4]
    $region82: #{sound_stage_net_v2.1} parent=78 // loop_header_branch
      %908 = sbr.rel (%p906) target = $region86
    $region83: #{sound_stage_net_v2.1} parent=78 // loop_body
      %v912 = vld [vmem:[%s910] sm:$0xff]
      %913 = vst [vmem:[%s911] sm:$0xff] %v912
      %v914 = vld [vmem:[%s910 + $0x8] sm:$0xff]
      %915 = vst [vmem:[%s911 + $0x8] sm:$0xff] %v914
      %v916 = vld [vmem:[%s910 + $0x10] sm:$0xff]
      %917 = vst [vmem:[%s911 + $0x10] sm:$0xff] %v916
      %v918 = vld [vmem:[%s910 + $0x18] sm:$0xff]
      %919 = vst [vmem:[%s911 + $0x18] sm:$0xff] %v918
      %v920 = vld [vmem:[%s910 + $0x20] sm:$0xff]
      %921 = vst [vmem:[%s911 + $0x20] sm:$0xff] %v920
      %v922 = vld [vmem:[%s910 + $0x28] sm:$0xff]
      %923 = vst [vmem:[%s911 + $0x28] sm:$0xff] %v922
      %v924 = vld [vmem:[%s910 + $0x30] sm:$0xff]
      %925 = vst [vmem:[%s911 + $0x30] sm:$0xff] %v924
      %v926 = vld [vmem:[%s910 + $0x38] sm:$0xff]
      %927 = vst [vmem:[%s911 + $0x38] sm:$0xff] %v926
    $region84: #{sound_stage_net_v2.1} parent=78 // loop_footer
      %s909 = sadd.s32 1, %s905
    $region85: #{sound_stage_net_v2.1} parent=78 // loop_footer_branch
      %904 = sbr.rel target = $region81
    $region86: #{sound_stage_net_v2.1} parent=78 // loop_exit
      _
  $region79: #{sound_stage_net_v2.1} parent=0 // pred_fallthru
    _
  // Predicated region
  $region87: #{sound_stage_net_v2.1} parent=0 // pred_check
    _
  $region88: #{sound_stage_net_v2.1} parent=0 // pred_check_branch
    %929 = sbr.rel target = $region90
  $region89: #{sound_stage_net_v2.1} parent=0 // pred_region
    _
  $region90: #{sound_stage_net_v2.1} parent=0 // pred_fallthru
    _
  // Predicated region
  $region91: #{sound_stage_net_v2.1} parent=0 // pred_check
    _
  $region92: #{sound_stage_net_v2.1} parent=0 // pred_check_branch
    %932 = sbr.rel (0) target = $region94
  $region93: #{sound_stage_net_v2.1} parent=0 // pred_region
    %933 = vsyncadd %s901, 1024
  $region94: #{sound_stage_net_v2.1} parent=0 // pred_fallthru
    _
  %v934 = vld [vmem:[%s0] sm:$0xf]
  %v935 = vld [vmem:[%s0 + $0x4] sm:$0xf]
  %v936 = vld [vmem:[%s0 + $0x8] sm:$0xf]
  %v937 = vld [vmem:[%s0 + $0xc] sm:$0xf]
  %v938 = vld [vmem:[%s0 + $0x10] sm:$0xf]
  %v939 = vld [vmem:[%s0 + $0x14] sm:$0xf]
  %v940 = vld [vmem:[%s0 + $0x18] sm:$0xf]
  %v941 = vld [vmem:[%s0 + $0x1c] sm:$0xf]
  %v942 = vld [vmem:[%s0 + $0x20] sm:$0xf]
  %v943 = vld [vmem:[%s0 + $0x24] sm:$0xf]
  %v944 = vld [vmem:[%s0 + $0x28] sm:$0xf]
  %v945 = vld [vmem:[%s0 + $0x2c] sm:$0xf]
  %v946 = vld [vmem:[%s0 + $0x30] sm:$0xf]
  %v947 = vld [vmem:[%s0 + $0x34] sm:$0xf]
  %v948 = vld [vmem:[%s0 + $0x38] sm:$0xf]
  %v949 = vld [vmem:[%s0 + $0x3c] sm:$0xf]
  %v950 = vld [vmem:[%s0 + $0x40] sm:$0xf]
  %v951 = vld [vmem:[%s0 + $0x44] sm:$0xf]
  %v952 = vld [vmem:[%s0 + $0x48] sm:$0xf]
  %v953 = vld [vmem:[%s0 + $0x4c] sm:$0xf]
  %v954 = vld [vmem:[%s0 + $0x50] sm:$0xf]
  %v955 = vld [vmem:[%s0 + $0x54] sm:$0xf]
  %v956 = vld [vmem:[%s0 + $0x58] sm:$0xf]
  %v957 = vld [vmem:[%s0 + $0x5c] sm:$0xf]
  %v958 = vld [vmem:[%s0 + $0x60] sm:$0xf]
  %v959 = vld [vmem:[%s0 + $0x64] sm:$0xf]
  %v960 = vld [vmem:[%s0 + $0x68] sm:$0xf]
  %v961 = vld [vmem:[%s0 + $0x6c] sm:$0xf]
  %v962 = vld [vmem:[%s0 + $0x70] sm:$0xf]
  %v963 = vld [vmem:[%s0 + $0x74] sm:$0xf]
  %v964 = vld [vmem:[%s0 + $0x78] sm:$0xf]
  %v965 = vld [vmem:[%s0 + $0x7c] sm:$0xf]
  %v966 = vld [vmem:[%s0 + $0x80] sm:$0xf]
  %v967 = vld [vmem:[%s0 + $0x84] sm:$0xf]
  %v968 = vld [vmem:[%s0 + $0x88] sm:$0xf]
  %v969 = vld [vmem:[%s0 + $0x8c] sm:$0xf]
  %v970 = vld [vmem:[%s0 + $0x90] sm:$0xf]
  %v971 = vld [vmem:[%s0 + $0x94] sm:$0xf]
  %v972 = vld [vmem:[%s0 + $0x98] sm:$0xf]
  %v973 = vld [vmem:[%s0 + $0x9c] sm:$0xf]
  %v974 = vld [vmem:[%s0 + $0xa0] sm:$0xf]
  %v975 = vld [vmem:[%s0 + $0xa4] sm:$0xf]
  %v976 = vld [vmem:[%s0 + $0xa8] sm:$0xf]
  %v977 = vld [vmem:[%s0 + $0xac] sm:$0xf]
  %v978 = vld [vmem:[%s0 + $0xb0] sm:$0xf]
  %v979 = vld [vmem:[%s0 + $0xb4] sm:$0xf]
  %v980 = vld [vmem:[%s0 + $0xb8] sm:$0xf]
  %v981 = vld [vmem:[%s0 + $0xbc] sm:$0xf]
  %v982 = vld [vmem:[%s0 + $0xc0] sm:$0xf]
  %v983 = vld [vmem:[%s0 + $0xc4] sm:$0xf]
  %v984 = vld [vmem:[%s0 + $0xc8] sm:$0xf]
  %v985 = vld [vmem:[%s0 + $0xcc] sm:$0xf]
  %v986 = vld [vmem:[%s0 + $0xd0] sm:$0xf]
  %v987 = vld [vmem:[%s0 + $0xd4] sm:$0xf]
  %v988 = vld [vmem:[%s0 + $0xd8] sm:$0xf]
  %v989 = vld [vmem:[%s0 + $0xdc] sm:$0xf]
  %v990 = vld [vmem:[%s0 + $0xe0] sm:$0xf]
  %v991 = vld [vmem:[%s0 + $0xe4] sm:$0xf]
  %v992 = vld [vmem:[%s0 + $0xe8] sm:$0xf]
  %v993 = vld [vmem:[%s0 + $0xec] sm:$0xf]
  %v994 = vld [vmem:[%s0 + $0xf0] sm:$0xf]
  %v995 = vld [vmem:[%s0 + $0xf4] sm:$0xf]
  %v996 = vld [vmem:[%s0 + $0xf8] sm:$0xf]
  %v997 = vld [vmem:[%s0 + $0xfc] sm:$0xf]
  %v998 = vld [vmem:[%s2] sm:$0xff]
  %v999 = vld [vmem:[%s2 + $0x8] sm:$0xf]
  %v1000 = vld [vmem:[%s2 + $0xc] sm:$0xff]
  %v1001 = vld [vmem:[%s2 + $0x14] sm:$0xf]
  %v1002 = vld [vmem:[%s2 + $0x18] sm:$0xff]
  %v1003 = vld [vmem:[%s2 + $0x20] sm:$0xf]
  %v1004 = vld [vmem:[%s2 + $0x24] sm:$0xff]
  %v1005 = vld [vmem:[%s2 + $0x2c] sm:$0xf]
  %v1006 = vld [vmem:[%s2 + $0x30] sm:$0xff]
  %v1007 = vld [vmem:[%s2 + $0x38] sm:$0xf]
  %v1008 = vld [vmem:[%s2 + $0x3c] sm:$0xff]
  %v1009 = vld [vmem:[%s2 + $0x44] sm:$0xf]
  %v1010 = vld [vmem:[%s2 + $0x48] sm:$0xff]
  %v1011 = vld [vmem:[%s2 + $0x50] sm:$0xf]
  %v1012 = vld [vmem:[%s2 + $0x54] sm:$0xff]
  %v1013 = vld [vmem:[%s2 + $0x5c] sm:$0xf]
  %v1014 = vld [vmem:[%s2 + $0x60] sm:$0xff]
  %v1015 = vld [vmem:[%s2 + $0x68] sm:$0xf]
  %v1016 = vld [vmem:[%s2 + $0x6c] sm:$0xff]
  %v1017 = vld [vmem:[%s2 + $0x74] sm:$0xf]
  %v1018 = vld [vmem:[%s2 + $0x78] sm:$0xff]
  %v1019 = vld [vmem:[%s2 + $0x80] sm:$0xf]
  %v1020 = vld [vmem:[%s2 + $0x84] sm:$0xff]
  %v1021 = vld [vmem:[%s2 + $0x8c] sm:$0xf]
  %v1022 = vld [vmem:[%s2 + $0x90] sm:$0xff]
  %v1023 = vld [vmem:[%s2 + $0x98] sm:$0xf]
  %v1024 = vld [vmem:[%s2 + $0x9c] sm:$0xff]
  %v1025 = vld [vmem:[%s2 + $0xa4] sm:$0xf]
  %v1026 = vld [vmem:[%s2 + $0xa8] sm:$0xff]
  %v1027 = vld [vmem:[%s2 + $0xb0] sm:$0xf]
  %v1028 = vld [vmem:[%s2 + $0xb4] sm:$0xff]
  %v1029 = vld [vmem:[%s2 + $0xbc] sm:$0xf]
  %v1030 = vld [vmem:[%s3] sm:$0x7]
  %v1032 = vperm.slane %v1030, 0
  %v1033 = vperm.slane %v1030, 1
  %v1034 = vperm.slane %v1030, 2
  %v1102 = vunpack.c.l.b16 %v934
  %v1103 = vunpack.c.l.b16 %v935
  %v1104 = vunpack.c.l.b16 %v936
  %v1105 = vunpack.c.l.b16 %v937
  %v1106 = vunpack.c.l.b16 %v938
  %v1107 = vunpack.c.l.b16 %v939
  %v1108 = vunpack.c.l.b16 %v940
  %v1109 = vunpack.c.l.b16 %v941
  %v1110 = vunpack.c.l.b16 %v942
  %v1111 = vunpack.c.l.b16 %v943
  %v1112 = vunpack.c.l.b16 %v944
  %v1113 = vunpack.c.l.b16 %v945
  %v1114 = vunpack.c.l.b16 %v946
  %v1115 = vunpack.c.l.b16 %v947
  %v1116 = vunpack.c.l.b16 %v948
  %v1117 = vunpack.c.l.b16 %v949
  %v1118 = vunpack.c.l.b16 %v950
  %v1119 = vunpack.c.l.b16 %v951
  %v1120 = vunpack.c.l.b16 %v952
  %v1121 = vunpack.c.l.b16 %v953
  %v1122 = vunpack.c.l.b16 %v954
  %v1123 = vunpack.c.l.b16 %v955
  %v1124 = vunpack.c.l.b16 %v956
  %v1125 = vunpack.c.l.b16 %v957
  %v1126 = vunpack.c.l.b16 %v958
  %v1127 = vunpack.c.l.b16 %v959
  %v1128 = vunpack.c.l.b16 %v960
  %v1129 = vunpack.c.l.b16 %v961
  %v1130 = vunpack.c.l.b16 %v962
  %v1131 = vunpack.c.l.b16 %v963
  %v1132 = vunpack.c.l.b16 %v964
  %v1133 = vunpack.c.l.b16 %v965
  %v1134 = vunpack.c.l.b16 %v966
  %v1135 = vunpack.c.l.b16 %v967
  %v1136 = vunpack.c.l.b16 %v968
  %v1137 = vunpack.c.l.b16 %v969
  %v1138 = vunpack.c.l.b16 %v970
  %v1139 = vunpack.c.l.b16 %v971
  %v1140 = vunpack.c.l.b16 %v972
  %v1141 = vunpack.c.l.b16 %v973
  %v1142 = vunpack.c.l.b16 %v974
  %v1143 = vunpack.c.l.b16 %v975
  %v1144 = vunpack.c.l.b16 %v976
  %v1145 = vunpack.c.l.b16 %v977
  %v1146 = vunpack.c.l.b16 %v978
  %v1147 = vunpack.c.l.b16 %v979
  %v1148 = vunpack.c.l.b16 %v980
  %v1149 = vunpack.c.l.b16 %v981
  %v1150 = vunpack.c.l.b16 %v982
  %v1151 = vunpack.c.l.b16 %v983
  %v1152 = vunpack.c.l.b16 %v984
  %v1153 = vunpack.c.l.b16 %v985
  %v1154 = vunpack.c.l.b16 %v986
  %v1155 = vunpack.c.l.b16 %v987
  %v1156 = vunpack.c.l.b16 %v988
  %v1157 = vunpack.c.l.b16 %v989
  %v1158 = vunpack.c.l.b16 %v990
  %v1159 = vunpack.c.l.b16 %v991
  %v1160 = vunpack.c.l.b16 %v992
  %v1161 = vunpack.c.l.b16 %v993
  %v1162 = vunpack.c.l.b16 %v994
  %v1163 = vunpack.c.l.b16 %v995
  %v1164 = vunpack.c.l.b16 %v996
  %v1165 = vunpack.c.l.b16 %v997
  %v1166 = vpack.c.b16 %v1103, %v1102
  %v1167 = vpack.c.b16 %v1105, %v1104
  %v1168 = vpack.c.b16 %v1107, %v1106
  %v1169 = vpack.c.b16 %v1109, %v1108
  %v1170 = vpack.c.b16 %v1111, %v1110
  %v1171 = vpack.c.b16 %v1113, %v1112
  %v1172 = vpack.c.b16 %v1115, %v1114
  %v1173 = vpack.c.b16 %v1117, %v1116
  %v1174 = vpack.c.b16 %v1119, %v1118
  %v1175 = vpack.c.b16 %v1121, %v1120
  %v1176 = vpack.c.b16 %v1123, %v1122
  %v1177 = vpack.c.b16 %v1125, %v1124
  %v1178 = vpack.c.b16 %v1127, %v1126
  %v1179 = vpack.c.b16 %v1129, %v1128
  %v1180 = vpack.c.b16 %v1131, %v1130
  %v1181 = vpack.c.b16 %v1133, %v1132
  %v1182 = vpack.c.b16 %v1135, %v1134
  %v1183 = vpack.c.b16 %v1137, %v1136
  %v1184 = vpack.c.b16 %v1139, %v1138
  %v1185 = vpack.c.b16 %v1141, %v1140
  %v1186 = vpack.c.b16 %v1143, %v1142
  %v1187 = vpack.c.b16 %v1145, %v1144
  %v1188 = vpack.c.b16 %v1147, %v1146
  %v1189 = vpack.c.b16 %v1149, %v1148
  %v1190 = vpack.c.b16 %v1151, %v1150
  %v1191 = vpack.c.b16 %v1153, %v1152
  %v1192 = vpack.c.b16 %v1155, %v1154
  %v1193 = vpack.c.b16 %v1157, %v1156
  %v1194 = vpack.c.b16 %v1159, %v1158
  %v1195 = vpack.c.b16 %v1161, %v1160
  %v1196 = vpack.c.b16 %v1163, %v1162
  %v1197 = vpack.c.b16 %v1165, %v1164
  %v1262 = vunpack.c.l.b16 %v998
  %v1263 = vunpack.c.h.b16 %v998
  %v1264 = vunpack.c.l.b16 %v999
  %v1265 = vunpack.c.l.b16 %v1000
  %v1266 = vunpack.c.h.b16 %v1000
  %v1267 = vunpack.c.l.b16 %v1001
  %v1268 = vunpack.c.l.b16 %v1002
  %v1269 = vunpack.c.h.b16 %v1002
  %v1270 = vunpack.c.l.b16 %v1003
  %v1271 = vunpack.c.l.b16 %v1004
  %v1272 = vunpack.c.h.b16 %v1004
  %v1273 = vunpack.c.l.b16 %v1005
  %v1274 = vunpack.c.l.b16 %v1006
  %v1275 = vunpack.c.h.b16 %v1006
  %v1276 = vunpack.c.l.b16 %v1007
  %v1277 = vunpack.c.l.b16 %v1008
  %v1278 = vunpack.c.h.b16 %v1008
  %v1279 = vunpack.c.l.b16 %v1009
  %v1280 = vunpack.c.l.b16 %v1010
  %v1281 = vunpack.c.h.b16 %v1010
  %v1282 = vunpack.c.l.b16 %v1011
  %v1283 = vunpack.c.l.b16 %v1012
  %v1284 = vunpack.c.h.b16 %v1012
  %v1285 = vunpack.c.l.b16 %v1013
  %v1286 = vunpack.c.l.b16 %v1014
  %v1287 = vunpack.c.h.b16 %v1014
  %v1288 = vunpack.c.l.b16 %v1015
  %v1289 = vunpack.c.l.b16 %v1016
  %v1290 = vunpack.c.h.b16 %v1016
  %v1291 = vunpack.c.l.b16 %v1017
  %v1292 = vunpack.c.l.b16 %v1018
  %v1293 = vunpack.c.h.b16 %v1018
  %v1294 = vunpack.c.l.b16 %v1019
  %v1295 = vunpack.c.l.b16 %v1020
  %v1296 = vunpack.c.h.b16 %v1020
  %v1297 = vunpack.c.l.b16 %v1021
  %v1298 = vunpack.c.l.b16 %v1022
  %v1299 = vunpack.c.h.b16 %v1022
  %v1300 = vunpack.c.l.b16 %v1023
  %v1301 = vunpack.c.l.b16 %v1024
  %v1302 = vunpack.c.h.b16 %v1024
  %v1303 = vunpack.c.l.b16 %v1025
  %v1304 = vunpack.c.l.b16 %v1026
  %v1305 = vunpack.c.h.b16 %v1026
  %v1306 = vunpack.c.l.b16 %v1027
  %v1307 = vunpack.c.l.b16 %v1028
  %v1308 = vunpack.c.h.b16 %v1028
  %v1309 = vunpack.c.l.b16 %v1029
  %v1310 = vpack.c.b16 %v1265, %v1262
  %v1311 = vpack.c.b16 %v1266, %v1263
  %v1312 = vpack.c.b16 %v1267, %v1264
  %v1313 = vpack.c.b16 %v1271, %v1268
  %v1314 = vpack.c.b16 %v1272, %v1269
  %v1315 = vpack.c.b16 %v1273, %v1270
  %v1316 = vpack.c.b16 %v1277, %v1274
  %v1317 = vpack.c.b16 %v1278, %v1275
  %v1318 = vpack.c.b16 %v1279, %v1276
  %v1319 = vpack.c.b16 %v1283, %v1280
  %v1320 = vpack.c.b16 %v1284, %v1281
  %v1321 = vpack.c.b16 %v1285, %v1282
  %v1322 = vpack.c.b16 %v1289, %v1286
  %v1323 = vpack.c.b16 %v1290, %v1287
  %v1324 = vpack.c.b16 %v1291, %v1288
  %v1325 = vpack.c.b16 %v1295, %v1292
  %v1326 = vpack.c.b16 %v1296, %v1293
  %v1327 = vpack.c.b16 %v1297, %v1294
  %v1328 = vpack.c.b16 %v1301, %v1298
  %v1329 = vpack.c.b16 %v1302, %v1299
  %v1330 = vpack.c.b16 %v1303, %v1300
  %v1331 = vpack.c.b16 %v1307, %v1304
  %v1332 = vpack.c.b16 %v1308, %v1305
  %v1333 = vpack.c.b16 %v1309, %v1306
  %1358 = vmatpush.bf16.msra.mxu0 %v1331
  %1359 = vmatpush.bf16.msra.mxu0 %v1328
  %1360 = vmatpush.bf16.msra.mxu0 %v1325
  %1361 = vmatpush.bf16.msra.mxu0 %v1322
  %1362 = vmatpush.bf16.msra.mxu0 %v1319
  %1363 = vmatpush.bf16.msra.mxu0 %v1316
  %1364 = vmatpush.bf16.msra.mxu0 %v1313
  %1365 = vmatpush.bf16.msra.mxu0 %v1310
  %1366 = vmatmul.bf16.gmra.mxu0 %v1166
  %v1367 = vpop.f32.mrf.mxu0
  %v1368 = vadd.f32 %v1032, %v1367
  %v1369 = vpop.f32.mrf.mxu0
  %v1370 = vadd.f32 %v1032, %v1369
  %1371 = vmatmul.bf16.gmra.mxu0 %v1167
  %v1372 = vpop.f32.mrf.mxu0
  %v1373 = vadd.f32 %v1032, %v1372
  %v1374 = vpop.f32.mrf.mxu0
  %v1375 = vadd.f32 %v1032, %v1374
  %1376 = vmatmul.bf16.gmra.mxu0 %v1168
  %v1377 = vpop.f32.mrf.mxu0
  %v1378 = vadd.f32 %v1032, %v1377
  %v1379 = vpop.f32.mrf.mxu0
  %v1380 = vadd.f32 %v1032, %v1379
  %1381 = vmatmul.bf16.gmra.mxu0 %v1169
  %v1382 = vpop.f32.mrf.mxu0
  %v1383 = vadd.f32 %v1032, %v1382
  %v1384 = vpop.f32.mrf.mxu0
  %v1385 = vadd.f32 %v1032, %v1384
  %1386 = vmatmul.bf16.gmra.mxu0 %v1170
  %v1387 = vpop.f32.mrf.mxu0
  %v1388 = vadd.f32 %v1032, %v1387
  %v1389 = vpop.f32.mrf.mxu0
  %v1390 = vadd.f32 %v1032, %v1389
  %1391 = vmatmul.bf16.gmra.mxu0 %v1171
  %v1392 = vpop.f32.mrf.mxu0
  %v1393 = vadd.f32 %v1032, %v1392
  %v1394 = vpop.f32.mrf.mxu0
  %v1395 = vadd.f32 %v1032, %v1394
  %1396 = vmatmul.bf16.gmra.mxu0 %v1172
  %v1397 = vpop.f32.mrf.mxu0
  %v1398 = vadd.f32 %v1032, %v1397
  %v1399 = vpop.f32.mrf.mxu0
  %v1400 = vadd.f32 %v1032, %v1399
  %1401 = vmatmul.bf16.gmra.mxu0 %v1173
  %v1402 = vpop.f32.mrf.mxu0
  %v1403 = vadd.f32 %v1032, %v1402
  %v1404 = vpop.f32.mrf.mxu0
  %v1405 = vadd.f32 %v1032, %v1404
  %1406 = vmatmul.bf16.gmra.mxu0 %v1174
  %v1407 = vpop.f32.mrf.mxu0
  %v1408 = vadd.f32 %v1032, %v1407
  %v1409 = vpop.f32.mrf.mxu0
  %v1410 = vadd.f32 %v1032, %v1409
  %1411 = vmatmul.bf16.gmra.mxu0 %v1175
  %v1412 = vpop.f32.mrf.mxu0
  %v1413 = vadd.f32 %v1032, %v1412
  %v1414 = vpop.f32.mrf.mxu0
  %v1415 = vadd.f32 %v1032, %v1414
  %1416 = vmatmul.bf16.gmra.mxu0 %v1176
  %v1417 = vpop.f32.mrf.mxu0
  %v1418 = vadd.f32 %v1032, %v1417
  %v1419 = vpop.f32.mrf.mxu0
  %v1420 = vadd.f32 %v1032, %v1419
  %1421 = vmatmul.bf16.gmra.mxu0 %v1177
  %v1422 = vpop.f32.mrf.mxu0
  %v1423 = vadd.f32 %v1032, %v1422
  %v1424 = vpop.f32.mrf.mxu0
  %v1425 = vadd.f32 %v1032, %v1424
  %1426 = vmatmul.bf16.gmra.mxu0 %v1178
  %v1427 = vpop.f32.mrf.mxu0
  %v1428 = vadd.f32 %v1032, %v1427
  %v1429 = vpop.f32.mrf.mxu0
  %v1430 = vadd.f32 %v1032, %v1429
  %1431 = vmatmul.bf16.gmra.mxu0 %v1179
  %v1432 = vpop.f32.mrf.mxu0
  %v1433 = vadd.f32 %v1032, %v1432
  %v1434 = vpop.f32.mrf.mxu0
  %v1435 = vadd.f32 %v1032, %v1434
  %1436 = vmatmul.bf16.gmra.mxu0 %v1180
  %v1437 = vpop.f32.mrf.mxu0
  %v1438 = vadd.f32 %v1032, %v1437
  %v1439 = vpop.f32.mrf.mxu0
  %v1440 = vadd.f32 %v1032, %v1439
  %1441 = vmatmul.bf16.gmra.mxu0 %v1181
  %v1442 = vpop.f32.mrf.mxu0
  %v1443 = vadd.f32 %v1032, %v1442
  %v1444 = vpop.f32.mrf.mxu0
  %v1445 = vadd.f32 %v1032, %v1444
  %1446 = vmatmul.bf16.gmra.mxu0 %v1182
  %v1447 = vpop.f32.mrf.mxu0
  %v1448 = vadd.f32 %v1032, %v1447
  %v1449 = vpop.f32.mrf.mxu0
  %v1450 = vadd.f32 %v1032, %v1449
  %1451 = vmatmul.bf16.gmra.mxu0 %v1183
  %v1452 = vpop.f32.mrf.mxu0
  %v1453 = vadd.f32 %v1032, %v1452
  %v1454 = vpop.f32.mrf.mxu0
  %v1455 = vadd.f32 %v1032, %v1454
  %1456 = vmatmul.bf16.gmra.mxu0 %v1184
  %v1457 = vpop.f32.mrf.mxu0
  %v1458 = vadd.f32 %v1032, %v1457
  %v1459 = vpop.f32.mrf.mxu0
  %v1460 = vadd.f32 %v1032, %v1459
  %1461 = vmatmul.bf16.gmra.mxu0 %v1185
  %v1462 = vpop.f32.mrf.mxu0
  %v1463 = vadd.f32 %v1032, %v1462
  %v1464 = vpop.f32.mrf.mxu0
  %v1465 = vadd.f32 %v1032, %v1464
  %1466 = vmatmul.bf16.gmra.mxu0 %v1186
  %v1467 = vpop.f32.mrf.mxu0
  %v1468 = vadd.f32 %v1032, %v1467
  %v1469 = vpop.f32.mrf.mxu0
  %v1470 = vadd.f32 %v1032, %v1469
  %1471 = vmatmul.bf16.gmra.mxu0 %v1187
  %v1472 = vpop.f32.mrf.mxu0
  %v1473 = vadd.f32 %v1032, %v1472
  %v1474 = vpop.f32.mrf.mxu0
  %v1475 = vadd.f32 %v1032, %v1474
  %1476 = vmatmul.bf16.gmra.mxu0 %v1188
  %v1477 = vpop.f32.mrf.mxu0
  %v1478 = vadd.f32 %v1032, %v1477
  %v1479 = vpop.f32.mrf.mxu0
  %v1480 = vadd.f32 %v1032, %v1479
  %1481 = vmatmul.bf16.gmra.mxu0 %v1189
  %v1482 = vpop.f32.mrf.mxu0
  %v1483 = vadd.f32 %v1032, %v1482
  %v1484 = vpop.f32.mrf.mxu0
  %v1485 = vadd.f32 %v1032, %v1484
  %1486 = vmatmul.bf16.gmra.mxu0 %v1190
  %v1487 = vpop.f32.mrf.mxu0
  %v1488 = vadd.f32 %v1032, %v1487
  %v1489 = vpop.f32.mrf.mxu0
  %v1490 = vadd.f32 %v1032, %v1489
  %1491 = vmatmul.bf16.gmra.mxu0 %v1191
  %v1492 = vpop.f32.mrf.mxu0
  %v1493 = vadd.f32 %v1032, %v1492
  %v1494 = vpop.f32.mrf.mxu0
  %v1495 = vadd.f32 %v1032, %v1494
  %1496 = vmatmul.bf16.gmra.mxu0 %v1192
  %v1497 = vpop.f32.mrf.mxu0
  %v1498 = vadd.f32 %v1032, %v1497
  %v1499 = vpop.f32.mrf.mxu0
  %v1500 = vadd.f32 %v1032, %v1499
  %1501 = vmatmul.bf16.gmra.mxu0 %v1193
  %v1502 = vpop.f32.mrf.mxu0
  %v1503 = vadd.f32 %v1032, %v1502
  %v1504 = vpop.f32.mrf.mxu0
  %v1505 = vadd.f32 %v1032, %v1504
  %1506 = vmatmul.bf16.gmra.mxu0 %v1194
  %v1507 = vpop.f32.mrf.mxu0
  %v1508 = vadd.f32 %v1032, %v1507
  %v1509 = vpop.f32.mrf.mxu0
  %v1510 = vadd.f32 %v1032, %v1509
  %1511 = vmatmul.bf16.gmra.mxu0 %v1195
  %v1512 = vpop.f32.mrf.mxu0
  %v1513 = vadd.f32 %v1032, %v1512
  %v1514 = vpop.f32.mrf.mxu0
  %v1515 = vadd.f32 %v1032, %v1514
  %1516 = vmatmul.bf16.gmra.mxu0 %v1196
  %v1517 = vpop.f32.mrf.mxu0
  %v1518 = vadd.f32 %v1032, %v1517
  %v1519 = vpop.f32.mrf.mxu0
  %v1520 = vadd.f32 %v1032, %v1519
  %1521 = vmatmul.bf16.gmra.mxu0 %v1197
  %v1522 = vpop.f32.mrf.mxu0
  %v1523 = vadd.f32 %v1032, %v1522
  %v1524 = vpop.f32.mrf.mxu0
  %v1525 = vadd.f32 %v1032, %v1524
  %1526 = vdwg.mxu0
  %1527 = vmatpush.bf16.msra.mxu0 %v1332
  %1528 = vmatpush.bf16.msra.mxu0 %v1329
  %1529 = vmatpush.bf16.msra.mxu0 %v1326
  %1530 = vmatpush.bf16.msra.mxu0 %v1323
  %1531 = vmatpush.bf16.msra.mxu0 %v1320
  %1532 = vmatpush.bf16.msra.mxu0 %v1317
  %1533 = vmatpush.bf16.msra.mxu0 %v1314
  %1534 = vmatpush.bf16.msra.mxu0 %v1311
  %1535 = vmatmul.bf16.gmra.mxu0 %v1166
  %v1536 = vpop.f32.mrf.mxu0
  %v1537 = vadd.f32 %v1033, %v1536
  %v1538 = vpop.f32.mrf.mxu0
  %v1539 = vadd.f32 %v1033, %v1538
  %1540 = vmatmul.bf16.gmra.mxu0 %v1167
  %v1541 = vpop.f32.mrf.mxu0
  %v1542 = vadd.f32 %v1033, %v1541
  %v1543 = vpop.f32.mrf.mxu0
  %v1544 = vadd.f32 %v1033, %v1543
  %1545 = vmatmul.bf16.gmra.mxu0 %v1168
  %v1546 = vpop.f32.mrf.mxu0
  %v1547 = vadd.f32 %v1033, %v1546
  %v1548 = vpop.f32.mrf.mxu0
  %v1549 = vadd.f32 %v1033, %v1548
  %1550 = vmatmul.bf16.gmra.mxu0 %v1169
  %v1551 = vpop.f32.mrf.mxu0
  %v1552 = vadd.f32 %v1033, %v1551
  %v1553 = vpop.f32.mrf.mxu0
  %v1554 = vadd.f32 %v1033, %v1553
  %1555 = vmatmul.bf16.gmra.mxu0 %v1170
  %v1556 = vpop.f32.mrf.mxu0
  %v1557 = vadd.f32 %v1033, %v1556
  %v1558 = vpop.f32.mrf.mxu0
  %v1559 = vadd.f32 %v1033, %v1558
  %1560 = vmatmul.bf16.gmra.mxu0 %v1171
  %v1561 = vpop.f32.mrf.mxu0
  %v1562 = vadd.f32 %v1033, %v1561
  %v1563 = vpop.f32.mrf.mxu0
  %v1564 = vadd.f32 %v1033, %v1563
  %1565 = vmatmul.bf16.gmra.mxu0 %v1172
  %v1566 = vpop.f32.mrf.mxu0
  %v1567 = vadd.f32 %v1033, %v1566
  %v1568 = vpop.f32.mrf.mxu0
  %v1569 = vadd.f32 %v1033, %v1568
  %1570 = vmatmul.bf16.gmra.mxu0 %v1173
  %v1571 = vpop.f32.mrf.mxu0
  %v1572 = vadd.f32 %v1033, %v1571
  %v1573 = vpop.f32.mrf.mxu0
  %v1574 = vadd.f32 %v1033, %v1573
  %1575 = vmatmul.bf16.gmra.mxu0 %v1174
  %v1576 = vpop.f32.mrf.mxu0
  %v1577 = vadd.f32 %v1033, %v1576
  %v1578 = vpop.f32.mrf.mxu0
  %v1579 = vadd.f32 %v1033, %v1578
  %1580 = vmatmul.bf16.gmra.mxu0 %v1175
  %v1581 = vpop.f32.mrf.mxu0
  %v1582 = vadd.f32 %v1033, %v1581
  %v1583 = vpop.f32.mrf.mxu0
  %v1584 = vadd.f32 %v1033, %v1583
  %1585 = vmatmul.bf16.gmra.mxu0 %v1176
  %v1586 = vpop.f32.mrf.mxu0
  %v1587 = vadd.f32 %v1033, %v1586
  %v1588 = vpop.f32.mrf.mxu0
  %v1589 = vadd.f32 %v1033, %v1588
  %1590 = vmatmul.bf16.gmra.mxu0 %v1177
  %v1591 = vpop.f32.mrf.mxu0
  %v1592 = vadd.f32 %v1033, %v1591
  %v1593 = vpop.f32.mrf.mxu0
  %v1594 = vadd.f32 %v1033, %v1593
  %1595 = vmatmul.bf16.gmra.mxu0 %v1178
  %v1596 = vpop.f32.mrf.mxu0
  %v1597 = vadd.f32 %v1033, %v1596
  %v1598 = vpop.f32.mrf.mxu0
  %v1599 = vadd.f32 %v1033, %v1598
  %1600 = vmatmul.bf16.gmra.mxu0 %v1179
  %v1601 = vpop.f32.mrf.mxu0
  %v1602 = vadd.f32 %v1033, %v1601
  %v1603 = vpop.f32.mrf.mxu0
  %v1604 = vadd.f32 %v1033, %v1603
  %1605 = vmatmul.bf16.gmra.mxu0 %v1180
  %v1606 = vpop.f32.mrf.mxu0
  %v1607 = vadd.f32 %v1033, %v1606
  %v1608 = vpop.f32.mrf.mxu0
  %v1609 = vadd.f32 %v1033, %v1608
  %1610 = vmatmul.bf16.gmra.mxu0 %v1181
  %v1611 = vpop.f32.mrf.mxu0
  %v1612 = vadd.f32 %v1033, %v1611
  %v1613 = vpop.f32.mrf.mxu0
  %v1614 = vadd.f32 %v1033, %v1613
  %1615 = vmatmul.bf16.gmra.mxu0 %v1182
  %v1616 = vpop.f32.mrf.mxu0
  %v1617 = vadd.f32 %v1033, %v1616
  %v1618 = vpop.f32.mrf.mxu0
  %v1619 = vadd.f32 %v1033, %v1618
  %1620 = vmatmul.bf16.gmra.mxu0 %v1183
  %v1621 = vpop.f32.mrf.mxu0
  %v1622 = vadd.f32 %v1033, %v1621
  %v1623 = vpop.f32.mrf.mxu0
  %v1624 = vadd.f32 %v1033, %v1623
  %1625 = vmatmul.bf16.gmra.mxu0 %v1184
  %v1626 = vpop.f32.mrf.mxu0
  %v1627 = vadd.f32 %v1033, %v1626
  %v1628 = vpop.f32.mrf.mxu0
  %v1629 = vadd.f32 %v1033, %v1628
  %1630 = vmatmul.bf16.gmra.mxu0 %v1185
  %v1631 = vpop.f32.mrf.mxu0
  %v1632 = vadd.f32 %v1033, %v1631
  %v1633 = vpop.f32.mrf.mxu0
  %v1634 = vadd.f32 %v1033, %v1633
  %1635 = vmatmul.bf16.gmra.mxu0 %v1186
  %v1636 = vpop.f32.mrf.mxu0
  %v1637 = vadd.f32 %v1033, %v1636
  %v1638 = vpop.f32.mrf.mxu0
  %v1639 = vadd.f32 %v1033, %v1638
  %1640 = vmatmul.bf16.gmra.mxu0 %v1187
  %v1641 = vpop.f32.mrf.mxu0
  %v1642 = vadd.f32 %v1033, %v1641
  %v1643 = vpop.f32.mrf.mxu0
  %v1644 = vadd.f32 %v1033, %v1643
  %1645 = vmatmul.bf16.gmra.mxu0 %v1188
  %v1646 = vpop.f32.mrf.mxu0
  %v1647 = vadd.f32 %v1033, %v1646
  %v1648 = vpop.f32.mrf.mxu0
  %v1649 = vadd.f32 %v1033, %v1648
  %1650 = vmatmul.bf16.gmra.mxu0 %v1189
  %v1651 = vpop.f32.mrf.mxu0
  %v1652 = vadd.f32 %v1033, %v1651
  %v1653 = vpop.f32.mrf.mxu0
  %v1654 = vadd.f32 %v1033, %v1653
  %1655 = vmatmul.bf16.gmra.mxu0 %v1190
  %v1656 = vpop.f32.mrf.mxu0
  %v1657 = vadd.f32 %v1033, %v1656
  %v1658 = vpop.f32.mrf.mxu0
  %v1659 = vadd.f32 %v1033, %v1658
  %1660 = vmatmul.bf16.gmra.mxu0 %v1191
  %v1661 = vpop.f32.mrf.mxu0
  %v1662 = vadd.f32 %v1033, %v1661
  %v1663 = vpop.f32.mrf.mxu0
  %v1664 = vadd.f32 %v1033, %v1663
  %1665 = vmatmul.bf16.gmra.mxu0 %v1192
  %v1666 = vpop.f32.mrf.mxu0
  %v1667 = vadd.f32 %v1033, %v1666
  %v1668 = vpop.f32.mrf.mxu0
  %v1669 = vadd.f32 %v1033, %v1668
  %1670 = vmatmul.bf16.gmra.mxu0 %v1193
  %v1671 = vpop.f32.mrf.mxu0
  %v1672 = vadd.f32 %v1033, %v1671
  %v1673 = vpop.f32.mrf.mxu0
  %v1674 = vadd.f32 %v1033, %v1673
  %1675 = vmatmul.bf16.gmra.mxu0 %v1194
  %v1676 = vpop.f32.mrf.mxu0
  %v1677 = vadd.f32 %v1033, %v1676
  %v1678 = vpop.f32.mrf.mxu0
  %v1679 = vadd.f32 %v1033, %v1678
  %1680 = vmatmul.bf16.gmra.mxu0 %v1195
  %v1681 = vpop.f32.mrf.mxu0
  %v1682 = vadd.f32 %v1033, %v1681
  %v1683 = vpop.f32.mrf.mxu0
  %v1684 = vadd.f32 %v1033, %v1683
  %1685 = vmatmul.bf16.gmra.mxu0 %v1196
  %v1686 = vpop.f32.mrf.mxu0
  %v1687 = vadd.f32 %v1033, %v1686
  %v1688 = vpop.f32.mrf.mxu0
  %v1689 = vadd.f32 %v1033, %v1688
  %1690 = vmatmul.bf16.gmra.mxu0 %v1197
  %v1691 = vpop.f32.mrf.mxu0
  %v1692 = vadd.f32 %v1033, %v1691
  %v1693 = vpop.f32.mrf.mxu0
  %v1694 = vadd.f32 %v1033, %v1693
  %1695 = vdwg.mxu0
  %1696 = vmatpush.bf16.msra.mxu0 %v1333
  %1697 = vmatpush.bf16.msra.mxu0 %v1330
  %1698 = vmatpush.bf16.msra.mxu0 %v1327
  %1699 = vmatpush.bf16.msra.mxu0 %v1324
  %1700 = vmatpush.bf16.msra.mxu0 %v1321
  %1701 = vmatpush.bf16.msra.mxu0 %v1318
  %1702 = vmatpush.bf16.msra.mxu0 %v1315
  %1703 = vmatpush.bf16.msra.mxu0 %v1312
  %1704 = vmatmul.bf16.gmra.mxu0 %v1166
  %v1705 = vpop.f32.mrf.mxu0
  %v1706 = vadd.f32 %v1034, %v1705
  %v1707 = vpop.f32.mrf.mxu0
  %v1708 = vadd.f32 %v1034, %v1707
  %1709 = vmatmul.bf16.gmra.mxu0 %v1167
  %v1710 = vpop.f32.mrf.mxu0
  %v1711 = vadd.f32 %v1034, %v1710
  %v1712 = vpop.f32.mrf.mxu0
  %v1713 = vadd.f32 %v1034, %v1712
  %1714 = vmatmul.bf16.gmra.mxu0 %v1168
  %v1715 = vpop.f32.mrf.mxu0
  %v1716 = vadd.f32 %v1034, %v1715
  %v1717 = vpop.f32.mrf.mxu0
  %v1718 = vadd.f32 %v1034, %v1717
  %1719 = vmatmul.bf16.gmra.mxu0 %v1169
  %v1720 = vpop.f32.mrf.mxu0
  %v1721 = vadd.f32 %v1034, %v1720
  %v1722 = vpop.f32.mrf.mxu0
  %v1723 = vadd.f32 %v1034, %v1722
  %1724 = vmatmul.bf16.gmra.mxu0 %v1170
  %v1725 = vpop.f32.mrf.mxu0
  %v1726 = vadd.f32 %v1034, %v1725
  %v1727 = vpop.f32.mrf.mxu0
  %v1728 = vadd.f32 %v1034, %v1727
  %1729 = vmatmul.bf16.gmra.mxu0 %v1171
  %v1730 = vpop.f32.mrf.mxu0
  %v1731 = vadd.f32 %v1034, %v1730
  %v1732 = vpop.f32.mrf.mxu0
  %v1733 = vadd.f32 %v1034, %v1732
  %1734 = vmatmul.bf16.gmra.mxu0 %v1172
  %v1735 = vpop.f32.mrf.mxu0
  %v1736 = vadd.f32 %v1034, %v1735
  %v1737 = vpop.f32.mrf.mxu0
  %v1738 = vadd.f32 %v1034, %v1737
  %1739 = vmatmul.bf16.gmra.mxu0 %v1173
  %v1740 = vpop.f32.mrf.mxu0
  %v1741 = vadd.f32 %v1034, %v1740
  %v1742 = vpop.f32.mrf.mxu0
  %v1743 = vadd.f32 %v1034, %v1742
  %1744 = vmatmul.bf16.gmra.mxu0 %v1174
  %v1745 = vpop.f32.mrf.mxu0
  %v1746 = vadd.f32 %v1034, %v1745
  %v1747 = vpop.f32.mrf.mxu0
  %v1748 = vadd.f32 %v1034, %v1747
  %1749 = vmatmul.bf16.gmra.mxu0 %v1175
  %v1750 = vpop.f32.mrf.mxu0
  %v1751 = vadd.f32 %v1034, %v1750
  %v1752 = vpop.f32.mrf.mxu0
  %v1753 = vadd.f32 %v1034, %v1752
  %1754 = vmatmul.bf16.gmra.mxu0 %v1176
  %v1755 = vpop.f32.mrf.mxu0
  %v1756 = vadd.f32 %v1034, %v1755
  %v1757 = vpop.f32.mrf.mxu0
  %v1758 = vadd.f32 %v1034, %v1757
  %1759 = vmatmul.bf16.gmra.mxu0 %v1177
  %v1760 = vpop.f32.mrf.mxu0
  %v1761 = vadd.f32 %v1034, %v1760
  %v1762 = vpop.f32.mrf.mxu0
  %v1763 = vadd.f32 %v1034, %v1762
  %1764 = vmatmul.bf16.gmra.mxu0 %v1178
  %v1765 = vpop.f32.mrf.mxu0
  %v1766 = vadd.f32 %v1034, %v1765
  %v1767 = vpop.f32.mrf.mxu0
  %v1768 = vadd.f32 %v1034, %v1767
  %1769 = vmatmul.bf16.gmra.mxu0 %v1179
  %v1770 = vpop.f32.mrf.mxu0
  %v1771 = vadd.f32 %v1034, %v1770
  %v1772 = vpop.f32.mrf.mxu0
  %v1773 = vadd.f32 %v1034, %v1772
  %1774 = vmatmul.bf16.gmra.mxu0 %v1180
  %v1775 = vpop.f32.mrf.mxu0
  %v1776 = vadd.f32 %v1034, %v1775
  %v1777 = vpop.f32.mrf.mxu0
  %v1778 = vadd.f32 %v1034, %v1777
  %1779 = vmatmul.bf16.gmra.mxu0 %v1181
  %v1780 = vpop.f32.mrf.mxu0
  %v1781 = vadd.f32 %v1034, %v1780
  %v1782 = vpop.f32.mrf.mxu0
  %v1783 = vadd.f32 %v1034, %v1782
  %1784 = vmatmul.bf16.gmra.mxu0 %v1182
  %v1785 = vpop.f32.mrf.mxu0
  %v1786 = vadd.f32 %v1034, %v1785
  %v1787 = vpop.f32.mrf.mxu0
  %v1788 = vadd.f32 %v1034, %v1787
  %1789 = vmatmul.bf16.gmra.mxu0 %v1183
  %v1790 = vpop.f32.mrf.mxu0
  %v1791 = vadd.f32 %v1034, %v1790
  %v1792 = vpop.f32.mrf.mxu0
  %v1793 = vadd.f32 %v1034, %v1792
  %1794 = vmatmul.bf16.gmra.mxu0 %v1184
  %v1795 = vpop.f32.mrf.mxu0
  %v1796 = vadd.f32 %v1034, %v1795
  %v1797 = vpop.f32.mrf.mxu0
  %v1798 = vadd.f32 %v1034, %v1797
  %1799 = vmatmul.bf16.gmra.mxu0 %v1185
  %v1800 = vpop.f32.mrf.mxu0
  %v1801 = vadd.f32 %v1034, %v1800
  %v1802 = vpop.f32.mrf.mxu0
  %v1803 = vadd.f32 %v1034, %v1802
  %1804 = vmatmul.bf16.gmra.mxu0 %v1186
  %v1805 = vpop.f32.mrf.mxu0
  %v1806 = vadd.f32 %v1034, %v1805
  %v1807 = vpop.f32.mrf.mxu0
  %v1808 = vadd.f32 %v1034, %v1807
  %1809 = vmatmul.bf16.gmra.mxu0 %v1187
  %v1810 = vpop.f32.mrf.mxu0
  %v1811 = vadd.f32 %v1034, %v1810
  %v1812 = vpop.f32.mrf.mxu0
  %v1813 = vadd.f32 %v1034, %v1812
  %1814 = vmatmul.bf16.gmra.mxu0 %v1188
  %v1815 = vpop.f32.mrf.mxu0
  %v1816 = vadd.f32 %v1034, %v1815
  %v1817 = vpop.f32.mrf.mxu0
  %v1818 = vadd.f32 %v1034, %v1817
  %1819 = vmatmul.bf16.gmra.mxu0 %v1189
  %v1820 = vpop.f32.mrf.mxu0
  %v1821 = vadd.f32 %v1034, %v1820
  %v1822 = vpop.f32.mrf.mxu0
  %v1823 = vadd.f32 %v1034, %v1822
  %1824 = vmatmul.bf16.gmra.mxu0 %v1190
  %v1825 = vpop.f32.mrf.mxu0
  %v1826 = vadd.f32 %v1034, %v1825
  %v1827 = vpop.f32.mrf.mxu0
  %v1828 = vadd.f32 %v1034, %v1827
  %1829 = vmatmul.bf16.gmra.mxu0 %v1191
  %v1830 = vpop.f32.mrf.mxu0
  %v1831 = vadd.f32 %v1034, %v1830
  %v1832 = vpop.f32.mrf.mxu0
  %v1833 = vadd.f32 %v1034, %v1832
  %1834 = vmatmul.bf16.gmra.mxu0 %v1192
  %v1835 = vpop.f32.mrf.mxu0
  %v1836 = vadd.f32 %v1034, %v1835
  %v1837 = vpop.f32.mrf.mxu0
  %v1838 = vadd.f32 %v1034, %v1837
  %1839 = vmatmul.bf16.gmra.mxu0 %v1193
  %v1840 = vpop.f32.mrf.mxu0
  %v1841 = vadd.f32 %v1034, %v1840
  %v1842 = vpop.f32.mrf.mxu0
  %v1843 = vadd.f32 %v1034, %v1842
  %1844 = vmatmul.bf16.gmra.mxu0 %v1194
  %v1845 = vpop.f32.mrf.mxu0
  %v1846 = vadd.f32 %v1034, %v1845
  %v1847 = vpop.f32.mrf.mxu0
  %v1848 = vadd.f32 %v1034, %v1847
  %1849 = vmatmul.bf16.gmra.mxu0 %v1195
  %v1850 = vpop.f32.mrf.mxu0
  %v1851 = vadd.f32 %v1034, %v1850
  %v1852 = vpop.f32.mrf.mxu0
  %v1853 = vadd.f32 %v1034, %v1852
  %1854 = vmatmul.bf16.gmra.mxu0 %v1196
  %v1855 = vpop.f32.mrf.mxu0
  %v1856 = vadd.f32 %v1034, %v1855
  %v1857 = vpop.f32.mrf.mxu0
  %v1858 = vadd.f32 %v1034, %v1857
  %1859 = vmatmul.bf16.gmra.mxu0 %v1197
  %v1860 = vpop.f32.mrf.mxu0
  %v1861 = vadd.f32 %v1034, %v1860
  %v1862 = vpop.f32.mrf.mxu0
  %v1863 = vadd.f32 %v1034, %v1862
  %1864 = vdwg.mxu0
  %v1865 = vmax.f32 %v1368, 0.0
  %v1866 = vmax.f32 %v1537, 0.0
  %v1867 = vmax.f32 %v1706, 0.0
  %v1868 = vmax.f32 %v1370, 0.0
  %v1869 = vmax.f32 %v1539, 0.0
  %v1870 = vmax.f32 %v1708, 0.0
  %v1871 = vmax.f32 %v1373, 0.0
  %v1872 = vmax.f32 %v1542, 0.0
  %v1873 = vmax.f32 %v1711, 0.0
  %v1874 = vmax.f32 %v1375, 0.0
  %v1875 = vmax.f32 %v1544, 0.0
  %v1876 = vmax.f32 %v1713, 0.0
  %v1877 = vmax.f32 %v1378, 0.0
  %v1878 = vmax.f32 %v1547, 0.0
  %v1879 = vmax.f32 %v1716, 0.0
  %v1880 = vmax.f32 %v1380, 0.0
  %v1881 = vmax.f32 %v1549, 0.0
  %v1882 = vmax.f32 %v1718, 0.0
  %v1883 = vmax.f32 %v1383, 0.0
  %v1884 = vmax.f32 %v1552, 0.0
  %v1885 = vmax.f32 %v1721, 0.0
  %v1886 = vmax.f32 %v1385, 0.0
  %v1887 = vmax.f32 %v1554, 0.0
  %v1888 = vmax.f32 %v1723, 0.0
  %v1889 = vmax.f32 %v1388, 0.0
  %v1890 = vmax.f32 %v1557, 0.0
  %v1891 = vmax.f32 %v1726, 0.0
  %v1892 = vmax.f32 %v1390, 0.0
  %v1893 = vmax.f32 %v1559, 0.0
  %v1894 = vmax.f32 %v1728, 0.0
  %v1895 = vmax.f32 %v1393, 0.0
  %v1896 = vmax.f32 %v1562, 0.0
  %v1897 = vmax.f32 %v1731, 0.0
  %v1898 = vmax.f32 %v1395, 0.0
  %v1899 = vmax.f32 %v1564, 0.0
  %v1900 = vmax.f32 %v1733, 0.0
  %v1901 = vmax.f32 %v1398, 0.0
  %v1902 = vmax.f32 %v1567, 0.0
  %v1903 = vmax.f32 %v1736, 0.0
  %v1904 = vmax.f32 %v1400, 0.0
  %v1905 = vmax.f32 %v1569, 0.0
  %v1906 = vmax.f32 %v1738, 0.0
  %v1907 = vmax.f32 %v1403, 0.0
  %v1908 = vmax.f32 %v1572, 0.0
  %v1909 = vmax.f32 %v1741, 0.0
  %v1910 = vmax.f32 %v1405, 0.0
  %v1911 = vmax.f32 %v1574, 0.0
  %v1912 = vmax.f32 %v1743, 0.0
  %v1913 = vmax.f32 %v1408, 0.0
  %v1914 = vmax.f32 %v1577, 0.0
  %v1915 = vmax.f32 %v1746, 0.0
  %v1916 = vmax.f32 %v1410, 0.0
  %v1917 = vmax.f32 %v1579, 0.0
  %v1918 = vmax.f32 %v1748, 0.0
  %v1919 = vmax.f32 %v1413, 0.0
  %v1920 = vmax.f32 %v1582, 0.0
  %v1921 = vmax.f32 %v1751, 0.0
  %v1922 = vmax.f32 %v1415, 0.0
  %v1923 = vmax.f32 %v1584, 0.0
  %v1924 = vmax.f32 %v1753, 0.0
  %v1925 = vmax.f32 %v1418, 0.0
  %v1926 = vmax.f32 %v1587, 0.0
  %v1927 = vmax.f32 %v1756, 0.0
  %v1928 = vmax.f32 %v1420, 0.0
  %v1929 = vmax.f32 %v1589, 0.0
  %v1930 = vmax.f32 %v1758, 0.0
  %v1931 = vmax.f32 %v1423, 0.0
  %v1932 = vmax.f32 %v1592, 0.0
  %v1933 = vmax.f32 %v1761, 0.0
  %v1934 = vmax.f32 %v1425, 0.0
  %v1935 = vmax.f32 %v1594, 0.0
  %v1936 = vmax.f32 %v1763, 0.0
  %v1937 = vmax.f32 %v1428, 0.0
  %v1938 = vmax.f32 %v1597, 0.0
  %v1939 = vmax.f32 %v1766, 0.0
  %v1940 = vmax.f32 %v1430, 0.0
  %v1941 = vmax.f32 %v1599, 0.0
  %v1942 = vmax.f32 %v1768, 0.0
  %v1943 = vmax.f32 %v1433, 0.0
  %v1944 = vmax.f32 %v1602, 0.0
  %v1945 = vmax.f32 %v1771, 0.0
  %v1946 = vmax.f32 %v1435, 0.0
  %v1947 = vmax.f32 %v1604, 0.0
  %v1948 = vmax.f32 %v1773, 0.0
  %v1949 = vmax.f32 %v1438, 0.0
  %v1950 = vmax.f32 %v1607, 0.0
  %v1951 = vmax.f32 %v1776, 0.0
  %v1952 = vmax.f32 %v1440, 0.0
  %v1953 = vmax.f32 %v1609, 0.0
  %v1954 = vmax.f32 %v1778, 0.0
  %v1955 = vmax.f32 %v1443, 0.0
  %v1956 = vmax.f32 %v1612, 0.0
  %v1957 = vmax.f32 %v1781, 0.0
  %v1958 = vmax.f32 %v1445, 0.0
  %v1959 = vmax.f32 %v1614, 0.0
  %v1960 = vmax.f32 %v1783, 0.0
  %v1961 = vmax.f32 %v1448, 0.0
  %v1962 = vmax.f32 %v1617, 0.0
  %v1963 = vmax.f32 %v1786, 0.0
  %v1964 = vmax.f32 %v1450, 0.0
  %v1965 = vmax.f32 %v1619, 0.0
  %v1966 = vmax.f32 %v1788, 0.0
  %v1967 = vmax.f32 %v1453, 0.0
  %v1968 = vmax.f32 %v1622, 0.0
  %v1969 = vmax.f32 %v1791, 0.0
  %v1970 = vmax.f32 %v1455, 0.0
  %v1971 = vmax.f32 %v1624, 0.0
  %v1972 = vmax.f32 %v1793, 0.0
  %v1973 = vmax.f32 %v1458, 0.0
  %v1974 = vmax.f32 %v1627, 0.0
  %v1975 = vmax.f32 %v1796, 0.0
  %v1976 = vmax.f32 %v1460, 0.0
  %v1977 = vmax.f32 %v1629, 0.0
  %v1978 = vmax.f32 %v1798, 0.0
  %v1979 = vmax.f32 %v1463, 0.0
  %v1980 = vmax.f32 %v1632, 0.0
  %v1981 = vmax.f32 %v1801, 0.0
  %v1982 = vmax.f32 %v1465, 0.0
  %v1983 = vmax.f32 %v1634, 0.0
  %v1984 = vmax.f32 %v1803, 0.0
  %v1985 = vmax.f32 %v1468, 0.0
  %v1986 = vmax.f32 %v1637, 0.0
  %v1987 = vmax.f32 %v1806, 0.0
  %v1988 = vmax.f32 %v1470, 0.0
  %v1989 = vmax.f32 %v1639, 0.0
  %v1990 = vmax.f32 %v1808, 0.0
  %v1991 = vmax.f32 %v1473, 0.0
  %v1992 = vmax.f32 %v1642, 0.0
  %v1993 = vmax.f32 %v1811, 0.0
  %v1994 = vmax.f32 %v1475, 0.0
  %v1995 = vmax.f32 %v1644, 0.0
  %v1996 = vmax.f32 %v1813, 0.0
  %v1997 = vmax.f32 %v1478, 0.0
  %v1998 = vmax.f32 %v1647, 0.0
  %v1999 = vmax.f32 %v1816, 0.0
  %v2000 = vmax.f32 %v1480, 0.0
  %v2001 = vmax.f32 %v1649, 0.0
  %v2002 = vmax.f32 %v1818, 0.0
  %v2003 = vmax.f32 %v1483, 0.0
  %v2004 = vmax.f32 %v1652, 0.0
  %v2005 = vmax.f32 %v1821, 0.0
  %v2006 = vmax.f32 %v1485, 0.0
  %v2007 = vmax.f32 %v1654, 0.0
  %v2008 = vmax.f32 %v1823, 0.0
  %v2009 = vmax.f32 %v1488, 0.0
  %v2010 = vmax.f32 %v1657, 0.0
  %v2011 = vmax.f32 %v1826, 0.0
  %v2012 = vmax.f32 %v1490, 0.0
  %v2013 = vmax.f32 %v1659, 0.0
  %v2014 = vmax.f32 %v1828, 0.0
  %v2015 = vmax.f32 %v1493, 0.0
  %v2016 = vmax.f32 %v1662, 0.0
  %v2017 = vmax.f32 %v1831, 0.0
  %v2018 = vmax.f32 %v1495, 0.0
  %v2019 = vmax.f32 %v1664, 0.0
  %v2020 = vmax.f32 %v1833, 0.0
  %v2021 = vmax.f32 %v1498, 0.0
  %v2022 = vmax.f32 %v1667, 0.0
  %v2023 = vmax.f32 %v1836, 0.0
  %v2024 = vmax.f32 %v1500, 0.0
  %v2025 = vmax.f32 %v1669, 0.0
  %v2026 = vmax.f32 %v1838, 0.0
  %v2027 = vmax.f32 %v1503, 0.0
  %v2028 = vmax.f32 %v1672, 0.0
  %v2029 = vmax.f32 %v1841, 0.0
  %v2030 = vmax.f32 %v1505, 0.0
  %v2031 = vmax.f32 %v1674, 0.0
  %v2032 = vmax.f32 %v1843, 0.0
  %v2033 = vmax.f32 %v1508, 0.0
  %v2034 = vmax.f32 %v1677, 0.0
  %v2035 = vmax.f32 %v1846, 0.0
  %v2036 = vmax.f32 %v1510, 0.0
  %v2037 = vmax.f32 %v1679, 0.0
  %v2038 = vmax.f32 %v1848, 0.0
  %v2039 = vmax.f32 %v1513, 0.0
  %v2040 = vmax.f32 %v1682, 0.0
  %v2041 = vmax.f32 %v1851, 0.0
  %v2042 = vmax.f32 %v1515, 0.0
  %v2043 = vmax.f32 %v1684, 0.0
  %v2044 = vmax.f32 %v1853, 0.0
  %v2045 = vmax.f32 %v1518, 0.0
  %v2046 = vmax.f32 %v1687, 0.0
  %v2047 = vmax.f32 %v1856, 0.0
  %v2048 = vmax.f32 %v1520, 0.0
  %v2049 = vmax.f32 %v1689, 0.0
  %v2050 = vmax.f32 %v1858, 0.0
  %v2051 = vmax.f32 %v1523, 0.0
  %v2052 = vmax.f32 %v1692, 0.0
  %v2053 = vmax.f32 %v1861, 0.0
  %v2054 = vmax.f32 %v1525, 0.0
  %v2055 = vmax.f32 %v1694, 0.0
  %v2056 = vmax.f32 %v1863, 0.0
  %v2057 = vpack.c.bf16 %v1868, %v1865
  %v2058 = vpack.c.bf16 %v1869, %v1866
  %v2059 = vpack.c.bf16 %v1870, %v1867
  %v2060 = vpack.c.bf16 %v1874, %v1871
  %v2061 = vpack.c.bf16 %v1875, %v1872
  %v2062 = vpack.c.bf16 %v1876, %v1873
  %v2063 = vpack.c.bf16 %v1880, %v1877
  %v2064 = vpack.c.bf16 %v1881, %v1878
  %v2065 = vpack.c.bf16 %v1882, %v1879
  %v2066 = vpack.c.bf16 %v1886, %v1883
  %v2067 = vpack.c.bf16 %v1887, %v1884
  %v2068 = vpack.c.bf16 %v1888, %v1885
  %v2069 = vpack.c.bf16 %v1892, %v1889
  %v2070 = vpack.c.bf16 %v1893, %v1890
  %v2071 = vpack.c.bf16 %v1894, %v1891
  %v2072 = vpack.c.bf16 %v1898, %v1895
  %v2073 = vpack.c.bf16 %v1899, %v1896
  %v2074 = vpack.c.bf16 %v1900, %v1897
  %v2075 = vpack.c.bf16 %v1904, %v1901
  %v2076 = vpack.c.bf16 %v1905, %v1902
  %v2077 = vpack.c.bf16 %v1906, %v1903
  %v2078 = vpack.c.bf16 %v1910, %v1907
  %v2079 = vpack.c.bf16 %v1911, %v1908
  %v2080 = vpack.c.bf16 %v1912, %v1909
  %v2081 = vpack.c.bf16 %v1916, %v1913
  %v2082 = vpack.c.bf16 %v1917, %v1914
  %v2083 = vpack.c.bf16 %v1918, %v1915
  %v2084 = vpack.c.bf16 %v1922, %v1919
  %v2085 = vpack.c.bf16 %v1923, %v1920
  %v2086 = vpack.c.bf16 %v1924, %v1921
  %v2087 = vpack.c.bf16 %v1928, %v1925
  %v2088 = vpack.c.bf16 %v1929, %v1926
  %v2089 = vpack.c.bf16 %v1930, %v1927
  %v2090 = vpack.c.bf16 %v1934, %v1931
  %v2091 = vpack.c.bf16 %v1935, %v1932
  %v2092 = vpack.c.bf16 %v1936, %v1933
  %v2093 = vpack.c.bf16 %v1940, %v1937
  %v2094 = vpack.c.bf16 %v1941, %v1938
  %v2095 = vpack.c.bf16 %v1942, %v1939
  %v2096 = vpack.c.bf16 %v1946, %v1943
  %v2097 = vpack.c.bf16 %v1947, %v1944
  %v2098 = vpack.c.bf16 %v1948, %v1945
  %v2099 = vpack.c.bf16 %v1952, %v1949
  %v2100 = vpack.c.bf16 %v1953, %v1950
  %v2101 = vpack.c.bf16 %v1954, %v1951
  %v2102 = vpack.c.bf16 %v1958, %v1955
  %v2103 = vpack.c.bf16 %v1959, %v1956
  %v2104 = vpack.c.bf16 %v1960, %v1957
  %v2105 = vpack.c.bf16 %v1964, %v1961
  %v2106 = vpack.c.bf16 %v1965, %v1962
  %v2107 = vpack.c.bf16 %v1966, %v1963
  %v2108 = vpack.c.bf16 %v1970, %v1967
  %v2109 = vpack.c.bf16 %v1971, %v1968
  %v2110 = vpack.c.bf16 %v1972, %v1969
  %v2111 = vpack.c.bf16 %v1976, %v1973
  %v2112 = vpack.c.bf16 %v1977, %v1974
  %v2113 = vpack.c.bf16 %v1978, %v1975
  %v2114 = vpack.c.bf16 %v1982, %v1979
  %v2115 = vpack.c.bf16 %v1983, %v1980
  %v2116 = vpack.c.bf16 %v1984, %v1981
  %v2117 = vpack.c.bf16 %v1988, %v1985
  %v2118 = vpack.c.bf16 %v1989, %v1986
  %v2119 = vpack.c.bf16 %v1990, %v1987
  %v2120 = vpack.c.bf16 %v1994, %v1991
  %v2121 = vpack.c.bf16 %v1995, %v1992
  %v2122 = vpack.c.bf16 %v1996, %v1993
  %v2123 = vpack.c.bf16 %v2000, %v1997
  %v2124 = vpack.c.bf16 %v2001, %v1998
  %v2125 = vpack.c.bf16 %v2002, %v1999
  %v2126 = vpack.c.bf16 %v2006, %v2003
  %v2127 = vpack.c.bf16 %v2007, %v2004
  %v2128 = vpack.c.bf16 %v2008, %v2005
  %v2129 = vpack.c.bf16 %v2012, %v2009
  %v2130 = vpack.c.bf16 %v2013, %v2010
  %v2131 = vpack.c.bf16 %v2014, %v2011
  %v2132 = vpack.c.bf16 %v2018, %v2015
  %v2133 = vpack.c.bf16 %v2019, %v2016
  %v2134 = vpack.c.bf16 %v2020, %v2017
  %v2135 = vpack.c.bf16 %v2024, %v2021
  %v2136 = vpack.c.bf16 %v2025, %v2022
  %v2137 = vpack.c.bf16 %v2026, %v2023
  %v2138 = vpack.c.bf16 %v2030, %v2027
  %v2139 = vpack.c.bf16 %v2031, %v2028
  %v2140 = vpack.c.bf16 %v2032, %v2029
  %v2141 = vpack.c.bf16 %v2036, %v2033
  %v2142 = vpack.c.bf16 %v2037, %v2034
  %v2143 = vpack.c.bf16 %v2038, %v2035
  %v2144 = vpack.c.bf16 %v2042, %v2039
  %v2145 = vpack.c.bf16 %v2043, %v2040
  %v2146 = vpack.c.bf16 %v2044, %v2041
  %v2147 = vpack.c.bf16 %v2048, %v2045
  %v2148 = vpack.c.bf16 %v2049, %v2046
  %v2149 = vpack.c.bf16 %v2050, %v2047
  %v2150 = vpack.c.bf16 %v2054, %v2051
  %v2151 = vpack.c.bf16 %v2055, %v2052
  %v2152 = vpack.c.bf16 %v2056, %v2053
  %v2153 = vld [vmem:[%s4] sm:$0xff]
  %v2154 = vld [vmem:[%s4 + $0x8] sm:$0xff]
  %v2155 = vld [vmem:[%s4 + $0x10] sm:$0xff]
  %v2156 = vld [vmem:[%s4 + $0x18] sm:$0xff]
  %v2157 = vld [vmem:[%s4 + $0x20] sm:$0xff]
  %v2158 = vld [vmem:[%s4 + $0x28] sm:$0xff]
  %v2159 = vld [vmem:[%s4 + $0x30] sm:$0xff]
  %v2160 = vld [vmem:[%s4 + $0x38] sm:$0xff]
  %v2161 = vld [vmem:[%s4 + $0x40] sm:$0xff]
  %v2162 = vld [vmem:[%s4 + $0x48] sm:$0xff]
  %v2163 = vld [vmem:[%s4 + $0x50] sm:$0xff]
  %v2164 = vld [vmem:[%s4 + $0x58] sm:$0xff]
  %v2165 = vld [vmem:[%s4 + $0x60] sm:$0xff]
  %v2166 = vld [vmem:[%s4 + $0x68] sm:$0xff]
  %v2167 = vld [vmem:[%s4 + $0x70] sm:$0xff]
  %v2168 = vld [vmem:[%s4 + $0x78] sm:$0xff]
  %v2169 = vld [vmem:[%s4 + $0x80] sm:$0xff]
  %v2170 = vld [vmem:[%s4 + $0x88] sm:$0xff]
  %v2171 = vld [vmem:[%s4 + $0x90] sm:$0xff]
  %v2172 = vld [vmem:[%s4 + $0x98] sm:$0xff]
  %v2173 = vld [vmem:[%s4 + $0xa0] sm:$0xff]
  %v2174 = vld [vmem:[%s4 + $0xa8] sm:$0xff]
  %v2175 = vld [vmem:[%s4 + $0xb0] sm:$0xff]
  %v2176 = vld [vmem:[%s4 + $0xb8] sm:$0xff]
  %v2177 = vld [vmem:[%s4 + $0xc0] sm:$0xff]
  %v2178 = vld [vmem:[%s4 + $0xc8] sm:$0xff]
  %v2179 = vld [vmem:[%s4 + $0xd0] sm:$0xff]
  %v2180 = vld [vmem:[%s4 + $0xd8] sm:$0xff]
  %v2181 = vld [vmem:[%s4 + $0xe0] sm:$0xff]
  %v2182 = vld [vmem:[%s4 + $0xe8] sm:$0xff]
  %v2183 = vld [vmem:[%s4 + $0xf0] sm:$0xff]
  %v2184 = vld [vmem:[%s4 + $0xf8] sm:$0xff]
  %v2185 = vld [vmem:[%s4 + $0x100] sm:$0xff]
  %v2186 = vld [vmem:[%s4 + $0x108] sm:$0xff]
  %v2187 = vld [vmem:[%s4 + $0x110] sm:$0xff]
  %v2188 = vld [vmem:[%s4 + $0x118] sm:$0xff]
  %v2189 = vld [vmem:[%s4 + $0x120] sm:$0xff]
  %v2190 = vld [vmem:[%s4 + $0x128] sm:$0xff]
  %v2191 = vld [vmem:[%s4 + $0x130] sm:$0xff]
  %v2192 = vld [vmem:[%s4 + $0x138] sm:$0xff]
  %v2193 = vld [vmem:[%s4 + $0x140] sm:$0xff]
  %v2194 = vld [vmem:[%s4 + $0x148] sm:$0xff]
  %v2195 = vld [vmem:[%s4 + $0x150] sm:$0xff]
  %v2196 = vld [vmem:[%s4 + $0x158] sm:$0xff]
  %v2197 = vld [vmem:[%s4 + $0x160] sm:$0xff]
  %v2198 = vld [vmem:[%s4 + $0x168] sm:$0xff]
  %v2199 = vld [vmem:[%s4 + $0x170] sm:$0xff]
  %v2200 = vld [vmem:[%s4 + $0x178] sm:$0xff]
  %v2201 = vld [vmem:[%s4 + $0x180] sm:$0xff]
  %v2202 = vld [vmem:[%s4 + $0x188] sm:$0xff]
  %v2203 = vld [vmem:[%s4 + $0x190] sm:$0xff]
  %v2204 = vld [vmem:[%s4 + $0x198] sm:$0xff]
  %v2205 = vld [vmem:[%s4 + $0x1a0] sm:$0xff]
  %v2206 = vld [vmem:[%s4 + $0x1a8] sm:$0xff]
  %v2207 = vld [vmem:[%s4 + $0x1b0] sm:$0xff]
  %v2208 = vld [vmem:[%s4 + $0x1b8] sm:$0xff]
  %v2209 = vld [vmem:[%s4 + $0x1c0] sm:$0xff]
  %v2210 = vld [vmem:[%s4 + $0x1c8] sm:$0xff]
  %v2211 = vld [vmem:[%s4 + $0x1d0] sm:$0xff]
  %v2212 = vld [vmem:[%s4 + $0x1d8] sm:$0xff]
  %v2213 = vld [vmem:[%s4 + $0x1e0] sm:$0xff]
  %v2214 = vld [vmem:[%s4 + $0x1e8] sm:$0xff]
  %v2215 = vld [vmem:[%s4 + $0x1f0] sm:$0xff]
  %v2216 = vld [vmem:[%s4 + $0x1f8] sm:$0xff]
  %v2217 = vld [vmem:[%s4 + $0x200] sm:$0xff]
  %v2218 = vld [vmem:[%s4 + $0x208] sm:$0xff]
  %v2219 = vld [vmem:[%s4 + $0x210] sm:$0xff]
  %v2220 = vld [vmem:[%s4 + $0x218] sm:$0xff]
  %v2221 = vld [vmem:[%s4 + $0x220] sm:$0xff]
  %v2222 = vld [vmem:[%s4 + $0x228] sm:$0xff]
  %v2223 = vld [vmem:[%s4 + $0x230] sm:$0xff]
  %v2224 = vld [vmem:[%s4 + $0x238] sm:$0xff]
  %v2225 = vld [vmem:[%s5] sm:$0xf]
  %v2227 = vperm.slane %v2225, 0
  %v2228 = vperm.slane %v2225, 1
  %v2229 = vperm.slane %v2225, 2
  %v2230 = vperm.slane %v2225, 3
  %v2307 = vunpack.c.l.b16 %v2153
  %v2308 = vunpack.c.h.b16 %v2153
  %v2309 = vunpack.c.l.b16 %v2154
  %v2310 = vunpack.c.h.b16 %v2154
  %v2311 = vunpack.c.l.b16 %v2155
  %v2312 = vunpack.c.h.b16 %v2155
  %v2313 = vunpack.c.l.b16 %v2156
  %v2314 = vunpack.c.h.b16 %v2156
  %v2315 = vunpack.c.l.b16 %v2157
  %v2316 = vunpack.c.h.b16 %v2157
  %v2317 = vunpack.c.l.b16 %v2158
  %v2318 = vunpack.c.h.b16 %v2158
  %v2319 = vunpack.c.l.b16 %v2159
  %v2320 = vunpack.c.h.b16 %v2159
  %v2321 = vunpack.c.l.b16 %v2160
  %v2322 = vunpack.c.h.b16 %v2160
  %v2323 = vunpack.c.l.b16 %v2161
  %v2324 = vunpack.c.h.b16 %v2161
  %v2325 = vunpack.c.l.b16 %v2162
  %v2326 = vunpack.c.h.b16 %v2162
  %v2327 = vunpack.c.l.b16 %v2163
  %v2328 = vunpack.c.h.b16 %v2163
  %v2329 = vunpack.c.l.b16 %v2164
  %v2330 = vunpack.c.h.b16 %v2164
  %v2331 = vunpack.c.l.b16 %v2165
  %v2332 = vunpack.c.h.b16 %v2165
  %v2333 = vunpack.c.l.b16 %v2166
  %v2334 = vunpack.c.h.b16 %v2166
  %v2335 = vunpack.c.l.b16 %v2167
  %v2336 = vunpack.c.h.b16 %v2167
  %v2337 = vunpack.c.l.b16 %v2168
  %v2338 = vunpack.c.h.b16 %v2168
  %v2339 = vunpack.c.l.b16 %v2169
  %v2340 = vunpack.c.h.b16 %v2169
  %v2341 = vunpack.c.l.b16 %v2170
  %v2342 = vunpack.c.h.b16 %v2170
  %v2343 = vunpack.c.l.b16 %v2171
  %v2344 = vunpack.c.h.b16 %v2171
  %v2345 = vunpack.c.l.b16 %v2172
  %v2346 = vunpack.c.h.b16 %v2172
  %v2347 = vunpack.c.l.b16 %v2173
  %v2348 = vunpack.c.h.b16 %v2173
  %v2349 = vunpack.c.l.b16 %v2174
  %v2350 = vunpack.c.h.b16 %v2174
  %v2351 = vunpack.c.l.b16 %v2175
  %v2352 = vunpack.c.h.b16 %v2175
  %v2353 = vunpack.c.l.b16 %v2176
  %v2354 = vunpack.c.h.b16 %v2176
  %v2355 = vunpack.c.l.b16 %v2177
  %v2356 = vunpack.c.h.b16 %v2177
  %v2357 = vunpack.c.l.b16 %v2178
  %v2358 = vunpack.c.h.b16 %v2178
  %v2359 = vunpack.c.l.b16 %v2179
  %v2360 = vunpack.c.h.b16 %v2179
  %v2361 = vunpack.c.l.b16 %v2180
  %v2362 = vunpack.c.h.b16 %v2180
  %v2363 = vunpack.c.l.b16 %v2181
  %v2364 = vunpack.c.h.b16 %v2181
  %v2365 = vunpack.c.l.b16 %v2182
  %v2366 = vunpack.c.h.b16 %v2182
  %v2367 = vunpack.c.l.b16 %v2183
  %v2368 = vunpack.c.h.b16 %v2183
  %v2369 = vunpack.c.l.b16 %v2184
  %v2370 = vunpack.c.h.b16 %v2184
  %v2371 = vunpack.c.l.b16 %v2185
  %v2372 = vunpack.c.h.b16 %v2185
  %v2373 = vunpack.c.l.b16 %v2186
  %v2374 = vunpack.c.h.b16 %v2186
  %v2375 = vunpack.c.l.b16 %v2187
  %v2376 = vunpack.c.h.b16 %v2187
  %v2377 = vunpack.c.l.b16 %v2188
  %v2378 = vunpack.c.h.b16 %v2188
  %v2379 = vunpack.c.l.b16 %v2189
  %v2380 = vunpack.c.h.b16 %v2189
  %v2381 = vunpack.c.l.b16 %v2190
  %v2382 = vunpack.c.h.b16 %v2190
  %v2383 = vunpack.c.l.b16 %v2191
  %v2384 = vunpack.c.h.b16 %v2191
  %v2385 = vunpack.c.l.b16 %v2192
  %v2386 = vunpack.c.h.b16 %v2192
  %v2387 = vunpack.c.l.b16 %v2193
  %v2388 = vunpack.c.h.b16 %v2193
  %v2389 = vunpack.c.l.b16 %v2194
  %v2390 = vunpack.c.h.b16 %v2194
  %v2391 = vunpack.c.l.b16 %v2195
  %v2392 = vunpack.c.h.b16 %v2195
  %v2393 = vunpack.c.l.b16 %v2196
  %v2394 = vunpack.c.h.b16 %v2196
  %v2395 = vunpack.c.l.b16 %v2197
  %v2396 = vunpack.c.h.b16 %v2197
  %v2397 = vunpack.c.l.b16 %v2198
  %v2398 = vunpack.c.h.b16 %v2198
  %v2399 = vunpack.c.l.b16 %v2199
  %v2400 = vunpack.c.h.b16 %v2199
  %v2401 = vunpack.c.l.b16 %v2200
  %v2402 = vunpack.c.h.b16 %v2200
  %v2403 = vunpack.c.l.b16 %v2201
  %v2404 = vunpack.c.h.b16 %v2201
  %v2405 = vunpack.c.l.b16 %v2202
  %v2406 = vunpack.c.h.b16 %v2202
  %v2407 = vunpack.c.l.b16 %v2203
  %v2408 = vunpack.c.h.b16 %v2203
  %v2409 = vunpack.c.l.b16 %v2204
  %v2410 = vunpack.c.h.b16 %v2204
  %v2411 = vunpack.c.l.b16 %v2205
  %v2412 = vunpack.c.h.b16 %v2205
  %v2413 = vunpack.c.l.b16 %v2206
  %v2414 = vunpack.c.h.b16 %v2206
  %v2415 = vunpack.c.l.b16 %v2207
  %v2416 = vunpack.c.h.b16 %v2207
  %v2417 = vunpack.c.l.b16 %v2208
  %v2418 = vunpack.c.h.b16 %v2208
  %v2419 = vunpack.c.l.b16 %v2209
  %v2420 = vunpack.c.h.b16 %v2209
  %v2421 = vunpack.c.l.b16 %v2210
  %v2422 = vunpack.c.h.b16 %v2210
  %v2423 = vunpack.c.l.b16 %v2211
  %v2424 = vunpack.c.h.b16 %v2211
  %v2425 = vunpack.c.l.b16 %v2212
  %v2426 = vunpack.c.h.b16 %v2212
  %v2427 = vunpack.c.l.b16 %v2213
  %v2428 = vunpack.c.h.b16 %v2213
  %v2429 = vunpack.c.l.b16 %v2214
  %v2430 = vunpack.c.h.b16 %v2214
  %v2431 = vunpack.c.l.b16 %v2215
  %v2432 = vunpack.c.h.b16 %v2215
  %v2433 = vunpack.c.l.b16 %v2216
  %v2434 = vunpack.c.h.b16 %v2216
  %v2435 = vunpack.c.l.b16 %v2217
  %v2436 = vunpack.c.h.b16 %v2217
  %v2437 = vunpack.c.l.b16 %v2218
  %v2438 = vunpack.c.h.b16 %v2218
  %v2439 = vunpack.c.l.b16 %v2219
  %v2440 = vunpack.c.h.b16 %v2219
  %v2441 = vunpack.c.l.b16 %v2220
  %v2442 = vunpack.c.h.b16 %v2220
  %v2443 = vunpack.c.l.b16 %v2221
  %v2444 = vunpack.c.h.b16 %v2221
  %v2445 = vunpack.c.l.b16 %v2222
  %v2446 = vunpack.c.h.b16 %v2222
  %v2447 = vunpack.c.l.b16 %v2223
  %v2448 = vunpack.c.h.b16 %v2223
  %v2449 = vunpack.c.l.b16 %v2224
  %v2450 = vunpack.c.h.b16 %v2224
  %v2451 = vpack.c.b16 %v2311, %v2307
  %v2452 = vpack.c.b16 %v2312, %v2308
  %v2453 = vpack.c.b16 %v2313, %v2309
  %v2454 = vpack.c.b16 %v2314, %v2310
  %v2455 = vpack.c.b16 %v2319, %v2315
  %v2456 = vpack.c.b16 %v2320, %v2316
  %v2457 = vpack.c.b16 %v2321, %v2317
  %v2458 = vpack.c.b16 %v2322, %v2318
  %v2459 = vpack.c.b16 %v2327, %v2323
  %v2460 = vpack.c.b16 %v2328, %v2324
  %v2461 = vpack.c.b16 %v2329, %v2325
  %v2462 = vpack.c.b16 %v2330, %v2326
  %v2463 = vpack.c.b16 %v2335, %v2331
  %v2464 = vpack.c.b16 %v2336, %v2332
  %v2465 = vpack.c.b16 %v2337, %v2333
  %v2466 = vpack.c.b16 %v2338, %v2334
  %v2467 = vpack.c.b16 %v2343, %v2339
  %v2468 = vpack.c.b16 %v2344, %v2340
  %v2469 = vpack.c.b16 %v2345, %v2341
  %v2470 = vpack.c.b16 %v2346, %v2342
  %v2471 = vpack.c.b16 %v2351, %v2347
  %v2472 = vpack.c.b16 %v2352, %v2348
  %v2473 = vpack.c.b16 %v2353, %v2349
  %v2474 = vpack.c.b16 %v2354, %v2350
  %v2475 = vpack.c.b16 %v2359, %v2355
  %v2476 = vpack.c.b16 %v2360, %v2356
  %v2477 = vpack.c.b16 %v2361, %v2357
  %v2478 = vpack.c.b16 %v2362, %v2358
  %v2479 = vpack.c.b16 %v2367, %v2363
  %v2480 = vpack.c.b16 %v2368, %v2364
  %v2481 = vpack.c.b16 %v2369, %v2365
  %v2482 = vpack.c.b16 %v2370, %v2366
  %v2483 = vpack.c.b16 %v2375, %v2371
  %v2484 = vpack.c.b16 %v2376, %v2372
  %v2485 = vpack.c.b16 %v2377, %v2373
  %v2486 = vpack.c.b16 %v2378, %v2374
  %v2487 = vpack.c.b16 %v2383, %v2379
  %v2488 = vpack.c.b16 %v2384, %v2380
  %v2489 = vpack.c.b16 %v2385, %v2381
  %v2490 = vpack.c.b16 %v2386, %v2382
  %v2491 = vpack.c.b16 %v2391, %v2387
  %v2492 = vpack.c.b16 %v2392, %v2388
  %v2493 = vpack.c.b16 %v2393, %v2389
  %v2494 = vpack.c.b16 %v2394, %v2390
  %v2495 = vpack.c.b16 %v2399, %v2395
  %v2496 = vpack.c.b16 %v2400, %v2396
  %v2497 = vpack.c.b16 %v2401, %v2397
  %v2498 = vpack.c.b16 %v2402, %v2398
  %v2499 = vpack.c.b16 %v2407, %v2403
  %v2500 = vpack.c.b16 %v2408, %v2404
  %v2501 = vpack.c.b16 %v2409, %v2405
  %v2502 = vpack.c.b16 %v2410, %v2406
  %v2503 = vpack.c.b16 %v2415, %v2411
  %v2504 = vpack.c.b16 %v2416, %v2412
  %v2505 = vpack.c.b16 %v2417, %v2413
  %v2506 = vpack.c.b16 %v2418, %v2414
  %v2507 = vpack.c.b16 %v2423, %v2419
  %v2508 = vpack.c.b16 %v2424, %v2420
  %v2509 = vpack.c.b16 %v2425, %v2421
  %v2510 = vpack.c.b16 %v2426, %v2422
  %v2511 = vpack.c.b16 %v2431, %v2427
  %v2512 = vpack.c.b16 %v2432, %v2428
  %v2513 = vpack.c.b16 %v2433, %v2429
  %v2514 = vpack.c.b16 %v2434, %v2430
  %v2515 = vpack.c.b16 %v2439, %v2435
  %v2516 = vpack.c.b16 %v2440, %v2436
  %v2517 = vpack.c.b16 %v2441, %v2437
  %v2518 = vpack.c.b16 %v2442, %v2438
  %v2519 = vpack.c.b16 %v2447, %v2443
  %v2520 = vpack.c.b16 %v2448, %v2444
  %v2521 = vpack.c.b16 %v2449, %v2445
  %v2522 = vpack.c.b16 %v2450, %v2446
  %vm2595 = vcmask 261120
  %v2597 = vsel %vm2595, %v2059, 0
  %v2600 = vsel %vm2595, %v2062, 0
  %v2603 = vsel %vm2595, %v2065, 0
  %v2606 = vsel %vm2595, %v2068, 0
  %v2609 = vsel %vm2595, %v2071, 0
  %v2612 = vsel %vm2595, %v2074, 0
  %v2615 = vsel %vm2595, %v2077, 0
  %v2618 = vsel %vm2595, %v2080, 0
  %v2621 = vsel %vm2595, %v2083, 0
  %v2624 = vsel %vm2595, %v2086, 0
  %v2627 = vsel %vm2595, %v2089, 0
  %v2630 = vsel %vm2595, %v2092, 0
  %v2633 = vsel %vm2595, %v2095, 0
  %v2636 = vsel %vm2595, %v2098, 0
  %v2639 = vsel %vm2595, %v2101, 0
  %v2642 = vsel %vm2595, %v2104, 0
  %v2645 = vsel %vm2595, %v2107, 0
  %v2648 = vsel %vm2595, %v2110, 0
  %v2651 = vsel %vm2595, %v2113, 0
  %v2654 = vsel %vm2595, %v2116, 0
  %v2657 = vsel %vm2595, %v2119, 0
  %v2660 = vsel %vm2595, %v2122, 0
  %v2663 = vsel %vm2595, %v2125, 0
  %v2666 = vsel %vm2595, %v2128, 0
  %v2669 = vsel %vm2595, %v2131, 0
  %v2672 = vsel %vm2595, %v2134, 0
  %v2675 = vsel %vm2595, %v2137, 0
  %v2678 = vsel %vm2595, %v2140, 0
  %v2681 = vsel %vm2595, %v2143, 0
  %v2684 = vsel %vm2595, %v2146, 0
  %v2687 = vsel %vm2595, %v2149, 0
  %v2690 = vsel %vm2595, %v2152, 0
  %2692 = vmatpush.bf16.msra.mxu0 %v2479
  %2693 = vmatpush.bf16.msra.mxu0 %v2475
  %2694 = vmatpush.bf16.msra.mxu0 %v2471
  %2695 = vmatpush.bf16.msra.mxu0 %v2467
  %2696 = vmatpush.bf16.msra.mxu0 %v2463
  %2697 = vmatpush.bf16.msra.mxu0 %v2459
  %2698 = vmatpush.bf16.msra.mxu0 %v2455
  %2699 = vmatpush.bf16.msra.mxu0 %v2451
  %2700 = vmatmul.bf16.gmra.mxu0 %v2057
  %v2701 = vpop.f32.mrf.mxu0
  %v2702 = vadd.f32 %v2227, %v2701
  %v2703 = vpop.f32.mrf.mxu0
  %v2704 = vadd.f32 %v2227, %v2703
  %2705 = vmatmul.bf16.gmra.mxu0 %v2060
  %v2706 = vpop.f32.mrf.mxu0
  %v2707 = vadd.f32 %v2227, %v2706
  %v2708 = vpop.f32.mrf.mxu0
  %v2709 = vadd.f32 %v2227, %v2708
  %2710 = vmatmul.bf16.gmra.mxu0 %v2063
  %v2711 = vpop.f32.mrf.mxu0
  %v2712 = vadd.f32 %v2227, %v2711
  %v2713 = vpop.f32.mrf.mxu0
  %v2714 = vadd.f32 %v2227, %v2713
  %2715 = vmatmul.bf16.gmra.mxu0 %v2066
  %v2716 = vpop.f32.mrf.mxu0
  %v2717 = vadd.f32 %v2227, %v2716
  %v2718 = vpop.f32.mrf.mxu0
  %v2719 = vadd.f32 %v2227, %v2718
  %2720 = vmatmul.bf16.gmra.mxu0 %v2069
  %v2721 = vpop.f32.mrf.mxu0
  %v2722 = vadd.f32 %v2227, %v2721
  %v2723 = vpop.f32.mrf.mxu0
  %v2724 = vadd.f32 %v2227, %v2723
  %2725 = vmatmul.bf16.gmra.mxu0 %v2072
  %v2726 = vpop.f32.mrf.mxu0
  %v2727 = vadd.f32 %v2227, %v2726
  %v2728 = vpop.f32.mrf.mxu0
  %v2729 = vadd.f32 %v2227, %v2728
  %2730 = vmatmul.bf16.gmra.mxu0 %v2075
  %v2731 = vpop.f32.mrf.mxu0
  %v2732 = vadd.f32 %v2227, %v2731
  %v2733 = vpop.f32.mrf.mxu0
  %v2734 = vadd.f32 %v2227, %v2733
  %2735 = vmatmul.bf16.gmra.mxu0 %v2078
  %v2736 = vpop.f32.mrf.mxu0
  %v2737 = vadd.f32 %v2227, %v2736
  %v2738 = vpop.f32.mrf.mxu0
  %v2739 = vadd.f32 %v2227, %v2738
  %2740 = vmatmul.bf16.gmra.mxu0 %v2081
  %v2741 = vpop.f32.mrf.mxu0
  %v2742 = vadd.f32 %v2227, %v2741
  %v2743 = vpop.f32.mrf.mxu0
  %v2744 = vadd.f32 %v2227, %v2743
  %2745 = vmatmul.bf16.gmra.mxu0 %v2084
  %v2746 = vpop.f32.mrf.mxu0
  %v2747 = vadd.f32 %v2227, %v2746
  %v2748 = vpop.f32.mrf.mxu0
  %v2749 = vadd.f32 %v2227, %v2748
  %2750 = vmatmul.bf16.gmra.mxu0 %v2087
  %v2751 = vpop.f32.mrf.mxu0
  %v2752 = vadd.f32 %v2227, %v2751
  %v2753 = vpop.f32.mrf.mxu0
  %v2754 = vadd.f32 %v2227, %v2753
  %2755 = vmatmul.bf16.gmra.mxu0 %v2090
  %v2756 = vpop.f32.mrf.mxu0
  %v2757 = vadd.f32 %v2227, %v2756
  %v2758 = vpop.f32.mrf.mxu0
  %v2759 = vadd.f32 %v2227, %v2758
  %2760 = vmatmul.bf16.gmra.mxu0 %v2093
  %v2761 = vpop.f32.mrf.mxu0
  %v2762 = vadd.f32 %v2227, %v2761
  %v2763 = vpop.f32.mrf.mxu0
  %v2764 = vadd.f32 %v2227, %v2763
  %2765 = vmatmul.bf16.gmra.mxu0 %v2096
  %v2766 = vpop.f32.mrf.mxu0
  %v2767 = vadd.f32 %v2227, %v2766
  %v2768 = vpop.f32.mrf.mxu0
  %v2769 = vadd.f32 %v2227, %v2768
  %2770 = vmatmul.bf16.gmra.mxu0 %v2099
  %v2771 = vpop.f32.mrf.mxu0
  %v2772 = vadd.f32 %v2227, %v2771
  %v2773 = vpop.f32.mrf.mxu0
  %v2774 = vadd.f32 %v2227, %v2773
  %2775 = vmatmul.bf16.gmra.mxu0 %v2102
  %v2776 = vpop.f32.mrf.mxu0
  %v2777 = vadd.f32 %v2227, %v2776
  %v2778 = vpop.f32.mrf.mxu0
  %v2779 = vadd.f32 %v2227, %v2778
  %2780 = vmatmul.bf16.gmra.mxu0 %v2105
  %v2781 = vpop.f32.mrf.mxu0
  %v2782 = vadd.f32 %v2227, %v2781
  %v2783 = vpop.f32.mrf.mxu0
  %v2784 = vadd.f32 %v2227, %v2783
  %2785 = vmatmul.bf16.gmra.mxu0 %v2108
  %v2786 = vpop.f32.mrf.mxu0
  %v2787 = vadd.f32 %v2227, %v2786
  %v2788 = vpop.f32.mrf.mxu0
  %v2789 = vadd.f32 %v2227, %v2788
  %2790 = vmatmul.bf16.gmra.mxu0 %v2111
  %v2791 = vpop.f32.mrf.mxu0
  %v2792 = vadd.f32 %v2227, %v2791
  %v2793 = vpop.f32.mrf.mxu0
  %v2794 = vadd.f32 %v2227, %v2793
  %2795 = vmatmul.bf16.gmra.mxu0 %v2114
  %v2796 = vpop.f32.mrf.mxu0
  %v2797 = vadd.f32 %v2227, %v2796
  %v2798 = vpop.f32.mrf.mxu0
  %v2799 = vadd.f32 %v2227, %v2798
  %2800 = vmatmul.bf16.gmra.mxu0 %v2117
  %v2801 = vpop.f32.mrf.mxu0
  %v2802 = vadd.f32 %v2227, %v2801
  %v2803 = vpop.f32.mrf.mxu0
  %v2804 = vadd.f32 %v2227, %v2803
  %2805 = vmatmul.bf16.gmra.mxu0 %v2120
  %v2806 = vpop.f32.mrf.mxu0
  %v2807 = vadd.f32 %v2227, %v2806
  %v2808 = vpop.f32.mrf.mxu0
  %v2809 = vadd.f32 %v2227, %v2808
  %2810 = vmatmul.bf16.gmra.mxu0 %v2123
  %v2811 = vpop.f32.mrf.mxu0
  %v2812 = vadd.f32 %v2227, %v2811
  %v2813 = vpop.f32.mrf.mxu0
  %v2814 = vadd.f32 %v2227, %v2813
  %2815 = vmatmul.bf16.gmra.mxu0 %v2126
  %v2816 = vpop.f32.mrf.mxu0
  %v2817 = vadd.f32 %v2227, %v2816
  %v2818 = vpop.f32.mrf.mxu0
  %v2819 = vadd.f32 %v2227, %v2818
  %2820 = vmatmul.bf16.gmra.mxu0 %v2129
  %v2821 = vpop.f32.mrf.mxu0
  %v2822 = vadd.f32 %v2227, %v2821
  %v2823 = vpop.f32.mrf.mxu0
  %v2824 = vadd.f32 %v2227, %v2823
  %2825 = vmatmul.bf16.gmra.mxu0 %v2132
  %v2826 = vpop.f32.mrf.mxu0
  %v2827 = vadd.f32 %v2227, %v2826
  %v2828 = vpop.f32.mrf.mxu0
  %v2829 = vadd.f32 %v2227, %v2828
  %2830 = vmatmul.bf16.gmra.mxu0 %v2135
  %v2831 = vpop.f32.mrf.mxu0
  %v2832 = vadd.f32 %v2227, %v2831
  %v2833 = vpop.f32.mrf.mxu0
  %v2834 = vadd.f32 %v2227, %v2833
  %2835 = vmatmul.bf16.gmra.mxu0 %v2138
  %v2836 = vpop.f32.mrf.mxu0
  %v2837 = vadd.f32 %v2227, %v2836
  %v2838 = vpop.f32.mrf.mxu0
  %v2839 = vadd.f32 %v2227, %v2838
  %2840 = vmatmul.bf16.gmra.mxu0 %v2141
  %v2841 = vpop.f32.mrf.mxu0
  %v2842 = vadd.f32 %v2227, %v2841
  %v2843 = vpop.f32.mrf.mxu0
  %v2844 = vadd.f32 %v2227, %v2843
  %2845 = vmatmul.bf16.gmra.mxu0 %v2144
  %v2846 = vpop.f32.mrf.mxu0
  %v2847 = vadd.f32 %v2227, %v2846
  %v2848 = vpop.f32.mrf.mxu0
  %v2849 = vadd.f32 %v2227, %v2848
  %2850 = vmatmul.bf16.gmra.mxu0 %v2147
  %v2851 = vpop.f32.mrf.mxu0
  %v2852 = vadd.f32 %v2227, %v2851
  %v2853 = vpop.f32.mrf.mxu0
  %v2854 = vadd.f32 %v2227, %v2853
  %2855 = vmatmul.bf16.gmra.mxu0 %v2150
  %v2856 = vpop.f32.mrf.mxu0
  %v2857 = vadd.f32 %v2227, %v2856
  %v2858 = vpop.f32.mrf.mxu0
  %v2859 = vadd.f32 %v2227, %v2858
  %2860 = vdwg.mxu0
  %2861 = vmatpush.bf16.msra.mxu0 %v2511
  %2862 = vmatpush.bf16.msra.mxu0 %v2507
  %2863 = vmatpush.bf16.msra.mxu0 %v2503
  %2864 = vmatpush.bf16.msra.mxu0 %v2499
  %2865 = vmatpush.bf16.msra.mxu0 %v2495
  %2866 = vmatpush.bf16.msra.mxu0 %v2491
  %2867 = vmatpush.bf16.msra.mxu0 %v2487
  %2868 = vmatpush.bf16.msra.mxu0 %v2483
  %2869 = vmatmul.bf16.gmra.mxu0 %v2058
  %v2870 = vpop.f32.mrf.mxu0
  %v2871 = vadd.f32 %v2702, %v2870
  %v2872 = vpop.f32.mrf.mxu0
  %v2873 = vadd.f32 %v2704, %v2872
  %2874 = vmatmul.bf16.gmra.mxu0 %v2061
  %v2875 = vpop.f32.mrf.mxu0
  %v2876 = vadd.f32 %v2707, %v2875
  %v2877 = vpop.f32.mrf.mxu0
  %v2878 = vadd.f32 %v2709, %v2877
  %2879 = vmatmul.bf16.gmra.mxu0 %v2064
  %v2880 = vpop.f32.mrf.mxu0
  %v2881 = vadd.f32 %v2712, %v2880
  %v2882 = vpop.f32.mrf.mxu0
  %v2883 = vadd.f32 %v2714, %v2882
  %2884 = vmatmul.bf16.gmra.mxu0 %v2067
  %v2885 = vpop.f32.mrf.mxu0
  %v2886 = vadd.f32 %v2717, %v2885
  %v2887 = vpop.f32.mrf.mxu0
  %v2888 = vadd.f32 %v2719, %v2887
  %2889 = vmatmul.bf16.gmra.mxu0 %v2070
  %v2890 = vpop.f32.mrf.mxu0
  %v2891 = vadd.f32 %v2722, %v2890
  %v2892 = vpop.f32.mrf.mxu0
  %v2893 = vadd.f32 %v2724, %v2892
  %2894 = vmatmul.bf16.gmra.mxu0 %v2073
  %v2895 = vpop.f32.mrf.mxu0
  %v2896 = vadd.f32 %v2727, %v2895
  %v2897 = vpop.f32.mrf.mxu0
  %v2898 = vadd.f32 %v2729, %v2897
  %2899 = vmatmul.bf16.gmra.mxu0 %v2076
  %v2900 = vpop.f32.mrf.mxu0
  %v2901 = vadd.f32 %v2732, %v2900
  %v2902 = vpop.f32.mrf.mxu0
  %v2903 = vadd.f32 %v2734, %v2902
  %2904 = vmatmul.bf16.gmra.mxu0 %v2079
  %v2905 = vpop.f32.mrf.mxu0
  %v2906 = vadd.f32 %v2737, %v2905
  %v2907 = vpop.f32.mrf.mxu0
  %v2908 = vadd.f32 %v2739, %v2907
  %2909 = vmatmul.bf16.gmra.mxu0 %v2082
  %v2910 = vpop.f32.mrf.mxu0
  %v2911 = vadd.f32 %v2742, %v2910
  %v2912 = vpop.f32.mrf.mxu0
  %v2913 = vadd.f32 %v2744, %v2912
  %2914 = vmatmul.bf16.gmra.mxu0 %v2085
  %v2915 = vpop.f32.mrf.mxu0
  %v2916 = vadd.f32 %v2747, %v2915
  %v2917 = vpop.f32.mrf.mxu0
  %v2918 = vadd.f32 %v2749, %v2917
  %2919 = vmatmul.bf16.gmra.mxu0 %v2088
  %v2920 = vpop.f32.mrf.mxu0
  %v2921 = vadd.f32 %v2752, %v2920
  %v2922 = vpop.f32.mrf.mxu0
  %v2923 = vadd.f32 %v2754, %v2922
  %2924 = vmatmul.bf16.gmra.mxu0 %v2091
  %v2925 = vpop.f32.mrf.mxu0
  %v2926 = vadd.f32 %v2757, %v2925
  %v2927 = vpop.f32.mrf.mxu0
  %v2928 = vadd.f32 %v2759, %v2927
  %2929 = vmatmul.bf16.gmra.mxu0 %v2094
  %v2930 = vpop.f32.mrf.mxu0
  %v2931 = vadd.f32 %v2762, %v2930
  %v2932 = vpop.f32.mrf.mxu0
  %v2933 = vadd.f32 %v2764, %v2932
  %2934 = vmatmul.bf16.gmra.mxu0 %v2097
  %v2935 = vpop.f32.mrf.mxu0
  %v2936 = vadd.f32 %v2767, %v2935
  %v2937 = vpop.f32.mrf.mxu0
  %v2938 = vadd.f32 %v2769, %v2937
  %2939 = vmatmul.bf16.gmra.mxu0 %v2100
  %v2940 = vpop.f32.mrf.mxu0
  %v2941 = vadd.f32 %v2772, %v2940
  %v2942 = vpop.f32.mrf.mxu0
  %v2943 = vadd.f32 %v2774, %v2942
  %2944 = vmatmul.bf16.gmra.mxu0 %v2103
  %v2945 = vpop.f32.mrf.mxu0
  %v2946 = vadd.f32 %v2777, %v2945
  %v2947 = vpop.f32.mrf.mxu0
  %v2948 = vadd.f32 %v2779, %v2947
  %2949 = vmatmul.bf16.gmra.mxu0 %v2106
  %v2950 = vpop.f32.mrf.mxu0
  %v2951 = vadd.f32 %v2782, %v2950
  %v2952 = vpop.f32.mrf.mxu0
  %v2953 = vadd.f32 %v2784, %v2952
  %2954 = vmatmul.bf16.gmra.mxu0 %v2109
  %v2955 = vpop.f32.mrf.mxu0
  %v2956 = vadd.f32 %v2787, %v2955
  %v2957 = vpop.f32.mrf.mxu0
  %v2958 = vadd.f32 %v2789, %v2957
  %2959 = vmatmul.bf16.gmra.mxu0 %v2112
  %v2960 = vpop.f32.mrf.mxu0
  %v2961 = vadd.f32 %v2792, %v2960
  %v2962 = vpop.f32.mrf.mxu0
  %v2963 = vadd.f32 %v2794, %v2962
  %2964 = vmatmul.bf16.gmra.mxu0 %v2115
  %v2965 = vpop.f32.mrf.mxu0
  %v2966 = vadd.f32 %v2797, %v2965
  %v2967 = vpop.f32.mrf.mxu0
  %v2968 = vadd.f32 %v2799, %v2967
  %2969 = vmatmul.bf16.gmra.mxu0 %v2118
  %v2970 = vpop.f32.mrf.mxu0
  %v2971 = vadd.f32 %v2802, %v2970
  %v2972 = vpop.f32.mrf.mxu0
  %v2973 = vadd.f32 %v2804, %v2972
  %2974 = vmatmul.bf16.gmra.mxu0 %v2121
  %v2975 = vpop.f32.mrf.mxu0
  %v2976 = vadd.f32 %v2807, %v2975
  %v2977 = vpop.f32.mrf.mxu0
  %v2978 = vadd.f32 %v2809, %v2977
  %2979 = vmatmul.bf16.gmra.mxu0 %v2124
  %v2980 = vpop.f32.mrf.mxu0
  %v2981 = vadd.f32 %v2812, %v2980
  %v2982 = vpop.f32.mrf.mxu0
  %v2983 = vadd.f32 %v2814, %v2982
  %2984 = vmatmul.bf16.gmra.mxu0 %v2127
  %v2985 = vpop.f32.mrf.mxu0
  %v2986 = vadd.f32 %v2817, %v2985
  %v2987 = vpop.f32.mrf.mxu0
  %v2988 = vadd.f32 %v2819, %v2987
  %2989 = vmatmul.bf16.gmra.mxu0 %v2130
  %v2990 = vpop.f32.mrf.mxu0
  %v2991 = vadd.f32 %v2822, %v2990
  %v2992 = vpop.f32.mrf.mxu0
  %v2993 = vadd.f32 %v2824, %v2992
  %2994 = vmatmul.bf16.gmra.mxu0 %v2133
  %v2995 = vpop.f32.mrf.mxu0
  %v2996 = vadd.f32 %v2827, %v2995
  %v2997 = vpop.f32.mrf.mxu0
  %v2998 = vadd.f32 %v2829, %v2997
  %2999 = vmatmul.bf16.gmra.mxu0 %v2136
  %v3000 = vpop.f32.mrf.mxu0
  %v3001 = vadd.f32 %v2832, %v3000
  %v3002 = vpop.f32.mrf.mxu0
  %v3003 = vadd.f32 %v2834, %v3002
  %3004 = vmatmul.bf16.gmra.mxu0 %v2139
  %v3005 = vpop.f32.mrf.mxu0
  %v3006 = vadd.f32 %v2837, %v3005
  %v3007 = vpop.f32.mrf.mxu0
  %v3008 = vadd.f32 %v2839, %v3007
  %3009 = vmatmul.bf16.gmra.mxu0 %v2142
  %v3010 = vpop.f32.mrf.mxu0
  %v3011 = vadd.f32 %v2842, %v3010
  %v3012 = vpop.f32.mrf.mxu0
  %v3013 = vadd.f32 %v2844, %v3012
  %3014 = vmatmul.bf16.gmra.mxu0 %v2145
  %v3015 = vpop.f32.mrf.mxu0
  %v3016 = vadd.f32 %v2847, %v3015
  %v3017 = vpop.f32.mrf.mxu0
  %v3018 = vadd.f32 %v2849, %v3017
  %3019 = vmatmul.bf16.gmra.mxu0 %v2148
  %v3020 = vpop.f32.mrf.mxu0
  %v3021 = vadd.f32 %v2852, %v3020
  %v3022 = vpop.f32.mrf.mxu0
  %v3023 = vadd.f32 %v2854, %v3022
  %3024 = vmatmul.bf16.gmra.mxu0 %v2151
  %v3025 = vpop.f32.mrf.mxu0
  %v3026 = vadd.f32 %v2857, %v3025
  %v3027 = vpop.f32.mrf.mxu0
  %v3028 = vadd.f32 %v2859, %v3027
  %3029 = vdwg.mxu0
  %3030 = vmatpush.bf16.msra.mxu0 0
  %3031 = vmatpush.bf16.msra.mxu0 0
  %3032 = vmatpush.bf16.msra.mxu0 0
  %3033 = vmatpush.bf16.msra.mxu0 0
  %3034 = vmatpush.bf16.msra.mxu0 0
  %3035 = vmatpush.bf16.msra.mxu0 0
  %3036 = vmatpush.bf16.msra.mxu0 %v2519
  %3037 = vmatpush.bf16.msra.mxu0 %v2515
  %3038 = vmatmul.bf16.gmra.mxu0 %v2597
  %v3039 = vpop.f32.mrf.mxu0
  %v3040 = vadd.f32 %v2871, %v3039
  %v3041 = vpop.f32.mrf.mxu0
  %v3042 = vadd.f32 %v2873, %v3041
  %3043 = vmatmul.bf16.gmra.mxu0 %v2600
  %v3044 = vpop.f32.mrf.mxu0
  %v3045 = vadd.f32 %v2876, %v3044
  %v3046 = vpop.f32.mrf.mxu0
  %v3047 = vadd.f32 %v2878, %v3046
  %3048 = vmatmul.bf16.gmra.mxu0 %v2603
  %v3049 = vpop.f32.mrf.mxu0
  %v3050 = vadd.f32 %v2881, %v3049
  %v3051 = vpop.f32.mrf.mxu0
  %v3052 = vadd.f32 %v2883, %v3051
  %3053 = vmatmul.bf16.gmra.mxu0 %v2606
  %v3054 = vpop.f32.mrf.mxu0
  %v3055 = vadd.f32 %v2886, %v3054
  %v3056 = vpop.f32.mrf.mxu0
  %v3057 = vadd.f32 %v2888, %v3056
  %3058 = vmatmul.bf16.gmra.mxu0 %v2609
  %v3059 = vpop.f32.mrf.mxu0
  %v3060 = vadd.f32 %v2891, %v3059
  %v3061 = vpop.f32.mrf.mxu0
  %v3062 = vadd.f32 %v2893, %v3061
  %3063 = vmatmul.bf16.gmra.mxu0 %v2612
  %v3064 = vpop.f32.mrf.mxu0
  %v3065 = vadd.f32 %v2896, %v3064
  %v3066 = vpop.f32.mrf.mxu0
  %v3067 = vadd.f32 %v2898, %v3066
  %3068 = vmatmul.bf16.gmra.mxu0 %v2615
  %v3069 = vpop.f32.mrf.mxu0
  %v3070 = vadd.f32 %v2901, %v3069
  %v3071 = vpop.f32.mrf.mxu0
  %v3072 = vadd.f32 %v2903, %v3071
  %3073 = vmatmul.bf16.gmra.mxu0 %v2618
  %v3074 = vpop.f32.mrf.mxu0
  %v3075 = vadd.f32 %v2906, %v3074
  %v3076 = vpop.f32.mrf.mxu0
  %v3077 = vadd.f32 %v2908, %v3076
  %3078 = vmatmul.bf16.gmra.mxu0 %v2621
  %v3079 = vpop.f32.mrf.mxu0
  %v3080 = vadd.f32 %v2911, %v3079
  %v3081 = vpop.f32.mrf.mxu0
  %v3082 = vadd.f32 %v2913, %v3081
  %3083 = vmatmul.bf16.gmra.mxu0 %v2624
  %v3084 = vpop.f32.mrf.mxu0
  %v3085 = vadd.f32 %v2916, %v3084
  %v3086 = vpop.f32.mrf.mxu0
  %v3087 = vadd.f32 %v2918, %v3086
  %3088 = vmatmul.bf16.gmra.mxu0 %v2627
  %v3089 = vpop.f32.mrf.mxu0
  %v3090 = vadd.f32 %v2921, %v3089
  %v3091 = vpop.f32.mrf.mxu0
  %v3092 = vadd.f32 %v2923, %v3091
  %3093 = vmatmul.bf16.gmra.mxu0 %v2630
  %v3094 = vpop.f32.mrf.mxu0
  %v3095 = vadd.f32 %v2926, %v3094
  %v3096 = vpop.f32.mrf.mxu0
  %v3097 = vadd.f32 %v2928, %v3096
  %3098 = vmatmul.bf16.gmra.mxu0 %v2633
  %v3099 = vpop.f32.mrf.mxu0
  %v3100 = vadd.f32 %v2931, %v3099
  %v3101 = vpop.f32.mrf.mxu0
  %v3102 = vadd.f32 %v2933, %v3101
  %3103 = vmatmul.bf16.gmra.mxu0 %v2636
  %v3104 = vpop.f32.mrf.mxu0
  %v3105 = vadd.f32 %v2936, %v3104
  %v3106 = vpop.f32.mrf.mxu0
  %v3107 = vadd.f32 %v2938, %v3106
  %3108 = vmatmul.bf16.gmra.mxu0 %v2639
  %v3109 = vpop.f32.mrf.mxu0
  %v3110 = vadd.f32 %v2941, %v3109
  %v3111 = vpop.f32.mrf.mxu0
  %v3112 = vadd.f32 %v2943, %v3111
  %3113 = vmatmul.bf16.gmra.mxu0 %v2642
  %v3114 = vpop.f32.mrf.mxu0
  %v3115 = vadd.f32 %v2946, %v3114
  %v3116 = vpop.f32.mrf.mxu0
  %v3117 = vadd.f32 %v2948, %v3116
  %3118 = vmatmul.bf16.gmra.mxu0 %v2645
  %v3119 = vpop.f32.mrf.mxu0
  %v3120 = vadd.f32 %v2951, %v3119
  %v3121 = vpop.f32.mrf.mxu0
  %v3122 = vadd.f32 %v2953, %v3121
  %3123 = vmatmul.bf16.gmra.mxu0 %v2648
  %v3124 = vpop.f32.mrf.mxu0
  %v3125 = vadd.f32 %v2956, %v3124
  %v3126 = vpop.f32.mrf.mxu0
  %v3127 = vadd.f32 %v2958, %v3126
  %3128 = vmatmul.bf16.gmra.mxu0 %v2651
  %v3129 = vpop.f32.mrf.mxu0
  %v3130 = vadd.f32 %v2961, %v3129
  %v3131 = vpop.f32.mrf.mxu0
  %v3132 = vadd.f32 %v2963, %v3131
  %3133 = vmatmul.bf16.gmra.mxu0 %v2654
  %v3134 = vpop.f32.mrf.mxu0
  %v3135 = vadd.f32 %v2966, %v3134
  %v3136 = vpop.f32.mrf.mxu0
  %v3137 = vadd.f32 %v2968, %v3136
  %3138 = vmatmul.bf16.gmra.mxu0 %v2657
  %v3139 = vpop.f32.mrf.mxu0
  %v3140 = vadd.f32 %v2971, %v3139
  %v3141 = vpop.f32.mrf.mxu0
  %v3142 = vadd.f32 %v2973, %v3141
  %3143 = vmatmul.bf16.gmra.mxu0 %v2660
  %v3144 = vpop.f32.mrf.mxu0
  %v3145 = vadd.f32 %v2976, %v3144
  %v3146 = vpop.f32.mrf.mxu0
  %v3147 = vadd.f32 %v2978, %v3146
  %3148 = vmatmul.bf16.gmra.mxu0 %v2663
  %v3149 = vpop.f32.mrf.mxu0
  %v3150 = vadd.f32 %v2981, %v3149
  %v3151 = vpop.f32.mrf.mxu0
  %v3152 = vadd.f32 %v2983, %v3151
  %3153 = vmatmul.bf16.gmra.mxu0 %v2666
  %v3154 = vpop.f32.mrf.mxu0
  %v3155 = vadd.f32 %v2986, %v3154
  %v3156 = vpop.f32.mrf.mxu0
  %v3157 = vadd.f32 %v2988, %v3156
  %3158 = vmatmul.bf16.gmra.mxu0 %v2669
  %v3159 = vpop.f32.mrf.mxu0
  %v3160 = vadd.f32 %v2991, %v3159
  %v3161 = vpop.f32.mrf.mxu0
  %v3162 = vadd.f32 %v2993, %v3161
  %3163 = vmatmul.bf16.gmra.mxu0 %v2672
  %v3164 = vpop.f32.mrf.mxu0
  %v3165 = vadd.f32 %v2996, %v3164
  %v3166 = vpop.f32.mrf.mxu0
  %v3167 = vadd.f32 %v2998, %v3166
  %3168 = vmatmul.bf16.gmra.mxu0 %v2675
  %v3169 = vpop.f32.mrf.mxu0
  %v3170 = vadd.f32 %v3001, %v3169
  %v3171 = vpop.f32.mrf.mxu0
  %v3172 = vadd.f32 %v3003, %v3171
  %3173 = vmatmul.bf16.gmra.mxu0 %v2678
  %v3174 = vpop.f32.mrf.mxu0
  %v3175 = vadd.f32 %v3006, %v3174
  %v3176 = vpop.f32.mrf.mxu0
  %v3177 = vadd.f32 %v3008, %v3176
  %3178 = vmatmul.bf16.gmra.mxu0 %v2681
  %v3179 = vpop.f32.mrf.mxu0
  %v3180 = vadd.f32 %v3011, %v3179
  %v3181 = vpop.f32.mrf.mxu0
  %v3182 = vadd.f32 %v3013, %v3181
  %3183 = vmatmul.bf16.gmra.mxu0 %v2684
  %v3184 = vpop.f32.mrf.mxu0
  %v3185 = vadd.f32 %v3016, %v3184
  %v3186 = vpop.f32.mrf.mxu0
  %v3187 = vadd.f32 %v3018, %v3186
  %3188 = vmatmul.bf16.gmra.mxu0 %v2687
  %v3189 = vpop.f32.mrf.mxu0
  %v3190 = vadd.f32 %v3021, %v3189
  %v3191 = vpop.f32.mrf.mxu0
  %v3192 = vadd.f32 %v3023, %v3191
  %3193 = vmatmul.bf16.gmra.mxu0 %v2690
  %v3194 = vpop.f32.mrf.mxu0
  %v3195 = vadd.f32 %v3026, %v3194
  %v3196 = vpop.f32.mrf.mxu0
  %v3197 = vadd.f32 %v3028, %v3196
  %3198 = vdwg.mxu0
  %3199 = vmatpush.bf16.msra.mxu0 %v2480
  %3200 = vmatpush.bf16.msra.mxu0 %v2476
  %3201 = vmatpush.bf16.msra.mxu0 %v2472
  %3202 = vmatpush.bf16.msra.mxu0 %v2468
  %3203 = vmatpush.bf16.msra.mxu0 %v2464
  %3204 = vmatpush.bf16.msra.mxu0 %v2460
  %3205 = vmatpush.bf16.msra.mxu0 %v2456
  %3206 = vmatpush.bf16.msra.mxu0 %v2452
  %3207 = vmatmul.bf16.gmra.mxu0 %v2057
  %v3208 = vpop.f32.mrf.mxu0
  %v3209 = vadd.f32 %v2228, %v3208
  %v3210 = vpop.f32.mrf.mxu0
  %v3211 = vadd.f32 %v2228, %v3210
  %3212 = vmatmul.bf16.gmra.mxu0 %v2060
  %v3213 = vpop.f32.mrf.mxu0
  %v3214 = vadd.f32 %v2228, %v3213
  %v3215 = vpop.f32.mrf.mxu0
  %v3216 = vadd.f32 %v2228, %v3215
  %3217 = vmatmul.bf16.gmra.mxu0 %v2063
  %v3218 = vpop.f32.mrf.mxu0
  %v3219 = vadd.f32 %v2228, %v3218
  %v3220 = vpop.f32.mrf.mxu0
  %v3221 = vadd.f32 %v2228, %v3220
  %3222 = vmatmul.bf16.gmra.mxu0 %v2066
  %v3223 = vpop.f32.mrf.mxu0
  %v3224 = vadd.f32 %v2228, %v3223
  %v3225 = vpop.f32.mrf.mxu0
  %v3226 = vadd.f32 %v2228, %v3225
  %3227 = vmatmul.bf16.gmra.mxu0 %v2069
  %v3228 = vpop.f32.mrf.mxu0
  %v3229 = vadd.f32 %v2228, %v3228
  %v3230 = vpop.f32.mrf.mxu0
  %v3231 = vadd.f32 %v2228, %v3230
  %3232 = vmatmul.bf16.gmra.mxu0 %v2072
  %v3233 = vpop.f32.mrf.mxu0
  %v3234 = vadd.f32 %v2228, %v3233
  %v3235 = vpop.f32.mrf.mxu0
  %v3236 = vadd.f32 %v2228, %v3235
  %3237 = vmatmul.bf16.gmra.mxu0 %v2075
  %v3238 = vpop.f32.mrf.mxu0
  %v3239 = vadd.f32 %v2228, %v3238
  %v3240 = vpop.f32.mrf.mxu0
  %v3241 = vadd.f32 %v2228, %v3240
  %3242 = vmatmul.bf16.gmra.mxu0 %v2078
  %v3243 = vpop.f32.mrf.mxu0
  %v3244 = vadd.f32 %v2228, %v3243
  %v3245 = vpop.f32.mrf.mxu0
  %v3246 = vadd.f32 %v2228, %v3245
  %3247 = vmatmul.bf16.gmra.mxu0 %v2081
  %v3248 = vpop.f32.mrf.mxu0
  %v3249 = vadd.f32 %v2228, %v3248
  %v3250 = vpop.f32.mrf.mxu0
  %v3251 = vadd.f32 %v2228, %v3250
  %3252 = vmatmul.bf16.gmra.mxu0 %v2084
  %v3253 = vpop.f32.mrf.mxu0
  %v3254 = vadd.f32 %v2228, %v3253
  %v3255 = vpop.f32.mrf.mxu0
  %v3256 = vadd.f32 %v2228, %v3255
  %3257 = vmatmul.bf16.gmra.mxu0 %v2087
  %v3258 = vpop.f32.mrf.mxu0
  %v3259 = vadd.f32 %v2228, %v3258
  %v3260 = vpop.f32.mrf.mxu0
  %v3261 = vadd.f32 %v2228, %v3260
  %3262 = vmatmul.bf16.gmra.mxu0 %v2090
  %v3263 = vpop.f32.mrf.mxu0
  %v3264 = vadd.f32 %v2228, %v3263
  %v3265 = vpop.f32.mrf.mxu0
  %v3266 = vadd.f32 %v2228, %v3265
  %3267 = vmatmul.bf16.gmra.mxu0 %v2093
  %v3268 = vpop.f32.mrf.mxu0
  %v3269 = vadd.f32 %v2228, %v3268
  %v3270 = vpop.f32.mrf.mxu0
  %v3271 = vadd.f32 %v2228, %v3270
  %3272 = vmatmul.bf16.gmra.mxu0 %v2096
  %v3273 = vpop.f32.mrf.mxu0
  %v3274 = vadd.f32 %v2228, %v3273
  %v3275 = vpop.f32.mrf.mxu0
  %v3276 = vadd.f32 %v2228, %v3275
  %3277 = vmatmul.bf16.gmra.mxu0 %v2099
  %v3278 = vpop.f32.mrf.mxu0
  %v3279 = vadd.f32 %v2228, %v3278
  %v3280 = vpop.f32.mrf.mxu0
  %v3281 = vadd.f32 %v2228, %v3280
  %3282 = vmatmul.bf16.gmra.mxu0 %v2102
  %v3283 = vpop.f32.mrf.mxu0
  %v3284 = vadd.f32 %v2228, %v3283
  %v3285 = vpop.f32.mrf.mxu0
  %v3286 = vadd.f32 %v2228, %v3285
  %3287 = vmatmul.bf16.gmra.mxu0 %v2105
  %v3288 = vpop.f32.mrf.mxu0
  %v3289 = vadd.f32 %v2228, %v3288
  %v3290 = vpop.f32.mrf.mxu0
  %v3291 = vadd.f32 %v2228, %v3290
  %3292 = vmatmul.bf16.gmra.mxu0 %v2108
  %v3293 = vpop.f32.mrf.mxu0
  %v3294 = vadd.f32 %v2228, %v3293
  %v3295 = vpop.f32.mrf.mxu0
  %v3296 = vadd.f32 %v2228, %v3295
  %3297 = vmatmul.bf16.gmra.mxu0 %v2111
  %v3298 = vpop.f32.mrf.mxu0
  %v3299 = vadd.f32 %v2228, %v3298
  %v3300 = vpop.f32.mrf.mxu0
  %v3301 = vadd.f32 %v2228, %v3300
  %3302 = vmatmul.bf16.gmra.mxu0 %v2114
  %v3303 = vpop.f32.mrf.mxu0
  %v3304 = vadd.f32 %v2228, %v3303
  %v3305 = vpop.f32.mrf.mxu0
  %v3306 = vadd.f32 %v2228, %v3305
  %3307 = vmatmul.bf16.gmra.mxu0 %v2117
  %v3308 = vpop.f32.mrf.mxu0
  %v3309 = vadd.f32 %v2228, %v3308
  %v3310 = vpop.f32.mrf.mxu0
  %v3311 = vadd.f32 %v2228, %v3310
  %3312 = vmatmul.bf16.gmra.mxu0 %v2120
  %v3313 = vpop.f32.mrf.mxu0
  %v3314 = vadd.f32 %v2228, %v3313
  %v3315 = vpop.f32.mrf.mxu0
  %v3316 = vadd.f32 %v2228, %v3315
  %3317 = vmatmul.bf16.gmra.mxu0 %v2123
  %v3318 = vpop.f32.mrf.mxu0
  %v3319 = vadd.f32 %v2228, %v3318
  %v3320 = vpop.f32.mrf.mxu0
  %v3321 = vadd.f32 %v2228, %v3320
  %3322 = vmatmul.bf16.gmra.mxu0 %v2126
  %v3323 = vpop.f32.mrf.mxu0
  %v3324 = vadd.f32 %v2228, %v3323
  %v3325 = vpop.f32.mrf.mxu0
  %v3326 = vadd.f32 %v2228, %v3325
  %3327 = vmatmul.bf16.gmra.mxu0 %v2129
  %v3328 = vpop.f32.mrf.mxu0
  %v3329 = vadd.f32 %v2228, %v3328
  %v3330 = vpop.f32.mrf.mxu0
  %v3331 = vadd.f32 %v2228, %v3330
  %3332 = vmatmul.bf16.gmra.mxu0 %v2132
  %v3333 = vpop.f32.mrf.mxu0
  %v3334 = vadd.f32 %v2228, %v3333
  %v3335 = vpop.f32.mrf.mxu0
  %v3336 = vadd.f32 %v2228, %v3335
  %3337 = vmatmul.bf16.gmra.mxu0 %v2135
  %v3338 = vpop.f32.mrf.mxu0
  %v3339 = vadd.f32 %v2228, %v3338
  %v3340 = vpop.f32.mrf.mxu0
  %v3341 = vadd.f32 %v2228, %v3340
  %3342 = vmatmul.bf16.gmra.mxu0 %v2138
  %v3343 = vpop.f32.mrf.mxu0
  %v3344 = vadd.f32 %v2228, %v3343
  %v3345 = vpop.f32.mrf.mxu0
  %v3346 = vadd.f32 %v2228, %v3345
  %3347 = vmatmul.bf16.gmra.mxu0 %v2141
  %v3348 = vpop.f32.mrf.mxu0
  %v3349 = vadd.f32 %v2228, %v3348
  %v3350 = vpop.f32.mrf.mxu0
  %v3351 = vadd.f32 %v2228, %v3350
  %3352 = vmatmul.bf16.gmra.mxu0 %v2144
  %v3353 = vpop.f32.mrf.mxu0
  %v3354 = vadd.f32 %v2228, %v3353
  %v3355 = vpop.f32.mrf.mxu0
  %v3356 = vadd.f32 %v2228, %v3355
  %3357 = vmatmul.bf16.gmra.mxu0 %v2147
  %v3358 = vpop.f32.mrf.mxu0
  %v3359 = vadd.f32 %v2228, %v3358
  %v3360 = vpop.f32.mrf.mxu0
  %v3361 = vadd.f32 %v2228, %v3360
  %3362 = vmatmul.bf16.gmra.mxu0 %v2150
  %v3363 = vpop.f32.mrf.mxu0
  %v3364 = vadd.f32 %v2228, %v3363
  %v3365 = vpop.f32.mrf.mxu0
  %v3366 = vadd.f32 %v2228, %v3365
  %3367 = vdwg.mxu0
  %3368 = vmatpush.bf16.msra.mxu0 %v2512
  %3369 = vmatpush.bf16.msra.mxu0 %v2508
  %3370 = vmatpush.bf16.msra.mxu0 %v2504
  %3371 = vmatpush.bf16.msra.mxu0 %v2500
  %3372 = vmatpush.bf16.msra.mxu0 %v2496
  %3373 = vmatpush.bf16.msra.mxu0 %v2492
  %3374 = vmatpush.bf16.msra.mxu0 %v2488
  %3375 = vmatpush.bf16.msra.mxu0 %v2484
  %3376 = vmatmul.bf16.gmra.mxu0 %v2058
  %v3377 = vpop.f32.mrf.mxu0
  %v3378 = vadd.f32 %v3209, %v3377
  %v3379 = vpop.f32.mrf.mxu0
  %v3380 = vadd.f32 %v3211, %v3379
  %3381 = vmatmul.bf16.gmra.mxu0 %v2061
  %v3382 = vpop.f32.mrf.mxu0
  %v3383 = vadd.f32 %v3214, %v3382
  %v3384 = vpop.f32.mrf.mxu0
  %v3385 = vadd.f32 %v3216, %v3384
  %3386 = vmatmul.bf16.gmra.mxu0 %v2064
  %v3387 = vpop.f32.mrf.mxu0
  %v3388 = vadd.f32 %v3219, %v3387
  %v3389 = vpop.f32.mrf.mxu0
  %v3390 = vadd.f32 %v3221, %v3389
  %3391 = vmatmul.bf16.gmra.mxu0 %v2067
  %v3392 = vpop.f32.mrf.mxu0
  %v3393 = vadd.f32 %v3224, %v3392
  %v3394 = vpop.f32.mrf.mxu0
  %v3395 = vadd.f32 %v3226, %v3394
  %3396 = vmatmul.bf16.gmra.mxu0 %v2070
  %v3397 = vpop.f32.mrf.mxu0
  %v3398 = vadd.f32 %v3229, %v3397
  %v3399 = vpop.f32.mrf.mxu0
  %v3400 = vadd.f32 %v3231, %v3399
  %3401 = vmatmul.bf16.gmra.mxu0 %v2073
  %v3402 = vpop.f32.mrf.mxu0
  %v3403 = vadd.f32 %v3234, %v3402
  %v3404 = vpop.f32.mrf.mxu0
  %v3405 = vadd.f32 %v3236, %v3404
  %3406 = vmatmul.bf16.gmra.mxu0 %v2076
  %v3407 = vpop.f32.mrf.mxu0
  %v3408 = vadd.f32 %v3239, %v3407
  %v3409 = vpop.f32.mrf.mxu0
  %v3410 = vadd.f32 %v3241, %v3409
  %3411 = vmatmul.bf16.gmra.mxu0 %v2079
  %v3412 = vpop.f32.mrf.mxu0
  %v3413 = vadd.f32 %v3244, %v3412
  %v3414 = vpop.f32.mrf.mxu0
  %v3415 = vadd.f32 %v3246, %v3414
  %3416 = vmatmul.bf16.gmra.mxu0 %v2082
  %v3417 = vpop.f32.mrf.mxu0
  %v3418 = vadd.f32 %v3249, %v3417
  %v3419 = vpop.f32.mrf.mxu0
  %v3420 = vadd.f32 %v3251, %v3419
  %3421 = vmatmul.bf16.gmra.mxu0 %v2085
  %v3422 = vpop.f32.mrf.mxu0
  %v3423 = vadd.f32 %v3254, %v3422
  %v3424 = vpop.f32.mrf.mxu0
  %v3425 = vadd.f32 %v3256, %v3424
  %3426 = vmatmul.bf16.gmra.mxu0 %v2088
  %v3427 = vpop.f32.mrf.mxu0
  %v3428 = vadd.f32 %v3259, %v3427
  %v3429 = vpop.f32.mrf.mxu0
  %v3430 = vadd.f32 %v3261, %v3429
  %3431 = vmatmul.bf16.gmra.mxu0 %v2091
  %v3432 = vpop.f32.mrf.mxu0
  %v3433 = vadd.f32 %v3264, %v3432
  %v3434 = vpop.f32.mrf.mxu0
  %v3435 = vadd.f32 %v3266, %v3434
  %3436 = vmatmul.bf16.gmra.mxu0 %v2094
  %v3437 = vpop.f32.mrf.mxu0
  %v3438 = vadd.f32 %v3269, %v3437
  %v3439 = vpop.f32.mrf.mxu0
  %v3440 = vadd.f32 %v3271, %v3439
  %3441 = vmatmul.bf16.gmra.mxu0 %v2097
  %v3442 = vpop.f32.mrf.mxu0
  %v3443 = vadd.f32 %v3274, %v3442
  %v3444 = vpop.f32.mrf.mxu0
  %v3445 = vadd.f32 %v3276, %v3444
  %3446 = vmatmul.bf16.gmra.mxu0 %v2100
  %v3447 = vpop.f32.mrf.mxu0
  %v3448 = vadd.f32 %v3279, %v3447
  %v3449 = vpop.f32.mrf.mxu0
  %v3450 = vadd.f32 %v3281, %v3449
  %3451 = vmatmul.bf16.gmra.mxu0 %v2103
  %v3452 = vpop.f32.mrf.mxu0
  %v3453 = vadd.f32 %v3284, %v3452
  %v3454 = vpop.f32.mrf.mxu0
  %v3455 = vadd.f32 %v3286, %v3454
  %3456 = vmatmul.bf16.gmra.mxu0 %v2106
  %v3457 = vpop.f32.mrf.mxu0
  %v3458 = vadd.f32 %v3289, %v3457
  %v3459 = vpop.f32.mrf.mxu0
  %v3460 = vadd.f32 %v3291, %v3459
  %3461 = vmatmul.bf16.gmra.mxu0 %v2109
  %v3462 = vpop.f32.mrf.mxu0
  %v3463 = vadd.f32 %v3294, %v3462
  %v3464 = vpop.f32.mrf.mxu0
  %v3465 = vadd.f32 %v3296, %v3464
  %3466 = vmatmul.bf16.gmra.mxu0 %v2112
  %v3467 = vpop.f32.mrf.mxu0
  %v3468 = vadd.f32 %v3299, %v3467
  %v3469 = vpop.f32.mrf.mxu0
  %v3470 = vadd.f32 %v3301, %v3469
  %3471 = vmatmul.bf16.gmra.mxu0 %v2115
  %v3472 = vpop.f32.mrf.mxu0
  %v3473 = vadd.f32 %v3304, %v3472
  %v3474 = vpop.f32.mrf.mxu0
  %v3475 = vadd.f32 %v3306, %v3474
  %3476 = vmatmul.bf16.gmra.mxu0 %v2118
  %v3477 = vpop.f32.mrf.mxu0
  %v3478 = vadd.f32 %v3309, %v3477
  %v3479 = vpop.f32.mrf.mxu0
  %v3480 = vadd.f32 %v3311, %v3479
  %3481 = vmatmul.bf16.gmra.mxu0 %v2121
  %v3482 = vpop.f32.mrf.mxu0
  %v3483 = vadd.f32 %v3314, %v3482
  %v3484 = vpop.f32.mrf.mxu0
  %v3485 = vadd.f32 %v3316, %v3484
  %3486 = vmatmul.bf16.gmra.mxu0 %v2124
  %v3487 = vpop.f32.mrf.mxu0
  %v3488 = vadd.f32 %v3319, %v3487
  %v3489 = vpop.f32.mrf.mxu0
  %v3490 = vadd.f32 %v3321, %v3489
  %3491 = vmatmul.bf16.gmra.mxu0 %v2127
  %v3492 = vpop.f32.mrf.mxu0
  %v3493 = vadd.f32 %v3324, %v3492
  %v3494 = vpop.f32.mrf.mxu0
  %v3495 = vadd.f32 %v3326, %v3494
  %3496 = vmatmul.bf16.gmra.mxu0 %v2130
  %v3497 = vpop.f32.mrf.mxu0
  %v3498 = vadd.f32 %v3329, %v3497
  %v3499 = vpop.f32.mrf.mxu0
  %v3500 = vadd.f32 %v3331, %v3499
  %3501 = vmatmul.bf16.gmra.mxu0 %v2133
  %v3502 = vpop.f32.mrf.mxu0
  %v3503 = vadd.f32 %v3334, %v3502
  %v3504 = vpop.f32.mrf.mxu0
  %v3505 = vadd.f32 %v3336, %v3504
  %3506 = vmatmul.bf16.gmra.mxu0 %v2136
  %v3507 = vpop.f32.mrf.mxu0
  %v3508 = vadd.f32 %v3339, %v3507
  %v3509 = vpop.f32.mrf.mxu0
  %v3510 = vadd.f32 %v3341, %v3509
  %3511 = vmatmul.bf16.gmra.mxu0 %v2139
  %v3512 = vpop.f32.mrf.mxu0
  %v3513 = vadd.f32 %v3344, %v3512
  %v3514 = vpop.f32.mrf.mxu0
  %v3515 = vadd.f32 %v3346, %v3514
  %3516 = vmatmul.bf16.gmra.mxu0 %v2142
  %v3517 = vpop.f32.mrf.mxu0
  %v3518 = vadd.f32 %v3349, %v3517
  %v3519 = vpop.f32.mrf.mxu0
  %v3520 = vadd.f32 %v3351, %v3519
  %3521 = vmatmul.bf16.gmra.mxu0 %v2145
  %v3522 = vpop.f32.mrf.mxu0
  %v3523 = vadd.f32 %v3354, %v3522
  %v3524 = vpop.f32.mrf.mxu0
  %v3525 = vadd.f32 %v3356, %v3524
  %3526 = vmatmul.bf16.gmra.mxu0 %v2148
  %v3527 = vpop.f32.mrf.mxu0
  %v3528 = vadd.f32 %v3359, %v3527
  %v3529 = vpop.f32.mrf.mxu0
  %v3530 = vadd.f32 %v3361, %v3529
  %3531 = vmatmul.bf16.gmra.mxu0 %v2151
  %v3532 = vpop.f32.mrf.mxu0
  %v3533 = vadd.f32 %v3364, %v3532
  %v3534 = vpop.f32.mrf.mxu0
  %v3535 = vadd.f32 %v3366, %v3534
  %3536 = vdwg.mxu0
  %3537 = vmatpush.bf16.msra.mxu0 0
  %3538 = vmatpush.bf16.msra.mxu0 0
  %3539 = vmatpush.bf16.msra.mxu0 0
  %3540 = vmatpush.bf16.msra.mxu0 0
  %3541 = vmatpush.bf16.msra.mxu0 0
  %3542 = vmatpush.bf16.msra.mxu0 0
  %3543 = vmatpush.bf16.msra.mxu0 %v2520
  %3544 = vmatpush.bf16.msra.mxu0 %v2516
  %3545 = vmatmul.bf16.gmra.mxu0 %v2597
  %v3546 = vpop.f32.mrf.mxu0
  %v3547 = vadd.f32 %v3378, %v3546
  %v3548 = vpop.f32.mrf.mxu0
  %v3549 = vadd.f32 %v3380, %v3548
  %3550 = vmatmul.bf16.gmra.mxu0 %v2600
  %v3551 = vpop.f32.mrf.mxu0
  %v3552 = vadd.f32 %v3383, %v3551
  %v3553 = vpop.f32.mrf.mxu0
  %v3554 = vadd.f32 %v3385, %v3553
  %3555 = vmatmul.bf16.gmra.mxu0 %v2603
  %v3556 = vpop.f32.mrf.mxu0
  %v3557 = vadd.f32 %v3388, %v3556
  %v3558 = vpop.f32.mrf.mxu0
  %v3559 = vadd.f32 %v3390, %v3558
  %3560 = vmatmul.bf16.gmra.mxu0 %v2606
  %v3561 = vpop.f32.mrf.mxu0
  %v3562 = vadd.f32 %v3393, %v3561
  %v3563 = vpop.f32.mrf.mxu0
  %v3564 = vadd.f32 %v3395, %v3563
  %3565 = vmatmul.bf16.gmra.mxu0 %v2609
  %v3566 = vpop.f32.mrf.mxu0
  %v3567 = vadd.f32 %v3398, %v3566
  %v3568 = vpop.f32.mrf.mxu0
  %v3569 = vadd.f32 %v3400, %v3568
  %3570 = vmatmul.bf16.gmra.mxu0 %v2612
  %v3571 = vpop.f32.mrf.mxu0
  %v3572 = vadd.f32 %v3403, %v3571
  %v3573 = vpop.f32.mrf.mxu0
  %v3574 = vadd.f32 %v3405, %v3573
  %3575 = vmatmul.bf16.gmra.mxu0 %v2615
  %v3576 = vpop.f32.mrf.mxu0
  %v3577 = vadd.f32 %v3408, %v3576
  %v3578 = vpop.f32.mrf.mxu0
  %v3579 = vadd.f32 %v3410, %v3578
  %3580 = vmatmul.bf16.gmra.mxu0 %v2618
  %v3581 = vpop.f32.mrf.mxu0
  %v3582 = vadd.f32 %v3413, %v3581
  %v3583 = vpop.f32.mrf.mxu0
  %v3584 = vadd.f32 %v3415, %v3583
  %3585 = vmatmul.bf16.gmra.mxu0 %v2621
  %v3586 = vpop.f32.mrf.mxu0
  %v3587 = vadd.f32 %v3418, %v3586
  %v3588 = vpop.f32.mrf.mxu0
  %v3589 = vadd.f32 %v3420, %v3588
  %3590 = vmatmul.bf16.gmra.mxu0 %v2624
  %v3591 = vpop.f32.mrf.mxu0
  %v3592 = vadd.f32 %v3423, %v3591
  %v3593 = vpop.f32.mrf.mxu0
  %v3594 = vadd.f32 %v3425, %v3593
  %3595 = vmatmul.bf16.gmra.mxu0 %v2627
  %v3596 = vpop.f32.mrf.mxu0
  %v3597 = vadd.f32 %v3428, %v3596
  %v3598 = vpop.f32.mrf.mxu0
  %v3599 = vadd.f32 %v3430, %v3598
  %3600 = vmatmul.bf16.gmra.mxu0 %v2630
  %v3601 = vpop.f32.mrf.mxu0
  %v3602 = vadd.f32 %v3433, %v3601
  %v3603 = vpop.f32.mrf.mxu0
  %v3604 = vadd.f32 %v3435, %v3603
  %3605 = vmatmul.bf16.gmra.mxu0 %v2633
  %v3606 = vpop.f32.mrf.mxu0
  %v3607 = vadd.f32 %v3438, %v3606
  %v3608 = vpop.f32.mrf.mxu0
  %v3609 = vadd.f32 %v3440, %v3608
  %3610 = vmatmul.bf16.gmra.mxu0 %v2636
  %v3611 = vpop.f32.mrf.mxu0
  %v3612 = vadd.f32 %v3443, %v3611
  %v3613 = vpop.f32.mrf.mxu0
  %v3614 = vadd.f32 %v3445, %v3613
  %3615 = vmatmul.bf16.gmra.mxu0 %v2639
  %v3616 = vpop.f32.mrf.mxu0
  %v3617 = vadd.f32 %v3448, %v3616
  %v3618 = vpop.f32.mrf.mxu0
  %v3619 = vadd.f32 %v3450, %v3618
  %3620 = vmatmul.bf16.gmra.mxu0 %v2642
  %v3621 = vpop.f32.mrf.mxu0
  %v3622 = vadd.f32 %v3453, %v3621
  %v3623 = vpop.f32.mrf.mxu0
  %v3624 = vadd.f32 %v3455, %v3623
  %3625 = vmatmul.bf16.gmra.mxu0 %v2645
  %v3626 = vpop.f32.mrf.mxu0
  %v3627 = vadd.f32 %v3458, %v3626
  %v3628 = vpop.f32.mrf.mxu0
  %v3629 = vadd.f32 %v3460, %v3628
  %3630 = vmatmul.bf16.gmra.mxu0 %v2648
  %v3631 = vpop.f32.mrf.mxu0
  %v3632 = vadd.f32 %v3463, %v3631
  %v3633 = vpop.f32.mrf.mxu0
  %v3634 = vadd.f32 %v3465, %v3633
  %3635 = vmatmul.bf16.gmra.mxu0 %v2651
  %v3636 = vpop.f32.mrf.mxu0
  %v3637 = vadd.f32 %v3468, %v3636
  %v3638 = vpop.f32.mrf.mxu0
  %v3639 = vadd.f32 %v3470, %v3638
  %3640 = vmatmul.bf16.gmra.mxu0 %v2654
  %v3641 = vpop.f32.mrf.mxu0
  %v3642 = vadd.f32 %v3473, %v3641
  %v3643 = vpop.f32.mrf.mxu0
  %v3644 = vadd.f32 %v3475, %v3643
  %3645 = vmatmul.bf16.gmra.mxu0 %v2657
  %v3646 = vpop.f32.mrf.mxu0
  %v3647 = vadd.f32 %v3478, %v3646
  %v3648 = vpop.f32.mrf.mxu0
  %v3649 = vadd.f32 %v3480, %v3648
  %3650 = vmatmul.bf16.gmra.mxu0 %v2660
  %v3651 = vpop.f32.mrf.mxu0
  %v3652 = vadd.f32 %v3483, %v3651
  %v3653 = vpop.f32.mrf.mxu0
  %v3654 = vadd.f32 %v3485, %v3653
  %3655 = vmatmul.bf16.gmra.mxu0 %v2663
  %v3656 = vpop.f32.mrf.mxu0
  %v3657 = vadd.f32 %v3488, %v3656
  %v3658 = vpop.f32.mrf.mxu0
  %v3659 = vadd.f32 %v3490, %v3658
  %3660 = vmatmul.bf16.gmra.mxu0 %v2666
  %v3661 = vpop.f32.mrf.mxu0
  %v3662 = vadd.f32 %v3493, %v3661
  %v3663 = vpop.f32.mrf.mxu0
  %v3664 = vadd.f32 %v3495, %v3663
  %3665 = vmatmul.bf16.gmra.mxu0 %v2669
  %v3666 = vpop.f32.mrf.mxu0
  %v3667 = vadd.f32 %v3498, %v3666
  %v3668 = vpop.f32.mrf.mxu0
  %v3669 = vadd.f32 %v3500, %v3668
  %3670 = vmatmul.bf16.gmra.mxu0 %v2672
  %v3671 = vpop.f32.mrf.mxu0
  %v3672 = vadd.f32 %v3503, %v3671
  %v3673 = vpop.f32.mrf.mxu0
  %v3674 = vadd.f32 %v3505, %v3673
  %3675 = vmatmul.bf16.gmra.mxu0 %v2675
  %v3676 = vpop.f32.mrf.mxu0
  %v3677 = vadd.f32 %v3508, %v3676
  %v3678 = vpop.f32.mrf.mxu0
  %v3679 = vadd.f32 %v3510, %v3678
  %3680 = vmatmul.bf16.gmra.mxu0 %v2678
  %v3681 = vpop.f32.mrf.mxu0
  %v3682 = vadd.f32 %v3513, %v3681
  %v3683 = vpop.f32.mrf.mxu0
  %v3684 = vadd.f32 %v3515, %v3683
  %3685 = vmatmul.bf16.gmra.mxu0 %v2681
  %v3686 = vpop.f32.mrf.mxu0
  %v3687 = vadd.f32 %v3518, %v3686
  %v3688 = vpop.f32.mrf.mxu0
  %v3689 = vadd.f32 %v3520, %v3688
  %3690 = vmatmul.bf16.gmra.mxu0 %v2684
  %v3691 = vpop.f32.mrf.mxu0
  %v3692 = vadd.f32 %v3523, %v3691
  %v3693 = vpop.f32.mrf.mxu0
  %v3694 = vadd.f32 %v3525, %v3693
  %3695 = vmatmul.bf16.gmra.mxu0 %v2687
  %v3696 = vpop.f32.mrf.mxu0
  %v3697 = vadd.f32 %v3528, %v3696
  %v3698 = vpop.f32.mrf.mxu0
  %v3699 = vadd.f32 %v3530, %v3698
  %3700 = vmatmul.bf16.gmra.mxu0 %v2690
  %v3701 = vpop.f32.mrf.mxu0
  %v3702 = vadd.f32 %v3533, %v3701
  %v3703 = vpop.f32.mrf.mxu0
  %v3704 = vadd.f32 %v3535, %v3703
  %3705 = vdwg.mxu0
  %3706 = vmatpush.bf16.msra.mxu0 %v2481
  %3707 = vmatpush.bf16.msra.mxu0 %v2477
  %3708 = vmatpush.bf16.msra.mxu0 %v2473
  %3709 = vmatpush.bf16.msra.mxu0 %v2469
  %3710 = vmatpush.bf16.msra.mxu0 %v2465
  %3711 = vmatpush.bf16.msra.mxu0 %v2461
  %3712 = vmatpush.bf16.msra.mxu0 %v2457
  %3713 = vmatpush.bf16.msra.mxu0 %v2453
  %3714 = vmatmul.bf16.gmra.mxu0 %v2057
  %v3715 = vpop.f32.mrf.mxu0
  %v3716 = vadd.f32 %v2229, %v3715
  %v3717 = vpop.f32.mrf.mxu0
  %v3718 = vadd.f32 %v2229, %v3717
  %3719 = vmatmul.bf16.gmra.mxu0 %v2060
  %v3720 = vpop.f32.mrf.mxu0
  %v3721 = vadd.f32 %v2229, %v3720
  %v3722 = vpop.f32.mrf.mxu0
  %v3723 = vadd.f32 %v2229, %v3722
  %3724 = vmatmul.bf16.gmra.mxu0 %v2063
  %v3725 = vpop.f32.mrf.mxu0
  %v3726 = vadd.f32 %v2229, %v3725
  %v3727 = vpop.f32.mrf.mxu0
  %v3728 = vadd.f32 %v2229, %v3727
  %3729 = vmatmul.bf16.gmra.mxu0 %v2066
  %v3730 = vpop.f32.mrf.mxu0
  %v3731 = vadd.f32 %v2229, %v3730
  %v3732 = vpop.f32.mrf.mxu0
  %v3733 = vadd.f32 %v2229, %v3732
  %3734 = vmatmul.bf16.gmra.mxu0 %v2069
  %v3735 = vpop.f32.mrf.mxu0
  %v3736 = vadd.f32 %v2229, %v3735
  %v3737 = vpop.f32.mrf.mxu0
  %v3738 = vadd.f32 %v2229, %v3737
  %3739 = vmatmul.bf16.gmra.mxu0 %v2072
  %v3740 = vpop.f32.mrf.mxu0
  %v3741 = vadd.f32 %v2229, %v3740
  %v3742 = vpop.f32.mrf.mxu0
  %v3743 = vadd.f32 %v2229, %v3742
  %3744 = vmatmul.bf16.gmra.mxu0 %v2075
  %v3745 = vpop.f32.mrf.mxu0
  %v3746 = vadd.f32 %v2229, %v3745
  %v3747 = vpop.f32.mrf.mxu0
  %v3748 = vadd.f32 %v2229, %v3747
  %3749 = vmatmul.bf16.gmra.mxu0 %v2078
  %v3750 = vpop.f32.mrf.mxu0
  %v3751 = vadd.f32 %v2229, %v3750
  %v3752 = vpop.f32.mrf.mxu0
  %v3753 = vadd.f32 %v2229, %v3752
  %3754 = vmatmul.bf16.gmra.mxu0 %v2081
  %v3755 = vpop.f32.mrf.mxu0
  %v3756 = vadd.f32 %v2229, %v3755
  %v3757 = vpop.f32.mrf.mxu0
  %v3758 = vadd.f32 %v2229, %v3757
  %3759 = vmatmul.bf16.gmra.mxu0 %v2084
  %v3760 = vpop.f32.mrf.mxu0
  %v3761 = vadd.f32 %v2229, %v3760
  %v3762 = vpop.f32.mrf.mxu0
  %v3763 = vadd.f32 %v2229, %v3762
  %3764 = vmatmul.bf16.gmra.mxu0 %v2087
  %v3765 = vpop.f32.mrf.mxu0
  %v3766 = vadd.f32 %v2229, %v3765
  %v3767 = vpop.f32.mrf.mxu0
  %v3768 = vadd.f32 %v2229, %v3767
  %3769 = vmatmul.bf16.gmra.mxu0 %v2090
  %v3770 = vpop.f32.mrf.mxu0
  %v3771 = vadd.f32 %v2229, %v3770
  %v3772 = vpop.f32.mrf.mxu0
  %v3773 = vadd.f32 %v2229, %v3772
  %3774 = vmatmul.bf16.gmra.mxu0 %v2093
  %v3775 = vpop.f32.mrf.mxu0
  %v3776 = vadd.f32 %v2229, %v3775
  %v3777 = vpop.f32.mrf.mxu0
  %v3778 = vadd.f32 %v2229, %v3777
  %3779 = vmatmul.bf16.gmra.mxu0 %v2096
  %v3780 = vpop.f32.mrf.mxu0
  %v3781 = vadd.f32 %v2229, %v3780
  %v3782 = vpop.f32.mrf.mxu0
  %v3783 = vadd.f32 %v2229, %v3782
  %3784 = vmatmul.bf16.gmra.mxu0 %v2099
  %v3785 = vpop.f32.mrf.mxu0
  %v3786 = vadd.f32 %v2229, %v3785
  %v3787 = vpop.f32.mrf.mxu0
  %v3788 = vadd.f32 %v2229, %v3787
  %3789 = vmatmul.bf16.gmra.mxu0 %v2102
  %v3790 = vpop.f32.mrf.mxu0
  %v3791 = vadd.f32 %v2229, %v3790
  %v3792 = vpop.f32.mrf.mxu0
  %v3793 = vadd.f32 %v2229, %v3792
  %3794 = vmatmul.bf16.gmra.mxu0 %v2105
  %v3795 = vpop.f32.mrf.mxu0
  %v3796 = vadd.f32 %v2229, %v3795
  %v3797 = vpop.f32.mrf.mxu0
  %v3798 = vadd.f32 %v2229, %v3797
  %3799 = vmatmul.bf16.gmra.mxu0 %v2108
  %v3800 = vpop.f32.mrf.mxu0
  %v3801 = vadd.f32 %v2229, %v3800
  %v3802 = vpop.f32.mrf.mxu0
  %v3803 = vadd.f32 %v2229, %v3802
  %3804 = vmatmul.bf16.gmra.mxu0 %v2111
  %v3805 = vpop.f32.mrf.mxu0
  %v3806 = vadd.f32 %v2229, %v3805
  %v3807 = vpop.f32.mrf.mxu0
  %v3808 = vadd.f32 %v2229, %v3807
  %3809 = vmatmul.bf16.gmra.mxu0 %v2114
  %v3810 = vpop.f32.mrf.mxu0
  %v3811 = vadd.f32 %v2229, %v3810
  %v3812 = vpop.f32.mrf.mxu0
  %v3813 = vadd.f32 %v2229, %v3812
  %3814 = vmatmul.bf16.gmra.mxu0 %v2117
  %v3815 = vpop.f32.mrf.mxu0
  %v3816 = vadd.f32 %v2229, %v3815
  %v3817 = vpop.f32.mrf.mxu0
  %v3818 = vadd.f32 %v2229, %v3817
  %3819 = vmatmul.bf16.gmra.mxu0 %v2120
  %v3820 = vpop.f32.mrf.mxu0
  %v3821 = vadd.f32 %v2229, %v3820
  %v3822 = vpop.f32.mrf.mxu0
  %v3823 = vadd.f32 %v2229, %v3822
  %3824 = vmatmul.bf16.gmra.mxu0 %v2123
  %v3825 = vpop.f32.mrf.mxu0
  %v3826 = vadd.f32 %v2229, %v3825
  %v3827 = vpop.f32.mrf.mxu0
  %v3828 = vadd.f32 %v2229, %v3827
  %3829 = vmatmul.bf16.gmra.mxu0 %v2126
  %v3830 = vpop.f32.mrf.mxu0
  %v3831 = vadd.f32 %v2229, %v3830
  %v3832 = vpop.f32.mrf.mxu0
  %v3833 = vadd.f32 %v2229, %v3832
  %3834 = vmatmul.bf16.gmra.mxu0 %v2129
  %v3835 = vpop.f32.mrf.mxu0
  %v3836 = vadd.f32 %v2229, %v3835
  %v3837 = vpop.f32.mrf.mxu0
  %v3838 = vadd.f32 %v2229, %v3837
  %3839 = vmatmul.bf16.gmra.mxu0 %v2132
  %v3840 = vpop.f32.mrf.mxu0
  %v3841 = vadd.f32 %v2229, %v3840
  %v3842 = vpop.f32.mrf.mxu0
  %v3843 = vadd.f32 %v2229, %v3842
  %3844 = vmatmul.bf16.gmra.mxu0 %v2135
  %v3845 = vpop.f32.mrf.mxu0
  %v3846 = vadd.f32 %v2229, %v3845
  %v3847 = vpop.f32.mrf.mxu0
  %v3848 = vadd.f32 %v2229, %v3847
  %3849 = vmatmul.bf16.gmra.mxu0 %v2138
  %v3850 = vpop.f32.mrf.mxu0
  %v3851 = vadd.f32 %v2229, %v3850
  %v3852 = vpop.f32.mrf.mxu0
  %v3853 = vadd.f32 %v2229, %v3852
  %3854 = vmatmul.bf16.gmra.mxu0 %v2141
  %v3855 = vpop.f32.mrf.mxu0
  %v3856 = vadd.f32 %v2229, %v3855
  %v3857 = vpop.f32.mrf.mxu0
  %v3858 = vadd.f32 %v2229, %v3857
  %3859 = vmatmul.bf16.gmra.mxu0 %v2144
  %v3860 = vpop.f32.mrf.mxu0
  %v3861 = vadd.f32 %v2229, %v3860
  %v3862 = vpop.f32.mrf.mxu0
  %v3863 = vadd.f32 %v2229, %v3862
  %3864 = vmatmul.bf16.gmra.mxu0 %v2147
  %v3865 = vpop.f32.mrf.mxu0
  %v3866 = vadd.f32 %v2229, %v3865
  %v3867 = vpop.f32.mrf.mxu0
  %v3868 = vadd.f32 %v2229, %v3867
  %3869 = vmatmul.bf16.gmra.mxu0 %v2150
  %v3870 = vpop.f32.mrf.mxu0
  %v3871 = vadd.f32 %v2229, %v3870
  %v3872 = vpop.f32.mrf.mxu0
  %v3873 = vadd.f32 %v2229, %v3872
  %3874 = vdwg.mxu0
  %3875 = vmatpush.bf16.msra.mxu0 %v2513
  %3876 = vmatpush.bf16.msra.mxu0 %v2509
  %3877 = vmatpush.bf16.msra.mxu0 %v2505
  %3878 = vmatpush.bf16.msra.mxu0 %v2501
  %3879 = vmatpush.bf16.msra.mxu0 %v2497
  %3880 = vmatpush.bf16.msra.mxu0 %v2493
  %3881 = vmatpush.bf16.msra.mxu0 %v2489
  %3882 = vmatpush.bf16.msra.mxu0 %v2485
  %3883 = vmatmul.bf16.gmra.mxu0 %v2058
  %v3884 = vpop.f32.mrf.mxu0
  %v3885 = vadd.f32 %v3716, %v3884
  %v3886 = vpop.f32.mrf.mxu0
  %v3887 = vadd.f32 %v3718, %v3886
  %3888 = vmatmul.bf16.gmra.mxu0 %v2061
  %v3889 = vpop.f32.mrf.mxu0
  %v3890 = vadd.f32 %v3721, %v3889
  %v3891 = vpop.f32.mrf.mxu0
  %v3892 = vadd.f32 %v3723, %v3891
  %3893 = vmatmul.bf16.gmra.mxu0 %v2064
  %v3894 = vpop.f32.mrf.mxu0
  %v3895 = vadd.f32 %v3726, %v3894
  %v3896 = vpop.f32.mrf.mxu0
  %v3897 = vadd.f32 %v3728, %v3896
  %3898 = vmatmul.bf16.gmra.mxu0 %v2067
  %v3899 = vpop.f32.mrf.mxu0
  %v3900 = vadd.f32 %v3731, %v3899
  %v3901 = vpop.f32.mrf.mxu0
  %v3902 = vadd.f32 %v3733, %v3901
  %3903 = vmatmul.bf16.gmra.mxu0 %v2070
  %v3904 = vpop.f32.mrf.mxu0
  %v3905 = vadd.f32 %v3736, %v3904
  %v3906 = vpop.f32.mrf.mxu0
  %v3907 = vadd.f32 %v3738, %v3906
  %3908 = vmatmul.bf16.gmra.mxu0 %v2073
  %v3909 = vpop.f32.mrf.mxu0
  %v3910 = vadd.f32 %v3741, %v3909
  %v3911 = vpop.f32.mrf.mxu0
  %v3912 = vadd.f32 %v3743, %v3911
  %3913 = vmatmul.bf16.gmra.mxu0 %v2076
  %v3914 = vpop.f32.mrf.mxu0
  %v3915 = vadd.f32 %v3746, %v3914
  %v3916 = vpop.f32.mrf.mxu0
  %v3917 = vadd.f32 %v3748, %v3916
  %3918 = vmatmul.bf16.gmra.mxu0 %v2079
  %v3919 = vpop.f32.mrf.mxu0
  %v3920 = vadd.f32 %v3751, %v3919
  %v3921 = vpop.f32.mrf.mxu0
  %v3922 = vadd.f32 %v3753, %v3921
  %3923 = vmatmul.bf16.gmra.mxu0 %v2082
  %v3924 = vpop.f32.mrf.mxu0
  %v3925 = vadd.f32 %v3756, %v3924
  %v3926 = vpop.f32.mrf.mxu0
  %v3927 = vadd.f32 %v3758, %v3926
  %3928 = vmatmul.bf16.gmra.mxu0 %v2085
  %v3929 = vpop.f32.mrf.mxu0
  %v3930 = vadd.f32 %v3761, %v3929
  %v3931 = vpop.f32.mrf.mxu0
  %v3932 = vadd.f32 %v3763, %v3931
  %3933 = vmatmul.bf16.gmra.mxu0 %v2088
  %v3934 = vpop.f32.mrf.mxu0
  %v3935 = vadd.f32 %v3766, %v3934
  %v3936 = vpop.f32.mrf.mxu0
  %v3937 = vadd.f32 %v3768, %v3936
  %3938 = vmatmul.bf16.gmra.mxu0 %v2091
  %v3939 = vpop.f32.mrf.mxu0
  %v3940 = vadd.f32 %v3771, %v3939
  %v3941 = vpop.f32.mrf.mxu0
  %v3942 = vadd.f32 %v3773, %v3941
  %3943 = vmatmul.bf16.gmra.mxu0 %v2094
  %v3944 = vpop.f32.mrf.mxu0
  %v3945 = vadd.f32 %v3776, %v3944
  %v3946 = vpop.f32.mrf.mxu0
  %v3947 = vadd.f32 %v3778, %v3946
  %3948 = vmatmul.bf16.gmra.mxu0 %v2097
  %v3949 = vpop.f32.mrf.mxu0
  %v3950 = vadd.f32 %v3781, %v3949
  %v3951 = vpop.f32.mrf.mxu0
  %v3952 = vadd.f32 %v3783, %v3951
  %3953 = vmatmul.bf16.gmra.mxu0 %v2100
  %v3954 = vpop.f32.mrf.mxu0
  %v3955 = vadd.f32 %v3786, %v3954
  %v3956 = vpop.f32.mrf.mxu0
  %v3957 = vadd.f32 %v3788, %v3956
  %3958 = vmatmul.bf16.gmra.mxu0 %v2103
  %v3959 = vpop.f32.mrf.mxu0
  %v3960 = vadd.f32 %v3791, %v3959
  %v3961 = vpop.f32.mrf.mxu0
  %v3962 = vadd.f32 %v3793, %v3961
  %3963 = vmatmul.bf16.gmra.mxu0 %v2106
  %v3964 = vpop.f32.mrf.mxu0
  %v3965 = vadd.f32 %v3796, %v3964
  %v3966 = vpop.f32.mrf.mxu0
  %v3967 = vadd.f32 %v3798, %v3966
  %3968 = vmatmul.bf16.gmra.mxu0 %v2109
  %v3969 = vpop.f32.mrf.mxu0
  %v3970 = vadd.f32 %v3801, %v3969
  %v3971 = vpop.f32.mrf.mxu0
  %v3972 = vadd.f32 %v3803, %v3971
  %3973 = vmatmul.bf16.gmra.mxu0 %v2112
  %v3974 = vpop.f32.mrf.mxu0
  %v3975 = vadd.f32 %v3806, %v3974
  %v3976 = vpop.f32.mrf.mxu0
  %v3977 = vadd.f32 %v3808, %v3976
  %3978 = vmatmul.bf16.gmra.mxu0 %v2115
  %v3979 = vpop.f32.mrf.mxu0
  %v3980 = vadd.f32 %v3811, %v3979
  %v3981 = vpop.f32.mrf.mxu0
  %v3982 = vadd.f32 %v3813, %v3981
  %3983 = vmatmul.bf16.gmra.mxu0 %v2118
  %v3984 = vpop.f32.mrf.mxu0
  %v3985 = vadd.f32 %v3816, %v3984
  %v3986 = vpop.f32.mrf.mxu0
  %v3987 = vadd.f32 %v3818, %v3986
  %3988 = vmatmul.bf16.gmra.mxu0 %v2121
  %v3989 = vpop.f32.mrf.mxu0
  %v3990 = vadd.f32 %v3821, %v3989
  %v3991 = vpop.f32.mrf.mxu0
  %v3992 = vadd.f32 %v3823, %v3991
  %3993 = vmatmul.bf16.gmra.mxu0 %v2124
  %v3994 = vpop.f32.mrf.mxu0
  %v3995 = vadd.f32 %v3826, %v3994
  %v3996 = vpop.f32.mrf.mxu0
  %v3997 = vadd.f32 %v3828, %v3996
  %3998 = vmatmul.bf16.gmra.mxu0 %v2127
  %v3999 = vpop.f32.mrf.mxu0
  %v4000 = vadd.f32 %v3831, %v3999
  %v4001 = vpop.f32.mrf.mxu0
  %v4002 = vadd.f32 %v3833, %v4001
  %4003 = vmatmul.bf16.gmra.mxu0 %v2130
  %v4004 = vpop.f32.mrf.mxu0
  %v4005 = vadd.f32 %v3836, %v4004
  %v4006 = vpop.f32.mrf.mxu0
  %v4007 = vadd.f32 %v3838, %v4006
  %4008 = vmatmul.bf16.gmra.mxu0 %v2133
  %v4009 = vpop.f32.mrf.mxu0
  %v4010 = vadd.f32 %v3841, %v4009
  %v4011 = vpop.f32.mrf.mxu0
  %v4012 = vadd.f32 %v3843, %v4011
  %4013 = vmatmul.bf16.gmra.mxu0 %v2136
  %v4014 = vpop.f32.mrf.mxu0
  %v4015 = vadd.f32 %v3846, %v4014
  %v4016 = vpop.f32.mrf.mxu0
  %v4017 = vadd.f32 %v3848, %v4016
  %4018 = vmatmul.bf16.gmra.mxu0 %v2139
  %v4019 = vpop.f32.mrf.mxu0
  %v4020 = vadd.f32 %v3851, %v4019
  %v4021 = vpop.f32.mrf.mxu0
  %v4022 = vadd.f32 %v3853, %v4021
  %4023 = vmatmul.bf16.gmra.mxu0 %v2142
  %v4024 = vpop.f32.mrf.mxu0
  %v4025 = vadd.f32 %v3856, %v4024
  %v4026 = vpop.f32.mrf.mxu0
  %v4027 = vadd.f32 %v3858, %v4026
  %4028 = vmatmul.bf16.gmra.mxu0 %v2145
  %v4029 = vpop.f32.mrf.mxu0
  %v4030 = vadd.f32 %v3861, %v4029
  %v4031 = vpop.f32.mrf.mxu0
  %v4032 = vadd.f32 %v3863, %v4031
  %4033 = vmatmul.bf16.gmra.mxu0 %v2148
  %v4034 = vpop.f32.mrf.mxu0
  %v4035 = vadd.f32 %v3866, %v4034
  %v4036 = vpop.f32.mrf.mxu0
  %v4037 = vadd.f32 %v3868, %v4036
  %4038 = vmatmul.bf16.gmra.mxu0 %v2151
  %v4039 = vpop.f32.mrf.mxu0
  %v4040 = vadd.f32 %v3871, %v4039
  %v4041 = vpop.f32.mrf.mxu0
  %v4042 = vadd.f32 %v3873, %v4041
  %4043 = vdwg.mxu0
  %4044 = vmatpush.bf16.msra.mxu0 0
  %4045 = vmatpush.bf16.msra.mxu0 0
  %4046 = vmatpush.bf16.msra.mxu0 0
  %4047 = vmatpush.bf16.msra.mxu0 0
  %4048 = vmatpush.bf16.msra.mxu0 0
  %4049 = vmatpush.bf16.msra.mxu0 0
  %4050 = vmatpush.bf16.msra.mxu0 %v2521
  %4051 = vmatpush.bf16.msra.mxu0 %v2517
  %4052 = vmatmul.bf16.gmra.mxu0 %v2597
  %v4053 = vpop.f32.mrf.mxu0
  %v4054 = vadd.f32 %v3885, %v4053
  %v4055 = vpop.f32.mrf.mxu0
  %v4056 = vadd.f32 %v3887, %v4055
  %4057 = vmatmul.bf16.gmra.mxu0 %v2600
  %v4058 = vpop.f32.mrf.mxu0
  %v4059 = vadd.f32 %v3890, %v4058
  %v4060 = vpop.f32.mrf.mxu0
  %v4061 = vadd.f32 %v3892, %v4060
  %4062 = vmatmul.bf16.gmra.mxu0 %v2603
  %v4063 = vpop.f32.mrf.mxu0
  %v4064 = vadd.f32 %v3895, %v4063
  %v4065 = vpop.f32.mrf.mxu0
  %v4066 = vadd.f32 %v3897, %v4065
  %4067 = vmatmul.bf16.gmra.mxu0 %v2606
  %v4068 = vpop.f32.mrf.mxu0
  %v4069 = vadd.f32 %v3900, %v4068
  %v4070 = vpop.f32.mrf.mxu0
  %v4071 = vadd.f32 %v3902, %v4070
  %4072 = vmatmul.bf16.gmra.mxu0 %v2609
  %v4073 = vpop.f32.mrf.mxu0
  %v4074 = vadd.f32 %v3905, %v4073
  %v4075 = vpop.f32.mrf.mxu0
  %v4076 = vadd.f32 %v3907, %v4075
  %4077 = vmatmul.bf16.gmra.mxu0 %v2612
  %v4078 = vpop.f32.mrf.mxu0
  %v4079 = vadd.f32 %v3910, %v4078
  %v4080 = vpop.f32.mrf.mxu0
  %v4081 = vadd.f32 %v3912, %v4080
  %4082 = vmatmul.bf16.gmra.mxu0 %v2615
  %v4083 = vpop.f32.mrf.mxu0
  %v4084 = vadd.f32 %v3915, %v4083
  %v4085 = vpop.f32.mrf.mxu0
  %v4086 = vadd.f32 %v3917, %v4085
  %4087 = vmatmul.bf16.gmra.mxu0 %v2618
  %v4088 = vpop.f32.mrf.mxu0
  %v4089 = vadd.f32 %v3920, %v4088
  %v4090 = vpop.f32.mrf.mxu0
  %v4091 = vadd.f32 %v3922, %v4090
  %4092 = vmatmul.bf16.gmra.mxu0 %v2621
  %v4093 = vpop.f32.mrf.mxu0
  %v4094 = vadd.f32 %v3925, %v4093
  %v4095 = vpop.f32.mrf.mxu0
  %v4096 = vadd.f32 %v3927, %v4095
  %4097 = vmatmul.bf16.gmra.mxu0 %v2624
  %v4098 = vpop.f32.mrf.mxu0
  %v4099 = vadd.f32 %v3930, %v4098
  %v4100 = vpop.f32.mrf.mxu0
  %v4101 = vadd.f32 %v3932, %v4100
  %4102 = vmatmul.bf16.gmra.mxu0 %v2627
  %v4103 = vpop.f32.mrf.mxu0
  %v4104 = vadd.f32 %v3935, %v4103
  %v4105 = vpop.f32.mrf.mxu0
  %v4106 = vadd.f32 %v3937, %v4105
  %4107 = vmatmul.bf16.gmra.mxu0 %v2630
  %v4108 = vpop.f32.mrf.mxu0
  %v4109 = vadd.f32 %v3940, %v4108
  %v4110 = vpop.f32.mrf.mxu0
  %v4111 = vadd.f32 %v3942, %v4110
  %4112 = vmatmul.bf16.gmra.mxu0 %v2633
  %v4113 = vpop.f32.mrf.mxu0
  %v4114 = vadd.f32 %v3945, %v4113
  %v4115 = vpop.f32.mrf.mxu0
  %v4116 = vadd.f32 %v3947, %v4115
  %4117 = vmatmul.bf16.gmra.mxu0 %v2636
  %v4118 = vpop.f32.mrf.mxu0
  %v4119 = vadd.f32 %v3950, %v4118
  %v4120 = vpop.f32.mrf.mxu0
  %v4121 = vadd.f32 %v3952, %v4120
  %4122 = vmatmul.bf16.gmra.mxu0 %v2639
  %v4123 = vpop.f32.mrf.mxu0
  %v4124 = vadd.f32 %v3955, %v4123
  %v4125 = vpop.f32.mrf.mxu0
  %v4126 = vadd.f32 %v3957, %v4125
  %4127 = vmatmul.bf16.gmra.mxu0 %v2642
  %v4128 = vpop.f32.mrf.mxu0
  %v4129 = vadd.f32 %v3960, %v4128
  %v4130 = vpop.f32.mrf.mxu0
  %v4131 = vadd.f32 %v3962, %v4130
  %4132 = vmatmul.bf16.gmra.mxu0 %v2645
  %v4133 = vpop.f32.mrf.mxu0
  %v4134 = vadd.f32 %v3965, %v4133
  %v4135 = vpop.f32.mrf.mxu0
  %v4136 = vadd.f32 %v3967, %v4135
  %4137 = vmatmul.bf16.gmra.mxu0 %v2648
  %v4138 = vpop.f32.mrf.mxu0
  %v4139 = vadd.f32 %v3970, %v4138
  %v4140 = vpop.f32.mrf.mxu0
  %v4141 = vadd.f32 %v3972, %v4140
  %4142 = vmatmul.bf16.gmra.mxu0 %v2651
  %v4143 = vpop.f32.mrf.mxu0
  %v4144 = vadd.f32 %v3975, %v4143
  %v4145 = vpop.f32.mrf.mxu0
  %v4146 = vadd.f32 %v3977, %v4145
  %4147 = vmatmul.bf16.gmra.mxu0 %v2654
  %v4148 = vpop.f32.mrf.mxu0
  %v4149 = vadd.f32 %v3980, %v4148
  %v4150 = vpop.f32.mrf.mxu0
  %v4151 = vadd.f32 %v3982, %v4150
  %4152 = vmatmul.bf16.gmra.mxu0 %v2657
  %v4153 = vpop.f32.mrf.mxu0
  %v4154 = vadd.f32 %v3985, %v4153
  %v4155 = vpop.f32.mrf.mxu0
  %v4156 = vadd.f32 %v3987, %v4155
  %4157 = vmatmul.bf16.gmra.mxu0 %v2660
  %v4158 = vpop.f32.mrf.mxu0
  %v4159 = vadd.f32 %v3990, %v4158
  %v4160 = vpop.f32.mrf.mxu0
  %v4161 = vadd.f32 %v3992, %v4160
  %4162 = vmatmul.bf16.gmra.mxu0 %v2663
  %v4163 = vpop.f32.mrf.mxu0
  %v4164 = vadd.f32 %v3995, %v4163
  %v4165 = vpop.f32.mrf.mxu0
  %v4166 = vadd.f32 %v3997, %v4165
  %4167 = vmatmul.bf16.gmra.mxu0 %v2666
  %v4168 = vpop.f32.mrf.mxu0
  %v4169 = vadd.f32 %v4000, %v4168
  %v4170 = vpop.f32.mrf.mxu0
  %v4171 = vadd.f32 %v4002, %v4170
  %4172 = vmatmul.bf16.gmra.mxu0 %v2669
  %v4173 = vpop.f32.mrf.mxu0
  %v4174 = vadd.f32 %v4005, %v4173
  %v4175 = vpop.f32.mrf.mxu0
  %v4176 = vadd.f32 %v4007, %v4175
  %4177 = vmatmul.bf16.gmra.mxu0 %v2672
  %v4178 = vpop.f32.mrf.mxu0
  %v4179 = vadd.f32 %v4010, %v4178
  %v4180 = vpop.f32.mrf.mxu0
  %v4181 = vadd.f32 %v4012, %v4180
  %4182 = vmatmul.bf16.gmra.mxu0 %v2675
  %v4183 = vpop.f32.mrf.mxu0
  %v4184 = vadd.f32 %v4015, %v4183
  %v4185 = vpop.f32.mrf.mxu0
  %v4186 = vadd.f32 %v4017, %v4185
  %4187 = vmatmul.bf16.gmra.mxu0 %v2678
  %v4188 = vpop.f32.mrf.mxu0
  %v4189 = vadd.f32 %v4020, %v4188
  %v4190 = vpop.f32.mrf.mxu0
  %v4191 = vadd.f32 %v4022, %v4190
  %4192 = vmatmul.bf16.gmra.mxu0 %v2681
  %v4193 = vpop.f32.mrf.mxu0
  %v4194 = vadd.f32 %v4025, %v4193
  %v4195 = vpop.f32.mrf.mxu0
  %v4196 = vadd.f32 %v4027, %v4195
  %4197 = vmatmul.bf16.gmra.mxu0 %v2684
  %v4198 = vpop.f32.mrf.mxu0
  %v4199 = vadd.f32 %v4030, %v4198
  %v4200 = vpop.f32.mrf.mxu0
  %v4201 = vadd.f32 %v4032, %v4200
  %4202 = vmatmul.bf16.gmra.mxu0 %v2687
  %v4203 = vpop.f32.mrf.mxu0
  %v4204 = vadd.f32 %v4035, %v4203
  %v4205 = vpop.f32.mrf.mxu0
  %v4206 = vadd.f32 %v4037, %v4205
  %4207 = vmatmul.bf16.gmra.mxu0 %v2690
  %v4208 = vpop.f32.mrf.mxu0
  %v4209 = vadd.f32 %v4040, %v4208
  %v4210 = vpop.f32.mrf.mxu0
  %v4211 = vadd.f32 %v4042, %v4210
  %4212 = vdwg.mxu0
  %4213 = vmatpush.bf16.msra.mxu0 %v2482
  %4214 = vmatpush.bf16.msra.mxu0 %v2478
  %4215 = vmatpush.bf16.msra.mxu0 %v2474
  %4216 = vmatpush.bf16.msra.mxu0 %v2470
  %4217 = vmatpush.bf16.msra.mxu0 %v2466
  %4218 = vmatpush.bf16.msra.mxu0 %v2462
  %4219 = vmatpush.bf16.msra.mxu0 %v2458
  %4220 = vmatpush.bf16.msra.mxu0 %v2454
  %4221 = vmatmul.bf16.gmra.mxu0 %v2057
  %v4222 = vpop.f32.mrf.mxu0
  %v4223 = vadd.f32 %v2230, %v4222
  %v4224 = vpop.f32.mrf.mxu0
  %v4225 = vadd.f32 %v2230, %v4224
  %4226 = vmatmul.bf16.gmra.mxu0 %v2060
  %v4227 = vpop.f32.mrf.mxu0
  %v4228 = vadd.f32 %v2230, %v4227
  %v4229 = vpop.f32.mrf.mxu0
  %v4230 = vadd.f32 %v2230, %v4229
  %4231 = vmatmul.bf16.gmra.mxu0 %v2063
  %v4232 = vpop.f32.mrf.mxu0
  %v4233 = vadd.f32 %v2230, %v4232
  %v4234 = vpop.f32.mrf.mxu0
  %v4235 = vadd.f32 %v2230, %v4234
  %4236 = vmatmul.bf16.gmra.mxu0 %v2066
  %v4237 = vpop.f32.mrf.mxu0
  %v4238 = vadd.f32 %v2230, %v4237
  %v4239 = vpop.f32.mrf.mxu0
  %v4240 = vadd.f32 %v2230, %v4239
  %4241 = vmatmul.bf16.gmra.mxu0 %v2069
  %v4242 = vpop.f32.mrf.mxu0
  %v4243 = vadd.f32 %v2230, %v4242
  %v4244 = vpop.f32.mrf.mxu0
  %v4245 = vadd.f32 %v2230, %v4244
  %4246 = vmatmul.bf16.gmra.mxu0 %v2072
  %v4247 = vpop.f32.mrf.mxu0
  %v4248 = vadd.f32 %v2230, %v4247
  %v4249 = vpop.f32.mrf.mxu0
  %v4250 = vadd.f32 %v2230, %v4249
  %4251 = vmatmul.bf16.gmra.mxu0 %v2075
  %v4252 = vpop.f32.mrf.mxu0
  %v4253 = vadd.f32 %v2230, %v4252
  %v4254 = vpop.f32.mrf.mxu0
  %v4255 = vadd.f32 %v2230, %v4254
  %4256 = vmatmul.bf16.gmra.mxu0 %v2078
  %v4257 = vpop.f32.mrf.mxu0
  %v4258 = vadd.f32 %v2230, %v4257
  %v4259 = vpop.f32.mrf.mxu0
  %v4260 = vadd.f32 %v2230, %v4259
  %4261 = vmatmul.bf16.gmra.mxu0 %v2081
  %v4262 = vpop.f32.mrf.mxu0
  %v4263 = vadd.f32 %v2230, %v4262
  %v4264 = vpop.f32.mrf.mxu0
  %v4265 = vadd.f32 %v2230, %v4264
  %4266 = vmatmul.bf16.gmra.mxu0 %v2084
  %v4267 = vpop.f32.mrf.mxu0
  %v4268 = vadd.f32 %v2230, %v4267
  %v4269 = vpop.f32.mrf.mxu0
  %v4270 = vadd.f32 %v2230, %v4269
  %4271 = vmatmul.bf16.gmra.mxu0 %v2087
  %v4272 = vpop.f32.mrf.mxu0
  %v4273 = vadd.f32 %v2230, %v4272
  %v4274 = vpop.f32.mrf.mxu0
  %v4275 = vadd.f32 %v2230, %v4274
  %4276 = vmatmul.bf16.gmra.mxu0 %v2090
  %v4277 = vpop.f32.mrf.mxu0
  %v4278 = vadd.f32 %v2230, %v4277
  %v4279 = vpop.f32.mrf.mxu0
  %v4280 = vadd.f32 %v2230, %v4279
  %4281 = vmatmul.bf16.gmra.mxu0 %v2093
  %v4282 = vpop.f32.mrf.mxu0
  %v4283 = vadd.f32 %v2230, %v4282
  %v4284 = vpop.f32.mrf.mxu0
  %v4285 = vadd.f32 %v2230, %v4284
  %4286 = vmatmul.bf16.gmra.mxu0 %v2096
  %v4287 = vpop.f32.mrf.mxu0
  %v4288 = vadd.f32 %v2230, %v4287
  %v4289 = vpop.f32.mrf.mxu0
  %v4290 = vadd.f32 %v2230, %v4289
  %4291 = vmatmul.bf16.gmra.mxu0 %v2099
  %v4292 = vpop.f32.mrf.mxu0
  %v4293 = vadd.f32 %v2230, %v4292
  %v4294 = vpop.f32.mrf.mxu0
  %v4295 = vadd.f32 %v2230, %v4294
  %4296 = vmatmul.bf16.gmra.mxu0 %v2102
  %v4297 = vpop.f32.mrf.mxu0
  %v4298 = vadd.f32 %v2230, %v4297
  %v4299 = vpop.f32.mrf.mxu0
  %v4300 = vadd.f32 %v2230, %v4299
  %4301 = vmatmul.bf16.gmra.mxu0 %v2105
  %v4302 = vpop.f32.mrf.mxu0
  %v4303 = vadd.f32 %v2230, %v4302
  %v4304 = vpop.f32.mrf.mxu0
  %v4305 = vadd.f32 %v2230, %v4304
  %4306 = vmatmul.bf16.gmra.mxu0 %v2108
  %v4307 = vpop.f32.mrf.mxu0
  %v4308 = vadd.f32 %v2230, %v4307
  %v4309 = vpop.f32.mrf.mxu0
  %v4310 = vadd.f32 %v2230, %v4309
  %4311 = vmatmul.bf16.gmra.mxu0 %v2111
  %v4312 = vpop.f32.mrf.mxu0
  %v4313 = vadd.f32 %v2230, %v4312
  %v4314 = vpop.f32.mrf.mxu0
  %v4315 = vadd.f32 %v2230, %v4314
  %4316 = vmatmul.bf16.gmra.mxu0 %v2114
  %v4317 = vpop.f32.mrf.mxu0
  %v4318 = vadd.f32 %v2230, %v4317
  %v4319 = vpop.f32.mrf.mxu0
  %v4320 = vadd.f32 %v2230, %v4319
  %4321 = vmatmul.bf16.gmra.mxu0 %v2117
  %v4322 = vpop.f32.mrf.mxu0
  %v4323 = vadd.f32 %v2230, %v4322
  %v4324 = vpop.f32.mrf.mxu0
  %v4325 = vadd.f32 %v2230, %v4324
  %4326 = vmatmul.bf16.gmra.mxu0 %v2120
  %v4327 = vpop.f32.mrf.mxu0
  %v4328 = vadd.f32 %v2230, %v4327
  %v4329 = vpop.f32.mrf.mxu0
  %v4330 = vadd.f32 %v2230, %v4329
  %4331 = vmatmul.bf16.gmra.mxu0 %v2123
  %v4332 = vpop.f32.mrf.mxu0
  %v4333 = vadd.f32 %v2230, %v4332
  %v4334 = vpop.f32.mrf.mxu0
  %v4335 = vadd.f32 %v2230, %v4334
  %4336 = vmatmul.bf16.gmra.mxu0 %v2126
  %v4337 = vpop.f32.mrf.mxu0
  %v4338 = vadd.f32 %v2230, %v4337
  %v4339 = vpop.f32.mrf.mxu0
  %v4340 = vadd.f32 %v2230, %v4339
  %4341 = vmatmul.bf16.gmra.mxu0 %v2129
  %v4342 = vpop.f32.mrf.mxu0
  %v4343 = vadd.f32 %v2230, %v4342
  %v4344 = vpop.f32.mrf.mxu0
  %v4345 = vadd.f32 %v2230, %v4344
  %4346 = vmatmul.bf16.gmra.mxu0 %v2132
  %v4347 = vpop.f32.mrf.mxu0
  %v4348 = vadd.f32 %v2230, %v4347
  %v4349 = vpop.f32.mrf.mxu0
  %v4350 = vadd.f32 %v2230, %v4349
  %4351 = vmatmul.bf16.gmra.mxu0 %v2135
  %v4352 = vpop.f32.mrf.mxu0
  %v4353 = vadd.f32 %v2230, %v4352
  %v4354 = vpop.f32.mrf.mxu0
  %v4355 = vadd.f32 %v2230, %v4354
  %4356 = vmatmul.bf16.gmra.mxu0 %v2138
  %v4357 = vpop.f32.mrf.mxu0
  %v4358 = vadd.f32 %v2230, %v4357
  %v4359 = vpop.f32.mrf.mxu0
  %v4360 = vadd.f32 %v2230, %v4359
  %4361 = vmatmul.bf16.gmra.mxu0 %v2141
  %v4362 = vpop.f32.mrf.mxu0
  %v4363 = vadd.f32 %v2230, %v4362
  %v4364 = vpop.f32.mrf.mxu0
  %v4365 = vadd.f32 %v2230, %v4364
  %4366 = vmatmul.bf16.gmra.mxu0 %v2144
  %v4367 = vpop.f32.mrf.mxu0
  %v4368 = vadd.f32 %v2230, %v4367
  %v4369 = vpop.f32.mrf.mxu0
  %v4370 = vadd.f32 %v2230, %v4369
  %4371 = vmatmul.bf16.gmra.mxu0 %v2147
  %v4372 = vpop.f32.mrf.mxu0
  %v4373 = vadd.f32 %v2230, %v4372
  %v4374 = vpop.f32.mrf.mxu0
  %v4375 = vadd.f32 %v2230, %v4374
  %4376 = vmatmul.bf16.gmra.mxu0 %v2150
  %v4377 = vpop.f32.mrf.mxu0
  %v4378 = vadd.f32 %v2230, %v4377
  %v4379 = vpop.f32.mrf.mxu0
  %v4380 = vadd.f32 %v2230, %v4379
  %4381 = vdwg.mxu0
  %4382 = vmatpush.bf16.msra.mxu0 %v2514
  %4383 = vmatpush.bf16.msra.mxu0 %v2510
  %4384 = vmatpush.bf16.msra.mxu0 %v2506
  %4385 = vmatpush.bf16.msra.mxu0 %v2502
  %4386 = vmatpush.bf16.msra.mxu0 %v2498
  %4387 = vmatpush.bf16.msra.mxu0 %v2494
  %4388 = vmatpush.bf16.msra.mxu0 %v2490
  %4389 = vmatpush.bf16.msra.mxu0 %v2486
  %4390 = vmatmul.bf16.gmra.mxu0 %v2058
  %v4391 = vpop.f32.mrf.mxu0
  %v4392 = vadd.f32 %v4223, %v4391
  %v4393 = vpop.f32.mrf.mxu0
  %v4394 = vadd.f32 %v4225, %v4393
  %4395 = vmatmul.bf16.gmra.mxu0 %v2061
  %v4396 = vpop.f32.mrf.mxu0
  %v4397 = vadd.f32 %v4228, %v4396
  %v4398 = vpop.f32.mrf.mxu0
  %v4399 = vadd.f32 %v4230, %v4398
  %4400 = vmatmul.bf16.gmra.mxu0 %v2064
  %v4401 = vpop.f32.mrf.mxu0
  %v4402 = vadd.f32 %v4233, %v4401
  %v4403 = vpop.f32.mrf.mxu0
  %v4404 = vadd.f32 %v4235, %v4403
  %4405 = vmatmul.bf16.gmra.mxu0 %v2067
  %v4406 = vpop.f32.mrf.mxu0
  %v4407 = vadd.f32 %v4238, %v4406
  %v4408 = vpop.f32.mrf.mxu0
  %v4409 = vadd.f32 %v4240, %v4408
  %4410 = vmatmul.bf16.gmra.mxu0 %v2070
  %v4411 = vpop.f32.mrf.mxu0
  %v4412 = vadd.f32 %v4243, %v4411
  %v4413 = vpop.f32.mrf.mxu0
  %v4414 = vadd.f32 %v4245, %v4413
  %4415 = vmatmul.bf16.gmra.mxu0 %v2073
  %v4416 = vpop.f32.mrf.mxu0
  %v4417 = vadd.f32 %v4248, %v4416
  %v4418 = vpop.f32.mrf.mxu0
  %v4419 = vadd.f32 %v4250, %v4418
  %4420 = vmatmul.bf16.gmra.mxu0 %v2076
  %v4421 = vpop.f32.mrf.mxu0
  %v4422 = vadd.f32 %v4253, %v4421
  %v4423 = vpop.f32.mrf.mxu0
  %v4424 = vadd.f32 %v4255, %v4423
  %4425 = vmatmul.bf16.gmra.mxu0 %v2079
  %v4426 = vpop.f32.mrf.mxu0
  %v4427 = vadd.f32 %v4258, %v4426
  %v4428 = vpop.f32.mrf.mxu0
  %v4429 = vadd.f32 %v4260, %v4428
  %4430 = vmatmul.bf16.gmra.mxu0 %v2082
  %v4431 = vpop.f32.mrf.mxu0
  %v4432 = vadd.f32 %v4263, %v4431
  %v4433 = vpop.f32.mrf.mxu0
  %v4434 = vadd.f32 %v4265, %v4433
  %4435 = vmatmul.bf16.gmra.mxu0 %v2085
  %v4436 = vpop.f32.mrf.mxu0
  %v4437 = vadd.f32 %v4268, %v4436
  %v4438 = vpop.f32.mrf.mxu0
  %v4439 = vadd.f32 %v4270, %v4438
  %4440 = vmatmul.bf16.gmra.mxu0 %v2088
  %v4441 = vpop.f32.mrf.mxu0
  %v4442 = vadd.f32 %v4273, %v4441
  %v4443 = vpop.f32.mrf.mxu0
  %v4444 = vadd.f32 %v4275, %v4443
  %4445 = vmatmul.bf16.gmra.mxu0 %v2091
  %v4446 = vpop.f32.mrf.mxu0
  %v4447 = vadd.f32 %v4278, %v4446
  %v4448 = vpop.f32.mrf.mxu0
  %v4449 = vadd.f32 %v4280, %v4448
  %4450 = vmatmul.bf16.gmra.mxu0 %v2094
  %v4451 = vpop.f32.mrf.mxu0
  %v4452 = vadd.f32 %v4283, %v4451
  %v4453 = vpop.f32.mrf.mxu0
  %v4454 = vadd.f32 %v4285, %v4453
  %4455 = vmatmul.bf16.gmra.mxu0 %v2097
  %v4456 = vpop.f32.mrf.mxu0
  %v4457 = vadd.f32 %v4288, %v4456
  %v4458 = vpop.f32.mrf.mxu0
  %v4459 = vadd.f32 %v4290, %v4458
  %4460 = vmatmul.bf16.gmra.mxu0 %v2100
  %v4461 = vpop.f32.mrf.mxu0
  %v4462 = vadd.f32 %v4293, %v4461
  %v4463 = vpop.f32.mrf.mxu0
  %v4464 = vadd.f32 %v4295, %v4463
  %4465 = vmatmul.bf16.gmra.mxu0 %v2103
  %v4466 = vpop.f32.mrf.mxu0
  %v4467 = vadd.f32 %v4298, %v4466
  %v4468 = vpop.f32.mrf.mxu0
  %v4469 = vadd.f32 %v4300, %v4468
  %4470 = vmatmul.bf16.gmra.mxu0 %v2106
  %v4471 = vpop.f32.mrf.mxu0
  %v4472 = vadd.f32 %v4303, %v4471
  %v4473 = vpop.f32.mrf.mxu0
  %v4474 = vadd.f32 %v4305, %v4473
  %4475 = vmatmul.bf16.gmra.mxu0 %v2109
  %v4476 = vpop.f32.mrf.mxu0
  %v4477 = vadd.f32 %v4308, %v4476
  %v4478 = vpop.f32.mrf.mxu0
  %v4479 = vadd.f32 %v4310, %v4478
  %4480 = vmatmul.bf16.gmra.mxu0 %v2112
  %v4481 = vpop.f32.mrf.mxu0
  %v4482 = vadd.f32 %v4313, %v4481
  %v4483 = vpop.f32.mrf.mxu0
  %v4484 = vadd.f32 %v4315, %v4483
  %4485 = vmatmul.bf16.gmra.mxu0 %v2115
  %v4486 = vpop.f32.mrf.mxu0
  %v4487 = vadd.f32 %v4318, %v4486
  %v4488 = vpop.f32.mrf.mxu0
  %v4489 = vadd.f32 %v4320, %v4488
  %4490 = vmatmul.bf16.gmra.mxu0 %v2118
  %v4491 = vpop.f32.mrf.mxu0
  %v4492 = vadd.f32 %v4323, %v4491
  %v4493 = vpop.f32.mrf.mxu0
  %v4494 = vadd.f32 %v4325, %v4493
  %4495 = vmatmul.bf16.gmra.mxu0 %v2121
  %v4496 = vpop.f32.mrf.mxu0
  %v4497 = vadd.f32 %v4328, %v4496
  %v4498 = vpop.f32.mrf.mxu0
  %v4499 = vadd.f32 %v4330, %v4498
  %4500 = vmatmul.bf16.gmra.mxu0 %v2124
  %v4501 = vpop.f32.mrf.mxu0
  %v4502 = vadd.f32 %v4333, %v4501
  %v4503 = vpop.f32.mrf.mxu0
  %v4504 = vadd.f32 %v4335, %v4503
  %4505 = vmatmul.bf16.gmra.mxu0 %v2127
  %v4506 = vpop.f32.mrf.mxu0
  %v4507 = vadd.f32 %v4338, %v4506
  %v4508 = vpop.f32.mrf.mxu0
  %v4509 = vadd.f32 %v4340, %v4508
  %4510 = vmatmul.bf16.gmra.mxu0 %v2130
  %v4511 = vpop.f32.mrf.mxu0
  %v4512 = vadd.f32 %v4343, %v4511
  %v4513 = vpop.f32.mrf.mxu0
  %v4514 = vadd.f32 %v4345, %v4513
  %4515 = vmatmul.bf16.gmra.mxu0 %v2133
  %v4516 = vpop.f32.mrf.mxu0
  %v4517 = vadd.f32 %v4348, %v4516
  %v4518 = vpop.f32.mrf.mxu0
  %v4519 = vadd.f32 %v4350, %v4518
  %4520 = vmatmul.bf16.gmra.mxu0 %v2136
  %v4521 = vpop.f32.mrf.mxu0
  %v4522 = vadd.f32 %v4353, %v4521
  %v4523 = vpop.f32.mrf.mxu0
  %v4524 = vadd.f32 %v4355, %v4523
  %4525 = vmatmul.bf16.gmra.mxu0 %v2139
  %v4526 = vpop.f32.mrf.mxu0
  %v4527 = vadd.f32 %v4358, %v4526
  %v4528 = vpop.f32.mrf.mxu0
  %v4529 = vadd.f32 %v4360, %v4528
  %4530 = vmatmul.bf16.gmra.mxu0 %v2142
  %v4531 = vpop.f32.mrf.mxu0
  %v4532 = vadd.f32 %v4363, %v4531
  %v4533 = vpop.f32.mrf.mxu0
  %v4534 = vadd.f32 %v4365, %v4533
  %4535 = vmatmul.bf16.gmra.mxu0 %v2145
  %v4536 = vpop.f32.mrf.mxu0
  %v4537 = vadd.f32 %v4368, %v4536
  %v4538 = vpop.f32.mrf.mxu0
  %v4539 = vadd.f32 %v4370, %v4538
  %4540 = vmatmul.bf16.gmra.mxu0 %v2148
  %v4541 = vpop.f32.mrf.mxu0
  %v4542 = vadd.f32 %v4373, %v4541
  %v4543 = vpop.f32.mrf.mxu0
  %v4544 = vadd.f32 %v4375, %v4543
  %4545 = vmatmul.bf16.gmra.mxu0 %v2151
  %v4546 = vpop.f32.mrf.mxu0
  %v4547 = vadd.f32 %v4378, %v4546
  %v4548 = vpop.f32.mrf.mxu0
  %v4549 = vadd.f32 %v4380, %v4548
  %4550 = vdwg.mxu0
  %4551 = vmatpush.bf16.msra.mxu0 0
  %4552 = vmatpush.bf16.msra.mxu0 0
  %4553 = vmatpush.bf16.msra.mxu0 0
  %4554 = vmatpush.bf16.msra.mxu0 0
  %4555 = vmatpush.bf16.msra.mxu0 0
  %4556 = vmatpush.bf16.msra.mxu0 0
  %4557 = vmatpush.bf16.msra.mxu0 %v2522
  %4558 = vmatpush.bf16.msra.mxu0 %v2518
  %4559 = vmatmul.bf16.gmra.mxu0 %v2597
  %v4560 = vpop.f32.mrf.mxu0
  %v4561 = vadd.f32 %v4392, %v4560
  %v4562 = vpop.f32.mrf.mxu0
  %v4563 = vadd.f32 %v4394, %v4562
  %4564 = vmatmul.bf16.gmra.mxu0 %v2600
  %v4565 = vpop.f32.mrf.mxu0
  %v4566 = vadd.f32 %v4397, %v4565
  %v4567 = vpop.f32.mrf.mxu0
  %v4568 = vadd.f32 %v4399, %v4567
  %4569 = vmatmul.bf16.gmra.mxu0 %v2603
  %v4570 = vpop.f32.mrf.mxu0
  %v4571 = vadd.f32 %v4402, %v4570
  %v4572 = vpop.f32.mrf.mxu0
  %v4573 = vadd.f32 %v4404, %v4572
  %4574 = vmatmul.bf16.gmra.mxu0 %v2606
  %v4575 = vpop.f32.mrf.mxu0
  %v4576 = vadd.f32 %v4407, %v4575
  %v4577 = vpop.f32.mrf.mxu0
  %v4578 = vadd.f32 %v4409, %v4577
  %4579 = vmatmul.bf16.gmra.mxu0 %v2609
  %v4580 = vpop.f32.mrf.mxu0
  %v4581 = vadd.f32 %v4412, %v4580
  %v4582 = vpop.f32.mrf.mxu0
  %v4583 = vadd.f32 %v4414, %v4582
  %4584 = vmatmul.bf16.gmra.mxu0 %v2612
  %v4585 = vpop.f32.mrf.mxu0
  %v4586 = vadd.f32 %v4417, %v4585
  %v4587 = vpop.f32.mrf.mxu0
  %v4588 = vadd.f32 %v4419, %v4587
  %4589 = vmatmul.bf16.gmra.mxu0 %v2615
  %v4590 = vpop.f32.mrf.mxu0
  %v4591 = vadd.f32 %v4422, %v4590
  %v4592 = vpop.f32.mrf.mxu0
  %v4593 = vadd.f32 %v4424, %v4592
  %4594 = vmatmul.bf16.gmra.mxu0 %v2618
  %v4595 = vpop.f32.mrf.mxu0
  %v4596 = vadd.f32 %v4427, %v4595
  %v4597 = vpop.f32.mrf.mxu0
  %v4598 = vadd.f32 %v4429, %v4597
  %4599 = vmatmul.bf16.gmra.mxu0 %v2621
  %v4600 = vpop.f32.mrf.mxu0
  %v4601 = vadd.f32 %v4432, %v4600
  %v4602 = vpop.f32.mrf.mxu0
  %v4603 = vadd.f32 %v4434, %v4602
  %4604 = vmatmul.bf16.gmra.mxu0 %v2624
  %v4605 = vpop.f32.mrf.mxu0
  %v4606 = vadd.f32 %v4437, %v4605
  %v4607 = vpop.f32.mrf.mxu0
  %v4608 = vadd.f32 %v4439, %v4607
  %4609 = vmatmul.bf16.gmra.mxu0 %v2627
  %v4610 = vpop.f32.mrf.mxu0
  %v4611 = vadd.f32 %v4442, %v4610
  %v4612 = vpop.f32.mrf.mxu0
  %v4613 = vadd.f32 %v4444, %v4612
  %4614 = vmatmul.bf16.gmra.mxu0 %v2630
  %v4615 = vpop.f32.mrf.mxu0
  %v4616 = vadd.f32 %v4447, %v4615
  %v4617 = vpop.f32.mrf.mxu0
  %v4618 = vadd.f32 %v4449, %v4617
  %4619 = vmatmul.bf16.gmra.mxu0 %v2633
  %v4620 = vpop.f32.mrf.mxu0
  %v4621 = vadd.f32 %v4452, %v4620
  %v4622 = vpop.f32.mrf.mxu0
  %v4623 = vadd.f32 %v4454, %v4622
  %4624 = vmatmul.bf16.gmra.mxu0 %v2636
  %v4625 = vpop.f32.mrf.mxu0
  %v4626 = vadd.f32 %v4457, %v4625
  %v4627 = vpop.f32.mrf.mxu0
  %v4628 = vadd.f32 %v4459, %v4627
  %4629 = vmatmul.bf16.gmra.mxu0 %v2639
  %v4630 = vpop.f32.mrf.mxu0
  %v4631 = vadd.f32 %v4462, %v4630
  %v4632 = vpop.f32.mrf.mxu0
  %v4633 = vadd.f32 %v4464, %v4632
  %4634 = vmatmul.bf16.gmra.mxu0 %v2642
  %v4635 = vpop.f32.mrf.mxu0
  %v4636 = vadd.f32 %v4467, %v4635
  %v4637 = vpop.f32.mrf.mxu0
  %v4638 = vadd.f32 %v4469, %v4637
  %4639 = vmatmul.bf16.gmra.mxu0 %v2645
  %v4640 = vpop.f32.mrf.mxu0
  %v4641 = vadd.f32 %v4472, %v4640
  %v4642 = vpop.f32.mrf.mxu0
  %v4643 = vadd.f32 %v4474, %v4642
  %4644 = vmatmul.bf16.gmra.mxu0 %v2648
  %v4645 = vpop.f32.mrf.mxu0
  %v4646 = vadd.f32 %v4477, %v4645
  %v4647 = vpop.f32.mrf.mxu0
  %v4648 = vadd.f32 %v4479, %v4647
  %4649 = vmatmul.bf16.gmra.mxu0 %v2651
  %v4650 = vpop.f32.mrf.mxu0
  %v4651 = vadd.f32 %v4482, %v4650
  %v4652 = vpop.f32.mrf.mxu0
  %v4653 = vadd.f32 %v4484, %v4652
  %4654 = vmatmul.bf16.gmra.mxu0 %v2654
  %v4655 = vpop.f32.mrf.mxu0
  %v4656 = vadd.f32 %v4487, %v4655
  %v4657 = vpop.f32.mrf.mxu0
  %v4658 = vadd.f32 %v4489, %v4657
  %4659 = vmatmul.bf16.gmra.mxu0 %v2657
  %v4660 = vpop.f32.mrf.mxu0
  %v4661 = vadd.f32 %v4492, %v4660
  %v4662 = vpop.f32.mrf.mxu0
  %v4663 = vadd.f32 %v4494, %v4662
  %4664 = vmatmul.bf16.gmra.mxu0 %v2660
  %v4665 = vpop.f32.mrf.mxu0
  %v4666 = vadd.f32 %v4497, %v4665
  %v4667 = vpop.f32.mrf.mxu0
  %v4668 = vadd.f32 %v4499, %v4667
  %4669 = vmatmul.bf16.gmra.mxu0 %v2663
  %v4670 = vpop.f32.mrf.mxu0
  %v4671 = vadd.f32 %v4502, %v4670
  %v4672 = vpop.f32.mrf.mxu0
  %v4673 = vadd.f32 %v4504, %v4672
  %4674 = vmatmul.bf16.gmra.mxu0 %v2666
  %v4675 = vpop.f32.mrf.mxu0
  %v4676 = vadd.f32 %v4507, %v4675
  %v4677 = vpop.f32.mrf.mxu0
  %v4678 = vadd.f32 %v4509, %v4677
  %4679 = vmatmul.bf16.gmra.mxu0 %v2669
  %v4680 = vpop.f32.mrf.mxu0
  %v4681 = vadd.f32 %v4512, %v4680
  %v4682 = vpop.f32.mrf.mxu0
  %v4683 = vadd.f32 %v4514, %v4682
  %4684 = vmatmul.bf16.gmra.mxu0 %v2672
  %v4685 = vpop.f32.mrf.mxu0
  %v4686 = vadd.f32 %v4517, %v4685
  %v4687 = vpop.f32.mrf.mxu0
  %v4688 = vadd.f32 %v4519, %v4687
  %4689 = vmatmul.bf16.gmra.mxu0 %v2675
  %v4690 = vpop.f32.mrf.mxu0
  %v4691 = vadd.f32 %v4522, %v4690
  %v4692 = vpop.f32.mrf.mxu0
  %v4693 = vadd.f32 %v4524, %v4692
  %4694 = vmatmul.bf16.gmra.mxu0 %v2678
  %v4695 = vpop.f32.mrf.mxu0
  %v4696 = vadd.f32 %v4527, %v4695
  %v4697 = vpop.f32.mrf.mxu0
  %v4698 = vadd.f32 %v4529, %v4697
  %4699 = vmatmul.bf16.gmra.mxu0 %v2681
  %v4700 = vpop.f32.mrf.mxu0
  %v4701 = vadd.f32 %v4532, %v4700
  %v4702 = vpop.f32.mrf.mxu0
  %v4703 = vadd.f32 %v4534, %v4702
  %4704 = vmatmul.bf16.gmra.mxu0 %v2684
  %v4705 = vpop.f32.mrf.mxu0
  %v4706 = vadd.f32 %v4537, %v4705
  %v4707 = vpop.f32.mrf.mxu0
  %v4708 = vadd.f32 %v4539, %v4707
  %4709 = vmatmul.bf16.gmra.mxu0 %v2687
  %v4710 = vpop.f32.mrf.mxu0
  %v4711 = vadd.f32 %v4542, %v4710
  %v4712 = vpop.f32.mrf.mxu0
  %v4713 = vadd.f32 %v4544, %v4712
  %4714 = vmatmul.bf16.gmra.mxu0 %v2690
  %v4715 = vpop.f32.mrf.mxu0
  %v4716 = vadd.f32 %v4547, %v4715
  %v4717 = vpop.f32.mrf.mxu0
  %v4718 = vadd.f32 %v4549, %v4717
  %4719 = vdwg.mxu0
  %v4720 = vmax.f32 %v3040, 0.0
  %v4721 = vmax.f32 %v3547, 0.0
  %v4722 = vmax.f32 %v4054, 0.0
  %v4723 = vmax.f32 %v4561, 0.0
  %v4724 = vmax.f32 %v3042, 0.0
  %v4725 = vmax.f32 %v3549, 0.0
  %v4726 = vmax.f32 %v4056, 0.0
  %v4727 = vmax.f32 %v4563, 0.0
  %v4728 = vmax.f32 %v3045, 0.0
  %v4729 = vmax.f32 %v3552, 0.0
  %v4730 = vmax.f32 %v4059, 0.0
  %v4731 = vmax.f32 %v4566, 0.0
  %v4732 = vmax.f32 %v3047, 0.0
  %v4733 = vmax.f32 %v3554, 0.0
  %v4734 = vmax.f32 %v4061, 0.0
  %v4735 = vmax.f32 %v4568, 0.0
  %v4736 = vmax.f32 %v3050, 0.0
  %v4737 = vmax.f32 %v3557, 0.0
  %v4738 = vmax.f32 %v4064, 0.0
  %v4739 = vmax.f32 %v4571, 0.0
  %v4740 = vmax.f32 %v3052, 0.0
  %v4741 = vmax.f32 %v3559, 0.0
  %v4742 = vmax.f32 %v4066, 0.0
  %v4743 = vmax.f32 %v4573, 0.0
  %v4744 = vmax.f32 %v3055, 0.0
  %v4745 = vmax.f32 %v3562, 0.0
  %v4746 = vmax.f32 %v4069, 0.0
  %v4747 = vmax.f32 %v4576, 0.0
  %v4748 = vmax.f32 %v3057, 0.0
  %v4749 = vmax.f32 %v3564, 0.0
  %v4750 = vmax.f32 %v4071, 0.0
  %v4751 = vmax.f32 %v4578, 0.0
  %v4752 = vmax.f32 %v3060, 0.0
  %v4753 = vmax.f32 %v3567, 0.0
  %v4754 = vmax.f32 %v4074, 0.0
  %v4755 = vmax.f32 %v4581, 0.0
  %v4756 = vmax.f32 %v3062, 0.0
  %v4757 = vmax.f32 %v3569, 0.0
  %v4758 = vmax.f32 %v4076, 0.0
  %v4759 = vmax.f32 %v4583, 0.0
  %v4760 = vmax.f32 %v3065, 0.0
  %v4761 = vmax.f32 %v3572, 0.0
  %v4762 = vmax.f32 %v4079, 0.0
  %v4763 = vmax.f32 %v4586, 0.0
  %v4764 = vmax.f32 %v3067, 0.0
  %v4765 = vmax.f32 %v3574, 0.0
  %v4766 = vmax.f32 %v4081, 0.0
  %v4767 = vmax.f32 %v4588, 0.0
  %v4768 = vmax.f32 %v3070, 0.0
  %v4769 = vmax.f32 %v3577, 0.0
  %v4770 = vmax.f32 %v4084, 0.0
  %v4771 = vmax.f32 %v4591, 0.0
  %v4772 = vmax.f32 %v3072, 0.0
  %v4773 = vmax.f32 %v3579, 0.0
  %v4774 = vmax.f32 %v4086, 0.0
  %v4775 = vmax.f32 %v4593, 0.0
  %v4776 = vmax.f32 %v3075, 0.0
  %v4777 = vmax.f32 %v3582, 0.0
  %v4778 = vmax.f32 %v4089, 0.0
  %v4779 = vmax.f32 %v4596, 0.0
  %v4780 = vmax.f32 %v3077, 0.0
  %v4781 = vmax.f32 %v3584, 0.0
  %v4782 = vmax.f32 %v4091, 0.0
  %v4783 = vmax.f32 %v4598, 0.0
  %v4784 = vmax.f32 %v3080, 0.0
  %v4785 = vmax.f32 %v3587, 0.0
  %v4786 = vmax.f32 %v4094, 0.0
  %v4787 = vmax.f32 %v4601, 0.0
  %v4788 = vmax.f32 %v3082, 0.0
  %v4789 = vmax.f32 %v3589, 0.0
  %v4790 = vmax.f32 %v4096, 0.0
  %v4791 = vmax.f32 %v4603, 0.0
  %v4792 = vmax.f32 %v3085, 0.0
  %v4793 = vmax.f32 %v3592, 0.0
  %v4794 = vmax.f32 %v4099, 0.0
  %v4795 = vmax.f32 %v4606, 0.0
  %v4796 = vmax.f32 %v3087, 0.0
  %v4797 = vmax.f32 %v3594, 0.0
  %v4798 = vmax.f32 %v4101, 0.0
  %v4799 = vmax.f32 %v4608, 0.0
  %v4800 = vmax.f32 %v3090, 0.0
  %v4801 = vmax.f32 %v3597, 0.0
  %v4802 = vmax.f32 %v4104, 0.0
  %v4803 = vmax.f32 %v4611, 0.0
  %v4804 = vmax.f32 %v3092, 0.0
  %v4805 = vmax.f32 %v3599, 0.0
  %v4806 = vmax.f32 %v4106, 0.0
  %v4807 = vmax.f32 %v4613, 0.0
  %v4808 = vmax.f32 %v3095, 0.0
  %v4809 = vmax.f32 %v3602, 0.0
  %v4810 = vmax.f32 %v4109, 0.0
  %v4811 = vmax.f32 %v4616, 0.0
  %v4812 = vmax.f32 %v3097, 0.0
  %v4813 = vmax.f32 %v3604, 0.0
  %v4814 = vmax.f32 %v4111, 0.0
  %v4815 = vmax.f32 %v4618, 0.0
  %v4816 = vmax.f32 %v3100, 0.0
  %v4817 = vmax.f32 %v3607, 0.0
  %v4818 = vmax.f32 %v4114, 0.0
  %v4819 = vmax.f32 %v4621, 0.0
  %v4820 = vmax.f32 %v3102, 0.0
  %v4821 = vmax.f32 %v3609, 0.0
  %v4822 = vmax.f32 %v4116, 0.0
  %v4823 = vmax.f32 %v4623, 0.0
  %v4824 = vmax.f32 %v3105, 0.0
  %v4825 = vmax.f32 %v3612, 0.0
  %v4826 = vmax.f32 %v4119, 0.0
  %v4827 = vmax.f32 %v4626, 0.0
  %v4828 = vmax.f32 %v3107, 0.0
  %v4829 = vmax.f32 %v3614, 0.0
  %v4830 = vmax.f32 %v4121, 0.0
  %v4831 = vmax.f32 %v4628, 0.0
  %v4832 = vmax.f32 %v3110, 0.0
  %v4833 = vmax.f32 %v3617, 0.0
  %v4834 = vmax.f32 %v4124, 0.0
  %v4835 = vmax.f32 %v4631, 0.0
  %v4836 = vmax.f32 %v3112, 0.0
  %v4837 = vmax.f32 %v3619, 0.0
  %v4838 = vmax.f32 %v4126, 0.0
  %v4839 = vmax.f32 %v4633, 0.0
  %v4840 = vmax.f32 %v3115, 0.0
  %v4841 = vmax.f32 %v3622, 0.0
  %v4842 = vmax.f32 %v4129, 0.0
  %v4843 = vmax.f32 %v4636, 0.0
  %v4844 = vmax.f32 %v3117, 0.0
  %v4845 = vmax.f32 %v3624, 0.0
  %v4846 = vmax.f32 %v4131, 0.0
  %v4847 = vmax.f32 %v4638, 0.0
  %v4848 = vmax.f32 %v3120, 0.0
  %v4849 = vmax.f32 %v3627, 0.0
  %v4850 = vmax.f32 %v4134, 0.0
  %v4851 = vmax.f32 %v4641, 0.0
  %v4852 = vmax.f32 %v3122, 0.0
  %v4853 = vmax.f32 %v3629, 0.0
  %v4854 = vmax.f32 %v4136, 0.0
  %v4855 = vmax.f32 %v4643, 0.0
  %v4856 = vmax.f32 %v3125, 0.0
  %v4857 = vmax.f32 %v3632, 0.0
  %v4858 = vmax.f32 %v4139, 0.0
  %v4859 = vmax.f32 %v4646, 0.0
  %v4860 = vmax.f32 %v3127, 0.0
  %v4861 = vmax.f32 %v3634, 0.0
  %v4862 = vmax.f32 %v4141, 0.0
  %v4863 = vmax.f32 %v4648, 0.0
  %v4864 = vmax.f32 %v3130, 0.0
  %v4865 = vmax.f32 %v3637, 0.0
  %v4866 = vmax.f32 %v4144, 0.0
  %v4867 = vmax.f32 %v4651, 0.0
  %v4868 = vmax.f32 %v3132, 0.0
  %v4869 = vmax.f32 %v3639, 0.0
  %v4870 = vmax.f32 %v4146, 0.0
  %v4871 = vmax.f32 %v4653, 0.0
  %v4872 = vmax.f32 %v3135, 0.0
  %v4873 = vmax.f32 %v3642, 0.0
  %v4874 = vmax.f32 %v4149, 0.0
  %v4875 = vmax.f32 %v4656, 0.0
  %v4876 = vmax.f32 %v3137, 0.0
  %v4877 = vmax.f32 %v3644, 0.0
  %v4878 = vmax.f32 %v4151, 0.0
  %v4879 = vmax.f32 %v4658, 0.0
  %v4880 = vmax.f32 %v3140, 0.0
  %v4881 = vmax.f32 %v3647, 0.0
  %v4882 = vmax.f32 %v4154, 0.0
  %v4883 = vmax.f32 %v4661, 0.0
  %v4884 = vmax.f32 %v3142, 0.0
  %v4885 = vmax.f32 %v3649, 0.0
  %v4886 = vmax.f32 %v4156, 0.0
  %v4887 = vmax.f32 %v4663, 0.0
  %v4888 = vmax.f32 %v3145, 0.0
  %v4889 = vmax.f32 %v3652, 0.0
  %v4890 = vmax.f32 %v4159, 0.0
  %v4891 = vmax.f32 %v4666, 0.0
  %v4892 = vmax.f32 %v3147, 0.0
  %v4893 = vmax.f32 %v3654, 0.0
  %v4894 = vmax.f32 %v4161, 0.0
  %v4895 = vmax.f32 %v4668, 0.0
  %v4896 = vmax.f32 %v3150, 0.0
  %v4897 = vmax.f32 %v3657, 0.0
  %v4898 = vmax.f32 %v4164, 0.0
  %v4899 = vmax.f32 %v4671, 0.0
  %v4900 = vmax.f32 %v3152, 0.0
  %v4901 = vmax.f32 %v3659, 0.0
  %v4902 = vmax.f32 %v4166, 0.0
  %v4903 = vmax.f32 %v4673, 0.0
  %v4904 = vmax.f32 %v3155, 0.0
  %v4905 = vmax.f32 %v3662, 0.0
  %v4906 = vmax.f32 %v4169, 0.0
  %v4907 = vmax.f32 %v4676, 0.0
  %v4908 = vmax.f32 %v3157, 0.0
  %v4909 = vmax.f32 %v3664, 0.0
  %v4910 = vmax.f32 %v4171, 0.0
  %v4911 = vmax.f32 %v4678, 0.0
  %v4912 = vmax.f32 %v3160, 0.0
  %v4913 = vmax.f32 %v3667, 0.0
  %v4914 = vmax.f32 %v4174, 0.0
  %v4915 = vmax.f32 %v4681, 0.0
  %v4916 = vmax.f32 %v3162, 0.0
  %v4917 = vmax.f32 %v3669, 0.0
  %v4918 = vmax.f32 %v4176, 0.0
  %v4919 = vmax.f32 %v4683, 0.0
  %v4920 = vmax.f32 %v3165, 0.0
  %v4921 = vmax.f32 %v3672, 0.0
  %v4922 = vmax.f32 %v4179, 0.0
  %v4923 = vmax.f32 %v4686, 0.0
  %v4924 = vmax.f32 %v3167, 0.0
  %v4925 = vmax.f32 %v3674, 0.0
  %v4926 = vmax.f32 %v4181, 0.0
  %v4927 = vmax.f32 %v4688, 0.0
  %v4928 = vmax.f32 %v3170, 0.0
  %v4929 = vmax.f32 %v3677, 0.0
  %v4930 = vmax.f32 %v4184, 0.0
  %v4931 = vmax.f32 %v4691, 0.0
  %v4932 = vmax.f32 %v3172, 0.0
  %v4933 = vmax.f32 %v3679, 0.0
  %v4934 = vmax.f32 %v4186, 0.0
  %v4935 = vmax.f32 %v4693, 0.0
  %v4936 = vmax.f32 %v3175, 0.0
  %v4937 = vmax.f32 %v3682, 0.0
  %v4938 = vmax.f32 %v4189, 0.0
  %v4939 = vmax.f32 %v4696, 0.0
  %v4940 = vmax.f32 %v3177, 0.0
  %v4941 = vmax.f32 %v3684, 0.0
  %v4942 = vmax.f32 %v4191, 0.0
  %v4943 = vmax.f32 %v4698, 0.0
  %v4944 = vmax.f32 %v3180, 0.0
  %v4945 = vmax.f32 %v3687, 0.0
  %v4946 = vmax.f32 %v4194, 0.0
  %v4947 = vmax.f32 %v4701, 0.0
  %v4948 = vmax.f32 %v3182, 0.0
  %v4949 = vmax.f32 %v3689, 0.0
  %v4950 = vmax.f32 %v4196, 0.0
  %v4951 = vmax.f32 %v4703, 0.0
  %v4952 = vmax.f32 %v3185, 0.0
  %v4953 = vmax.f32 %v3692, 0.0
  %v4954 = vmax.f32 %v4199, 0.0
  %v4955 = vmax.f32 %v4706, 0.0
  %v4956 = vmax.f32 %v3187, 0.0
  %v4957 = vmax.f32 %v3694, 0.0
  %v4958 = vmax.f32 %v4201, 0.0
  %v4959 = vmax.f32 %v4708, 0.0
  %v4960 = vmax.f32 %v3190, 0.0
  %v4961 = vmax.f32 %v3697, 0.0
  %v4962 = vmax.f32 %v4204, 0.0
  %v4963 = vmax.f32 %v4711, 0.0
  %v4964 = vmax.f32 %v3192, 0.0
  %v4965 = vmax.f32 %v3699, 0.0
  %v4966 = vmax.f32 %v4206, 0.0
  %v4967 = vmax.f32 %v4713, 0.0
  %v4968 = vmax.f32 %v3195, 0.0
  %v4969 = vmax.f32 %v3702, 0.0
  %v4970 = vmax.f32 %v4209, 0.0
  %v4971 = vmax.f32 %v4716, 0.0
  %v4972 = vmax.f32 %v3197, 0.0
  %v4973 = vmax.f32 %v3704, 0.0
  %v4974 = vmax.f32 %v4211, 0.0
  %v4975 = vmax.f32 %v4718, 0.0
  %v4976 = vld [vmem:[%s1] sm:$0xff]
  %4978 = vst [vmem:[#allocation1] ss:$4 sm:$0xff] %v4976
  %v4979 = vld.sshfl [vmem:[#allocation1] sm:$0xff pattern:$0x73625140]
  %v4980 = vld.sshfl [vmem:[#allocation1 + $0x8] sm:$0xff pattern:$0x73625140]
  %v4981 = vld.sshfl [vmem:[#allocation1 + $0x10] sm:$0xff pattern:$0x73625140]
  %v4982 = vld.sshfl [vmem:[#allocation1 + $0x18] sm:$0xff pattern:$0x73625140]
  %4987 = vmatpush.msra.mxu0 %v4780
  %4988 = vmatpush.msra.mxu0 %v4776
  %4989 = vmatpush.msra.mxu0 %v4772
  %4990 = vmatpush.msra.mxu0 %v4768
  %4991 = vmatpush.msra.mxu0 %v4764
  %4992 = vmatpush.msra.mxu0 %v4760
  %4993 = vmatpush.msra.mxu0 %v4756
  %4994 = vmatpush.msra.mxu0 %v4752
  %4995 = vmatpush.msra.mxu0 %v4748
  %4996 = vmatpush.msra.mxu0 %v4744
  %4997 = vmatpush.msra.mxu0 %v4740
  %4998 = vmatpush.msra.mxu0 %v4736
  %4999 = vmatpush.msra.mxu0 %v4732
  %5000 = vmatpush.msra.mxu0 %v4728
  %5001 = vmatpush.msra.mxu0 %v4724
  %5002 = vmatpush.msra.mxu0 %v4720
  %5003 = vmatmul.f32.gmra.mxu0 %v4979
  %v5004 = vpop.f32.mrf.mxu0
  %v5005 = vadd.f32 0.0, %v5004
  %5006 = vdwg.mxu0
  %5007 = vmatpush.msra.mxu0 %v4844
  %5008 = vmatpush.msra.mxu0 %v4840
  %5009 = vmatpush.msra.mxu0 %v4836
  %5010 = vmatpush.msra.mxu0 %v4832
  %5011 = vmatpush.msra.mxu0 %v4828
  %5012 = vmatpush.msra.mxu0 %v4824
  %5013 = vmatpush.msra.mxu0 %v4820
  %5014 = vmatpush.msra.mxu0 %v4816
  %5015 = vmatpush.msra.mxu0 %v4812
  %5016 = vmatpush.msra.mxu0 %v4808
  %5017 = vmatpush.msra.mxu0 %v4804
  %5018 = vmatpush.msra.mxu0 %v4800
  %5019 = vmatpush.msra.mxu0 %v4796
  %5020 = vmatpush.msra.mxu0 %v4792
  %5021 = vmatpush.msra.mxu0 %v4788
  %5022 = vmatpush.msra.mxu0 %v4784
  %5023 = vmatmul.f32.gmra.mxu0 %v4980
  %v5024 = vpop.f32.mrf.mxu0
  %v5025 = vadd.f32 %v5005, %v5024
  %5026 = vdwg.mxu0
  %5027 = vmatpush.msra.mxu0 %v4908
  %5028 = vmatpush.msra.mxu0 %v4904
  %5029 = vmatpush.msra.mxu0 %v4900
  %5030 = vmatpush.msra.mxu0 %v4896
  %5031 = vmatpush.msra.mxu0 %v4892
  %5032 = vmatpush.msra.mxu0 %v4888
  %5033 = vmatpush.msra.mxu0 %v4884
  %5034 = vmatpush.msra.mxu0 %v4880
  %5035 = vmatpush.msra.mxu0 %v4876
  %5036 = vmatpush.msra.mxu0 %v4872
  %5037 = vmatpush.msra.mxu0 %v4868
  %5038 = vmatpush.msra.mxu0 %v4864
  %5039 = vmatpush.msra.mxu0 %v4860
  %5040 = vmatpush.msra.mxu0 %v4856
  %5041 = vmatpush.msra.mxu0 %v4852
  %5042 = vmatpush.msra.mxu0 %v4848
  %5043 = vmatmul.f32.gmra.mxu0 %v4981
  %v5044 = vpop.f32.mrf.mxu0
  %v5045 = vadd.f32 %v5025, %v5044
  %5046 = vdwg.mxu0
  %5047 = vmatpush.msra.mxu0 %v4972
  %5048 = vmatpush.msra.mxu0 %v4968
  %5049 = vmatpush.msra.mxu0 %v4964
  %5050 = vmatpush.msra.mxu0 %v4960
  %5051 = vmatpush.msra.mxu0 %v4956
  %5052 = vmatpush.msra.mxu0 %v4952
  %5053 = vmatpush.msra.mxu0 %v4948
  %5054 = vmatpush.msra.mxu0 %v4944
  %5055 = vmatpush.msra.mxu0 %v4940
  %5056 = vmatpush.msra.mxu0 %v4936
  %5057 = vmatpush.msra.mxu0 %v4932
  %5058 = vmatpush.msra.mxu0 %v4928
  %5059 = vmatpush.msra.mxu0 %v4924
  %5060 = vmatpush.msra.mxu0 %v4920
  %5061 = vmatpush.msra.mxu0 %v4916
  %5062 = vmatpush.msra.mxu0 %v4912
  %5063 = vmatmul.f32.gmra.mxu0 %v4982
  %v5064 = vpop.f32.mrf.mxu0
  %v5065 = vadd.f32 %v5045, %v5064
  %5066 = vdwg.mxu0
  %5067 = vmatpush.msra.mxu0 %v4781
  %5068 = vmatpush.msra.mxu0 %v4777
  %5069 = vmatpush.msra.mxu0 %v4773
  %5070 = vmatpush.msra.mxu0 %v4769
  %5071 = vmatpush.msra.mxu0 %v4765
  %5072 = vmatpush.msra.mxu0 %v4761
  %5073 = vmatpush.msra.mxu0 %v4757
  %5074 = vmatpush.msra.mxu0 %v4753
  %5075 = vmatpush.msra.mxu0 %v4749
  %5076 = vmatpush.msra.mxu0 %v4745
  %5077 = vmatpush.msra.mxu0 %v4741
  %5078 = vmatpush.msra.mxu0 %v4737
  %5079 = vmatpush.msra.mxu0 %v4733
  %5080 = vmatpush.msra.mxu0 %v4729
  %5081 = vmatpush.msra.mxu0 %v4725
  %5082 = vmatpush.msra.mxu0 %v4721
  %5083 = vmatmul.f32.gmra.mxu0 %v4979
  %v5084 = vpop.f32.mrf.mxu0
  %v5085 = vadd.f32 0.0, %v5084
  %5086 = vdwg.mxu0
  %5087 = vmatpush.msra.mxu0 %v4845
  %5088 = vmatpush.msra.mxu0 %v4841
  %5089 = vmatpush.msra.mxu0 %v4837
  %5090 = vmatpush.msra.mxu0 %v4833
  %5091 = vmatpush.msra.mxu0 %v4829
  %5092 = vmatpush.msra.mxu0 %v4825
  %5093 = vmatpush.msra.mxu0 %v4821
  %5094 = vmatpush.msra.mxu0 %v4817
  %5095 = vmatpush.msra.mxu0 %v4813
  %5096 = vmatpush.msra.mxu0 %v4809
  %5097 = vmatpush.msra.mxu0 %v4805
  %5098 = vmatpush.msra.mxu0 %v4801
  %5099 = vmatpush.msra.mxu0 %v4797
  %5100 = vmatpush.msra.mxu0 %v4793
  %5101 = vmatpush.msra.mxu0 %v4789
  %5102 = vmatpush.msra.mxu0 %v4785
  %5103 = vmatmul.f32.gmra.mxu0 %v4980
  %v5104 = vpop.f32.mrf.mxu0
  %v5105 = vadd.f32 %v5085, %v5104
  %5106 = vdwg.mxu0
  %5107 = vmatpush.msra.mxu0 %v4909
  %5108 = vmatpush.msra.mxu0 %v4905
  %5109 = vmatpush.msra.mxu0 %v4901
  %5110 = vmatpush.msra.mxu0 %v4897
  %5111 = vmatpush.msra.mxu0 %v4893
  %5112 = vmatpush.msra.mxu0 %v4889
  %5113 = vmatpush.msra.mxu0 %v4885
  %5114 = vmatpush.msra.mxu0 %v4881
  %5115 = vmatpush.msra.mxu0 %v4877
  %5116 = vmatpush.msra.mxu0 %v4873
  %5117 = vmatpush.msra.mxu0 %v4869
  %5118 = vmatpush.msra.mxu0 %v4865
  %5119 = vmatpush.msra.mxu0 %v4861
  %5120 = vmatpush.msra.mxu0 %v4857
  %5121 = vmatpush.msra.mxu0 %v4853
  %5122 = vmatpush.msra.mxu0 %v4849
  %5123 = vmatmul.f32.gmra.mxu0 %v4981
  %v5124 = vpop.f32.mrf.mxu0
  %v5125 = vadd.f32 %v5105, %v5124
  %5126 = vdwg.mxu0
  %5127 = vmatpush.msra.mxu0 %v4973
  %5128 = vmatpush.msra.mxu0 %v4969
  %5129 = vmatpush.msra.mxu0 %v4965
  %5130 = vmatpush.msra.mxu0 %v4961
  %5131 = vmatpush.msra.mxu0 %v4957
  %5132 = vmatpush.msra.mxu0 %v4953
  %5133 = vmatpush.msra.mxu0 %v4949
  %5134 = vmatpush.msra.mxu0 %v4945
  %5135 = vmatpush.msra.mxu0 %v4941
  %5136 = vmatpush.msra.mxu0 %v4937
  %5137 = vmatpush.msra.mxu0 %v4933
  %5138 = vmatpush.msra.mxu0 %v4929
  %5139 = vmatpush.msra.mxu0 %v4925
  %5140 = vmatpush.msra.mxu0 %v4921
  %5141 = vmatpush.msra.mxu0 %v4917
  %5142 = vmatpush.msra.mxu0 %v4913
  %5143 = vmatmul.f32.gmra.mxu0 %v4982
  %v5144 = vpop.f32.mrf.mxu0
  %v5145 = vadd.f32 %v5125, %v5144
  %5146 = vdwg.mxu0
  %5147 = vmatpush.msra.mxu0 %v4782
  %5148 = vmatpush.msra.mxu0 %v4778
  %5149 = vmatpush.msra.mxu0 %v4774
  %5150 = vmatpush.msra.mxu0 %v4770
  %5151 = vmatpush.msra.mxu0 %v4766
  %5152 = vmatpush.msra.mxu0 %v4762
  %5153 = vmatpush.msra.mxu0 %v4758
  %5154 = vmatpush.msra.mxu0 %v4754
  %5155 = vmatpush.msra.mxu0 %v4750
  %5156 = vmatpush.msra.mxu0 %v4746
  %5157 = vmatpush.msra.mxu0 %v4742
  %5158 = vmatpush.msra.mxu0 %v4738
  %5159 = vmatpush.msra.mxu0 %v4734
  %5160 = vmatpush.msra.mxu0 %v4730
  %5161 = vmatpush.msra.mxu0 %v4726
  %5162 = vmatpush.msra.mxu0 %v4722
  %5163 = vmatmul.f32.gmra.mxu0 %v4979
  %v5164 = vpop.f32.mrf.mxu0
  %v5165 = vadd.f32 0.0, %v5164
  %5166 = vdwg.mxu0
  %5167 = vmatpush.msra.mxu0 %v4846
  %5168 = vmatpush.msra.mxu0 %v4842
  %5169 = vmatpush.msra.mxu0 %v4838
  %5170 = vmatpush.msra.mxu0 %v4834
  %5171 = vmatpush.msra.mxu0 %v4830
  %5172 = vmatpush.msra.mxu0 %v4826
  %5173 = vmatpush.msra.mxu0 %v4822
  %5174 = vmatpush.msra.mxu0 %v4818
  %5175 = vmatpush.msra.mxu0 %v4814
  %5176 = vmatpush.msra.mxu0 %v4810
  %5177 = vmatpush.msra.mxu0 %v4806
  %5178 = vmatpush.msra.mxu0 %v4802
  %5179 = vmatpush.msra.mxu0 %v4798
  %5180 = vmatpush.msra.mxu0 %v4794
  %5181 = vmatpush.msra.mxu0 %v4790
  %5182 = vmatpush.msra.mxu0 %v4786
  %5183 = vmatmul.f32.gmra.mxu0 %v4980
  %v5184 = vpop.f32.mrf.mxu0
  %v5185 = vadd.f32 %v5165, %v5184
  %5186 = vdwg.mxu0
  %5187 = vmatpush.msra.mxu0 %v4910
  %5188 = vmatpush.msra.mxu0 %v4906
  %5189 = vmatpush.msra.mxu0 %v4902
  %5190 = vmatpush.msra.mxu0 %v4898
  %5191 = vmatpush.msra.mxu0 %v4894
  %5192 = vmatpush.msra.mxu0 %v4890
  %5193 = vmatpush.msra.mxu0 %v4886
  %5194 = vmatpush.msra.mxu0 %v4882
  %5195 = vmatpush.msra.mxu0 %v4878
  %5196 = vmatpush.msra.mxu0 %v4874
  %5197 = vmatpush.msra.mxu0 %v4870
  %5198 = vmatpush.msra.mxu0 %v4866
  %5199 = vmatpush.msra.mxu0 %v4862
  %5200 = vmatpush.msra.mxu0 %v4858
  %5201 = vmatpush.msra.mxu0 %v4854
  %5202 = vmatpush.msra.mxu0 %v4850
  %5203 = vmatmul.f32.gmra.mxu0 %v4981
  %v5204 = vpop.f32.mrf.mxu0
  %v5205 = vadd.f32 %v5185, %v5204
  %5206 = vdwg.mxu0
  %5207 = vmatpush.msra.mxu0 %v4974
  %5208 = vmatpush.msra.mxu0 %v4970
  %5209 = vmatpush.msra.mxu0 %v4966
  %5210 = vmatpush.msra.mxu0 %v4962
  %5211 = vmatpush.msra.mxu0 %v4958
  %5212 = vmatpush.msra.mxu0 %v4954
  %5213 = vmatpush.msra.mxu0 %v4950
  %5214 = vmatpush.msra.mxu0 %v4946
  %5215 = vmatpush.msra.mxu0 %v4942
  %5216 = vmatpush.msra.mxu0 %v4938
  %5217 = vmatpush.msra.mxu0 %v4934
  %5218 = vmatpush.msra.mxu0 %v4930
  %5219 = vmatpush.msra.mxu0 %v4926
  %5220 = vmatpush.msra.mxu0 %v4922
  %5221 = vmatpush.msra.mxu0 %v4918
  %5222 = vmatpush.msra.mxu0 %v4914
  %5223 = vmatmul.f32.gmra.mxu0 %v4982
  %v5224 = vpop.f32.mrf.mxu0
  %v5225 = vadd.f32 %v5205, %v5224
  %5226 = vdwg.mxu0
  %5227 = vmatpush.msra.mxu0 %v4783
  %5228 = vmatpush.msra.mxu0 %v4779
  %5229 = vmatpush.msra.mxu0 %v4775
  %5230 = vmatpush.msra.mxu0 %v4771
  %5231 = vmatpush.msra.mxu0 %v4767
  %5232 = vmatpush.msra.mxu0 %v4763
  %5233 = vmatpush.msra.mxu0 %v4759
  %5234 = vmatpush.msra.mxu0 %v4755
  %5235 = vmatpush.msra.mxu0 %v4751
  %5236 = vmatpush.msra.mxu0 %v4747
  %5237 = vmatpush.msra.mxu0 %v4743
  %5238 = vmatpush.msra.mxu0 %v4739
  %5239 = vmatpush.msra.mxu0 %v4735
  %5240 = vmatpush.msra.mxu0 %v4731
  %5241 = vmatpush.msra.mxu0 %v4727
  %5242 = vmatpush.msra.mxu0 %v4723
  %5243 = vmatmul.f32.gmra.mxu0 %v4979
  %v5244 = vpop.f32.mrf.mxu0
  %v5245 = vadd.f32 0.0, %v5244
  %5246 = vdwg.mxu0
  %5247 = vmatpush.msra.mxu0 %v4847
  %5248 = vmatpush.msra.mxu0 %v4843
  %5249 = vmatpush.msra.mxu0 %v4839
  %5250 = vmatpush.msra.mxu0 %v4835
  %5251 = vmatpush.msra.mxu0 %v4831
  %5252 = vmatpush.msra.mxu0 %v4827
  %5253 = vmatpush.msra.mxu0 %v4823
  %5254 = vmatpush.msra.mxu0 %v4819
  %5255 = vmatpush.msra.mxu0 %v4815
  %5256 = vmatpush.msra.mxu0 %v4811
  %5257 = vmatpush.msra.mxu0 %v4807
  %5258 = vmatpush.msra.mxu0 %v4803
  %5259 = vmatpush.msra.mxu0 %v4799
  %5260 = vmatpush.msra.mxu0 %v4795
  %5261 = vmatpush.msra.mxu0 %v4791
  %5262 = vmatpush.msra.mxu0 %v4787
  %5263 = vmatmul.f32.gmra.mxu0 %v4980
  %v5264 = vpop.f32.mrf.mxu0
  %v5265 = vadd.f32 %v5245, %v5264
  %5266 = vdwg.mxu0
  %5267 = vmatpush.msra.mxu0 %v4911
  %5268 = vmatpush.msra.mxu0 %v4907
  %5269 = vmatpush.msra.mxu0 %v4903
  %5270 = vmatpush.msra.mxu0 %v4899
  %5271 = vmatpush.msra.mxu0 %v4895
  %5272 = vmatpush.msra.mxu0 %v4891
  %5273 = vmatpush.msra.mxu0 %v4887
  %5274 = vmatpush.msra.mxu0 %v4883
  %5275 = vmatpush.msra.mxu0 %v4879
  %5276 = vmatpush.msra.mxu0 %v4875
  %5277 = vmatpush.msra.mxu0 %v4871
  %5278 = vmatpush.msra.mxu0 %v4867
  %5279 = vmatpush.msra.mxu0 %v4863
  %5280 = vmatpush.msra.mxu0 %v4859
  %5281 = vmatpush.msra.mxu0 %v4855
  %5282 = vmatpush.msra.mxu0 %v4851
  %5283 = vmatmul.f32.gmra.mxu0 %v4981
  %v5284 = vpop.f32.mrf.mxu0
  %v5285 = vadd.f32 %v5265, %v5284
  %5286 = vdwg.mxu0
  %5287 = vmatpush.msra.mxu0 %v4975
  %5288 = vmatpush.msra.mxu0 %v4971
  %5289 = vmatpush.msra.mxu0 %v4967
  %5290 = vmatpush.msra.mxu0 %v4963
  %5291 = vmatpush.msra.mxu0 %v4959
  %5292 = vmatpush.msra.mxu0 %v4955
  %5293 = vmatpush.msra.mxu0 %v4951
  %5294 = vmatpush.msra.mxu0 %v4947
  %5295 = vmatpush.msra.mxu0 %v4943
  %5296 = vmatpush.msra.mxu0 %v4939
  %5297 = vmatpush.msra.mxu0 %v4935
  %5298 = vmatpush.msra.mxu0 %v4931
  %5299 = vmatpush.msra.mxu0 %v4927
  %5300 = vmatpush.msra.mxu0 %v4923
  %5301 = vmatpush.msra.mxu0 %v4919
  %5302 = vmatpush.msra.mxu0 %v4915
  %5303 = vmatmul.f32.gmra.mxu0 %v4982
  %v5304 = vpop.f32.mrf.mxu0
  %v5305 = vadd.f32 %v5285, %v5304
  %5306 = vdwg.mxu0
  %s5307 = smul.u32 4, 64
  %s5308 = smul.u32 %s5307, 12
  %s5309 = sshll.u32 %s5308, 4
  %5310 = dma.done [#allocation5], %s5309
  %v5311 = vpack.c.bf16 %v5065, %v5065
  %v5312 = vpack.c.bf16 %v5145, %v5145
  %v5313 = vpack.c.bf16 %v5225, %v5225
  %v5314 = vpack.c.bf16 %v5305, %v5305
  %v5315 = vld [vmem:[#allocation2] sm:$0xff]
  %v5316 = vld [vmem:[#allocation2 + $0x8] sm:$0xff]
  %v5317 = vld [vmem:[#allocation2 + $0x10] sm:$0xff]
  %v5318 = vld [vmem:[#allocation2 + $0x18] sm:$0xff]
  %v5319 = vld [vmem:[#allocation2 + $0x20] sm:$0xff]
  %v5320 = vld [vmem:[#allocation2 + $0x28] sm:$0xff]
  %v5321 = vld [vmem:[#allocation2 + $0x30] sm:$0xff]
  %v5322 = vld [vmem:[#allocation2 + $0x38] sm:$0xff]
  %v5323 = vld [vmem:[#allocation2 + $0x40] sm:$0xff]
  %v5324 = vld [vmem:[#allocation2 + $0x48] sm:$0xff]
  %v5325 = vld [vmem:[#allocation2 + $0x50] sm:$0xff]
  %v5326 = vld [vmem:[#allocation2 + $0x58] sm:$0xff]
  %v5327 = vld [vmem:[#allocation2 + $0x60] sm:$0xff]
  %v5328 = vld [vmem:[#allocation2 + $0x68] sm:$0xff]
  %v5329 = vld [vmem:[#allocation2 + $0x70] sm:$0xff]
  %v5330 = vld [vmem:[#allocation2 + $0x78] sm:$0xff]
  %v5331 = vld [vmem:[#allocation2 + $0x80] sm:$0xff]
  %v5332 = vld [vmem:[#allocation2 + $0x88] sm:$0xff]
  %v5333 = vld [vmem:[#allocation2 + $0x90] sm:$0xff]
  %v5334 = vld [vmem:[#allocation2 + $0x98] sm:$0xff]
  %v5335 = vld [vmem:[#allocation2 + $0xa0] sm:$0xff]
  %v5336 = vld [vmem:[#allocation2 + $0xa8] sm:$0xff]
  %v5337 = vld [vmem:[#allocation2 + $0xb0] sm:$0xff]
  %v5338 = vld [vmem:[#allocation2 + $0xb8] sm:$0xff]
  %v5339 = vld [vmem:[#allocation2 + $0xc0] sm:$0xff]
  %v5340 = vld [vmem:[#allocation2 + $0xc8] sm:$0xff]
  %v5341 = vld [vmem:[#allocation2 + $0xd0] sm:$0xff]
  %v5342 = vld [vmem:[#allocation2 + $0xd8] sm:$0xff]
  %v5343 = vld [vmem:[#allocation2 + $0xe0] sm:$0xff]
  %v5344 = vld [vmem:[#allocation2 + $0xe8] sm:$0xff]
  %v5345 = vld [vmem:[#allocation2 + $0xf0] sm:$0xff]
  %v5346 = vld [vmem:[#allocation2 + $0xf8] sm:$0xff]
  %v5347 = vld [vmem:[#allocation2 + $0x100] sm:$0xff]
  %v5348 = vld [vmem:[#allocation2 + $0x108] sm:$0xff]
  %v5349 = vld [vmem:[#allocation2 + $0x110] sm:$0xff]
  %v5350 = vld [vmem:[#allocation2 + $0x118] sm:$0xff]
  %v5351 = vld [vmem:[#allocation2 + $0x120] sm:$0xff]
  %v5352 = vld [vmem:[#allocation2 + $0x128] sm:$0xff]
  %v5353 = vld [vmem:[#allocation2 + $0x130] sm:$0xff]
  %v5354 = vld [vmem:[#allocation2 + $0x138] sm:$0xff]
  %v5355 = vld [vmem:[#allocation2 + $0x140] sm:$0xff]
  %v5356 = vld [vmem:[#allocation2 + $0x148] sm:$0xff]
  %v5357 = vld [vmem:[#allocation2 + $0x150] sm:$0xff]
  %v5358 = vld [vmem:[#allocation2 + $0x158] sm:$0xff]
  %v5359 = vld [vmem:[#allocation2 + $0x160] sm:$0xff]
  %v5360 = vld [vmem:[#allocation2 + $0x168] sm:$0xff]
  %v5361 = vld [vmem:[#allocation2 + $0x170] sm:$0xff]
  %v5362 = vld [vmem:[#allocation2 + $0x178] sm:$0xff]
  %v5363 = vld [vmem:[#allocation2 + $0x180] sm:$0xff]
  %v5364 = vld [vmem:[#allocation2 + $0x188] sm:$0xff]
  %v5365 = vld [vmem:[#allocation2 + $0x190] sm:$0xff]
  %v5366 = vld [vmem:[#allocation2 + $0x198] sm:$0xff]
  %v5367 = vld [vmem:[#allocation2 + $0x1a0] sm:$0xff]
  %v5368 = vld [vmem:[#allocation2 + $0x1a8] sm:$0xff]
  %v5369 = vld [vmem:[#allocation2 + $0x1b0] sm:$0xff]
  %v5370 = vld [vmem:[#allocation2 + $0x1b8] sm:$0xff]
  %v5371 = vld [vmem:[#allocation2 + $0x1c0] sm:$0xff]
  %v5372 = vld [vmem:[#allocation2 + $0x1c8] sm:$0xff]
  %v5373 = vld [vmem:[#allocation2 + $0x1d0] sm:$0xff]
  %v5374 = vld [vmem:[#allocation2 + $0x1d8] sm:$0xff]
  %v5375 = vld [vmem:[#allocation2 + $0x1e0] sm:$0xff]
  %v5376 = vld [vmem:[#allocation2 + $0x1e8] sm:$0xff]
  %v5377 = vld [vmem:[#allocation2 + $0x1f0] sm:$0xff]
  %v5378 = vld [vmem:[#allocation2 + $0x1f8] sm:$0xff]
  %v5379 = vld [vmem:[#allocation2 + $0x200] sm:$0xff]
  %v5380 = vld [vmem:[#allocation2 + $0x208] sm:$0xff]
  %v5381 = vld [vmem:[#allocation2 + $0x210] sm:$0xff]
  %v5382 = vld [vmem:[#allocation2 + $0x218] sm:$0xff]
  %v5383 = vld [vmem:[#allocation2 + $0x220] sm:$0xff]
  %v5384 = vld [vmem:[#allocation2 + $0x228] sm:$0xff]
  %v5385 = vld [vmem:[#allocation2 + $0x230] sm:$0xff]
  %v5386 = vld [vmem:[#allocation2 + $0x238] sm:$0xff]
  %v5387 = vld [vmem:[#allocation2 + $0x240] sm:$0xff]
  %v5388 = vld [vmem:[#allocation2 + $0x248] sm:$0xff]
  %v5389 = vld [vmem:[#allocation2 + $0x250] sm:$0xff]
  %v5390 = vld [vmem:[#allocation2 + $0x258] sm:$0xff]
  %v5391 = vld [vmem:[#allocation2 + $0x260] sm:$0xff]
  %v5392 = vld [vmem:[#allocation2 + $0x268] sm:$0xff]
  %v5393 = vld [vmem:[#allocation2 + $0x270] sm:$0xff]
  %v5394 = vld [vmem:[#allocation2 + $0x278] sm:$0xff]
  %v5395 = vld [vmem:[#allocation2 + $0x280] sm:$0xff]
  %v5396 = vld [vmem:[#allocation2 + $0x288] sm:$0xff]
  %v5397 = vld [vmem:[#allocation2 + $0x290] sm:$0xff]
  %v5398 = vld [vmem:[#allocation2 + $0x298] sm:$0xff]
  %v5399 = vld [vmem:[#allocation2 + $0x2a0] sm:$0xff]
  %v5400 = vld [vmem:[#allocation2 + $0x2a8] sm:$0xff]
  %v5401 = vld [vmem:[#allocation2 + $0x2b0] sm:$0xff]
  %v5402 = vld [vmem:[#allocation2 + $0x2b8] sm:$0xff]
  %v5403 = vld [vmem:[#allocation2 + $0x2c0] sm:$0xff]
  %v5404 = vld [vmem:[#allocation2 + $0x2c8] sm:$0xff]
  %v5405 = vld [vmem:[#allocation2 + $0x2d0] sm:$0xff]
  %v5406 = vld [vmem:[#allocation2 + $0x2d8] sm:$0xff]
  %v5407 = vld [vmem:[#allocation2 + $0x2e0] sm:$0xff]
  %v5408 = vld [vmem:[#allocation2 + $0x2e8] sm:$0xff]
  %v5409 = vld [vmem:[#allocation2 + $0x2f0] sm:$0xff]
  %v5410 = vld [vmem:[#allocation2 + $0x2f8] sm:$0xff]
  %v5411 = vld [vmem:[#allocation2 + $0x300] sm:$0xff]
  %v5412 = vld [vmem:[#allocation2 + $0x308] sm:$0xff]
  %v5413 = vld [vmem:[#allocation2 + $0x310] sm:$0xff]
  %v5414 = vld [vmem:[#allocation2 + $0x318] sm:$0xff]
  %v5415 = vld [vmem:[#allocation2 + $0x320] sm:$0xff]
  %v5416 = vld [vmem:[#allocation2 + $0x328] sm:$0xff]
  %v5417 = vld [vmem:[#allocation2 + $0x330] sm:$0xff]
  %v5418 = vld [vmem:[#allocation2 + $0x338] sm:$0xff]
  %v5419 = vld [vmem:[#allocation2 + $0x340] sm:$0xff]
  %v5420 = vld [vmem:[#allocation2 + $0x348] sm:$0xff]
  %v5421 = vld [vmem:[#allocation2 + $0x350] sm:$0xff]
  %v5422 = vld [vmem:[#allocation2 + $0x358] sm:$0xff]
  %v5423 = vld [vmem:[#allocation2 + $0x360] sm:$0xff]
  %v5424 = vld [vmem:[#allocation2 + $0x368] sm:$0xff]
  %v5425 = vld [vmem:[#allocation2 + $0x370] sm:$0xff]
  %v5426 = vld [vmem:[#allocation2 + $0x378] sm:$0xff]
  %v5427 = vld [vmem:[#allocation2 + $0x380] sm:$0xff]
  %v5428 = vld [vmem:[#allocation2 + $0x388] sm:$0xff]
  %v5429 = vld [vmem:[#allocation2 + $0x390] sm:$0xff]
  %v5430 = vld [vmem:[#allocation2 + $0x398] sm:$0xff]
  %v5431 = vld [vmem:[#allocation2 + $0x3a0] sm:$0xff]
  %v5432 = vld [vmem:[#allocation2 + $0x3a8] sm:$0xff]
  %v5433 = vld [vmem:[#allocation2 + $0x3b0] sm:$0xff]
  %v5434 = vld [vmem:[#allocation2 + $0x3b8] sm:$0xff]
  %v5435 = vld [vmem:[#allocation2 + $0x3c0] sm:$0xff]
  %v5436 = vld [vmem:[#allocation2 + $0x3c8] sm:$0xff]
  %v5437 = vld [vmem:[#allocation2 + $0x3d0] sm:$0xff]
  %v5438 = vld [vmem:[#allocation2 + $0x3d8] sm:$0xff]
  %v5439 = vld [vmem:[#allocation2 + $0x3e0] sm:$0xff]
  %v5440 = vld [vmem:[#allocation2 + $0x3e8] sm:$0xff]
  %v5441 = vld [vmem:[#allocation2 + $0x3f0] sm:$0xff]
  %v5442 = vld [vmem:[#allocation2 + $0x3f8] sm:$0xff]
  %v5443 = vld [vmem:[#allocation2 + $0x400] sm:$0xff]
  %v5444 = vld [vmem:[#allocation2 + $0x408] sm:$0xff]
  %v5445 = vld [vmem:[#allocation2 + $0x410] sm:$0xff]
  %v5446 = vld [vmem:[#allocation2 + $0x418] sm:$0xff]
  %v5447 = vld [vmem:[#allocation2 + $0x420] sm:$0xff]
  %v5448 = vld [vmem:[#allocation2 + $0x428] sm:$0xff]
  %v5449 = vld [vmem:[#allocation2 + $0x430] sm:$0xff]
  %v5450 = vld [vmem:[#allocation2 + $0x438] sm:$0xff]
  %v5451 = vld [vmem:[#allocation2 + $0x440] sm:$0xff]
  %v5452 = vld [vmem:[#allocation2 + $0x448] sm:$0xff]
  %v5453 = vld [vmem:[#allocation2 + $0x450] sm:$0xff]
  %v5454 = vld [vmem:[#allocation2 + $0x458] sm:$0xff]
  %v5455 = vld [vmem:[#allocation2 + $0x460] sm:$0xff]
  %v5456 = vld [vmem:[#allocation2 + $0x468] sm:$0xff]
  %v5457 = vld [vmem:[#allocation2 + $0x470] sm:$0xff]
  %v5458 = vld [vmem:[#allocation2 + $0x478] sm:$0xff]
  %v5459 = vld [vmem:[#allocation2 + $0x480] sm:$0xff]
  %v5460 = vld [vmem:[#allocation2 + $0x488] sm:$0xff]
  %v5461 = vld [vmem:[#allocation2 + $0x490] sm:$0xff]
  %v5462 = vld [vmem:[#allocation2 + $0x498] sm:$0xff]
  %v5463 = vld [vmem:[#allocation2 + $0x4a0] sm:$0xff]
  %v5464 = vld [vmem:[#allocation2 + $0x4a8] sm:$0xff]
  %v5465 = vld [vmem:[#allocation2 + $0x4b0] sm:$0xff]
  %v5466 = vld [vmem:[#allocation2 + $0x4b8] sm:$0xff]
  %v5467 = vld [vmem:[#allocation2 + $0x4c0] sm:$0xff]
  %v5468 = vld [vmem:[#allocation2 + $0x4c8] sm:$0xff]
  %v5469 = vld [vmem:[#allocation2 + $0x4d0] sm:$0xff]
  %v5470 = vld [vmem:[#allocation2 + $0x4d8] sm:$0xff]
  %v5471 = vld [vmem:[#allocation2 + $0x4e0] sm:$0xff]
  %v5472 = vld [vmem:[#allocation2 + $0x4e8] sm:$0xff]
  %v5473 = vld [vmem:[#allocation2 + $0x4f0] sm:$0xff]
  %v5474 = vld [vmem:[#allocation2 + $0x4f8] sm:$0xff]
  %v5475 = vld [vmem:[#allocation2 + $0x500] sm:$0xff]
  %v5476 = vld [vmem:[#allocation2 + $0x508] sm:$0xff]
  %v5477 = vld [vmem:[#allocation2 + $0x510] sm:$0xff]
  %v5478 = vld [vmem:[#allocation2 + $0x518] sm:$0xff]
  %v5479 = vld [vmem:[#allocation2 + $0x520] sm:$0xff]
  %v5480 = vld [vmem:[#allocation2 + $0x528] sm:$0xff]
  %v5481 = vld [vmem:[#allocation2 + $0x530] sm:$0xff]
  %v5482 = vld [vmem:[#allocation2 + $0x538] sm:$0xff]
  %v5483 = vld [vmem:[#allocation2 + $0x540] sm:$0xff]
  %v5484 = vld [vmem:[#allocation2 + $0x548] sm:$0xff]
  %v5485 = vld [vmem:[#allocation2 + $0x550] sm:$0xff]
  %v5486 = vld [vmem:[#allocation2 + $0x558] sm:$0xff]
  %v5487 = vld [vmem:[#allocation2 + $0x560] sm:$0xff]
  %v5488 = vld [vmem:[#allocation2 + $0x568] sm:$0xff]
  %v5489 = vld [vmem:[#allocation2 + $0x570] sm:$0xff]
  %v5490 = vld [vmem:[#allocation2 + $0x578] sm:$0xff]
  %v5491 = vld [vmem:[#allocation2 + $0x580] sm:$0xff]
  %v5492 = vld [vmem:[#allocation2 + $0x588] sm:$0xff]
  %v5493 = vld [vmem:[#allocation2 + $0x590] sm:$0xff]
  %v5494 = vld [vmem:[#allocation2 + $0x598] sm:$0xff]
  %v5495 = vld [vmem:[#allocation2 + $0x5a0] sm:$0xff]
  %v5496 = vld [vmem:[#allocation2 + $0x5a8] sm:$0xff]
  %v5497 = vld [vmem:[#allocation2 + $0x5b0] sm:$0xff]
  %v5498 = vld [vmem:[#allocation2 + $0x5b8] sm:$0xff]
  %v5499 = vld [vmem:[#allocation2 + $0x5c0] sm:$0xff]
  %v5500 = vld [vmem:[#allocation2 + $0x5c8] sm:$0xff]
  %v5501 = vld [vmem:[#allocation2 + $0x5d0] sm:$0xff]
  %v5502 = vld [vmem:[#allocation2 + $0x5d8] sm:$0xff]
  %v5503 = vld [vmem:[#allocation2 + $0x5e0] sm:$0xff]
  %v5504 = vld [vmem:[#allocation2 + $0x5e8] sm:$0xff]
  %v5505 = vld [vmem:[#allocation2 + $0x5f0] sm:$0xff]
  %v5506 = vld [vmem:[#allocation2 + $0x5f8] sm:$0xff]
  %v5507 = vld [vmem:[#allocation2 + $0x600] sm:$0xff]
  %v5508 = vld [vmem:[#allocation2 + $0x608] sm:$0xff]
  %v5509 = vld [vmem:[#allocation2 + $0x610] sm:$0xff]
  %v5510 = vld [vmem:[#allocation2 + $0x618] sm:$0xff]
  %v5511 = vld [vmem:[#allocation2 + $0x620] sm:$0xff]
  %v5512 = vld [vmem:[#allocation2 + $0x628] sm:$0xff]
  %v5513 = vld [vmem:[#allocation2 + $0x630] sm:$0xff]
  %v5514 = vld [vmem:[#allocation2 + $0x638] sm:$0xff]
  %v5515 = vld [vmem:[#allocation2 + $0x640] sm:$0xff]
  %v5516 = vld [vmem:[#allocation2 + $0x648] sm:$0xff]
  %v5517 = vld [vmem:[#allocation2 + $0x650] sm:$0xff]
  %v5518 = vld [vmem:[#allocation2 + $0x658] sm:$0xff]
  %v5519 = vld [vmem:[#allocation2 + $0x660] sm:$0xff]
  %v5520 = vld [vmem:[#allocation2 + $0x668] sm:$0xff]
  %v5521 = vld [vmem:[#allocation2 + $0x670] sm:$0xff]
  %v5522 = vld [vmem:[#allocation2 + $0x678] sm:$0xff]
  %v5523 = vld [vmem:[#allocation2 + $0x680] sm:$0xff]
  %v5524 = vld [vmem:[#allocation2 + $0x688] sm:$0xff]
  %v5525 = vld [vmem:[#allocation2 + $0x690] sm:$0xff]
  %v5526 = vld [vmem:[#allocation2 + $0x698] sm:$0xff]
  %v5527 = vld [vmem:[#allocation2 + $0x6a0] sm:$0xff]
  %v5528 = vld [vmem:[#allocation2 + $0x6a8] sm:$0xff]
  %v5529 = vld [vmem:[#allocation2 + $0x6b0] sm:$0xff]
  %v5530 = vld [vmem:[#allocation2 + $0x6b8] sm:$0xff]
  %v5531 = vld [vmem:[#allocation2 + $0x6c0] sm:$0xff]
  %v5532 = vld [vmem:[#allocation2 + $0x6c8] sm:$0xff]
  %v5533 = vld [vmem:[#allocation2 + $0x6d0] sm:$0xff]
  %v5534 = vld [vmem:[#allocation2 + $0x6d8] sm:$0xff]
  %v5535 = vld [vmem:[#allocation2 + $0x6e0] sm:$0xff]
  %v5536 = vld [vmem:[#allocation2 + $0x6e8] sm:$0xff]
  %v5537 = vld [vmem:[#allocation2 + $0x6f0] sm:$0xff]
  %v5538 = vld [vmem:[#allocation2 + $0x6f8] sm:$0xff]
  %v5539 = vld [vmem:[#allocation2 + $0x700] sm:$0xff]
  %v5540 = vld [vmem:[#allocation2 + $0x708] sm:$0xff]
  %v5541 = vld [vmem:[#allocation2 + $0x710] sm:$0xff]
  %v5542 = vld [vmem:[#allocation2 + $0x718] sm:$0xff]
  %v5543 = vld [vmem:[#allocation2 + $0x720] sm:$0xff]
  %v5544 = vld [vmem:[#allocation2 + $0x728] sm:$0xff]
  %v5545 = vld [vmem:[#allocation2 + $0x730] sm:$0xff]
  %v5546 = vld [vmem:[#allocation2 + $0x738] sm:$0xff]
  %v5547 = vld [vmem:[#allocation2 + $0x740] sm:$0xff]
  %v5548 = vld [vmem:[#allocation2 + $0x748] sm:$0xff]
  %v5549 = vld [vmem:[#allocation2 + $0x750] sm:$0xff]
  %v5550 = vld [vmem:[#allocation2 + $0x758] sm:$0xff]
  %v5551 = vld [vmem:[#allocation2 + $0x760] sm:$0xff]
  %v5552 = vld [vmem:[#allocation2 + $0x768] sm:$0xff]
  %v5553 = vld [vmem:[#allocation2 + $0x770] sm:$0xff]
  %v5554 = vld [vmem:[#allocation2 + $0x778] sm:$0xff]
  %v5555 = vld [vmem:[#allocation2 + $0x780] sm:$0xff]
  %v5556 = vld [vmem:[#allocation2 + $0x788] sm:$0xff]
  %v5557 = vld [vmem:[#allocation2 + $0x790] sm:$0xff]
  %v5558 = vld [vmem:[#allocation2 + $0x798] sm:$0xff]
  %v5559 = vld [vmem:[#allocation2 + $0x7a0] sm:$0xff]
  %v5560 = vld [vmem:[#allocation2 + $0x7a8] sm:$0xff]
  %v5561 = vld [vmem:[#allocation2 + $0x7b0] sm:$0xff]
  %v5562 = vld [vmem:[#allocation2 + $0x7b8] sm:$0xff]
  %v5563 = vld [vmem:[#allocation2 + $0x7c0] sm:$0xff]
  %v5564 = vld [vmem:[#allocation2 + $0x7c8] sm:$0xff]
  %v5565 = vld [vmem:[#allocation2 + $0x7d0] sm:$0xff]
  %v5566 = vld [vmem:[#allocation2 + $0x7d8] sm:$0xff]
  %v5567 = vld [vmem:[#allocation2 + $0x7e0] sm:$0xff]
  %v5568 = vld [vmem:[#allocation2 + $0x7e8] sm:$0xff]
  %v5569 = vld [vmem:[#allocation2 + $0x7f0] sm:$0xff]
  %v5570 = vld [vmem:[#allocation2 + $0x7f8] sm:$0xff]
  %v5571 = vld [vmem:[#allocation2 + $0x800] sm:$0xff]
  %v5572 = vld [vmem:[#allocation2 + $0x808] sm:$0xff]
  %v5573 = vld [vmem:[#allocation2 + $0x810] sm:$0xff]
  %v5574 = vld [vmem:[#allocation2 + $0x818] sm:$0xff]
  %v5575 = vld [vmem:[#allocation2 + $0x820] sm:$0xff]
  %v5576 = vld [vmem:[#allocation2 + $0x828] sm:$0xff]
  %v5577 = vld [vmem:[#allocation2 + $0x830] sm:$0xff]
  %v5578 = vld [vmem:[#allocation2 + $0x838] sm:$0xff]
  %v5579 = vld [vmem:[#allocation2 + $0x840] sm:$0xff]
  %v5580 = vld [vmem:[#allocation2 + $0x848] sm:$0xff]
  %v5581 = vld [vmem:[#allocation2 + $0x850] sm:$0xff]
  %v5582 = vld [vmem:[#allocation2 + $0x858] sm:$0xff]
  %v5583 = vld [vmem:[#allocation2 + $0x860] sm:$0xff]
  %v5584 = vld [vmem:[#allocation2 + $0x868] sm:$0xff]
  %v5585 = vld [vmem:[#allocation2 + $0x870] sm:$0xff]
  %v5586 = vld [vmem:[#allocation2 + $0x878] sm:$0xff]
  %v5587 = vld [vmem:[#allocation2 + $0x880] sm:$0xff]
  %v5588 = vld [vmem:[#allocation2 + $0x888] sm:$0xff]
  %v5589 = vld [vmem:[#allocation2 + $0x890] sm:$0xff]
  %v5590 = vld [vmem:[#allocation2 + $0x898] sm:$0xff]
  %v5591 = vld [vmem:[#allocation2 + $0x8a0] sm:$0xff]
  %v5592 = vld [vmem:[#allocation2 + $0x8a8] sm:$0xff]
  %v5593 = vld [vmem:[#allocation2 + $0x8b0] sm:$0xff]
  %v5594 = vld [vmem:[#allocation2 + $0x8b8] sm:$0xff]
  %v5595 = vld [vmem:[#allocation2 + $0x8c0] sm:$0xff]
  %v5596 = vld [vmem:[#allocation2 + $0x8c8] sm:$0xff]
  %v5597 = vld [vmem:[#allocation2 + $0x8d0] sm:$0xff]
  %v5598 = vld [vmem:[#allocation2 + $0x8d8] sm:$0xff]
  %v5599 = vld [vmem:[#allocation2 + $0x8e0] sm:$0xff]
  %v5600 = vld [vmem:[#allocation2 + $0x8e8] sm:$0xff]
  %v5601 = vld [vmem:[#allocation2 + $0x8f0] sm:$0xff]
  %v5602 = vld [vmem:[#allocation2 + $0x8f8] sm:$0xff]
  %v5603 = vld [vmem:[#allocation2 + $0x900] sm:$0xff]
  %v5604 = vld [vmem:[#allocation2 + $0x908] sm:$0xff]
  %v5605 = vld [vmem:[#allocation2 + $0x910] sm:$0xff]
  %v5606 = vld [vmem:[#allocation2 + $0x918] sm:$0xff]
  %v5607 = vld [vmem:[#allocation2 + $0x920] sm:$0xff]
  %v5608 = vld [vmem:[#allocation2 + $0x928] sm:$0xff]
  %v5609 = vld [vmem:[#allocation2 + $0x930] sm:$0xff]
  %v5610 = vld [vmem:[#allocation2 + $0x938] sm:$0xff]
  %v5611 = vld [vmem:[#allocation2 + $0x940] sm:$0xff]
  %v5612 = vld [vmem:[#allocation2 + $0x948] sm:$0xff]
  %v5613 = vld [vmem:[#allocation2 + $0x950] sm:$0xff]
  %v5614 = vld [vmem:[#allocation2 + $0x958] sm:$0xff]
  %v5615 = vld [vmem:[#allocation2 + $0x960] sm:$0xff]
  %v5616 = vld [vmem:[#allocation2 + $0x968] sm:$0xff]
  %v5617 = vld [vmem:[#allocation2 + $0x970] sm:$0xff]
  %v5618 = vld [vmem:[#allocation2 + $0x978] sm:$0xff]
  %v5619 = vld [vmem:[#allocation2 + $0x980] sm:$0xff]
  %v5620 = vld [vmem:[#allocation2 + $0x988] sm:$0xff]
  %v5621 = vld [vmem:[#allocation2 + $0x990] sm:$0xff]
  %v5622 = vld [vmem:[#allocation2 + $0x998] sm:$0xff]
  %v5623 = vld [vmem:[#allocation2 + $0x9a0] sm:$0xff]
  %v5624 = vld [vmem:[#allocation2 + $0x9a8] sm:$0xff]
  %v5625 = vld [vmem:[#allocation2 + $0x9b0] sm:$0xff]
  %v5626 = vld [vmem:[#allocation2 + $0x9b8] sm:$0xff]
  %v5627 = vld [vmem:[#allocation2 + $0x9c0] sm:$0xff]
  %v5628 = vld [vmem:[#allocation2 + $0x9c8] sm:$0xff]
  %v5629 = vld [vmem:[#allocation2 + $0x9d0] sm:$0xff]
  %v5630 = vld [vmem:[#allocation2 + $0x9d8] sm:$0xff]
  %v5631 = vld [vmem:[#allocation2 + $0x9e0] sm:$0xff]
  %v5632 = vld [vmem:[#allocation2 + $0x9e8] sm:$0xff]
  %v5633 = vld [vmem:[#allocation2 + $0x9f0] sm:$0xff]
  %v5634 = vld [vmem:[#allocation2 + $0x9f8] sm:$0xff]
  %v5635 = vld [vmem:[#allocation2 + $0xa00] sm:$0xff]
  %v5636 = vld [vmem:[#allocation2 + $0xa08] sm:$0xff]
  %v5637 = vld [vmem:[#allocation2 + $0xa10] sm:$0xff]
  %v5638 = vld [vmem:[#allocation2 + $0xa18] sm:$0xff]
  %v5639 = vld [vmem:[#allocation2 + $0xa20] sm:$0xff]
  %v5640 = vld [vmem:[#allocation2 + $0xa28] sm:$0xff]
  %v5641 = vld [vmem:[#allocation2 + $0xa30] sm:$0xff]
  %v5642 = vld [vmem:[#allocation2 + $0xa38] sm:$0xff]
  %v5643 = vld [vmem:[#allocation2 + $0xa40] sm:$0xff]
  %v5644 = vld [vmem:[#allocation2 + $0xa48] sm:$0xff]
  %v5645 = vld [vmem:[#allocation2 + $0xa50] sm:$0xff]
  %v5646 = vld [vmem:[#allocation2 + $0xa58] sm:$0xff]
  %v5647 = vld [vmem:[#allocation2 + $0xa60] sm:$0xff]
  %v5648 = vld [vmem:[#allocation2 + $0xa68] sm:$0xff]
  %v5649 = vld [vmem:[#allocation2 + $0xa70] sm:$0xff]
  %v5650 = vld [vmem:[#allocation2 + $0xa78] sm:$0xff]
  %v5651 = vld [vmem:[#allocation2 + $0xa80] sm:$0xff]
  %v5652 = vld [vmem:[#allocation2 + $0xa88] sm:$0xff]
  %v5653 = vld [vmem:[#allocation2 + $0xa90] sm:$0xff]
  %v5654 = vld [vmem:[#allocation2 + $0xa98] sm:$0xff]
  %v5655 = vld [vmem:[#allocation2 + $0xaa0] sm:$0xff]
  %v5656 = vld [vmem:[#allocation2 + $0xaa8] sm:$0xff]
  %v5657 = vld [vmem:[#allocation2 + $0xab0] sm:$0xff]
  %v5658 = vld [vmem:[#allocation2 + $0xab8] sm:$0xff]
  %v5659 = vld [vmem:[#allocation2 + $0xac0] sm:$0xff]
  %v5660 = vld [vmem:[#allocation2 + $0xac8] sm:$0xff]
  %v5661 = vld [vmem:[#allocation2 + $0xad0] sm:$0xff]
  %v5662 = vld [vmem:[#allocation2 + $0xad8] sm:$0xff]
  %v5663 = vld [vmem:[#allocation2 + $0xae0] sm:$0xff]
  %v5664 = vld [vmem:[#allocation2 + $0xae8] sm:$0xff]
  %v5665 = vld [vmem:[#allocation2 + $0xaf0] sm:$0xff]
  %v5666 = vld [vmem:[#allocation2 + $0xaf8] sm:$0xff]
  %v5667 = vld [vmem:[#allocation2 + $0xb00] sm:$0xff]
  %v5668 = vld [vmem:[#allocation2 + $0xb08] sm:$0xff]
  %v5669 = vld [vmem:[#allocation2 + $0xb10] sm:$0xff]
  %v5670 = vld [vmem:[#allocation2 + $0xb18] sm:$0xff]
  %v5671 = vld [vmem:[#allocation2 + $0xb20] sm:$0xff]
  %v5672 = vld [vmem:[#allocation2 + $0xb28] sm:$0xff]
  %v5673 = vld [vmem:[#allocation2 + $0xb30] sm:$0xff]
  %v5674 = vld [vmem:[#allocation2 + $0xb38] sm:$0xff]
  %v5675 = vld [vmem:[#allocation2 + $0xb40] sm:$0xff]
  %v5676 = vld [vmem:[#allocation2 + $0xb48] sm:$0xff]
  %v5677 = vld [vmem:[#allocation2 + $0xb50] sm:$0xff]
  %v5678 = vld [vmem:[#allocation2 + $0xb58] sm:$0xff]
  %v5679 = vld [vmem:[#allocation2 + $0xb60] sm:$0xff]
  %v5680 = vld [vmem:[#allocation2 + $0xb68] sm:$0xff]
  %v5681 = vld [vmem:[#allocation2 + $0xb70] sm:$0xff]
  %v5682 = vld [vmem:[#allocation2 + $0xb78] sm:$0xff]
  %v5683 = vld [vmem:[#allocation2 + $0xb80] sm:$0xff]
  %v5684 = vld [vmem:[#allocation2 + $0xb88] sm:$0xff]
  %v5685 = vld [vmem:[#allocation2 + $0xb90] sm:$0xff]
  %v5686 = vld [vmem:[#allocation2 + $0xb98] sm:$0xff]
  %v5687 = vld [vmem:[#allocation2 + $0xba0] sm:$0xff]
  %v5688 = vld [vmem:[#allocation2 + $0xba8] sm:$0xff]
  %v5689 = vld [vmem:[#allocation2 + $0xbb0] sm:$0xff]
  %v5690 = vld [vmem:[#allocation2 + $0xbb8] sm:$0xff]
  %v5691 = vld [vmem:[#allocation2 + $0xbc0] sm:$0xff]
  %v5692 = vld [vmem:[#allocation2 + $0xbc8] sm:$0xff]
  %v5693 = vld [vmem:[#allocation2 + $0xbd0] sm:$0xff]
  %v5694 = vld [vmem:[#allocation2 + $0xbd8] sm:$0xff]
  %v5695 = vld [vmem:[#allocation2 + $0xbe0] sm:$0xff]
  %v5696 = vld [vmem:[#allocation2 + $0xbe8] sm:$0xff]
  %v5697 = vld [vmem:[#allocation2 + $0xbf0] sm:$0xff]
  %v5698 = vld [vmem:[#allocation2 + $0xbf8] sm:$0xff]
  %v5699 = vld [vmem:[%s6] sm:$0xff]
  %v5700 = vld [vmem:[%s6 + $0x8] sm:$0xf]
  %v5703 = vperm.slane %v5699, 0
  %v5704 = vperm.slane %v5699, 1
  %v5705 = vperm.slane %v5699, 2
  %v5706 = vperm.slane %v5699, 3
  %v5707 = vperm.slane %v5699, 4
  %v5708 = vperm.slane %v5699, 5
  %v5709 = vperm.slane %v5699, 6
  %v5710 = vperm.slane %v5699, 7
  %v5711 = vperm.slane %v5700, 0
  %v5712 = vperm.slane %v5700, 1
  %v5713 = vperm.slane %v5700, 2
  %v5714 = vperm.slane %v5700, 3
  %v6111 = vunpack.c.l.b16 %v5315
  %v6112 = vunpack.c.h.b16 %v5315
  %v6113 = vunpack.c.l.b16 %v5316
  %v6114 = vunpack.c.h.b16 %v5316
  %v6115 = vunpack.c.l.b16 %v5317
  %v6116 = vunpack.c.h.b16 %v5317
  %v6117 = vunpack.c.l.b16 %v5318
  %v6118 = vunpack.c.h.b16 %v5318
  %v6119 = vunpack.c.l.b16 %v5319
  %v6120 = vunpack.c.h.b16 %v5319
  %v6121 = vunpack.c.l.b16 %v5320
  %v6122 = vunpack.c.h.b16 %v5320
  %v6123 = vunpack.c.l.b16 %v5321
  %v6124 = vunpack.c.h.b16 %v5321
  %v6125 = vunpack.c.l.b16 %v5322
  %v6126 = vunpack.c.h.b16 %v5322
  %v6127 = vunpack.c.l.b16 %v5323
  %v6128 = vunpack.c.h.b16 %v5323
  %v6129 = vunpack.c.l.b16 %v5324
  %v6130 = vunpack.c.h.b16 %v5324
  %v6131 = vunpack.c.l.b16 %v5325
  %v6132 = vunpack.c.h.b16 %v5325
  %v6133 = vunpack.c.l.b16 %v5326
  %v6134 = vunpack.c.h.b16 %v5326
  %v6135 = vunpack.c.l.b16 %v5327
  %v6136 = vunpack.c.h.b16 %v5327
  %v6137 = vunpack.c.l.b16 %v5328
  %v6138 = vunpack.c.h.b16 %v5328
  %v6139 = vunpack.c.l.b16 %v5329
  %v6140 = vunpack.c.h.b16 %v5329
  %v6141 = vunpack.c.l.b16 %v5330
  %v6142 = vunpack.c.h.b16 %v5330
  %v6143 = vunpack.c.l.b16 %v5331
  %v6144 = vunpack.c.h.b16 %v5331
  %v6145 = vunpack.c.l.b16 %v5332
  %v6146 = vunpack.c.h.b16 %v5332
  %v6147 = vunpack.c.l.b16 %v5333
  %v6148 = vunpack.c.h.b16 %v5333
  %v6149 = vunpack.c.l.b16 %v5334
  %v6150 = vunpack.c.h.b16 %v5334
  %v6151 = vunpack.c.l.b16 %v5335
  %v6152 = vunpack.c.h.b16 %v5335
  %v6153 = vunpack.c.l.b16 %v5336
  %v6154 = vunpack.c.h.b16 %v5336
  %v6155 = vunpack.c.l.b16 %v5337
  %v6156 = vunpack.c.h.b16 %v5337
  %v6157 = vunpack.c.l.b16 %v5338
  %v6158 = vunpack.c.h.b16 %v5338
  %v6159 = vunpack.c.l.b16 %v5339
  %v6160 = vunpack.c.h.b16 %v5339
  %v6161 = vunpack.c.l.b16 %v5340
  %v6162 = vunpack.c.h.b16 %v5340
  %v6163 = vunpack.c.l.b16 %v5341
  %v6164 = vunpack.c.h.b16 %v5341
  %v6165 = vunpack.c.l.b16 %v5342
  %v6166 = vunpack.c.h.b16 %v5342
  %v6167 = vunpack.c.l.b16 %v5343
  %v6168 = vunpack.c.h.b16 %v5343
  %v6169 = vunpack.c.l.b16 %v5344
  %v6170 = vunpack.c.h.b16 %v5344
  %v6171 = vunpack.c.l.b16 %v5345
  %v6172 = vunpack.c.h.b16 %v5345
  %v6173 = vunpack.c.l.b16 %v5346
  %v6174 = vunpack.c.h.b16 %v5346
  %v6175 = vunpack.c.l.b16 %v5347
  %v6176 = vunpack.c.h.b16 %v5347
  %v6177 = vunpack.c.l.b16 %v5348
  %v6178 = vunpack.c.h.b16 %v5348
  %v6179 = vunpack.c.l.b16 %v5349
  %v6180 = vunpack.c.h.b16 %v5349
  %v6181 = vunpack.c.l.b16 %v5350
  %v6182 = vunpack.c.h.b16 %v5350
  %v6183 = vunpack.c.l.b16 %v5351
  %v6184 = vunpack.c.h.b16 %v5351
  %v6185 = vunpack.c.l.b16 %v5352
  %v6186 = vunpack.c.h.b16 %v5352
  %v6187 = vunpack.c.l.b16 %v5353
  %v6188 = vunpack.c.h.b16 %v5353
  %v6189 = vunpack.c.l.b16 %v5354
  %v6190 = vunpack.c.h.b16 %v5354
  %v6191 = vunpack.c.l.b16 %v5355
  %v6192 = vunpack.c.h.b16 %v5355
  %v6193 = vunpack.c.l.b16 %v5356
  %v6194 = vunpack.c.h.b16 %v5356
  %v6195 = vunpack.c.l.b16 %v5357
  %v6196 = vunpack.c.h.b16 %v5357
  %v6197 = vunpack.c.l.b16 %v5358
  %v6198 = vunpack.c.h.b16 %v5358
  %v6199 = vunpack.c.l.b16 %v5359
  %v6200 = vunpack.c.h.b16 %v5359
  %v6201 = vunpack.c.l.b16 %v5360
  %v6202 = vunpack.c.h.b16 %v5360
  %v6203 = vunpack.c.l.b16 %v5361
  %v6204 = vunpack.c.h.b16 %v5361
  %v6205 = vunpack.c.l.b16 %v5362
  %v6206 = vunpack.c.h.b16 %v5362
  %v6207 = vunpack.c.l.b16 %v5363
  %v6208 = vunpack.c.h.b16 %v5363
  %v6209 = vunpack.c.l.b16 %v5364
  %v6210 = vunpack.c.h.b16 %v5364
  %v6211 = vunpack.c.l.b16 %v5365
  %v6212 = vunpack.c.h.b16 %v5365
  %v6213 = vunpack.c.l.b16 %v5366
  %v6214 = vunpack.c.h.b16 %v5366
  %v6215 = vunpack.c.l.b16 %v5367
  %v6216 = vunpack.c.h.b16 %v5367
  %v6217 = vunpack.c.l.b16 %v5368
  %v6218 = vunpack.c.h.b16 %v5368
  %v6219 = vunpack.c.l.b16 %v5369
  %v6220 = vunpack.c.h.b16 %v5369
  %v6221 = vunpack.c.l.b16 %v5370
  %v6222 = vunpack.c.h.b16 %v5370
  %v6223 = vunpack.c.l.b16 %v5371
  %v6224 = vunpack.c.h.b16 %v5371
  %v6225 = vunpack.c.l.b16 %v5372
  %v6226 = vunpack.c.h.b16 %v5372
  %v6227 = vunpack.c.l.b16 %v5373
  %v6228 = vunpack.c.h.b16 %v5373
  %v6229 = vunpack.c.l.b16 %v5374
  %v6230 = vunpack.c.h.b16 %v5374
  %v6231 = vunpack.c.l.b16 %v5375
  %v6232 = vunpack.c.h.b16 %v5375
  %v6233 = vunpack.c.l.b16 %v5376
  %v6234 = vunpack.c.h.b16 %v5376
  %v6235 = vunpack.c.l.b16 %v5377
  %v6236 = vunpack.c.h.b16 %v5377
  %v6237 = vunpack.c.l.b16 %v5378
  %v6238 = vunpack.c.h.b16 %v5378
  %v6239 = vunpack.c.l.b16 %v5379
  %v6240 = vunpack.c.h.b16 %v5379
  %v6241 = vunpack.c.l.b16 %v5380
  %v6242 = vunpack.c.h.b16 %v5380
  %v6243 = vunpack.c.l.b16 %v5381
  %v6244 = vunpack.c.h.b16 %v5381
  %v6245 = vunpack.c.l.b16 %v5382
  %v6246 = vunpack.c.h.b16 %v5382
  %v6247 = vunpack.c.l.b16 %v5383
  %v6248 = vunpack.c.h.b16 %v5383
  %v6249 = vunpack.c.l.b16 %v5384
  %v6250 = vunpack.c.h.b16 %v5384
  %v6251 = vunpack.c.l.b16 %v5385
  %v6252 = vunpack.c.h.b16 %v5385
  %v6253 = vunpack.c.l.b16 %v5386
  %v6254 = vunpack.c.h.b16 %v5386
  %v6255 = vunpack.c.l.b16 %v5387
  %v6256 = vunpack.c.h.b16 %v5387
  %v6257 = vunpack.c.l.b16 %v5388
  %v6258 = vunpack.c.h.b16 %v5388
  %v6259 = vunpack.c.l.b16 %v5389
  %v6260 = vunpack.c.h.b16 %v5389
  %v6261 = vunpack.c.l.b16 %v5390
  %v6262 = vunpack.c.h.b16 %v5390
  %v6263 = vunpack.c.l.b16 %v5391
  %v6264 = vunpack.c.h.b16 %v5391
  %v6265 = vunpack.c.l.b16 %v5392
  %v6266 = vunpack.c.h.b16 %v5392
  %v6267 = vunpack.c.l.b16 %v5393
  %v6268 = vunpack.c.h.b16 %v5393
  %v6269 = vunpack.c.l.b16 %v5394
  %v6270 = vunpack.c.h.b16 %v5394
  %v6271 = vunpack.c.l.b16 %v5395
  %v6272 = vunpack.c.h.b16 %v5395
  %v6273 = vunpack.c.l.b16 %v5396
  %v6274 = vunpack.c.h.b16 %v5396
  %v6275 = vunpack.c.l.b16 %v5397
  %v6276 = vunpack.c.h.b16 %v5397
  %v6277 = vunpack.c.l.b16 %v5398
  %v6278 = vunpack.c.h.b16 %v5398
  %v6279 = vunpack.c.l.b16 %v5399
  %v6280 = vunpack.c.h.b16 %v5399
  %v6281 = vunpack.c.l.b16 %v5400
  %v6282 = vunpack.c.h.b16 %v5400
  %v6283 = vunpack.c.l.b16 %v5401
  %v6284 = vunpack.c.h.b16 %v5401
  %v6285 = vunpack.c.l.b16 %v5402
  %v6286 = vunpack.c.h.b16 %v5402
  %v6287 = vunpack.c.l.b16 %v5403
  %v6288 = vunpack.c.h.b16 %v5403
  %v6289 = vunpack.c.l.b16 %v5404
  %v6290 = vunpack.c.h.b16 %v5404
  %v6291 = vunpack.c.l.b16 %v5405
  %v6292 = vunpack.c.h.b16 %v5405
  %v6293 = vunpack.c.l.b16 %v5406
  %v6294 = vunpack.c.h.b16 %v5406
  %v6295 = vunpack.c.l.b16 %v5407
  %v6296 = vunpack.c.h.b16 %v5407
  %v6297 = vunpack.c.l.b16 %v5408
  %v6298 = vunpack.c.h.b16 %v5408
  %v6299 = vunpack.c.l.b16 %v5409
  %v6300 = vunpack.c.h.b16 %v5409
  %v6301 = vunpack.c.l.b16 %v5410
  %v6302 = vunpack.c.h.b16 %v5410
  %v6303 = vunpack.c.l.b16 %v5411
  %v6304 = vunpack.c.h.b16 %v5411
  %v6305 = vunpack.c.l.b16 %v5412
  %v6306 = vunpack.c.h.b16 %v5412
  %v6307 = vunpack.c.l.b16 %v5413
  %v6308 = vunpack.c.h.b16 %v5413
  %v6309 = vunpack.c.l.b16 %v5414
  %v6310 = vunpack.c.h.b16 %v5414
  %v6311 = vunpack.c.l.b16 %v5415
  %v6312 = vunpack.c.h.b16 %v5415
  %v6313 = vunpack.c.l.b16 %v5416
  %v6314 = vunpack.c.h.b16 %v5416
  %v6315 = vunpack.c.l.b16 %v5417
  %v6316 = vunpack.c.h.b16 %v5417
  %v6317 = vunpack.c.l.b16 %v5418
  %v6318 = vunpack.c.h.b16 %v5418
  %v6319 = vunpack.c.l.b16 %v5419
  %v6320 = vunpack.c.h.b16 %v5419
  %v6321 = vunpack.c.l.b16 %v5420
  %v6322 = vunpack.c.h.b16 %v5420
  %v6323 = vunpack.c.l.b16 %v5421
  %v6324 = vunpack.c.h.b16 %v5421
  %v6325 = vunpack.c.l.b16 %v5422
  %v6326 = vunpack.c.h.b16 %v5422
  %v6327 = vunpack.c.l.b16 %v5423
  %v6328 = vunpack.c.h.b16 %v5423
  %v6329 = vunpack.c.l.b16 %v5424
  %v6330 = vunpack.c.h.b16 %v5424
  %v6331 = vunpack.c.l.b16 %v5425
  %v6332 = vunpack.c.h.b16 %v5425
  %v6333 = vunpack.c.l.b16 %v5426
  %v6334 = vunpack.c.h.b16 %v5426
  %v6335 = vunpack.c.l.b16 %v5427
  %v6336 = vunpack.c.h.b16 %v5427
  %v6337 = vunpack.c.l.b16 %v5428
  %v6338 = vunpack.c.h.b16 %v5428
  %v6339 = vunpack.c.l.b16 %v5429
  %v6340 = vunpack.c.h.b16 %v5429
  %v6341 = vunpack.c.l.b16 %v5430
  %v6342 = vunpack.c.h.b16 %v5430
  %v6343 = vunpack.c.l.b16 %v5431
  %v6344 = vunpack.c.h.b16 %v5431
  %v6345 = vunpack.c.l.b16 %v5432
  %v6346 = vunpack.c.h.b16 %v5432
  %v6347 = vunpack.c.l.b16 %v5433
  %v6348 = vunpack.c.h.b16 %v5433
  %v6349 = vunpack.c.l.b16 %v5434
  %v6350 = vunpack.c.h.b16 %v5434
  %v6351 = vunpack.c.l.b16 %v5435
  %v6352 = vunpack.c.h.b16 %v5435
  %v6353 = vunpack.c.l.b16 %v5436
  %v6354 = vunpack.c.h.b16 %v5436
  %v6355 = vunpack.c.l.b16 %v5437
  %v6356 = vunpack.c.h.b16 %v5437
  %v6357 = vunpack.c.l.b16 %v5438
  %v6358 = vunpack.c.h.b16 %v5438
  %v6359 = vunpack.c.l.b16 %v5439
  %v6360 = vunpack.c.h.b16 %v5439
  %v6361 = vunpack.c.l.b16 %v5440
  %v6362 = vunpack.c.h.b16 %v5440
  %v6363 = vunpack.c.l.b16 %v5441
  %v6364 = vunpack.c.h.b16 %v5441
  %v6365 = vunpack.c.l.b16 %v5442
  %v6366 = vunpack.c.h.b16 %v5442
  %v6367 = vunpack.c.l.b16 %v5443
  %v6368 = vunpack.c.h.b16 %v5443
  %v6369 = vunpack.c.l.b16 %v5444
  %v6370 = vunpack.c.h.b16 %v5444
  %v6371 = vunpack.c.l.b16 %v5445
  %v6372 = vunpack.c.h.b16 %v5445
  %v6373 = vunpack.c.l.b16 %v5446
  %v6374 = vunpack.c.h.b16 %v5446
  %v6375 = vunpack.c.l.b16 %v5447
  %v6376 = vunpack.c.h.b16 %v5447
  %v6377 = vunpack.c.l.b16 %v5448
  %v6378 = vunpack.c.h.b16 %v5448
  %v6379 = vunpack.c.l.b16 %v5449
  %v6380 = vunpack.c.h.b16 %v5449
  %v6381 = vunpack.c.l.b16 %v5450
  %v6382 = vunpack.c.h.b16 %v5450
  %v6383 = vunpack.c.l.b16 %v5451
  %v6384 = vunpack.c.h.b16 %v5451
  %v6385 = vunpack.c.l.b16 %v5452
  %v6386 = vunpack.c.h.b16 %v5452
  %v6387 = vunpack.c.l.b16 %v5453
  %v6388 = vunpack.c.h.b16 %v5453
  %v6389 = vunpack.c.l.b16 %v5454
  %v6390 = vunpack.c.h.b16 %v5454
  %v6391 = vunpack.c.l.b16 %v5455
  %v6392 = vunpack.c.h.b16 %v5455
  %v6393 = vunpack.c.l.b16 %v5456
  %v6394 = vunpack.c.h.b16 %v5456
  %v6395 = vunpack.c.l.b16 %v5457
  %v6396 = vunpack.c.h.b16 %v5457
  %v6397 = vunpack.c.l.b16 %v5458
  %v6398 = vunpack.c.h.b16 %v5458
  %v6399 = vunpack.c.l.b16 %v5459
  %v6400 = vunpack.c.h.b16 %v5459
  %v6401 = vunpack.c.l.b16 %v5460
  %v6402 = vunpack.c.h.b16 %v5460
  %v6403 = vunpack.c.l.b16 %v5461
  %v6404 = vunpack.c.h.b16 %v5461
  %v6405 = vunpack.c.l.b16 %v5462
  %v6406 = vunpack.c.h.b16 %v5462
  %v6407 = vunpack.c.l.b16 %v5463
  %v6408 = vunpack.c.h.b16 %v5463
  %v6409 = vunpack.c.l.b16 %v5464
  %v6410 = vunpack.c.h.b16 %v5464
  %v6411 = vunpack.c.l.b16 %v5465
  %v6412 = vunpack.c.h.b16 %v5465
  %v6413 = vunpack.c.l.b16 %v5466
  %v6414 = vunpack.c.h.b16 %v5466
  %v6415 = vunpack.c.l.b16 %v5467
  %v6416 = vunpack.c.h.b16 %v5467
  %v6417 = vunpack.c.l.b16 %v5468
  %v6418 = vunpack.c.h.b16 %v5468
  %v6419 = vunpack.c.l.b16 %v5469
  %v6420 = vunpack.c.h.b16 %v5469
  %v6421 = vunpack.c.l.b16 %v5470
  %v6422 = vunpack.c.h.b16 %v5470
  %v6423 = vunpack.c.l.b16 %v5471
  %v6424 = vunpack.c.h.b16 %v5471
  %v6425 = vunpack.c.l.b16 %v5472
  %v6426 = vunpack.c.h.b16 %v5472
  %v6427 = vunpack.c.l.b16 %v5473
  %v6428 = vunpack.c.h.b16 %v5473
  %v6429 = vunpack.c.l.b16 %v5474
  %v6430 = vunpack.c.h.b16 %v5474
  %v6431 = vunpack.c.l.b16 %v5475
  %v6432 = vunpack.c.h.b16 %v5475
  %v6433 = vunpack.c.l.b16 %v5476
  %v6434 = vunpack.c.h.b16 %v5476
  %v6435 = vunpack.c.l.b16 %v5477
  %v6436 = vunpack.c.h.b16 %v5477
  %v6437 = vunpack.c.l.b16 %v5478
  %v6438 = vunpack.c.h.b16 %v5478
  %v6439 = vunpack.c.l.b16 %v5479
  %v6440 = vunpack.c.h.b16 %v5479
  %v6441 = vunpack.c.l.b16 %v5480
  %v6442 = vunpack.c.h.b16 %v5480
  %v6443 = vunpack.c.l.b16 %v5481
  %v6444 = vunpack.c.h.b16 %v5481
  %v6445 = vunpack.c.l.b16 %v5482
  %v6446 = vunpack.c.h.b16 %v5482
  %v6447 = vunpack.c.l.b16 %v5483
  %v6448 = vunpack.c.h.b16 %v5483
  %v6449 = vunpack.c.l.b16 %v5484
  %v6450 = vunpack.c.h.b16 %v5484
  %v6451 = vunpack.c.l.b16 %v5485
  %v6452 = vunpack.c.h.b16 %v5485
  %v6453 = vunpack.c.l.b16 %v5486
  %v6454 = vunpack.c.h.b16 %v5486
  %v6455 = vunpack.c.l.b16 %v5487
  %v6456 = vunpack.c.h.b16 %v5487
  %v6457 = vunpack.c.l.b16 %v5488
  %v6458 = vunpack.c.h.b16 %v5488
  %v6459 = vunpack.c.l.b16 %v5489
  %v6460 = vunpack.c.h.b16 %v5489
  %v6461 = vunpack.c.l.b16 %v5490
  %v6462 = vunpack.c.h.b16 %v5490
  %v6463 = vunpack.c.l.b16 %v5491
  %v6464 = vunpack.c.h.b16 %v5491
  %v6465 = vunpack.c.l.b16 %v5492
  %v6466 = vunpack.c.h.b16 %v5492
  %v6467 = vunpack.c.l.b16 %v5493
  %v6468 = vunpack.c.h.b16 %v5493
  %v6469 = vunpack.c.l.b16 %v5494
  %v6470 = vunpack.c.h.b16 %v5494
  %v6471 = vunpack.c.l.b16 %v5495
  %v6472 = vunpack.c.h.b16 %v5495
  %v6473 = vunpack.c.l.b16 %v5496
  %v6474 = vunpack.c.h.b16 %v5496
  %v6475 = vunpack.c.l.b16 %v5497
  %v6476 = vunpack.c.h.b16 %v5497
  %v6477 = vunpack.c.l.b16 %v5498
  %v6478 = vunpack.c.h.b16 %v5498
  %v6479 = vunpack.c.l.b16 %v5499
  %v6480 = vunpack.c.h.b16 %v5499
  %v6481 = vunpack.c.l.b16 %v5500
  %v6482 = vunpack.c.h.b16 %v5500
  %v6483 = vunpack.c.l.b16 %v5501
  %v6484 = vunpack.c.h.b16 %v5501
  %v6485 = vunpack.c.l.b16 %v5502
  %v6486 = vunpack.c.h.b16 %v5502
  %v6487 = vunpack.c.l.b16 %v5503
  %v6488 = vunpack.c.h.b16 %v5503
  %v6489 = vunpack.c.l.b16 %v5504
  %v6490 = vunpack.c.h.b16 %v5504
  %v6491 = vunpack.c.l.b16 %v5505
  %v6492 = vunpack.c.h.b16 %v5505
  %v6493 = vunpack.c.l.b16 %v5506
  %v6494 = vunpack.c.h.b16 %v5506
  %v6495 = vunpack.c.l.b16 %v5507
  %v6496 = vunpack.c.h.b16 %v5507
  %v6497 = vunpack.c.l.b16 %v5508
  %v6498 = vunpack.c.h.b16 %v5508
  %v6499 = vunpack.c.l.b16 %v5509
  %v6500 = vunpack.c.h.b16 %v5509
  %v6501 = vunpack.c.l.b16 %v5510
  %v6502 = vunpack.c.h.b16 %v5510
  %v6503 = vunpack.c.l.b16 %v5511
  %v6504 = vunpack.c.h.b16 %v5511
  %v6505 = vunpack.c.l.b16 %v5512
  %v6506 = vunpack.c.h.b16 %v5512
  %v6507 = vunpack.c.l.b16 %v5513
  %v6508 = vunpack.c.h.b16 %v5513
  %v6509 = vunpack.c.l.b16 %v5514
  %v6510 = vunpack.c.h.b16 %v5514
  %v6511 = vunpack.c.l.b16 %v5515
  %v6512 = vunpack.c.h.b16 %v5515
  %v6513 = vunpack.c.l.b16 %v5516
  %v6514 = vunpack.c.h.b16 %v5516
  %v6515 = vunpack.c.l.b16 %v5517
  %v6516 = vunpack.c.h.b16 %v5517
  %v6517 = vunpack.c.l.b16 %v5518
  %v6518 = vunpack.c.h.b16 %v5518
  %v6519 = vunpack.c.l.b16 %v5519
  %v6520 = vunpack.c.h.b16 %v5519
  %v6521 = vunpack.c.l.b16 %v5520
  %v6522 = vunpack.c.h.b16 %v5520
  %v6523 = vunpack.c.l.b16 %v5521
  %v6524 = vunpack.c.h.b16 %v5521
  %v6525 = vunpack.c.l.b16 %v5522
  %v6526 = vunpack.c.h.b16 %v5522
  %v6527 = vunpack.c.l.b16 %v5523
  %v6528 = vunpack.c.h.b16 %v5523
  %v6529 = vunpack.c.l.b16 %v5524
  %v6530 = vunpack.c.h.b16 %v5524
  %v6531 = vunpack.c.l.b16 %v5525
  %v6532 = vunpack.c.h.b16 %v5525
  %v6533 = vunpack.c.l.b16 %v5526
  %v6534 = vunpack.c.h.b16 %v5526
  %v6535 = vunpack.c.l.b16 %v5527
  %v6536 = vunpack.c.h.b16 %v5527
  %v6537 = vunpack.c.l.b16 %v5528
  %v6538 = vunpack.c.h.b16 %v5528
  %v6539 = vunpack.c.l.b16 %v5529
  %v6540 = vunpack.c.h.b16 %v5529
  %v6541 = vunpack.c.l.b16 %v5530
  %v6542 = vunpack.c.h.b16 %v5530
  %v6543 = vunpack.c.l.b16 %v5531
  %v6544 = vunpack.c.h.b16 %v5531
  %v6545 = vunpack.c.l.b16 %v5532
  %v6546 = vunpack.c.h.b16 %v5532
  %v6547 = vunpack.c.l.b16 %v5533
  %v6548 = vunpack.c.h.b16 %v5533
  %v6549 = vunpack.c.l.b16 %v5534
  %v6550 = vunpack.c.h.b16 %v5534
  %v6551 = vunpack.c.l.b16 %v5535
  %v6552 = vunpack.c.h.b16 %v5535
  %v6553 = vunpack.c.l.b16 %v5536
  %v6554 = vunpack.c.h.b16 %v5536
  %v6555 = vunpack.c.l.b16 %v5537
  %v6556 = vunpack.c.h.b16 %v5537
  %v6557 = vunpack.c.l.b16 %v5538
  %v6558 = vunpack.c.h.b16 %v5538
  %v6559 = vunpack.c.l.b16 %v5539
  %v6560 = vunpack.c.h.b16 %v5539
  %v6561 = vunpack.c.l.b16 %v5540
  %v6562 = vunpack.c.h.b16 %v5540
  %v6563 = vunpack.c.l.b16 %v5541
  %v6564 = vunpack.c.h.b16 %v5541
  %v6565 = vunpack.c.l.b16 %v5542
  %v6566 = vunpack.c.h.b16 %v5542
  %v6567 = vunpack.c.l.b16 %v5543
  %v6568 = vunpack.c.h.b16 %v5543
  %v6569 = vunpack.c.l.b16 %v5544
  %v6570 = vunpack.c.h.b16 %v5544
  %v6571 = vunpack.c.l.b16 %v5545
  %v6572 = vunpack.c.h.b16 %v5545
  %v6573 = vunpack.c.l.b16 %v5546
  %v6574 = vunpack.c.h.b16 %v5546
  %v6575 = vunpack.c.l.b16 %v5547
  %v6576 = vunpack.c.h.b16 %v5547
  %v6577 = vunpack.c.l.b16 %v5548
  %v6578 = vunpack.c.h.b16 %v5548
  %v6579 = vunpack.c.l.b16 %v5549
  %v6580 = vunpack.c.h.b16 %v5549
  %v6581 = vunpack.c.l.b16 %v5550
  %v6582 = vunpack.c.h.b16 %v5550
  %v6583 = vunpack.c.l.b16 %v5551
  %v6584 = vunpack.c.h.b16 %v5551
  %v6585 = vunpack.c.l.b16 %v5552
  %v6586 = vunpack.c.h.b16 %v5552
  %v6587 = vunpack.c.l.b16 %v5553
  %v6588 = vunpack.c.h.b16 %v5553
  %v6589 = vunpack.c.l.b16 %v5554
  %v6590 = vunpack.c.h.b16 %v5554
  %v6591 = vunpack.c.l.b16 %v5555
  %v6592 = vunpack.c.h.b16 %v5555
  %v6593 = vunpack.c.l.b16 %v5556
  %v6594 = vunpack.c.h.b16 %v5556
  %v6595 = vunpack.c.l.b16 %v5557
  %v6596 = vunpack.c.h.b16 %v5557
  %v6597 = vunpack.c.l.b16 %v5558
  %v6598 = vunpack.c.h.b16 %v5558
  %v6599 = vunpack.c.l.b16 %v5559
  %v6600 = vunpack.c.h.b16 %v5559
  %v6601 = vunpack.c.l.b16 %v5560
  %v6602 = vunpack.c.h.b16 %v5560
  %v6603 = vunpack.c.l.b16 %v5561
  %v6604 = vunpack.c.h.b16 %v5561
  %v6605 = vunpack.c.l.b16 %v5562
  %v6606 = vunpack.c.h.b16 %v5562
  %v6607 = vunpack.c.l.b16 %v5563
  %v6608 = vunpack.c.h.b16 %v5563
  %v6609 = vunpack.c.l.b16 %v5564
  %v6610 = vunpack.c.h.b16 %v5564
  %v6611 = vunpack.c.l.b16 %v5565
  %v6612 = vunpack.c.h.b16 %v5565
  %v6613 = vunpack.c.l.b16 %v5566
  %v6614 = vunpack.c.h.b16 %v5566
  %v6615 = vunpack.c.l.b16 %v5567
  %v6616 = vunpack.c.h.b16 %v5567
  %v6617 = vunpack.c.l.b16 %v5568
  %v6618 = vunpack.c.h.b16 %v5568
  %v6619 = vunpack.c.l.b16 %v5569
  %v6620 = vunpack.c.h.b16 %v5569
  %v6621 = vunpack.c.l.b16 %v5570
  %v6622 = vunpack.c.h.b16 %v5570
  %v6623 = vunpack.c.l.b16 %v5571
  %v6624 = vunpack.c.h.b16 %v5571
  %v6625 = vunpack.c.l.b16 %v5572
  %v6626 = vunpack.c.h.b16 %v5572
  %v6627 = vunpack.c.l.b16 %v5573
  %v6628 = vunpack.c.h.b16 %v5573
  %v6629 = vunpack.c.l.b16 %v5574
  %v6630 = vunpack.c.h.b16 %v5574
  %v6631 = vunpack.c.l.b16 %v5575
  %v6632 = vunpack.c.h.b16 %v5575
  %v6633 = vunpack.c.l.b16 %v5576
  %v6634 = vunpack.c.h.b16 %v5576
  %v6635 = vunpack.c.l.b16 %v5577
  %v6636 = vunpack.c.h.b16 %v5577
  %v6637 = vunpack.c.l.b16 %v5578
  %v6638 = vunpack.c.h.b16 %v5578
  %v6639 = vunpack.c.l.b16 %v5579
  %v6640 = vunpack.c.h.b16 %v5579
  %v6641 = vunpack.c.l.b16 %v5580
  %v6642 = vunpack.c.h.b16 %v5580
  %v6643 = vunpack.c.l.b16 %v5581
  %v6644 = vunpack.c.h.b16 %v5581
  %v6645 = vunpack.c.l.b16 %v5582
  %v6646 = vunpack.c.h.b16 %v5582
  %v6647 = vunpack.c.l.b16 %v5583
  %v6648 = vunpack.c.h.b16 %v5583
  %v6649 = vunpack.c.l.b16 %v5584
  %v6650 = vunpack.c.h.b16 %v5584
  %v6651 = vunpack.c.l.b16 %v5585
  %v6652 = vunpack.c.h.b16 %v5585
  %v6653 = vunpack.c.l.b16 %v5586
  %v6654 = vunpack.c.h.b16 %v5586
  %v6655 = vunpack.c.l.b16 %v5587
  %v6656 = vunpack.c.h.b16 %v5587
  %v6657 = vunpack.c.l.b16 %v5588
  %v6658 = vunpack.c.h.b16 %v5588
  %v6659 = vunpack.c.l.b16 %v5589
  %v6660 = vunpack.c.h.b16 %v5589
  %v6661 = vunpack.c.l.b16 %v5590
  %v6662 = vunpack.c.h.b16 %v5590
  %v6663 = vunpack.c.l.b16 %v5591
  %v6664 = vunpack.c.h.b16 %v5591
  %v6665 = vunpack.c.l.b16 %v5592
  %v6666 = vunpack.c.h.b16 %v5592
  %v6667 = vunpack.c.l.b16 %v5593
  %v6668 = vunpack.c.h.b16 %v5593
  %v6669 = vunpack.c.l.b16 %v5594
  %v6670 = vunpack.c.h.b16 %v5594
  %v6671 = vunpack.c.l.b16 %v5595
  %v6672 = vunpack.c.h.b16 %v5595
  %v6673 = vunpack.c.l.b16 %v5596
  %v6674 = vunpack.c.h.b16 %v5596
  %v6675 = vunpack.c.l.b16 %v5597
  %v6676 = vunpack.c.h.b16 %v5597
  %v6677 = vunpack.c.l.b16 %v5598
  %v6678 = vunpack.c.h.b16 %v5598
  %v6679 = vunpack.c.l.b16 %v5599
  %v6680 = vunpack.c.h.b16 %v5599
  %v6681 = vunpack.c.l.b16 %v5600
  %v6682 = vunpack.c.h.b16 %v5600
  %v6683 = vunpack.c.l.b16 %v5601
  %v6684 = vunpack.c.h.b16 %v5601
  %v6685 = vunpack.c.l.b16 %v5602
  %v6686 = vunpack.c.h.b16 %v5602
  %v6687 = vunpack.c.l.b16 %v5603
  %v6688 = vunpack.c.h.b16 %v5603
  %v6689 = vunpack.c.l.b16 %v5604
  %v6690 = vunpack.c.h.b16 %v5604
  %v6691 = vunpack.c.l.b16 %v5605
  %v6692 = vunpack.c.h.b16 %v5605
  %v6693 = vunpack.c.l.b16 %v5606
  %v6694 = vunpack.c.h.b16 %v5606
  %v6695 = vunpack.c.l.b16 %v5607
  %v6696 = vunpack.c.h.b16 %v5607
  %v6697 = vunpack.c.l.b16 %v5608
  %v6698 = vunpack.c.h.b16 %v5608
  %v6699 = vunpack.c.l.b16 %v5609
  %v6700 = vunpack.c.h.b16 %v5609
  %v6701 = vunpack.c.l.b16 %v5610
  %v6702 = vunpack.c.h.b16 %v5610
  %v6703 = vunpack.c.l.b16 %v5611
  %v6704 = vunpack.c.h.b16 %v5611
  %v6705 = vunpack.c.l.b16 %v5612
  %v6706 = vunpack.c.h.b16 %v5612
  %v6707 = vunpack.c.l.b16 %v5613
  %v6708 = vunpack.c.h.b16 %v5613
  %v6709 = vunpack.c.l.b16 %v5614
  %v6710 = vunpack.c.h.b16 %v5614
  %v6711 = vunpack.c.l.b16 %v5615
  %v6712 = vunpack.c.h.b16 %v5615
  %v6713 = vunpack.c.l.b16 %v5616
  %v6714 = vunpack.c.h.b16 %v5616
  %v6715 = vunpack.c.l.b16 %v5617
  %v6716 = vunpack.c.h.b16 %v5617
  %v6717 = vunpack.c.l.b16 %v5618
  %v6718 = vunpack.c.h.b16 %v5618
  %v6719 = vunpack.c.l.b16 %v5619
  %v6720 = vunpack.c.h.b16 %v5619
  %v6721 = vunpack.c.l.b16 %v5620
  %v6722 = vunpack.c.h.b16 %v5620
  %v6723 = vunpack.c.l.b16 %v5621
  %v6724 = vunpack.c.h.b16 %v5621
  %v6725 = vunpack.c.l.b16 %v5622
  %v6726 = vunpack.c.h.b16 %v5622
  %v6727 = vunpack.c.l.b16 %v5623
  %v6728 = vunpack.c.h.b16 %v5623
  %v6729 = vunpack.c.l.b16 %v5624
  %v6730 = vunpack.c.h.b16 %v5624
  %v6731 = vunpack.c.l.b16 %v5625
  %v6732 = vunpack.c.h.b16 %v5625
  %v6733 = vunpack.c.l.b16 %v5626
  %v6734 = vunpack.c.h.b16 %v5626
  %v6735 = vunpack.c.l.b16 %v5627
  %v6736 = vunpack.c.h.b16 %v5627
  %v6737 = vunpack.c.l.b16 %v5628
  %v6738 = vunpack.c.h.b16 %v5628
  %v6739 = vunpack.c.l.b16 %v5629
  %v6740 = vunpack.c.h.b16 %v5629
  %v6741 = vunpack.c.l.b16 %v5630
  %v6742 = vunpack.c.h.b16 %v5630
  %v6743 = vunpack.c.l.b16 %v5631
  %v6744 = vunpack.c.h.b16 %v5631
  %v6745 = vunpack.c.l.b16 %v5632
  %v6746 = vunpack.c.h.b16 %v5632
  %v6747 = vunpack.c.l.b16 %v5633
  %v6748 = vunpack.c.h.b16 %v5633
  %v6749 = vunpack.c.l.b16 %v5634
  %v6750 = vunpack.c.h.b16 %v5634
  %v6751 = vunpack.c.l.b16 %v5635
  %v6752 = vunpack.c.h.b16 %v5635
  %v6753 = vunpack.c.l.b16 %v5636
  %v6754 = vunpack.c.h.b16 %v5636
  %v6755 = vunpack.c.l.b16 %v5637
  %v6756 = vunpack.c.h.b16 %v5637
  %v6757 = vunpack.c.l.b16 %v5638
  %v6758 = vunpack.c.h.b16 %v5638
  %v6759 = vunpack.c.l.b16 %v5639
  %v6760 = vunpack.c.h.b16 %v5639
  %v6761 = vunpack.c.l.b16 %v5640
  %v6762 = vunpack.c.h.b16 %v5640
  %v6763 = vunpack.c.l.b16 %v5641
  %v6764 = vunpack.c.h.b16 %v5641
  %v6765 = vunpack.c.l.b16 %v5642
  %v6766 = vunpack.c.h.b16 %v5642
  %v6767 = vunpack.c.l.b16 %v5643
  %v6768 = vunpack.c.h.b16 %v5643
  %v6769 = vunpack.c.l.b16 %v5644
  %v6770 = vunpack.c.h.b16 %v5644
  %v6771 = vunpack.c.l.b16 %v5645
  %v6772 = vunpack.c.h.b16 %v5645
  %v6773 = vunpack.c.l.b16 %v5646
  %v6774 = vunpack.c.h.b16 %v5646
  %v6775 = vunpack.c.l.b16 %v5647
  %v6776 = vunpack.c.h.b16 %v5647
  %v6777 = vunpack.c.l.b16 %v5648
  %v6778 = vunpack.c.h.b16 %v5648
  %v6779 = vunpack.c.l.b16 %v5649
  %v6780 = vunpack.c.h.b16 %v5649
  %v6781 = vunpack.c.l.b16 %v5650
  %v6782 = vunpack.c.h.b16 %v5650
  %v6783 = vunpack.c.l.b16 %v5651
  %v6784 = vunpack.c.h.b16 %v5651
  %v6785 = vunpack.c.l.b16 %v5652
  %v6786 = vunpack.c.h.b16 %v5652
  %v6787 = vunpack.c.l.b16 %v5653
  %v6788 = vunpack.c.h.b16 %v5653
  %v6789 = vunpack.c.l.b16 %v5654
  %v6790 = vunpack.c.h.b16 %v5654
  %v6791 = vunpack.c.l.b16 %v5655
  %v6792 = vunpack.c.h.b16 %v5655
  %v6793 = vunpack.c.l.b16 %v5656
  %v6794 = vunpack.c.h.b16 %v5656
  %v6795 = vunpack.c.l.b16 %v5657
  %v6796 = vunpack.c.h.b16 %v5657
  %v6797 = vunpack.c.l.b16 %v5658
  %v6798 = vunpack.c.h.b16 %v5658
  %v6799 = vunpack.c.l.b16 %v5659
  %v6800 = vunpack.c.h.b16 %v5659
  %v6801 = vunpack.c.l.b16 %v5660
  %v6802 = vunpack.c.h.b16 %v5660
  %v6803 = vunpack.c.l.b16 %v5661
  %v6804 = vunpack.c.h.b16 %v5661
  %v6805 = vunpack.c.l.b16 %v5662
  %v6806 = vunpack.c.h.b16 %v5662
  %v6807 = vunpack.c.l.b16 %v5663
  %v6808 = vunpack.c.h.b16 %v5663
  %v6809 = vunpack.c.l.b16 %v5664
  %v6810 = vunpack.c.h.b16 %v5664
  %v6811 = vunpack.c.l.b16 %v5665
  %v6812 = vunpack.c.h.b16 %v5665
  %v6813 = vunpack.c.l.b16 %v5666
  %v6814 = vunpack.c.h.b16 %v5666
  %v6815 = vunpack.c.l.b16 %v5667
  %v6816 = vunpack.c.h.b16 %v5667
  %v6817 = vunpack.c.l.b16 %v5668
  %v6818 = vunpack.c.h.b16 %v5668
  %v6819 = vunpack.c.l.b16 %v5669
  %v6820 = vunpack.c.h.b16 %v5669
  %v6821 = vunpack.c.l.b16 %v5670
  %v6822 = vunpack.c.h.b16 %v5670
  %v6823 = vunpack.c.l.b16 %v5671
  %v6824 = vunpack.c.h.b16 %v5671
  %v6825 = vunpack.c.l.b16 %v5672
  %v6826 = vunpack.c.h.b16 %v5672
  %v6827 = vunpack.c.l.b16 %v5673
  %v6828 = vunpack.c.h.b16 %v5673
  %v6829 = vunpack.c.l.b16 %v5674
  %v6830 = vunpack.c.h.b16 %v5674
  %v6831 = vunpack.c.l.b16 %v5675
  %v6832 = vunpack.c.h.b16 %v5675
  %v6833 = vunpack.c.l.b16 %v5676
  %v6834 = vunpack.c.h.b16 %v5676
  %v6835 = vunpack.c.l.b16 %v5677
  %v6836 = vunpack.c.h.b16 %v5677
  %v6837 = vunpack.c.l.b16 %v5678
  %v6838 = vunpack.c.h.b16 %v5678
  %v6839 = vunpack.c.l.b16 %v5679
  %v6840 = vunpack.c.h.b16 %v5679
  %v6841 = vunpack.c.l.b16 %v5680
  %v6842 = vunpack.c.h.b16 %v5680
  %v6843 = vunpack.c.l.b16 %v5681
  %v6844 = vunpack.c.h.b16 %v5681
  %v6845 = vunpack.c.l.b16 %v5682
  %v6846 = vunpack.c.h.b16 %v5682
  %v6847 = vunpack.c.l.b16 %v5683
  %v6848 = vunpack.c.h.b16 %v5683
  %v6849 = vunpack.c.l.b16 %v5684
  %v6850 = vunpack.c.h.b16 %v5684
  %v6851 = vunpack.c.l.b16 %v5685
  %v6852 = vunpack.c.h.b16 %v5685
  %v6853 = vunpack.c.l.b16 %v5686
  %v6854 = vunpack.c.h.b16 %v5686
  %v6855 = vunpack.c.l.b16 %v5687
  %v6856 = vunpack.c.h.b16 %v5687
  %v6857 = vunpack.c.l.b16 %v5688
  %v6858 = vunpack.c.h.b16 %v5688
  %v6859 = vunpack.c.l.b16 %v5689
  %v6860 = vunpack.c.h.b16 %v5689
  %v6861 = vunpack.c.l.b16 %v5690
  %v6862 = vunpack.c.h.b16 %v5690
  %v6863 = vunpack.c.l.b16 %v5691
  %v6864 = vunpack.c.h.b16 %v5691
  %v6865 = vunpack.c.l.b16 %v5692
  %v6866 = vunpack.c.h.b16 %v5692
  %v6867 = vunpack.c.l.b16 %v5693
  %v6868 = vunpack.c.h.b16 %v5693
  %v6869 = vunpack.c.l.b16 %v5694
  %v6870 = vunpack.c.h.b16 %v5694
  %v6871 = vunpack.c.l.b16 %v5695
  %v6872 = vunpack.c.h.b16 %v5695
  %v6873 = vunpack.c.l.b16 %v5696
  %v6874 = vunpack.c.h.b16 %v5696
  %v6875 = vunpack.c.l.b16 %v5697
  %v6876 = vunpack.c.h.b16 %v5697
  %v6877 = vunpack.c.l.b16 %v5698
  %v6878 = vunpack.c.h.b16 %v5698
  %v6879 = vpack.c.b16 %v6123, %v6111
  %v6880 = vpack.c.b16 %v6124, %v6112
  %v6881 = vpack.c.b16 %v6125, %v6113
  %v6882 = vpack.c.b16 %v6126, %v6114
  %v6883 = vpack.c.b16 %v6127, %v6115
  %v6884 = vpack.c.b16 %v6128, %v6116
  %v6885 = vpack.c.b16 %v6129, %v6117
  %v6886 = vpack.c.b16 %v6130, %v6118
  %v6887 = vpack.c.b16 %v6131, %v6119
  %v6888 = vpack.c.b16 %v6132, %v6120
  %v6889 = vpack.c.b16 %v6133, %v6121
  %v6890 = vpack.c.b16 %v6134, %v6122
  %v6891 = vpack.c.b16 %v6147, %v6135
  %v6892 = vpack.c.b16 %v6148, %v6136
  %v6893 = vpack.c.b16 %v6149, %v6137
  %v6894 = vpack.c.b16 %v6150, %v6138
  %v6895 = vpack.c.b16 %v6151, %v6139
  %v6896 = vpack.c.b16 %v6152, %v6140
  %v6897 = vpack.c.b16 %v6153, %v6141
  %v6898 = vpack.c.b16 %v6154, %v6142
  %v6899 = vpack.c.b16 %v6155, %v6143
  %v6900 = vpack.c.b16 %v6156, %v6144
  %v6901 = vpack.c.b16 %v6157, %v6145
  %v6902 = vpack.c.b16 %v6158, %v6146
  %v6903 = vpack.c.b16 %v6171, %v6159
  %v6904 = vpack.c.b16 %v6172, %v6160
  %v6905 = vpack.c.b16 %v6173, %v6161
  %v6906 = vpack.c.b16 %v6174, %v6162
  %v6907 = vpack.c.b16 %v6175, %v6163
  %v6908 = vpack.c.b16 %v6176, %v6164
  %v6909 = vpack.c.b16 %v6177, %v6165
  %v6910 = vpack.c.b16 %v6178, %v6166
  %v6911 = vpack.c.b16 %v6179, %v6167
  %v6912 = vpack.c.b16 %v6180, %v6168
  %v6913 = vpack.c.b16 %v6181, %v6169
  %v6914 = vpack.c.b16 %v6182, %v6170
  %v6915 = vpack.c.b16 %v6195, %v6183
  %v6916 = vpack.c.b16 %v6196, %v6184
  %v6917 = vpack.c.b16 %v6197, %v6185
  %v6918 = vpack.c.b16 %v6198, %v6186
  %v6919 = vpack.c.b16 %v6199, %v6187
  %v6920 = vpack.c.b16 %v6200, %v6188
  %v6921 = vpack.c.b16 %v6201, %v6189
  %v6922 = vpack.c.b16 %v6202, %v6190
  %v6923 = vpack.c.b16 %v6203, %v6191
  %v6924 = vpack.c.b16 %v6204, %v6192
  %v6925 = vpack.c.b16 %v6205, %v6193
  %v6926 = vpack.c.b16 %v6206, %v6194
  %v6927 = vpack.c.b16 %v6219, %v6207
  %v6928 = vpack.c.b16 %v6220, %v6208
  %v6929 = vpack.c.b16 %v6221, %v6209
  %v6930 = vpack.c.b16 %v6222, %v6210
  %v6931 = vpack.c.b16 %v6223, %v6211
  %v6932 = vpack.c.b16 %v6224, %v6212
  %v6933 = vpack.c.b16 %v6225, %v6213
  %v6934 = vpack.c.b16 %v6226, %v6214
  %v6935 = vpack.c.b16 %v6227, %v6215
  %v6936 = vpack.c.b16 %v6228, %v6216
  %v6937 = vpack.c.b16 %v6229, %v6217
  %v6938 = vpack.c.b16 %v6230, %v6218
  %v6939 = vpack.c.b16 %v6243, %v6231
  %v6940 = vpack.c.b16 %v6244, %v6232
  %v6941 = vpack.c.b16 %v6245, %v6233
  %v6942 = vpack.c.b16 %v6246, %v6234
  %v6943 = vpack.c.b16 %v6247, %v6235
  %v6944 = vpack.c.b16 %v6248, %v6236
  %v6945 = vpack.c.b16 %v6249, %v6237
  %v6946 = vpack.c.b16 %v6250, %v6238
  %v6947 = vpack.c.b16 %v6251, %v6239
  %v6948 = vpack.c.b16 %v6252, %v6240
  %v6949 = vpack.c.b16 %v6253, %v6241
  %v6950 = vpack.c.b16 %v6254, %v6242
  %v6951 = vpack.c.b16 %v6267, %v6255
  %v6952 = vpack.c.b16 %v6268, %v6256
  %v6953 = vpack.c.b16 %v6269, %v6257
  %v6954 = vpack.c.b16 %v6270, %v6258
  %v6955 = vpack.c.b16 %v6271, %v6259
  %v6956 = vpack.c.b16 %v6272, %v6260
  %v6957 = vpack.c.b16 %v6273, %v6261
  %v6958 = vpack.c.b16 %v6274, %v6262
  %v6959 = vpack.c.b16 %v6275, %v6263
  %v6960 = vpack.c.b16 %v6276, %v6264
  %v6961 = vpack.c.b16 %v6277, %v6265
  %v6962 = vpack.c.b16 %v6278, %v6266
  %v6963 = vpack.c.b16 %v6291, %v6279
  %v6964 = vpack.c.b16 %v6292, %v6280
  %v6965 = vpack.c.b16 %v6293, %v6281
  %v6966 = vpack.c.b16 %v6294, %v6282
  %v6967 = vpack.c.b16 %v6295, %v6283
  %v6968 = vpack.c.b16 %v6296, %v6284
  %v6969 = vpack.c.b16 %v6297, %v6285
  %v6970 = vpack.c.b16 %v6298, %v6286
  %v6971 = vpack.c.b16 %v6299, %v6287
  %v6972 = vpack.c.b16 %v6300, %v6288
  %v6973 = vpack.c.b16 %v6301, %v6289
  %v6974 = vpack.c.b16 %v6302, %v6290
  %v6975 = vpack.c.b16 %v6315, %v6303
  %v6976 = vpack.c.b16 %v6316, %v6304
  %v6977 = vpack.c.b16 %v6317, %v6305
  %v6978 = vpack.c.b16 %v6318, %v6306
  %v6979 = vpack.c.b16 %v6319, %v6307
  %v6980 = vpack.c.b16 %v6320, %v6308
  %v6981 = vpack.c.b16 %v6321, %v6309
  %v6982 = vpack.c.b16 %v6322, %v6310
  %v6983 = vpack.c.b16 %v6323, %v6311
  %v6984 = vpack.c.b16 %v6324, %v6312
  %v6985 = vpack.c.b16 %v6325, %v6313
  %v6986 = vpack.c.b16 %v6326, %v6314
  %v6987 = vpack.c.b16 %v6339, %v6327
  %v6988 = vpack.c.b16 %v6340, %v6328
  %v6989 = vpack.c.b16 %v6341, %v6329
  %v6990 = vpack.c.b16 %v6342, %v6330
  %v6991 = vpack.c.b16 %v6343, %v6331
  %v6992 = vpack.c.b16 %v6344, %v6332
  %v6993 = vpack.c.b16 %v6345, %v6333
  %v6994 = vpack.c.b16 %v6346, %v6334
  %v6995 = vpack.c.b16 %v6347, %v6335
  %v6996 = vpack.c.b16 %v6348, %v6336
  %v6997 = vpack.c.b16 %v6349, %v6337
  %v6998 = vpack.c.b16 %v6350, %v6338
  %v6999 = vpack.c.b16 %v6363, %v6351
  %v7000 = vpack.c.b16 %v6364, %v6352
  %v7001 = vpack.c.b16 %v6365, %v6353
  %v7002 = vpack.c.b16 %v6366, %v6354
  %v7003 = vpack.c.b16 %v6367, %v6355
  %v7004 = vpack.c.b16 %v6368, %v6356
  %v7005 = vpack.c.b16 %v6369, %v6357
  %v7006 = vpack.c.b16 %v6370, %v6358
  %v7007 = vpack.c.b16 %v6371, %v6359
  %v7008 = vpack.c.b16 %v6372, %v6360
  %v7009 = vpack.c.b16 %v6373, %v6361
  %v7010 = vpack.c.b16 %v6374, %v6362
  %v7011 = vpack.c.b16 %v6387, %v6375
  %v7012 = vpack.c.b16 %v6388, %v6376
  %v7013 = vpack.c.b16 %v6389, %v6377
  %v7014 = vpack.c.b16 %v6390, %v6378
  %v7015 = vpack.c.b16 %v6391, %v6379
  %v7016 = vpack.c.b16 %v6392, %v6380
  %v7017 = vpack.c.b16 %v6393, %v6381
  %v7018 = vpack.c.b16 %v6394, %v6382
  %v7019 = vpack.c.b16 %v6395, %v6383
  %v7020 = vpack.c.b16 %v6396, %v6384
  %v7021 = vpack.c.b16 %v6397, %v6385
  %v7022 = vpack.c.b16 %v6398, %v6386
  %v7023 = vpack.c.b16 %v6411, %v6399
  %v7024 = vpack.c.b16 %v6412, %v6400
  %v7025 = vpack.c.b16 %v6413, %v6401
  %v7026 = vpack.c.b16 %v6414, %v6402
  %v7027 = vpack.c.b16 %v6415, %v6403
  %v7028 = vpack.c.b16 %v6416, %v6404
  %v7029 = vpack.c.b16 %v6417, %v6405
  %v7030 = vpack.c.b16 %v6418, %v6406
  %v7031 = vpack.c.b16 %v6419, %v6407
  %v7032 = vpack.c.b16 %v6420, %v6408
  %v7033 = vpack.c.b16 %v6421, %v6409
  %v7034 = vpack.c.b16 %v6422, %v6410
  %v7035 = vpack.c.b16 %v6435, %v6423
  %v7036 = vpack.c.b16 %v6436, %v6424
  %v7037 = vpack.c.b16 %v6437, %v6425
  %v7038 = vpack.c.b16 %v6438, %v6426
  %v7039 = vpack.c.b16 %v6439, %v6427
  %v7040 = vpack.c.b16 %v6440, %v6428
  %v7041 = vpack.c.b16 %v6441, %v6429
  %v7042 = vpack.c.b16 %v6442, %v6430
  %v7043 = vpack.c.b16 %v6443, %v6431
  %v7044 = vpack.c.b16 %v6444, %v6432
  %v7045 = vpack.c.b16 %v6445, %v6433
  %v7046 = vpack.c.b16 %v6446, %v6434
  %v7047 = vpack.c.b16 %v6459, %v6447
  %v7048 = vpack.c.b16 %v6460, %v6448
  %v7049 = vpack.c.b16 %v6461, %v6449
  %v7050 = vpack.c.b16 %v6462, %v6450
  %v7051 = vpack.c.b16 %v6463, %v6451
  %v7052 = vpack.c.b16 %v6464, %v6452
  %v7053 = vpack.c.b16 %v6465, %v6453
  %v7054 = vpack.c.b16 %v6466, %v6454
  %v7055 = vpack.c.b16 %v6467, %v6455
  %v7056 = vpack.c.b16 %v6468, %v6456
  %v7057 = vpack.c.b16 %v6469, %v6457
  %v7058 = vpack.c.b16 %v6470, %v6458
  %v7059 = vpack.c.b16 %v6483, %v6471
  %v7060 = vpack.c.b16 %v6484, %v6472
  %v7061 = vpack.c.b16 %v6485, %v6473
  %v7062 = vpack.c.b16 %v6486, %v6474
  %v7063 = vpack.c.b16 %v6487, %v6475
  %v7064 = vpack.c.b16 %v6488, %v6476
  %v7065 = vpack.c.b16 %v6489, %v6477
  %v7066 = vpack.c.b16 %v6490, %v6478
  %v7067 = vpack.c.b16 %v6491, %v6479
  %v7068 = vpack.c.b16 %v6492, %v6480
  %v7069 = vpack.c.b16 %v6493, %v6481
  %v7070 = vpack.c.b16 %v6494, %v6482
  %v7071 = vpack.c.b16 %v6507, %v6495
  %v7072 = vpack.c.b16 %v6508, %v6496
  %v7073 = vpack.c.b16 %v6509, %v6497
  %v7074 = vpack.c.b16 %v6510, %v6498
  %v7075 = vpack.c.b16 %v6511, %v6499
  %v7076 = vpack.c.b16 %v6512, %v6500
  %v7077 = vpack.c.b16 %v6513, %v6501
  %v7078 = vpack.c.b16 %v6514, %v6502
  %v7079 = vpack.c.b16 %v6515, %v6503
  %v7080 = vpack.c.b16 %v6516, %v6504
  %v7081 = vpack.c.b16 %v6517, %v6505
  %v7082 = vpack.c.b16 %v6518, %v6506
  %v7083 = vpack.c.b16 %v6531, %v6519
  %v7084 = vpack.c.b16 %v6532, %v6520
  %v7085 = vpack.c.b16 %v6533, %v6521
  %v7086 = vpack.c.b16 %v6534, %v6522
  %v7087 = vpack.c.b16 %v6535, %v6523
  %v7088 = vpack.c.b16 %v6536, %v6524
  %v7089 = vpack.c.b16 %v6537, %v6525
  %v7090 = vpack.c.b16 %v6538, %v6526
  %v7091 = vpack.c.b16 %v6539, %v6527
  %v7092 = vpack.c.b16 %v6540, %v6528
  %v7093 = vpack.c.b16 %v6541, %v6529
  %v7094 = vpack.c.b16 %v6542, %v6530
  %v7095 = vpack.c.b16 %v6555, %v6543
  %v7096 = vpack.c.b16 %v6556, %v6544
  %v7097 = vpack.c.b16 %v6557, %v6545
  %v7098 = vpack.c.b16 %v6558, %v6546
  %v7099 = vpack.c.b16 %v6559, %v6547
  %v7100 = vpack.c.b16 %v6560, %v6548
  %v7101 = vpack.c.b16 %v6561, %v6549
  %v7102 = vpack.c.b16 %v6562, %v6550
  %v7103 = vpack.c.b16 %v6563, %v6551
  %v7104 = vpack.c.b16 %v6564, %v6552
  %v7105 = vpack.c.b16 %v6565, %v6553
  %v7106 = vpack.c.b16 %v6566, %v6554
  %v7107 = vpack.c.b16 %v6579, %v6567
  %v7108 = vpack.c.b16 %v6580, %v6568
  %v7109 = vpack.c.b16 %v6581, %v6569
  %v7110 = vpack.c.b16 %v6582, %v6570
  %v7111 = vpack.c.b16 %v6583, %v6571
  %v7112 = vpack.c.b16 %v6584, %v6572
  %v7113 = vpack.c.b16 %v6585, %v6573
  %v7114 = vpack.c.b16 %v6586, %v6574
  %v7115 = vpack.c.b16 %v6587, %v6575
  %v7116 = vpack.c.b16 %v6588, %v6576
  %v7117 = vpack.c.b16 %v6589, %v6577
  %v7118 = vpack.c.b16 %v6590, %v6578
  %v7119 = vpack.c.b16 %v6603, %v6591
  %v7120 = vpack.c.b16 %v6604, %v6592
  %v7121 = vpack.c.b16 %v6605, %v6593
  %v7122 = vpack.c.b16 %v6606, %v6594
  %v7123 = vpack.c.b16 %v6607, %v6595
  %v7124 = vpack.c.b16 %v6608, %v6596
  %v7125 = vpack.c.b16 %v6609, %v6597
  %v7126 = vpack.c.b16 %v6610, %v6598
  %v7127 = vpack.c.b16 %v6611, %v6599
  %v7128 = vpack.c.b16 %v6612, %v6600
  %v7129 = vpack.c.b16 %v6613, %v6601
  %v7130 = vpack.c.b16 %v6614, %v6602
  %v7131 = vpack.c.b16 %v6627, %v6615
  %v7132 = vpack.c.b16 %v6628, %v6616
  %v7133 = vpack.c.b16 %v6629, %v6617
  %v7134 = vpack.c.b16 %v6630, %v6618
  %v7135 = vpack.c.b16 %v6631, %v6619
  %v7136 = vpack.c.b16 %v6632, %v6620
  %v7137 = vpack.c.b16 %v6633, %v6621
  %v7138 = vpack.c.b16 %v6634, %v6622
  %v7139 = vpack.c.b16 %v6635, %v6623
  %v7140 = vpack.c.b16 %v6636, %v6624
  %v7141 = vpack.c.b16 %v6637, %v6625
  %v7142 = vpack.c.b16 %v6638, %v6626
  %v7143 = vpack.c.b16 %v6651, %v6639
  %v7144 = vpack.c.b16 %v6652, %v6640
  %v7145 = vpack.c.b16 %v6653, %v6641
  %v7146 = vpack.c.b16 %v6654, %v6642
  %v7147 = vpack.c.b16 %v6655, %v6643
  %v7148 = vpack.c.b16 %v6656, %v6644
  %v7149 = vpack.c.b16 %v6657, %v6645
  %v7150 = vpack.c.b16 %v6658, %v6646
  %v7151 = vpack.c.b16 %v6659, %v6647
  %v7152 = vpack.c.b16 %v6660, %v6648
  %v7153 = vpack.c.b16 %v6661, %v6649
  %v7154 = vpack.c.b16 %v6662, %v6650
  %v7155 = vpack.c.b16 %v6675, %v6663
  %v7156 = vpack.c.b16 %v6676, %v6664
  %v7157 = vpack.c.b16 %v6677, %v6665
  %v7158 = vpack.c.b16 %v6678, %v6666
  %v7159 = vpack.c.b16 %v6679, %v6667
  %v7160 = vpack.c.b16 %v6680, %v6668
  %v7161 = vpack.c.b16 %v6681, %v6669
  %v7162 = vpack.c.b16 %v6682, %v6670
  %v7163 = vpack.c.b16 %v6683, %v6671
  %v7164 = vpack.c.b16 %v6684, %v6672
  %v7165 = vpack.c.b16 %v6685, %v6673
  %v7166 = vpack.c.b16 %v6686, %v6674
  %v7167 = vpack.c.b16 %v6699, %v6687
  %v7168 = vpack.c.b16 %v6700, %v6688
  %v7169 = vpack.c.b16 %v6701, %v6689
  %v7170 = vpack.c.b16 %v6702, %v6690
  %v7171 = vpack.c.b16 %v6703, %v6691
  %v7172 = vpack.c.b16 %v6704, %v6692
  %v7173 = vpack.c.b16 %v6705, %v6693
  %v7174 = vpack.c.b16 %v6706, %v6694
  %v7175 = vpack.c.b16 %v6707, %v6695
  %v7176 = vpack.c.b16 %v6708, %v6696
  %v7177 = vpack.c.b16 %v6709, %v6697
  %v7178 = vpack.c.b16 %v6710, %v6698
  %v7179 = vpack.c.b16 %v6723, %v6711
  %v7180 = vpack.c.b16 %v6724, %v6712
  %v7181 = vpack.c.b16 %v6725, %v6713
  %v7182 = vpack.c.b16 %v6726, %v6714
  %v7183 = vpack.c.b16 %v6727, %v6715
  %v7184 = vpack.c.b16 %v6728, %v6716
  %v7185 = vpack.c.b16 %v6729, %v6717
  %v7186 = vpack.c.b16 %v6730, %v6718
  %v7187 = vpack.c.b16 %v6731, %v6719
  %v7188 = vpack.c.b16 %v6732, %v6720
  %v7189 = vpack.c.b16 %v6733, %v6721
  %v7190 = vpack.c.b16 %v6734, %v6722
  %v7191 = vpack.c.b16 %v6747, %v6735
  %v7192 = vpack.c.b16 %v6748, %v6736
  %v7193 = vpack.c.b16 %v6749, %v6737
  %v7194 = vpack.c.b16 %v6750, %v6738
  %v7195 = vpack.c.b16 %v6751, %v6739
  %v7196 = vpack.c.b16 %v6752, %v6740
  %v7197 = vpack.c.b16 %v6753, %v6741
  %v7198 = vpack.c.b16 %v6754, %v6742
  %v7199 = vpack.c.b16 %v6755, %v6743
  %v7200 = vpack.c.b16 %v6756, %v6744
  %v7201 = vpack.c.b16 %v6757, %v6745
  %v7202 = vpack.c.b16 %v6758, %v6746
  %v7203 = vpack.c.b16 %v6771, %v6759
  %v7204 = vpack.c.b16 %v6772, %v6760
  %v7205 = vpack.c.b16 %v6773, %v6761
  %v7206 = vpack.c.b16 %v6774, %v6762
  %v7207 = vpack.c.b16 %v6775, %v6763
  %v7208 = vpack.c.b16 %v6776, %v6764
  %v7209 = vpack.c.b16 %v6777, %v6765
  %v7210 = vpack.c.b16 %v6778, %v6766
  %v7211 = vpack.c.b16 %v6779, %v6767
  %v7212 = vpack.c.b16 %v6780, %v6768
  %v7213 = vpack.c.b16 %v6781, %v6769
  %v7214 = vpack.c.b16 %v6782, %v6770
  %v7215 = vpack.c.b16 %v6795, %v6783
  %v7216 = vpack.c.b16 %v6796, %v6784
  %v7217 = vpack.c.b16 %v6797, %v6785
  %v7218 = vpack.c.b16 %v6798, %v6786
  %v7219 = vpack.c.b16 %v6799, %v6787
  %v7220 = vpack.c.b16 %v6800, %v6788
  %v7221 = vpack.c.b16 %v6801, %v6789
  %v7222 = vpack.c.b16 %v6802, %v6790
  %v7223 = vpack.c.b16 %v6803, %v6791
  %v7224 = vpack.c.b16 %v6804, %v6792
  %v7225 = vpack.c.b16 %v6805, %v6793
  %v7226 = vpack.c.b16 %v6806, %v6794
  %v7227 = vpack.c.b16 %v6819, %v6807
  %v7228 = vpack.c.b16 %v6820, %v6808
  %v7229 = vpack.c.b16 %v6821, %v6809
  %v7230 = vpack.c.b16 %v6822, %v6810
  %v7231 = vpack.c.b16 %v6823, %v6811
  %v7232 = vpack.c.b16 %v6824, %v6812
  %v7233 = vpack.c.b16 %v6825, %v6813
  %v7234 = vpack.c.b16 %v6826, %v6814
  %v7235 = vpack.c.b16 %v6827, %v6815
  %v7236 = vpack.c.b16 %v6828, %v6816
  %v7237 = vpack.c.b16 %v6829, %v6817
  %v7238 = vpack.c.b16 %v6830, %v6818
  %v7239 = vpack.c.b16 %v6843, %v6831
  %v7240 = vpack.c.b16 %v6844, %v6832
  %v7241 = vpack.c.b16 %v6845, %v6833
  %v7242 = vpack.c.b16 %v6846, %v6834
  %v7243 = vpack.c.b16 %v6847, %v6835
  %v7244 = vpack.c.b16 %v6848, %v6836
  %v7245 = vpack.c.b16 %v6849, %v6837
  %v7246 = vpack.c.b16 %v6850, %v6838
  %v7247 = vpack.c.b16 %v6851, %v6839
  %v7248 = vpack.c.b16 %v6852, %v6840
  %v7249 = vpack.c.b16 %v6853, %v6841
  %v7250 = vpack.c.b16 %v6854, %v6842
  %v7251 = vpack.c.b16 %v6867, %v6855
  %v7252 = vpack.c.b16 %v6868, %v6856
  %v7253 = vpack.c.b16 %v6869, %v6857
  %v7254 = vpack.c.b16 %v6870, %v6858
  %v7255 = vpack.c.b16 %v6871, %v6859
  %v7256 = vpack.c.b16 %v6872, %v6860
  %v7257 = vpack.c.b16 %v6873, %v6861
  %v7258 = vpack.c.b16 %v6874, %v6862
  %v7259 = vpack.c.b16 %v6875, %v6863
  %v7260 = vpack.c.b16 %v6876, %v6864
  %v7261 = vpack.c.b16 %v6877, %v6865
  %v7262 = vpack.c.b16 %v6878, %v6866
  %7647 = vmatpush.bf16.msra.mxu0 %v6963
  %7648 = vmatpush.bf16.msra.mxu0 %v6951
  %7649 = vmatpush.bf16.msra.mxu0 %v6939
  %7650 = vmatpush.bf16.msra.mxu0 %v6927
  %7651 = vmatpush.bf16.msra.mxu0 %v6915
  %7652 = vmatpush.bf16.msra.mxu0 %v6903
  %7653 = vmatpush.bf16.msra.mxu0 %v6891
  %7654 = vmatpush.bf16.msra.mxu0 %v6879
  %7655 = vmatmul.bf16.gmra.mxu0 %v5311
  %v7656 = vpop.f32.mrf.mxu0
  %v7657 = vadd.f32 %v5703, %v7656
  %v7658 = vpop.f32.mrf.mxu0
  %7659 = vdwg.mxu0
  %7660 = vmatpush.bf16.msra.mxu0 %v7059
  %7661 = vmatpush.bf16.msra.mxu0 %v7047
  %7662 = vmatpush.bf16.msra.mxu0 %v7035
  %7663 = vmatpush.bf16.msra.mxu0 %v7023
  %7664 = vmatpush.bf16.msra.mxu0 %v7011
  %7665 = vmatpush.bf16.msra.mxu0 %v6999
  %7666 = vmatpush.bf16.msra.mxu0 %v6987
  %7667 = vmatpush.bf16.msra.mxu0 %v6975
  %7668 = vmatmul.bf16.gmra.mxu0 %v5312
  %v7669 = vpop.f32.mrf.mxu0
  %v7670 = vadd.f32 %v7657, %v7669
  %v7671 = vpop.f32.mrf.mxu0
  %7672 = vdwg.mxu0
  %7673 = vmatpush.bf16.msra.mxu0 %v7155
  %7674 = vmatpush.bf16.msra.mxu0 %v7143
  %7675 = vmatpush.bf16.msra.mxu0 %v7131
  %7676 = vmatpush.bf16.msra.mxu0 %v7119
  %7677 = vmatpush.bf16.msra.mxu0 %v7107
  %7678 = vmatpush.bf16.msra.mxu0 %v7095
  %7679 = vmatpush.bf16.msra.mxu0 %v7083
  %7680 = vmatpush.bf16.msra.mxu0 %v7071
  %7681 = vmatmul.bf16.gmra.mxu0 %v5313
  %v7682 = vpop.f32.mrf.mxu0
  %v7683 = vadd.f32 %v7670, %v7682
  %v7684 = vpop.f32.mrf.mxu0
  %7685 = vdwg.mxu0
  %7686 = vmatpush.bf16.msra.mxu0 %v7251
  %7687 = vmatpush.bf16.msra.mxu0 %v7239
  %7688 = vmatpush.bf16.msra.mxu0 %v7227
  %7689 = vmatpush.bf16.msra.mxu0 %v7215
  %7690 = vmatpush.bf16.msra.mxu0 %v7203
  %7691 = vmatpush.bf16.msra.mxu0 %v7191
  %7692 = vmatpush.bf16.msra.mxu0 %v7179
  %7693 = vmatpush.bf16.msra.mxu0 %v7167
  %7694 = vmatmul.bf16.gmra.mxu0 %v5314
  %v7695 = vpop.f32.mrf.mxu0
  %v7696 = vadd.f32 %v7683, %v7695
  %v7697 = vpop.f32.mrf.mxu0
  %7698 = vdwg.mxu0
  %7699 = vmatpush.bf16.msra.mxu0 %v6964
  %7700 = vmatpush.bf16.msra.mxu0 %v6952
  %7701 = vmatpush.bf16.msra.mxu0 %v6940
  %7702 = vmatpush.bf16.msra.mxu0 %v6928
  %7703 = vmatpush.bf16.msra.mxu0 %v6916
  %7704 = vmatpush.bf16.msra.mxu0 %v6904
  %7705 = vmatpush.bf16.msra.mxu0 %v6892
  %7706 = vmatpush.bf16.msra.mxu0 %v6880
  %7707 = vmatmul.bf16.gmra.mxu0 %v5311
  %v7708 = vpop.f32.mrf.mxu0
  %v7709 = vadd.f32 %v5704, %v7708
  %v7710 = vpop.f32.mrf.mxu0
  %7711 = vdwg.mxu0
  %7712 = vmatpush.bf16.msra.mxu0 %v7060
  %7713 = vmatpush.bf16.msra.mxu0 %v7048
  %7714 = vmatpush.bf16.msra.mxu0 %v7036
  %7715 = vmatpush.bf16.msra.mxu0 %v7024
  %7716 = vmatpush.bf16.msra.mxu0 %v7012
  %7717 = vmatpush.bf16.msra.mxu0 %v7000
  %7718 = vmatpush.bf16.msra.mxu0 %v6988
  %7719 = vmatpush.bf16.msra.mxu0 %v6976
  %7720 = vmatmul.bf16.gmra.mxu0 %v5312
  %v7721 = vpop.f32.mrf.mxu0
  %v7722 = vadd.f32 %v7709, %v7721
  %v7723 = vpop.f32.mrf.mxu0
  %7724 = vdwg.mxu0
  %7725 = vmatpush.bf16.msra.mxu0 %v7156
  %7726 = vmatpush.bf16.msra.mxu0 %v7144
  %7727 = vmatpush.bf16.msra.mxu0 %v7132
  %7728 = vmatpush.bf16.msra.mxu0 %v7120
  %7729 = vmatpush.bf16.msra.mxu0 %v7108
  %7730 = vmatpush.bf16.msra.mxu0 %v7096
  %7731 = vmatpush.bf16.msra.mxu0 %v7084
  %7732 = vmatpush.bf16.msra.mxu0 %v7072
  %7733 = vmatmul.bf16.gmra.mxu0 %v5313
  %v7734 = vpop.f32.mrf.mxu0
  %v7735 = vadd.f32 %v7722, %v7734
  %v7736 = vpop.f32.mrf.mxu0
  %7737 = vdwg.mxu0
  %7738 = vmatpush.bf16.msra.mxu0 %v7252
  %7739 = vmatpush.bf16.msra.mxu0 %v7240
  %7740 = vmatpush.bf16.msra.mxu0 %v7228
  %7741 = vmatpush.bf16.msra.mxu0 %v7216
  %7742 = vmatpush.bf16.msra.mxu0 %v7204
  %7743 = vmatpush.bf16.msra.mxu0 %v7192
  %7744 = vmatpush.bf16.msra.mxu0 %v7180
  %7745 = vmatpush.bf16.msra.mxu0 %v7168
  %7746 = vmatmul.bf16.gmra.mxu0 %v5314
  %v7747 = vpop.f32.mrf.mxu0
  %v7748 = vadd.f32 %v7735, %v7747
  %v7749 = vpop.f32.mrf.mxu0
  %7750 = vdwg.mxu0
  %7751 = vmatpush.bf16.msra.mxu0 %v6965
  %7752 = vmatpush.bf16.msra.mxu0 %v6953
  %7753 = vmatpush.bf16.msra.mxu0 %v6941
  %7754 = vmatpush.bf16.msra.mxu0 %v6929
  %7755 = vmatpush.bf16.msra.mxu0 %v6917
  %7756 = vmatpush.bf16.msra.mxu0 %v6905
  %7757 = vmatpush.bf16.msra.mxu0 %v6893
  %7758 = vmatpush.bf16.msra.mxu0 %v6881
  %7759 = vmatmul.bf16.gmra.mxu0 %v5311
  %v7760 = vpop.f32.mrf.mxu0
  %v7761 = vadd.f32 %v5705, %v7760
  %v7762 = vpop.f32.mrf.mxu0
  %7763 = vdwg.mxu0
  %7764 = vmatpush.bf16.msra.mxu0 %v7061
  %7765 = vmatpush.bf16.msra.mxu0 %v7049
  %7766 = vmatpush.bf16.msra.mxu0 %v7037
  %7767 = vmatpush.bf16.msra.mxu0 %v7025
  %7768 = vmatpush.bf16.msra.mxu0 %v7013
  %7769 = vmatpush.bf16.msra.mxu0 %v7001
  %7770 = vmatpush.bf16.msra.mxu0 %v6989
  %7771 = vmatpush.bf16.msra.mxu0 %v6977
  %7772 = vmatmul.bf16.gmra.mxu0 %v5312
  %v7773 = vpop.f32.mrf.mxu0
  %v7774 = vadd.f32 %v7761, %v7773
  %v7775 = vpop.f32.mrf.mxu0
  %7776 = vdwg.mxu0
  %7777 = vmatpush.bf16.msra.mxu0 %v7157
  %7778 = vmatpush.bf16.msra.mxu0 %v7145
  %7779 = vmatpush.bf16.msra.mxu0 %v7133
  %7780 = vmatpush.bf16.msra.mxu0 %v7121
  %7781 = vmatpush.bf16.msra.mxu0 %v7109
  %7782 = vmatpush.bf16.msra.mxu0 %v7097
  %7783 = vmatpush.bf16.msra.mxu0 %v7085
  %7784 = vmatpush.bf16.msra.mxu0 %v7073
  %7785 = vmatmul.bf16.gmra.mxu0 %v5313
  %v7786 = vpop.f32.mrf.mxu0
  %v7787 = vadd.f32 %v7774, %v7786
  %v7788 = vpop.f32.mrf.mxu0
  %7789 = vdwg.mxu0
  %7790 = vmatpush.bf16.msra.mxu0 %v7253
  %7791 = vmatpush.bf16.msra.mxu0 %v7241
  %7792 = vmatpush.bf16.msra.mxu0 %v7229
  %7793 = vmatpush.bf16.msra.mxu0 %v7217
  %7794 = vmatpush.bf16.msra.mxu0 %v7205
  %7795 = vmatpush.bf16.msra.mxu0 %v7193
  %7796 = vmatpush.bf16.msra.mxu0 %v7181
  %7797 = vmatpush.bf16.msra.mxu0 %v7169
  %7798 = vmatmul.bf16.gmra.mxu0 %v5314
  %v7799 = vpop.f32.mrf.mxu0
  %v7800 = vadd.f32 %v7787, %v7799
  %v7801 = vpop.f32.mrf.mxu0
  %7802 = vdwg.mxu0
  %7803 = vmatpush.bf16.msra.mxu0 %v6966
  %7804 = vmatpush.bf16.msra.mxu0 %v6954
  %7805 = vmatpush.bf16.msra.mxu0 %v6942
  %7806 = vmatpush.bf16.msra.mxu0 %v6930
  %7807 = vmatpush.bf16.msra.mxu0 %v6918
  %7808 = vmatpush.bf16.msra.mxu0 %v6906
  %7809 = vmatpush.bf16.msra.mxu0 %v6894
  %7810 = vmatpush.bf16.msra.mxu0 %v6882
  %7811 = vmatmul.bf16.gmra.mxu0 %v5311
  %v7812 = vpop.f32.mrf.mxu0
  %v7813 = vadd.f32 %v5706, %v7812
  %v7814 = vpop.f32.mrf.mxu0
  %7815 = vdwg.mxu0
  %7816 = vmatpush.bf16.msra.mxu0 %v7062
  %7817 = vmatpush.bf16.msra.mxu0 %v7050
  %7818 = vmatpush.bf16.msra.mxu0 %v7038
  %7819 = vmatpush.bf16.msra.mxu0 %v7026
  %7820 = vmatpush.bf16.msra.mxu0 %v7014
  %7821 = vmatpush.bf16.msra.mxu0 %v7002
  %7822 = vmatpush.bf16.msra.mxu0 %v6990
  %7823 = vmatpush.bf16.msra.mxu0 %v6978
  %7824 = vmatmul.bf16.gmra.mxu0 %v5312
  %v7825 = vpop.f32.mrf.mxu0
  %v7826 = vadd.f32 %v7813, %v7825
  %v7827 = vpop.f32.mrf.mxu0
  %7828 = vdwg.mxu0
  %7829 = vmatpush.bf16.msra.mxu0 %v7158
  %7830 = vmatpush.bf16.msra.mxu0 %v7146
  %7831 = vmatpush.bf16.msra.mxu0 %v7134
  %7832 = vmatpush.bf16.msra.mxu0 %v7122
  %7833 = vmatpush.bf16.msra.mxu0 %v7110
  %7834 = vmatpush.bf16.msra.mxu0 %v7098
  %7835 = vmatpush.bf16.msra.mxu0 %v7086
  %7836 = vmatpush.bf16.msra.mxu0 %v7074
  %7837 = vmatmul.bf16.gmra.mxu0 %v5313
  %v7838 = vpop.f32.mrf.mxu0
  %v7839 = vadd.f32 %v7826, %v7838
  %v7840 = vpop.f32.mrf.mxu0
  %7841 = vdwg.mxu0
  %7842 = vmatpush.bf16.msra.mxu0 %v7254
  %7843 = vmatpush.bf16.msra.mxu0 %v7242
  %7844 = vmatpush.bf16.msra.mxu0 %v7230
  %7845 = vmatpush.bf16.msra.mxu0 %v7218
  %7846 = vmatpush.bf16.msra.mxu0 %v7206
  %7847 = vmatpush.bf16.msra.mxu0 %v7194
  %7848 = vmatpush.bf16.msra.mxu0 %v7182
  %7849 = vmatpush.bf16.msra.mxu0 %v7170
  %7850 = vmatmul.bf16.gmra.mxu0 %v5314
  %v7851 = vpop.f32.mrf.mxu0
  %v7852 = vadd.f32 %v7839, %v7851
  %v7853 = vpop.f32.mrf.mxu0
  %7854 = vdwg.mxu0
  %7855 = vmatpush.bf16.msra.mxu0 %v6967
  %7856 = vmatpush.bf16.msra.mxu0 %v6955
  %7857 = vmatpush.bf16.msra.mxu0 %v6943
  %7858 = vmatpush.bf16.msra.mxu0 %v6931
  %7859 = vmatpush.bf16.msra.mxu0 %v6919
  %7860 = vmatpush.bf16.msra.mxu0 %v6907
  %7861 = vmatpush.bf16.msra.mxu0 %v6895
  %7862 = vmatpush.bf16.msra.mxu0 %v6883
  %7863 = vmatmul.bf16.gmra.mxu0 %v5311
  %v7864 = vpop.f32.mrf.mxu0
  %v7865 = vadd.f32 %v5707, %v7864
  %v7866 = vpop.f32.mrf.mxu0
  %7867 = vdwg.mxu0
  %7868 = vmatpush.bf16.msra.mxu0 %v7063
  %7869 = vmatpush.bf16.msra.mxu0 %v7051
  %7870 = vmatpush.bf16.msra.mxu0 %v7039
  %7871 = vmatpush.bf16.msra.mxu0 %v7027
  %7872 = vmatpush.bf16.msra.mxu0 %v7015
  %7873 = vmatpush.bf16.msra.mxu0 %v7003
  %7874 = vmatpush.bf16.msra.mxu0 %v6991
  %7875 = vmatpush.bf16.msra.mxu0 %v6979
  %7876 = vmatmul.bf16.gmra.mxu0 %v5312
  %v7877 = vpop.f32.mrf.mxu0
  %v7878 = vadd.f32 %v7865, %v7877
  %v7879 = vpop.f32.mrf.mxu0
  %7880 = vdwg.mxu0
  %7881 = vmatpush.bf16.msra.mxu0 %v7159
  %7882 = vmatpush.bf16.msra.mxu0 %v7147
  %7883 = vmatpush.bf16.msra.mxu0 %v7135
  %7884 = vmatpush.bf16.msra.mxu0 %v7123
  %7885 = vmatpush.bf16.msra.mxu0 %v7111
  %7886 = vmatpush.bf16.msra.mxu0 %v7099
  %7887 = vmatpush.bf16.msra.mxu0 %v7087
  %7888 = vmatpush.bf16.msra.mxu0 %v7075
  %7889 = vmatmul.bf16.gmra.mxu0 %v5313
  %v7890 = vpop.f32.mrf.mxu0
  %v7891 = vadd.f32 %v7878, %v7890
  %v7892 = vpop.f32.mrf.mxu0
  %7893 = vdwg.mxu0
  %7894 = vmatpush.bf16.msra.mxu0 %v7255
  %7895 = vmatpush.bf16.msra.mxu0 %v7243
  %7896 = vmatpush.bf16.msra.mxu0 %v7231
  %7897 = vmatpush.bf16.msra.mxu0 %v7219
  %7898 = vmatpush.bf16.msra.mxu0 %v7207
  %7899 = vmatpush.bf16.msra.mxu0 %v7195
  %7900 = vmatpush.bf16.msra.mxu0 %v7183
  %7901 = vmatpush.bf16.msra.mxu0 %v7171
  %7902 = vmatmul.bf16.gmra.mxu0 %v5314
  %v7903 = vpop.f32.mrf.mxu0
  %v7904 = vadd.f32 %v7891, %v7903
  %v7905 = vpop.f32.mrf.mxu0
  %7906 = vdwg.mxu0
  %7907 = vmatpush.bf16.msra.mxu0 %v6968
  %7908 = vmatpush.bf16.msra.mxu0 %v6956
  %7909 = vmatpush.bf16.msra.mxu0 %v6944
  %7910 = vmatpush.bf16.msra.mxu0 %v6932
  %7911 = vmatpush.bf16.msra.mxu0 %v6920
  %7912 = vmatpush.bf16.msra.mxu0 %v6908
  %7913 = vmatpush.bf16.msra.mxu0 %v6896
  %7914 = vmatpush.bf16.msra.mxu0 %v6884
  %7915 = vmatmul.bf16.gmra.mxu0 %v5311
  %v7916 = vpop.f32.mrf.mxu0
  %v7917 = vadd.f32 %v5708, %v7916
  %v7918 = vpop.f32.mrf.mxu0
  %7919 = vdwg.mxu0
  %7920 = vmatpush.bf16.msra.mxu0 %v7064
  %7921 = vmatpush.bf16.msra.mxu0 %v7052
  %7922 = vmatpush.bf16.msra.mxu0 %v7040
  %7923 = vmatpush.bf16.msra.mxu0 %v7028
  %7924 = vmatpush.bf16.msra.mxu0 %v7016
  %7925 = vmatpush.bf16.msra.mxu0 %v7004
  %7926 = vmatpush.bf16.msra.mxu0 %v6992
  %7927 = vmatpush.bf16.msra.mxu0 %v6980
  %7928 = vmatmul.bf16.gmra.mxu0 %v5312
  %v7929 = vpop.f32.mrf.mxu0
  %v7930 = vadd.f32 %v7917, %v7929
  %v7931 = vpop.f32.mrf.mxu0
  %7932 = vdwg.mxu0
  %7933 = vmatpush.bf16.msra.mxu0 %v7160
  %7934 = vmatpush.bf16.msra.mxu0 %v7148
  %7935 = vmatpush.bf16.msra.mxu0 %v7136
  %7936 = vmatpush.bf16.msra.mxu0 %v7124
  %7937 = vmatpush.bf16.msra.mxu0 %v7112
  %7938 = vmatpush.bf16.msra.mxu0 %v7100
  %7939 = vmatpush.bf16.msra.mxu0 %v7088
  %7940 = vmatpush.bf16.msra.mxu0 %v7076
  %7941 = vmatmul.bf16.gmra.mxu0 %v5313
  %v7942 = vpop.f32.mrf.mxu0
  %v7943 = vadd.f32 %v7930, %v7942
  %v7944 = vpop.f32.mrf.mxu0
  %7945 = vdwg.mxu0
  %7946 = vmatpush.bf16.msra.mxu0 %v7256
  %7947 = vmatpush.bf16.msra.mxu0 %v7244
  %7948 = vmatpush.bf16.msra.mxu0 %v7232
  %7949 = vmatpush.bf16.msra.mxu0 %v7220
  %7950 = vmatpush.bf16.msra.mxu0 %v7208
  %7951 = vmatpush.bf16.msra.mxu0 %v7196
  %7952 = vmatpush.bf16.msra.mxu0 %v7184
  %7953 = vmatpush.bf16.msra.mxu0 %v7172
  %7954 = vmatmul.bf16.gmra.mxu0 %v5314
  %v7955 = vpop.f32.mrf.mxu0
  %v7956 = vadd.f32 %v7943, %v7955
  %v7957 = vpop.f32.mrf.mxu0
  %7958 = vdwg.mxu0
  %7959 = vmatpush.bf16.msra.mxu0 %v6969
  %7960 = vmatpush.bf16.msra.mxu0 %v6957
  %7961 = vmatpush.bf16.msra.mxu0 %v6945
  %7962 = vmatpush.bf16.msra.mxu0 %v6933
  %7963 = vmatpush.bf16.msra.mxu0 %v6921
  %7964 = vmatpush.bf16.msra.mxu0 %v6909
  %7965 = vmatpush.bf16.msra.mxu0 %v6897
  %7966 = vmatpush.bf16.msra.mxu0 %v6885
  %7967 = vmatmul.bf16.gmra.mxu0 %v5311
  %v7968 = vpop.f32.mrf.mxu0
  %v7969 = vadd.f32 %v5709, %v7968
  %v7970 = vpop.f32.mrf.mxu0
  %7971 = vdwg.mxu0
  %7972 = vmatpush.bf16.msra.mxu0 %v7065
  %7973 = vmatpush.bf16.msra.mxu0 %v7053
  %7974 = vmatpush.bf16.msra.mxu0 %v7041
  %7975 = vmatpush.bf16.msra.mxu0 %v7029
  %7976 = vmatpush.bf16.msra.mxu0 %v7017
  %7977 = vmatpush.bf16.msra.mxu0 %v7005
  %7978 = vmatpush.bf16.msra.mxu0 %v6993
  %7979 = vmatpush.bf16.msra.mxu0 %v6981
  %7980 = vmatmul.bf16.gmra.mxu0 %v5312
  %v7981 = vpop.f32.mrf.mxu0
  %v7982 = vadd.f32 %v7969, %v7981
  %v7983 = vpop.f32.mrf.mxu0
  %7984 = vdwg.mxu0
  %7985 = vmatpush.bf16.msra.mxu0 %v7161
  %7986 = vmatpush.bf16.msra.mxu0 %v7149
  %7987 = vmatpush.bf16.msra.mxu0 %v7137
  %7988 = vmatpush.bf16.msra.mxu0 %v7125
  %7989 = vmatpush.bf16.msra.mxu0 %v7113
  %7990 = vmatpush.bf16.msra.mxu0 %v7101
  %7991 = vmatpush.bf16.msra.mxu0 %v7089
  %7992 = vmatpush.bf16.msra.mxu0 %v7077
  %7993 = vmatmul.bf16.gmra.mxu0 %v5313
  %v7994 = vpop.f32.mrf.mxu0
  %v7995 = vadd.f32 %v7982, %v7994
  %v7996 = vpop.f32.mrf.mxu0
  %7997 = vdwg.mxu0
  %7998 = vmatpush.bf16.msra.mxu0 %v7257
  %7999 = vmatpush.bf16.msra.mxu0 %v7245
  %8000 = vmatpush.bf16.msra.mxu0 %v7233
  %8001 = vmatpush.bf16.msra.mxu0 %v7221
  %8002 = vmatpush.bf16.msra.mxu0 %v7209
  %8003 = vmatpush.bf16.msra.mxu0 %v7197
  %8004 = vmatpush.bf16.msra.mxu0 %v7185
  %8005 = vmatpush.bf16.msra.mxu0 %v7173
  %8006 = vmatmul.bf16.gmra.mxu0 %v5314
  %v8007 = vpop.f32.mrf.mxu0
  %v8008 = vadd.f32 %v7995, %v8007
  %v8009 = vpop.f32.mrf.mxu0
  %8010 = vdwg.mxu0
  %8011 = vmatpush.bf16.msra.mxu0 %v6970
  %8012 = vmatpush.bf16.msra.mxu0 %v6958
  %8013 = vmatpush.bf16.msra.mxu0 %v6946
  %8014 = vmatpush.bf16.msra.mxu0 %v6934
  %8015 = vmatpush.bf16.msra.mxu0 %v6922
  %8016 = vmatpush.bf16.msra.mxu0 %v6910
  %8017 = vmatpush.bf16.msra.mxu0 %v6898
  %8018 = vmatpush.bf16.msra.mxu0 %v6886
  %8019 = vmatmul.bf16.gmra.mxu0 %v5311
  %v8020 = vpop.f32.mrf.mxu0
  %v8021 = vadd.f32 %v5710, %v8020
  %v8022 = vpop.f32.mrf.mxu0
  %8023 = vdwg.mxu0
  %8024 = vmatpush.bf16.msra.mxu0 %v7066
  %8025 = vmatpush.bf16.msra.mxu0 %v7054
  %8026 = vmatpush.bf16.msra.mxu0 %v7042
  %8027 = vmatpush.bf16.msra.mxu0 %v7030
  %8028 = vmatpush.bf16.msra.mxu0 %v7018
  %8029 = vmatpush.bf16.msra.mxu0 %v7006
  %8030 = vmatpush.bf16.msra.mxu0 %v6994
  %8031 = vmatpush.bf16.msra.mxu0 %v6982
  %8032 = vmatmul.bf16.gmra.mxu0 %v5312
  %v8033 = vpop.f32.mrf.mxu0
  %v8034 = vadd.f32 %v8021, %v8033
  %v8035 = vpop.f32.mrf.mxu0
  %8036 = vdwg.mxu0
  %8037 = vmatpush.bf16.msra.mxu0 %v7162
  %8038 = vmatpush.bf16.msra.mxu0 %v7150
  %8039 = vmatpush.bf16.msra.mxu0 %v7138
  %8040 = vmatpush.bf16.msra.mxu0 %v7126
  %8041 = vmatpush.bf16.msra.mxu0 %v7114
  %8042 = vmatpush.bf16.msra.mxu0 %v7102
  %8043 = vmatpush.bf16.msra.mxu0 %v7090
  %8044 = vmatpush.bf16.msra.mxu0 %v7078
  %8045 = vmatmul.bf16.gmra.mxu0 %v5313
  %v8046 = vpop.f32.mrf.mxu0
  %v8047 = vadd.f32 %v8034, %v8046
  %v8048 = vpop.f32.mrf.mxu0
  %8049 = vdwg.mxu0
  %8050 = vmatpush.bf16.msra.mxu0 %v7258
  %8051 = vmatpush.bf16.msra.mxu0 %v7246
  %8052 = vmatpush.bf16.msra.mxu0 %v7234
  %8053 = vmatpush.bf16.msra.mxu0 %v7222
  %8054 = vmatpush.bf16.msra.mxu0 %v7210
  %8055 = vmatpush.bf16.msra.mxu0 %v7198
  %8056 = vmatpush.bf16.msra.mxu0 %v7186
  %8057 = vmatpush.bf16.msra.mxu0 %v7174
  %8058 = vmatmul.bf16.gmra.mxu0 %v5314
  %v8059 = vpop.f32.mrf.mxu0
  %v8060 = vadd.f32 %v8047, %v8059
  %v8061 = vpop.f32.mrf.mxu0
  %8062 = vdwg.mxu0
  %8063 = vmatpush.bf16.msra.mxu0 %v6971
  %8064 = vmatpush.bf16.msra.mxu0 %v6959
  %8065 = vmatpush.bf16.msra.mxu0 %v6947
  %8066 = vmatpush.bf16.msra.mxu0 %v6935
  %8067 = vmatpush.bf16.msra.mxu0 %v6923
  %8068 = vmatpush.bf16.msra.mxu0 %v6911
  %8069 = vmatpush.bf16.msra.mxu0 %v6899
  %8070 = vmatpush.bf16.msra.mxu0 %v6887
  %8071 = vmatmul.bf16.gmra.mxu0 %v5311
  %v8072 = vpop.f32.mrf.mxu0
  %v8073 = vadd.f32 %v5711, %v8072
  %v8074 = vpop.f32.mrf.mxu0
  %8075 = vdwg.mxu0
  %8076 = vmatpush.bf16.msra.mxu0 %v7067
  %8077 = vmatpush.bf16.msra.mxu0 %v7055
  %8078 = vmatpush.bf16.msra.mxu0 %v7043
  %8079 = vmatpush.bf16.msra.mxu0 %v7031
  %8080 = vmatpush.bf16.msra.mxu0 %v7019
  %8081 = vmatpush.bf16.msra.mxu0 %v7007
  %8082 = vmatpush.bf16.msra.mxu0 %v6995
  %8083 = vmatpush.bf16.msra.mxu0 %v6983
  %8084 = vmatmul.bf16.gmra.mxu0 %v5312
  %v8085 = vpop.f32.mrf.mxu0
  %v8086 = vadd.f32 %v8073, %v8085
  %v8087 = vpop.f32.mrf.mxu0
  %8088 = vdwg.mxu0
  %8089 = vmatpush.bf16.msra.mxu0 %v7163
  %8090 = vmatpush.bf16.msra.mxu0 %v7151
  %8091 = vmatpush.bf16.msra.mxu0 %v7139
  %8092 = vmatpush.bf16.msra.mxu0 %v7127
  %8093 = vmatpush.bf16.msra.mxu0 %v7115
  %8094 = vmatpush.bf16.msra.mxu0 %v7103
  %8095 = vmatpush.bf16.msra.mxu0 %v7091
  %8096 = vmatpush.bf16.msra.mxu0 %v7079
  %8097 = vmatmul.bf16.gmra.mxu0 %v5313
  %v8098 = vpop.f32.mrf.mxu0
  %v8099 = vadd.f32 %v8086, %v8098
  %v8100 = vpop.f32.mrf.mxu0
  %8101 = vdwg.mxu0
  %8102 = vmatpush.bf16.msra.mxu0 %v7259
  %8103 = vmatpush.bf16.msra.mxu0 %v7247
  %8104 = vmatpush.bf16.msra.mxu0 %v7235
  %8105 = vmatpush.bf16.msra.mxu0 %v7223
  %8106 = vmatpush.bf16.msra.mxu0 %v7211
  %8107 = vmatpush.bf16.msra.mxu0 %v7199
  %8108 = vmatpush.bf16.msra.mxu0 %v7187
  %8109 = vmatpush.bf16.msra.mxu0 %v7175
  %8110 = vmatmul.bf16.gmra.mxu0 %v5314
  %v8111 = vpop.f32.mrf.mxu0
  %v8112 = vadd.f32 %v8099, %v8111
  %v8113 = vpop.f32.mrf.mxu0
  %8114 = vdwg.mxu0
  %8115 = vmatpush.bf16.msra.mxu0 %v6972
  %8116 = vmatpush.bf16.msra.mxu0 %v6960
  %8117 = vmatpush.bf16.msra.mxu0 %v6948
  %8118 = vmatpush.bf16.msra.mxu0 %v6936
  %8119 = vmatpush.bf16.msra.mxu0 %v6924
  %8120 = vmatpush.bf16.msra.mxu0 %v6912
  %8121 = vmatpush.bf16.msra.mxu0 %v6900
  %8122 = vmatpush.bf16.msra.mxu0 %v6888
  %8123 = vmatmul.bf16.gmra.mxu0 %v5311
  %v8124 = vpop.f32.mrf.mxu0
  %v8125 = vadd.f32 %v5712, %v8124
  %v8126 = vpop.f32.mrf.mxu0
  %8127 = vdwg.mxu0
  %8128 = vmatpush.bf16.msra.mxu0 %v7068
  %8129 = vmatpush.bf16.msra.mxu0 %v7056
  %8130 = vmatpush.bf16.msra.mxu0 %v7044
  %8131 = vmatpush.bf16.msra.mxu0 %v7032
  %8132 = vmatpush.bf16.msra.mxu0 %v7020
  %8133 = vmatpush.bf16.msra.mxu0 %v7008
  %8134 = vmatpush.bf16.msra.mxu0 %v6996
  %8135 = vmatpush.bf16.msra.mxu0 %v6984
  %8136 = vmatmul.bf16.gmra.mxu0 %v5312
  %v8137 = vpop.f32.mrf.mxu0
  %v8138 = vadd.f32 %v8125, %v8137
  %v8139 = vpop.f32.mrf.mxu0
  %8140 = vdwg.mxu0
  %8141 = vmatpush.bf16.msra.mxu0 %v7164
  %8142 = vmatpush.bf16.msra.mxu0 %v7152
  %8143 = vmatpush.bf16.msra.mxu0 %v7140
  %8144 = vmatpush.bf16.msra.mxu0 %v7128
  %8145 = vmatpush.bf16.msra.mxu0 %v7116
  %8146 = vmatpush.bf16.msra.mxu0 %v7104
  %8147 = vmatpush.bf16.msra.mxu0 %v7092
  %8148 = vmatpush.bf16.msra.mxu0 %v7080
  %8149 = vmatmul.bf16.gmra.mxu0 %v5313
  %v8150 = vpop.f32.mrf.mxu0
  %v8151 = vadd.f32 %v8138, %v8150
  %v8152 = vpop.f32.mrf.mxu0
  %8153 = vdwg.mxu0
  %8154 = vmatpush.bf16.msra.mxu0 %v7260
  %8155 = vmatpush.bf16.msra.mxu0 %v7248
  %8156 = vmatpush.bf16.msra.mxu0 %v7236
  %8157 = vmatpush.bf16.msra.mxu0 %v7224
  %8158 = vmatpush.bf16.msra.mxu0 %v7212
  %8159 = vmatpush.bf16.msra.mxu0 %v7200
  %8160 = vmatpush.bf16.msra.mxu0 %v7188
  %8161 = vmatpush.bf16.msra.mxu0 %v7176
  %8162 = vmatmul.bf16.gmra.mxu0 %v5314
  %v8163 = vpop.f32.mrf.mxu0
  %v8164 = vadd.f32 %v8151, %v8163
  %v8165 = vpop.f32.mrf.mxu0
  %8166 = vdwg.mxu0
  %8167 = vmatpush.bf16.msra.mxu0 %v6973
  %8168 = vmatpush.bf16.msra.mxu0 %v6961
  %8169 = vmatpush.bf16.msra.mxu0 %v6949
  %8170 = vmatpush.bf16.msra.mxu0 %v6937
  %8171 = vmatpush.bf16.msra.mxu0 %v6925
  %8172 = vmatpush.bf16.msra.mxu0 %v6913
  %8173 = vmatpush.bf16.msra.mxu0 %v6901
  %8174 = vmatpush.bf16.msra.mxu0 %v6889
  %8175 = vmatmul.bf16.gmra.mxu0 %v5311
  %v8176 = vpop.f32.mrf.mxu0
  %v8177 = vadd.f32 %v5713, %v8176
  %v8178 = vpop.f32.mrf.mxu0
  %8179 = vdwg.mxu0
  %8180 = vmatpush.bf16.msra.mxu0 %v7069
  %8181 = vmatpush.bf16.msra.mxu0 %v7057
  %8182 = vmatpush.bf16.msra.mxu0 %v7045
  %8183 = vmatpush.bf16.msra.mxu0 %v7033
  %8184 = vmatpush.bf16.msra.mxu0 %v7021
  %8185 = vmatpush.bf16.msra.mxu0 %v7009
  %8186 = vmatpush.bf16.msra.mxu0 %v6997
  %8187 = vmatpush.bf16.msra.mxu0 %v6985
  %8188 = vmatmul.bf16.gmra.mxu0 %v5312
  %v8189 = vpop.f32.mrf.mxu0
  %v8190 = vadd.f32 %v8177, %v8189
  %v8191 = vpop.f32.mrf.mxu0
  %8192 = vdwg.mxu0
  %8193 = vmatpush.bf16.msra.mxu0 %v7165
  %8194 = vmatpush.bf16.msra.mxu0 %v7153
  %8195 = vmatpush.bf16.msra.mxu0 %v7141
  %8196 = vmatpush.bf16.msra.mxu0 %v7129
  %8197 = vmatpush.bf16.msra.mxu0 %v7117
  %8198 = vmatpush.bf16.msra.mxu0 %v7105
  %8199 = vmatpush.bf16.msra.mxu0 %v7093
  %8200 = vmatpush.bf16.msra.mxu0 %v7081
  %8201 = vmatmul.bf16.gmra.mxu0 %v5313
  %v8202 = vpop.f32.mrf.mxu0
  %v8203 = vadd.f32 %v8190, %v8202
  %v8204 = vpop.f32.mrf.mxu0
  %8205 = vdwg.mxu0
  %8206 = vmatpush.bf16.msra.mxu0 %v7261
  %8207 = vmatpush.bf16.msra.mxu0 %v7249
  %8208 = vmatpush.bf16.msra.mxu0 %v7237
  %8209 = vmatpush.bf16.msra.mxu0 %v7225
  %8210 = vmatpush.bf16.msra.mxu0 %v7213
  %8211 = vmatpush.bf16.msra.mxu0 %v7201
  %8212 = vmatpush.bf16.msra.mxu0 %v7189
  %8213 = vmatpush.bf16.msra.mxu0 %v7177
  %8214 = vmatmul.bf16.gmra.mxu0 %v5314
  %v8215 = vpop.f32.mrf.mxu0
  %v8216 = vadd.f32 %v8203, %v8215
  %v8217 = vpop.f32.mrf.mxu0
  %8218 = vdwg.mxu0
  %8219 = vmatpush.bf16.msra.mxu0 %v6974
  %8220 = vmatpush.bf16.msra.mxu0 %v6962
  %8221 = vmatpush.bf16.msra.mxu0 %v6950
  %8222 = vmatpush.bf16.msra.mxu0 %v6938
  %8223 = vmatpush.bf16.msra.mxu0 %v6926
  %8224 = vmatpush.bf16.msra.mxu0 %v6914
  %8225 = vmatpush.bf16.msra.mxu0 %v6902
  %8226 = vmatpush.bf16.msra.mxu0 %v6890
  %8227 = vmatmul.bf16.gmra.mxu0 %v5311
  %v8228 = vpop.f32.mrf.mxu0
  %v8229 = vadd.f32 %v5714, %v8228
  %v8230 = vpop.f32.mrf.mxu0
  %8231 = vdwg.mxu0
  %8232 = vmatpush.bf16.msra.mxu0 %v7070
  %8233 = vmatpush.bf16.msra.mxu0 %v7058
  %8234 = vmatpush.bf16.msra.mxu0 %v7046
  %8235 = vmatpush.bf16.msra.mxu0 %v7034
  %8236 = vmatpush.bf16.msra.mxu0 %v7022
  %8237 = vmatpush.bf16.msra.mxu0 %v7010
  %8238 = vmatpush.bf16.msra.mxu0 %v6998
  %8239 = vmatpush.bf16.msra.mxu0 %v6986
  %8240 = vmatmul.bf16.gmra.mxu0 %v5312
  %v8241 = vpop.f32.mrf.mxu0
  %v8242 = vadd.f32 %v8229, %v8241
  %v8243 = vpop.f32.mrf.mxu0
  %8244 = vdwg.mxu0
  %8245 = vmatpush.bf16.msra.mxu0 %v7166
  %8246 = vmatpush.bf16.msra.mxu0 %v7154
  %8247 = vmatpush.bf16.msra.mxu0 %v7142
  %8248 = vmatpush.bf16.msra.mxu0 %v7130
  %8249 = vmatpush.bf16.msra.mxu0 %v7118
  %8250 = vmatpush.bf16.msra.mxu0 %v7106
  %8251 = vmatpush.bf16.msra.mxu0 %v7094
  %8252 = vmatpush.bf16.msra.mxu0 %v7082
  %8253 = vmatmul.bf16.gmra.mxu0 %v5313
  %v8254 = vpop.f32.mrf.mxu0
  %v8255 = vadd.f32 %v8242, %v8254
  %v8256 = vpop.f32.mrf.mxu0
  %8257 = vdwg.mxu0
  %8258 = vmatpush.bf16.msra.mxu0 %v7262
  %8259 = vmatpush.bf16.msra.mxu0 %v7250
  %8260 = vmatpush.bf16.msra.mxu0 %v7238
  %8261 = vmatpush.bf16.msra.mxu0 %v7226
  %8262 = vmatpush.bf16.msra.mxu0 %v7214
  %8263 = vmatpush.bf16.msra.mxu0 %v7202
  %8264 = vmatpush.bf16.msra.mxu0 %v7190
  %8265 = vmatpush.bf16.msra.mxu0 %v7178
  %8266 = vmatmul.bf16.gmra.mxu0 %v5314
  %v8267 = vpop.f32.mrf.mxu0
  %v8268 = vadd.f32 %v8255, %v8267
  %v8269 = vpop.f32.mrf.mxu0
  %8270 = vdwg.mxu0
  %v8271 = vxor.u32 %v7696, 2147483648
  %v8272 = vxor.u32 %v7748, 2147483648
  %v8273 = vxor.u32 %v7800, 2147483648
  %v8274 = vxor.u32 %v7852, 2147483648
  %v8275 = vmul.f32 %v8271, 1.442695
  %v8276 = vpow.pop %v8275
  %v8277 = vmul.f32 %v8272, 1.442695
  %v8278 = vpow.pop %v8277
  %v8279 = vmul.f32 %v8273, 1.442695
  %v8280 = vpow.pop %v8279
  %v8281 = vmul.f32 %v8274, 1.442695
  %v8282 = vpow.pop %v8281
  %v8283 = vadd.f32 %v8276, 1.0
  %v8284 = vadd.f32 %v8278, 1.0
  %v8285 = vadd.f32 %v8280, 1.0
  %v8286 = vadd.f32 %v8282, 1.0
  %v8287 = vrcp.pop %v8283
  %v8288 = vmul.f32 %v8283, %v8287
  %v8289 = vsub.f32 1.0, %v8288
  %v8290 = vmul.f32 %v8287, %v8289
  %v8291 = vadd.f32 %v8287, %v8290
  %vm8292 = vweird.f32 %v8283
  %vm8293 = vweird.f32 %v8287
  %vm8294 = vmor %vm8292, %vm8293
  %v8295 = vsel %vm8294, %v8287, %v8291
  %v8296 = vand.u32 2147483647, %v8283
  %vm8297 = vcmp.eq.f32.partialorder %v8296, 8.507059e+37
  %v8298 = vand.u32 %v8283, 2147483648
  %v8299 = vor.u32 1.1754944e-38, %v8298
  %v8300 = vsel %vm8297, %v8299, %v8295
  %v8301 = vmul.f32 1.0, %v8300
  %v8302 = vrcp.pop %v8284
  %v8303 = vmul.f32 %v8284, %v8302
  %v8304 = vsub.f32 1.0, %v8303
  %v8305 = vmul.f32 %v8302, %v8304
  %v8306 = vadd.f32 %v8302, %v8305
  %vm8307 = vweird.f32 %v8284
  %vm8308 = vweird.f32 %v8302
  %vm8309 = vmor %vm8307, %vm8308
  %v8310 = vsel %vm8309, %v8302, %v8306
  %v8311 = vand.u32 2147483647, %v8284
  %vm8312 = vcmp.eq.f32.partialorder %v8311, 8.507059e+37
  %v8313 = vand.u32 %v8284, 2147483648
  %v8314 = vor.u32 1.1754944e-38, %v8313
  %v8315 = vsel %vm8312, %v8314, %v8310
  %v8316 = vmul.f32 1.0, %v8315
  %v8317 = vrcp.pop %v8285
  %v8318 = vmul.f32 %v8285, %v8317
  %v8319 = vsub.f32 1.0, %v8318
  %v8320 = vmul.f32 %v8317, %v8319
  %v8321 = vadd.f32 %v8317, %v8320
  %vm8322 = vweird.f32 %v8285
  %vm8323 = vweird.f32 %v8317
  %vm8324 = vmor %vm8322, %vm8323
  %v8325 = vsel %vm8324, %v8317, %v8321
  %v8326 = vand.u32 2147483647, %v8285
  %vm8327 = vcmp.eq.f32.partialorder %v8326, 8.507059e+37
  %v8328 = vand.u32 %v8285, 2147483648
  %v8329 = vor.u32 1.1754944e-38, %v8328
  %v8330 = vsel %vm8327, %v8329, %v8325
  %v8331 = vmul.f32 1.0, %v8330
  %v8332 = vrcp.pop %v8286
  %v8333 = vmul.f32 %v8286, %v8332
  %v8334 = vsub.f32 1.0, %v8333
  %v8335 = vmul.f32 %v8332, %v8334
  %v8336 = vadd.f32 %v8332, %v8335
  %vm8337 = vweird.f32 %v8286
  %vm8338 = vweird.f32 %v8332
  %vm8339 = vmor %vm8337, %vm8338
  %v8340 = vsel %vm8339, %v8332, %v8336
  %v8341 = vand.u32 2147483647, %v8286
  %vm8342 = vcmp.eq.f32.partialorder %v8341, 8.507059e+37
  %v8343 = vand.u32 %v8286, 2147483648
  %v8344 = vor.u32 1.1754944e-38, %v8343
  %v8345 = vsel %vm8342, %v8344, %v8340
  %v8346 = vmul.f32 1.0, %v8345
  %v8347 = vtanh.pop %v7904
  %v8348 = vtanh.pop %v7956
  %v8349 = vtanh.pop %v8008
  %v8350 = vtanh.pop %v8060
  %v8351 = vxor.u32 %v8112, 2147483648
  %v8352 = vxor.u32 %v8164, 2147483648
  %v8353 = vxor.u32 %v8216, 2147483648
  %v8354 = vxor.u32 %v8268, 2147483648
  %v8355 = vmul.f32 %v8351, 1.442695
  %v8356 = vpow.pop %v8355
  %v8357 = vmul.f32 %v8352, 1.442695
  %v8358 = vpow.pop %v8357
  %v8359 = vmul.f32 %v8353, 1.442695
  %v8360 = vpow.pop %v8359
  %v8361 = vmul.f32 %v8354, 1.442695
  %v8362 = vpow.pop %v8361
  %v8363 = vadd.f32 %v8356, 1.0
  %v8364 = vadd.f32 %v8358, 1.0
  %v8365 = vadd.f32 %v8360, 1.0
  %v8366 = vadd.f32 %v8362, 1.0
  %v8367 = vrcp.pop %v8363
  %v8368 = vmul.f32 %v8363, %v8367
  %v8369 = vsub.f32 1.0, %v8368
  %v8370 = vmul.f32 %v8367, %v8369
  %v8371 = vadd.f32 %v8367, %v8370
  %vm8372 = vweird.f32 %v8363
  %vm8373 = vweird.f32 %v8367
  %vm8374 = vmor %vm8372, %vm8373
  %v8375 = vsel %vm8374, %v8367, %v8371
  %v8376 = vand.u32 2147483647, %v8363
  %vm8377 = vcmp.eq.f32.partialorder %v8376, 8.507059e+37
  %v8378 = vand.u32 %v8363, 2147483648
  %v8379 = vor.u32 1.1754944e-38, %v8378
  %v8380 = vsel %vm8377, %v8379, %v8375
  %v8381 = vmul.f32 1.0, %v8380
  %v8382 = vrcp.pop %v8364
  %v8383 = vmul.f32 %v8364, %v8382
  %v8384 = vsub.f32 1.0, %v8383
  %v8385 = vmul.f32 %v8382, %v8384
  %v8386 = vadd.f32 %v8382, %v8385
  %vm8387 = vweird.f32 %v8364
  %vm8388 = vweird.f32 %v8382
  %vm8389 = vmor %vm8387, %vm8388
  %v8390 = vsel %vm8389, %v8382, %v8386
  %v8391 = vand.u32 2147483647, %v8364
  %vm8392 = vcmp.eq.f32.partialorder %v8391, 8.507059e+37
  %v8393 = vand.u32 %v8364, 2147483648
  %v8394 = vor.u32 1.1754944e-38, %v8393
  %v8395 = vsel %vm8392, %v8394, %v8390
  %v8396 = vmul.f32 1.0, %v8395
  %v8397 = vrcp.pop %v8365
  %v8398 = vmul.f32 %v8365, %v8397
  %v8399 = vsub.f32 1.0, %v8398
  %v8400 = vmul.f32 %v8397, %v8399
  %v8401 = vadd.f32 %v8397, %v8400
  %vm8402 = vweird.f32 %v8365
  %vm8403 = vweird.f32 %v8397
  %vm8404 = vmor %vm8402, %vm8403
  %v8405 = vsel %vm8404, %v8397, %v8401
  %v8406 = vand.u32 2147483647, %v8365
  %vm8407 = vcmp.eq.f32.partialorder %v8406, 8.507059e+37
  %v8408 = vand.u32 %v8365, 2147483648
  %v8409 = vor.u32 1.1754944e-38, %v8408
  %v8410 = vsel %vm8407, %v8409, %v8405
  %v8411 = vmul.f32 1.0, %v8410
  %v8412 = vrcp.pop %v8366
  %v8413 = vmul.f32 %v8366, %v8412
  %v8414 = vsub.f32 1.0, %v8413
  %v8415 = vmul.f32 %v8412, %v8414
  %v8416 = vadd.f32 %v8412, %v8415
  %vm8417 = vweird.f32 %v8366
  %vm8418 = vweird.f32 %v8412
  %vm8419 = vmor %vm8417, %vm8418
  %v8420 = vsel %vm8419, %v8412, %v8416
  %v8421 = vand.u32 2147483647, %v8366
  %vm8422 = vcmp.eq.f32.partialorder %v8421, 8.507059e+37
  %v8423 = vand.u32 %v8366, 2147483648
  %v8424 = vor.u32 1.1754944e-38, %v8423
  %v8425 = vsel %vm8422, %v8424, %v8420
  %v8426 = vmul.f32 1.0, %v8425
  %v8427 = vmul.f32 %v8301, %v8347
  %v8428 = vmul.f32 %v8316, %v8348
  %v8429 = vmul.f32 %v8331, %v8349
  %v8430 = vmul.f32 %v8346, %v8350
  %v8431 = vtanh.pop %v8427
  %v8432 = vtanh.pop %v8428
  %v8433 = vtanh.pop %v8429
  %v8434 = vtanh.pop %v8430
  %v8435 = vmul.f32 %v8381, %v8431
  %v8436 = vmul.f32 %v8396, %v8432
  %v8437 = vmul.f32 %v8411, %v8433
  %v8438 = vmul.f32 %v8426, %v8434
  %s8439 = smul.u32 %s5307, 1
  %s8440 = sshll.u32 %s8439, 4
  %8441 = dma.done %s820, %s8440
  %v8442 = vpack.c.bf16 %v8435, %v8435
  %v8443 = vpack.c.bf16 %v8436, %v8436
  %v8444 = vpack.c.bf16 %v8437, %v8437
  %v8445 = vpack.c.bf16 %v8438, %v8438
  %v8446 = vld [vmem:[#allocation3] sm:$0xf]
  %v8447 = vld [vmem:[#allocation3 + $0x4] sm:$0xf]
  %v8448 = vld [vmem:[#allocation3 + $0x8] sm:$0xf]
  %v8449 = vld [vmem:[#allocation3 + $0xc] sm:$0xf]
  %v8450 = vld [vmem:[#allocation3 + $0x10] sm:$0xf]
  %v8451 = vld [vmem:[#allocation3 + $0x14] sm:$0xf]
  %v8452 = vld [vmem:[#allocation3 + $0x18] sm:$0xf]
  %v8453 = vld [vmem:[#allocation3 + $0x1c] sm:$0xf]
  %v8454 = vld [vmem:[#allocation3 + $0x20] sm:$0xf]
  %v8455 = vld [vmem:[#allocation3 + $0x24] sm:$0xf]
  %v8456 = vld [vmem:[#allocation3 + $0x28] sm:$0xf]
  %v8457 = vld [vmem:[#allocation3 + $0x2c] sm:$0xf]
  %v8458 = vld [vmem:[#allocation3 + $0x30] sm:$0xf]
  %v8459 = vld [vmem:[#allocation3 + $0x34] sm:$0xf]
  %v8460 = vld [vmem:[#allocation3 + $0x38] sm:$0xf]
  %v8461 = vld [vmem:[#allocation3 + $0x3c] sm:$0xf]
  %v8462 = vld [vmem:[#allocation3 + $0x40] sm:$0xf]
  %v8463 = vld [vmem:[#allocation3 + $0x44] sm:$0xf]
  %v8464 = vld [vmem:[#allocation3 + $0x48] sm:$0xf]
  %v8465 = vld [vmem:[#allocation3 + $0x4c] sm:$0xf]
  %v8466 = vld [vmem:[#allocation3 + $0x50] sm:$0xf]
  %v8467 = vld [vmem:[#allocation3 + $0x54] sm:$0xf]
  %v8468 = vld [vmem:[#allocation3 + $0x58] sm:$0xf]
  %v8469 = vld [vmem:[#allocation3 + $0x5c] sm:$0xf]
  %v8470 = vld [vmem:[#allocation3 + $0x60] sm:$0xf]
  %v8471 = vld [vmem:[#allocation3 + $0x64] sm:$0xf]
  %v8472 = vld [vmem:[#allocation3 + $0x68] sm:$0xf]
  %v8473 = vld [vmem:[#allocation3 + $0x6c] sm:$0xf]
  %v8474 = vld [vmem:[#allocation3 + $0x70] sm:$0xf]
  %v8475 = vld [vmem:[#allocation3 + $0x74] sm:$0xf]
  %v8476 = vld [vmem:[#allocation3 + $0x78] sm:$0xf]
  %v8477 = vld [vmem:[#allocation3 + $0x7c] sm:$0xf]
  %v8478 = vld [vmem:[#allocation3 + $0x80] sm:$0xf]
  %v8479 = vld [vmem:[#allocation3 + $0x84] sm:$0xf]
  %v8480 = vld [vmem:[#allocation3 + $0x88] sm:$0xf]
  %v8481 = vld [vmem:[#allocation3 + $0x8c] sm:$0xf]
  %v8482 = vld [vmem:[#allocation3 + $0x90] sm:$0xf]
  %v8483 = vld [vmem:[#allocation3 + $0x94] sm:$0xf]
  %v8484 = vld [vmem:[#allocation3 + $0x98] sm:$0xf]
  %v8485 = vld [vmem:[#allocation3 + $0x9c] sm:$0xf]
  %v8486 = vld [vmem:[#allocation3 + $0xa0] sm:$0xf]
  %v8487 = vld [vmem:[#allocation3 + $0xa4] sm:$0xf]
  %v8488 = vld [vmem:[#allocation3 + $0xa8] sm:$0xf]
  %v8489 = vld [vmem:[#allocation3 + $0xac] sm:$0xf]
  %v8490 = vld [vmem:[#allocation3 + $0xb0] sm:$0xf]
  %v8491 = vld [vmem:[#allocation3 + $0xb4] sm:$0xf]
  %v8492 = vld [vmem:[#allocation3 + $0xb8] sm:$0xf]
  %v8493 = vld [vmem:[#allocation3 + $0xbc] sm:$0xf]
  %v8494 = vld [vmem:[#allocation3 + $0xc0] sm:$0xf]
  %v8495 = vld [vmem:[#allocation3 + $0xc4] sm:$0xf]
  %v8496 = vld [vmem:[#allocation3 + $0xc8] sm:$0xf]
  %v8497 = vld [vmem:[#allocation3 + $0xcc] sm:$0xf]
  %v8498 = vld [vmem:[#allocation3 + $0xd0] sm:$0xf]
  %v8499 = vld [vmem:[#allocation3 + $0xd4] sm:$0xf]
  %v8500 = vld [vmem:[#allocation3 + $0xd8] sm:$0xf]
  %v8501 = vld [vmem:[#allocation3 + $0xdc] sm:$0xf]
  %v8502 = vld [vmem:[#allocation3 + $0xe0] sm:$0xf]
  %v8503 = vld [vmem:[#allocation3 + $0xe4] sm:$0xf]
  %v8504 = vld [vmem:[#allocation3 + $0xe8] sm:$0xf]
  %v8505 = vld [vmem:[#allocation3 + $0xec] sm:$0xf]
  %v8506 = vld [vmem:[#allocation3 + $0xf0] sm:$0xf]
  %v8507 = vld [vmem:[#allocation3 + $0xf4] sm:$0xf]
  %v8508 = vld [vmem:[#allocation3 + $0xf8] sm:$0xf]
  %v8509 = vld [vmem:[#allocation3 + $0xfc] sm:$0xf]
  %v8510 = vld [vmem:[%s7] sm:$0x1]
  %v8512 = vperm.slane %v8510, 0
  %v8578 = vunpack.c.l.b16 %v8446
  %v8579 = vunpack.c.l.b16 %v8447
  %v8580 = vunpack.c.l.b16 %v8448
  %v8581 = vunpack.c.l.b16 %v8449
  %v8582 = vunpack.c.l.b16 %v8450
  %v8583 = vunpack.c.l.b16 %v8451
  %v8584 = vunpack.c.l.b16 %v8452
  %v8585 = vunpack.c.l.b16 %v8453
  %v8586 = vunpack.c.l.b16 %v8454
  %v8587 = vunpack.c.l.b16 %v8455
  %v8588 = vunpack.c.l.b16 %v8456
  %v8589 = vunpack.c.l.b16 %v8457
  %v8590 = vunpack.c.l.b16 %v8458
  %v8591 = vunpack.c.l.b16 %v8459
  %v8592 = vunpack.c.l.b16 %v8460
  %v8593 = vunpack.c.l.b16 %v8461
  %v8594 = vunpack.c.l.b16 %v8462
  %v8595 = vunpack.c.l.b16 %v8463
  %v8596 = vunpack.c.l.b16 %v8464
  %v8597 = vunpack.c.l.b16 %v8465
  %v8598 = vunpack.c.l.b16 %v8466
  %v8599 = vunpack.c.l.b16 %v8467
  %v8600 = vunpack.c.l.b16 %v8468
  %v8601 = vunpack.c.l.b16 %v8469
  %v8602 = vunpack.c.l.b16 %v8470
  %v8603 = vunpack.c.l.b16 %v8471
  %v8604 = vunpack.c.l.b16 %v8472
  %v8605 = vunpack.c.l.b16 %v8473
  %v8606 = vunpack.c.l.b16 %v8474
  %v8607 = vunpack.c.l.b16 %v8475
  %v8608 = vunpack.c.l.b16 %v8476
  %v8609 = vunpack.c.l.b16 %v8477
  %v8610 = vunpack.c.l.b16 %v8478
  %v8611 = vunpack.c.l.b16 %v8479
  %v8612 = vunpack.c.l.b16 %v8480
  %v8613 = vunpack.c.l.b16 %v8481
  %v8614 = vunpack.c.l.b16 %v8482
  %v8615 = vunpack.c.l.b16 %v8483
  %v8616 = vunpack.c.l.b16 %v8484
  %v8617 = vunpack.c.l.b16 %v8485
  %v8618 = vunpack.c.l.b16 %v8486
  %v8619 = vunpack.c.l.b16 %v8487
  %v8620 = vunpack.c.l.b16 %v8488
  %v8621 = vunpack.c.l.b16 %v8489
  %v8622 = vunpack.c.l.b16 %v8490
  %v8623 = vunpack.c.l.b16 %v8491
  %v8624 = vunpack.c.l.b16 %v8492
  %v8625 = vunpack.c.l.b16 %v8493
  %v8626 = vunpack.c.l.b16 %v8494
  %v8627 = vunpack.c.l.b16 %v8495
  %v8628 = vunpack.c.l.b16 %v8496
  %v8629 = vunpack.c.l.b16 %v8497
  %v8630 = vunpack.c.l.b16 %v8498
  %v8631 = vunpack.c.l.b16 %v8499
  %v8632 = vunpack.c.l.b16 %v8500
  %v8633 = vunpack.c.l.b16 %v8501
  %v8634 = vunpack.c.l.b16 %v8502
  %v8635 = vunpack.c.l.b16 %v8503
  %v8636 = vunpack.c.l.b16 %v8504
  %v8637 = vunpack.c.l.b16 %v8505
  %v8638 = vunpack.c.l.b16 %v8506
  %v8639 = vunpack.c.l.b16 %v8507
  %v8640 = vunpack.c.l.b16 %v8508
  %v8641 = vunpack.c.l.b16 %v8509
  %v8642 = vpack.c.b16 %v8579, %v8578
  %v8643 = vpack.c.b16 %v8581, %v8580
  %v8644 = vpack.c.b16 %v8583, %v8582
  %v8645 = vpack.c.b16 %v8585, %v8584
  %v8646 = vpack.c.b16 %v8587, %v8586
  %v8647 = vpack.c.b16 %v8589, %v8588
  %v8648 = vpack.c.b16 %v8591, %v8590
  %v8649 = vpack.c.b16 %v8593, %v8592
  %v8650 = vpack.c.b16 %v8595, %v8594
  %v8651 = vpack.c.b16 %v8597, %v8596
  %v8652 = vpack.c.b16 %v8599, %v8598
  %v8653 = vpack.c.b16 %v8601, %v8600
  %v8654 = vpack.c.b16 %v8603, %v8602
  %v8655 = vpack.c.b16 %v8605, %v8604
  %v8656 = vpack.c.b16 %v8607, %v8606
  %v8657 = vpack.c.b16 %v8609, %v8608
  %v8658 = vpack.c.b16 %v8611, %v8610
  %v8659 = vpack.c.b16 %v8613, %v8612
  %v8660 = vpack.c.b16 %v8615, %v8614
  %v8661 = vpack.c.b16 %v8617, %v8616
  %v8662 = vpack.c.b16 %v8619, %v8618
  %v8663 = vpack.c.b16 %v8621, %v8620
  %v8664 = vpack.c.b16 %v8623, %v8622
  %v8665 = vpack.c.b16 %v8625, %v8624
  %v8666 = vpack.c.b16 %v8627, %v8626
  %v8667 = vpack.c.b16 %v8629, %v8628
  %v8668 = vpack.c.b16 %v8631, %v8630
  %v8669 = vpack.c.b16 %v8633, %v8632
  %v8670 = vpack.c.b16 %v8635, %v8634
  %v8671 = vpack.c.b16 %v8637, %v8636
  %v8672 = vpack.c.b16 %v8639, %v8638
  %v8673 = vpack.c.b16 %v8641, %v8640
  %8706 = vmatpush.bf16.msra.mxu0 %v8649
  %8707 = vmatpush.bf16.msra.mxu0 %v8648
  %8708 = vmatpush.bf16.msra.mxu0 %v8647
  %8709 = vmatpush.bf16.msra.mxu0 %v8646
  %8710 = vmatpush.bf16.msra.mxu0 %v8645
  %8711 = vmatpush.bf16.msra.mxu0 %v8644
  %8712 = vmatpush.bf16.msra.mxu0 %v8643
  %8713 = vmatpush.bf16.msra.mxu0 %v8642
  %8714 = vmatmul.bf16.gmra.mxu0 %v8442
  %v8715 = vpop.f32.mrf.mxu0
  %v8716 = vadd.f32 %v8512, %v8715
  %v8717 = vpop.f32.mrf.mxu0
  %8718 = vdwg.mxu0
  %8719 = vmatpush.bf16.msra.mxu0 %v8657
  %8720 = vmatpush.bf16.msra.mxu0 %v8656
  %8721 = vmatpush.bf16.msra.mxu0 %v8655
  %8722 = vmatpush.bf16.msra.mxu0 %v8654
  %8723 = vmatpush.bf16.msra.mxu0 %v8653
  %8724 = vmatpush.bf16.msra.mxu0 %v8652
  %8725 = vmatpush.bf16.msra.mxu0 %v8651
  %8726 = vmatpush.bf16.msra.mxu0 %v8650
  %8727 = vmatmul.bf16.gmra.mxu0 %v8443
  %v8728 = vpop.f32.mrf.mxu0
  %v8729 = vadd.f32 %v8716, %v8728
  %v8730 = vpop.f32.mrf.mxu0
  %8731 = vdwg.mxu0
  %8732 = vmatpush.bf16.msra.mxu0 %v8665
  %8733 = vmatpush.bf16.msra.mxu0 %v8664
  %8734 = vmatpush.bf16.msra.mxu0 %v8663
  %8735 = vmatpush.bf16.msra.mxu0 %v8662
  %8736 = vmatpush.bf16.msra.mxu0 %v8661
  %8737 = vmatpush.bf16.msra.mxu0 %v8660
  %8738 = vmatpush.bf16.msra.mxu0 %v8659
  %8739 = vmatpush.bf16.msra.mxu0 %v8658
  %8740 = vmatmul.bf16.gmra.mxu0 %v8444
  %v8741 = vpop.f32.mrf.mxu0
  %v8742 = vadd.f32 %v8729, %v8741
  %v8743 = vpop.f32.mrf.mxu0
  %8744 = vdwg.mxu0
  %8745 = vmatpush.bf16.msra.mxu0 %v8673
  %8746 = vmatpush.bf16.msra.mxu0 %v8672
  %8747 = vmatpush.bf16.msra.mxu0 %v8671
  %8748 = vmatpush.bf16.msra.mxu0 %v8670
  %8749 = vmatpush.bf16.msra.mxu0 %v8669
  %8750 = vmatpush.bf16.msra.mxu0 %v8668
  %8751 = vmatpush.bf16.msra.mxu0 %v8667
  %8752 = vmatpush.bf16.msra.mxu0 %v8666
  %8753 = vmatmul.bf16.gmra.mxu0 %v8445
  %v8754 = vpop.f32.mrf.mxu0
  %v8755 = vadd.f32 %v8742, %v8754
  %v8756 = vpop.f32.mrf.mxu0
  %8757 = vdwg.mxu0
  %v8758 = vmax.f32 %v8755, 0.0
  %s8759 = smul.u32 4, 16
  %s8760 = smul.u32 %s8759, 1
  %s8761 = sshll.u32 %s8760, 4
  %8762 = dma.done %s901, %s8761
  %v8763 = vpack.c.bf16 %v8758, %v8758
  %v8764 = vld [vmem:[#allocation4] sm:$0xf]
  %v8765 = vld [vmem:[#allocation4 + $0x4] sm:$0xf]
  %v8766 = vld [vmem:[#allocation4 + $0x8] sm:$0xf]
  %v8767 = vld [vmem:[#allocation4 + $0xc] sm:$0xf]
  %v8768 = vld [vmem:[#allocation4 + $0x10] sm:$0xf]
  %v8769 = vld [vmem:[#allocation4 + $0x14] sm:$0xf]
  %v8770 = vld [vmem:[#allocation4 + $0x18] sm:$0xf]
  %v8771 = vld [vmem:[#allocation4 + $0x1c] sm:$0xf]
  %v8772 = vld [vmem:[#allocation4 + $0x20] sm:$0xf]
  %v8773 = vld [vmem:[#allocation4 + $0x24] sm:$0xf]
  %v8774 = vld [vmem:[#allocation4 + $0x28] sm:$0xf]
  %v8775 = vld [vmem:[#allocation4 + $0x2c] sm:$0xf]
  %v8776 = vld [vmem:[#allocation4 + $0x30] sm:$0xf]
  %v8777 = vld [vmem:[#allocation4 + $0x34] sm:$0xf]
  %v8778 = vld [vmem:[#allocation4 + $0x38] sm:$0xf]
  %v8779 = vld [vmem:[#allocation4 + $0x3c] sm:$0xf]
  %v8780 = vld [vmem:[%s8] sm:$0x1]
  %v8782 = vperm.slane %v8780, 0
  %v8800 = vunpack.c.l.b16 %v8764
  %v8801 = vunpack.c.l.b16 %v8765
  %v8802 = vunpack.c.l.b16 %v8766
  %v8803 = vunpack.c.l.b16 %v8767
  %v8804 = vunpack.c.l.b16 %v8768
  %v8805 = vunpack.c.l.b16 %v8769
  %v8806 = vunpack.c.l.b16 %v8770
  %v8807 = vunpack.c.l.b16 %v8771
  %v8808 = vunpack.c.l.b16 %v8772
  %v8809 = vunpack.c.l.b16 %v8773
  %v8810 = vunpack.c.l.b16 %v8774
  %v8811 = vunpack.c.l.b16 %v8775
  %v8812 = vunpack.c.l.b16 %v8776
  %v8813 = vunpack.c.l.b16 %v8777
  %v8814 = vunpack.c.l.b16 %v8778
  %v8815 = vunpack.c.l.b16 %v8779
  %v8816 = vpack.c.b16 %v8801, %v8800
  %v8817 = vpack.c.b16 %v8803, %v8802
  %v8818 = vpack.c.b16 %v8805, %v8804
  %v8819 = vpack.c.b16 %v8807, %v8806
  %v8820 = vpack.c.b16 %v8809, %v8808
  %v8821 = vpack.c.b16 %v8811, %v8810
  %v8822 = vpack.c.b16 %v8813, %v8812
  %v8823 = vpack.c.b16 %v8815, %v8814
  %8832 = vmatpush.bf16.msra.mxu0 %v8823
  %8833 = vmatpush.bf16.msra.mxu0 %v8822
  %8834 = vmatpush.bf16.msra.mxu0 %v8821
  %8835 = vmatpush.bf16.msra.mxu0 %v8820
  %8836 = vmatpush.bf16.msra.mxu0 %v8819
  %8837 = vmatpush.bf16.msra.mxu0 %v8818
  %8838 = vmatpush.bf16.msra.mxu0 %v8817
  %8839 = vmatpush.bf16.msra.mxu0 %v8816
  %8840 = vmatmul.bf16.gmra.mxu0 %v8763
  %v8841 = vpop.f32.mrf.mxu0
  %v8842 = vadd.f32 %v8782, %v8841
  %v8843 = vpop.f32.mrf.mxu0
  %8844 = vdwg.mxu0
  %8845 = vst [vmem:[%s12] sm:$0x3] %v8842
  // Predicated region
  $region95: #{sound_stage_net_v2.1} parent=0 // pred_check
    _
  $region96: #{sound_stage_net_v2.1} parent=0 // pred_check_branch
    %8847 = sbr.rel (0) target = $region98
  $region97: #{sound_stage_net_v2.1} parent=0 // pred_region
    _
  $region98: #{sound_stage_net_v2.1} parent=0 // pred_fallthru
    _
  // Predicated region
  $region99: #{sound_stage_net_v2.1} parent=0 // pred_check
    _
  $region100: #{sound_stage_net_v2.1} parent=0 // pred_check_branch
    %8849 = sbr.rel (0) target = $region102
  $region101: #{sound_stage_net_v2.1} parent=0 // pred_region
    _
  $region102: #{sound_stage_net_v2.1} parent=0 // pred_fallthru
    _
  %8850 = vsyncmov [#allocation5]
  %s8851 = vpop.sfrf %8850
  %p8852 = scmp.eq.s32.totalorder %s8851, 0
  %p8853 = pneg %p8852
  %8855 = shalt.err (%p8853)
  %s8856 = scalar_lea.sflag [#allocation5], 1
  %8857 = vsyncmov %s8856
  %s8858 = vpop.sfrf %8857
  %p8859 = scmp.eq.s32.totalorder %s8858, 0
  %p8860 = pneg %p8859
  %8862 = shalt.err (%p8860)
  %s8863 = scalar_lea.sflag [#allocation5], 2
  %8864 = vsyncmov %s8863
  %s8865 = vpop.sfrf %8864
  %p8866 = scmp.eq.s32.totalorder %s8865, 0
  %p8867 = pneg %p8866
  %8869 = shalt.err (%p8867)

</llo_original>
